<compile_context>
chip_gen: v7x
topology: tpu7x:2x2x1
jax: 0.10.0
libtpu: 0.0.40
codegen_flags: <defaults>
</compile_context>

<pallas_src>
import math
from itertools import product

import jax
import jax.numpy as jnp
from jax import lax
from jax.experimental import pallas as pl
from jax.experimental.pallas import tpu as pltpu

_LANE = 128        # lane width of a vreg / minor tile dimension
_EPS = 1e-5        # nn.LayerNorm default epsilon


# ---------------------------------------------------------------------------
# Kernel factory
# ---------------------------------------------------------------------------
def _make_sim_kernel(C, Nt, wb, grid_vals, has_mask):
    """Fused LayerNorm + windowed-affinity softmax + soft-argmax.

    Block layouts (windows on lanes):
      x_ref, y_ref : (C, Nt, wb)   raw (pre-LayerNorm) tokens
      prm_ref      : (4, C) SMEM   [gamma_x, beta_x, gamma_y, beta_y]
      m_ref        : (Nt, wb)      1/0 token mask   (only when has_mask)
      out_ref      : (3, Nt, wb)   expected window offset per y-token
    """
    nchunks = wb // _LANE
    inv_c = 1.0 / float(C)
    inv_sqrt_c = 1.0 / math.sqrt(float(C))

    def kernel(*refs):
        if has_mask:
            x_ref, y_ref, prm_ref, m_ref, out_ref = refs
        else:
            x_ref, y_ref, prm_ref, out_ref = refs
            m_ref = None

        for j in range(nchunks):                      # 128-lane chunks
            sl = slice(j * _LANE, (j + 1) * _LANE)

            # ---- pass 1: per-token channel statistics (VPU adds) ----------
            sx = jnp.zeros((Nt, _LANE), jnp.float32)
            sxx = jnp.zeros((Nt, _LANE), jnp.float32)
            sy = jnp.zeros((Nt, _LANE), jnp.float32)
            syy = jnp.zeros((Nt, _LANE), jnp.float32)
            for c in range(C):
                xc = x_ref[c, :, sl]
                yc = y_ref[c, :, sl]
                sx = sx + xc
                sxx = sxx + xc * xc
                sy = sy + yc
                syy = syy + yc * yc
            mu_x = sx * inv_c
            mu_y = sy * inv_c
            var_x = jnp.maximum(sxx * inv_c - mu_x * mu_x, 0.0)
            var_y = jnp.maximum(syy * inv_c - mu_y * mu_y, 0.0)
            rstd_x = lax.rsqrt(var_x + _EPS)
            rstd_y = lax.rsqrt(var_y + _EPS)

            msk = m_ref[:, sl] if has_mask else None

            # ---- pass 2: LN affine + affinity accumulation (VPU MACs) -----
            # ab[p][q, w] = sum_c yn[c, q, w] * xn[c, p, w]
            asq = jnp.zeros((Nt, _LANE), jnp.float32)          # ||x_p||^2
            ab = [jnp.zeros((Nt, _LANE), jnp.float32) for _ in range(Nt)]
            for c in range(C):
                gx = prm_ref[0, c]
                bx = prm_ref[1, c]
                gy = prm_ref[2, c]
                by = prm_ref[3, c]
                xc = (x_ref[c, :, sl] - mu_x) * rstd_x * gx + bx
                if msk is not None:
                    # torch pads with zeros AFTER LayerNorm -> padded x tokens
                    # must be exactly zero post-norm.
                    xc = xc * msk
                yc = (y_ref[c, :, sl] - mu_y) * rstd_y * gy + by
                asq = asq + xc * xc
                for p in range(Nt):
                    ab[p] = ab[p] + yc * xc[p:p + 1, :]

            # ---- affinity + softmax over p (x positions inside window) ----
            s = [(2.0 * ab[p] - asq[p:p + 1, :]) * inv_sqrt_c
                 for p in range(Nt)]
            mmax = s[0]
            for p in range(1, Nt):
                mmax = jnp.maximum(mmax, s[p])
            e = [jnp.exp(s[p] - mmax) for p in range(Nt)]
            den = e[0]
            for p in range(1, Nt):
                den = den + e[p]
            inv_den = 1.0 / den      # exact divide (approx recip caused 3e-3 err)
            wgt = [e[p] * inv_den for p in range(Nt)]

            # ---- soft-argmax against the window-offset grid (constants) ---
            for dcomp in range(3):
                acc = None
                for p in range(Nt):
                    g = float(grid_vals[p][dcomp])
                    if g == 0.0:
                        continue
                    term = wgt[p] if g == 1.0 else wgt[p] * g
                    acc = term if acc is None else acc + term
                if acc is None:
                    acc = jnp.zeros((Nt, _LANE), jnp.float32)
                out_ref[dcomp, :, sl] = acc

    return kernel


# ---------------------------------------------------------------------------
# Host-side layout glue (pure XLA reshapes/transposes)
# ---------------------------------------------------------------------------
def _to_kernel_layout(t, ws):
    """(b, c, dp, hp, wp) -> (c, N, NW); tokens=(w0,w1,w2), windows=(b,D0,H0,W0)."""
    b, c, dp, hp, wp = t.shape
    w0, w1, w2 = ws
    d0, h0, wq = dp // w0, hp // w1, wp // w2
    t = t.reshape(b, c, d0, w0, h0, w1, wq, w2)
    t = jnp.transpose(t, (1, 3, 5, 7, 0, 2, 4, 6))
    return t.reshape(c, w0 * w1 * w2, b * d0 * h0 * wq)


def _from_kernel_layout(o, ws, dims):
    """(3, N, NW) -> (b, 3, dp, hp, wp)."""
    b, dp, hp, wp = dims
    w0, w1, w2 = ws
    d0, h0, wq = dp // w0, hp // w1, wp // w2
    o = o.reshape(3, w0, w1, w2, b, d0, h0, wq)
    o = jnp.transpose(o, (4, 0, 5, 1, 6, 2, 7, 3))
    return o.reshape(b, 3, dp, hp, wp)


def _grid_vals(window_size):
    """Window-offset grid as Python constants; matches torch's
    arange(-s//2+1, s//2+1) + meshgrid(indexing='ij') + stack(-1)."""
    axes = [list(range(-s // 2 + 1, s // 2 + 1)) for s in window_size]
    return [tuple(float(v) for v in tpl) for tpl in product(*axes)]


def _round_up(a, m):
    return (a + m - 1) // m * m


def _choose_block_windows(nw, cap):
    cap = max(_LANE, (cap // _LANE) * _LANE)
    lanes = _round_up(max(nw, 1), _LANE)
    wb = min(cap, lanes)
    # Prefer >=2 grid steps when there is enough work (pipelining; lets v7x's
    # second TensorCore pick up half of the "parallel" window axis).
    if lanes > _LANE and lanes <= wb:
        wb = max(_LANE, _round_up(lanes // 2, _LANE))
    return wb


# ---------------------------------------------------------------------------
# Forward wrapper
# ---------------------------------------------------------------------------
def sim_forward(x_in, y_in, params, window_size=(2, 2, 2), block_windows=512):
    b, c, d, h, w = x_in.shape
    channel = window_size[0] * window_size[1] * window_size[2]

    # get_winsize: clamp window to spatial extent.  The torch module's later
    # affinity.view(-1, *window_size, channel) only type-checks when
    # prod(ws) == channel, so that is the only valid path; mirror it.
    ws = tuple(min(sp, wsz) for sp, wsz in zip((d, h, w), window_size))
    assert ws[0] * ws[1] * ws[2] == channel, (
        "window clamping changes the token count; that path is invalid in the "
        "reference torch module as well")

    pd = (ws[0] - d % ws[0]) % ws[0]
    ph = (ws[1] - h % ws[1]) % ws[1]
    pw = (ws[2] - w % ws[2]) % ws[2]
    has_pad = bool(pd or ph or pw)
    dp, hp, wp = d + pd, h + ph, w + pw

    x = x_in.astype(jnp.float32)
    y = y_in.astype(jnp.float32)
    if has_pad:
        pads = ((0, 0), (0, 0), (0, pd), (0, ph), (0, pw))
        x = jnp.pad(x, pads)
        y = jnp.pad(y, pads)

    n_tok = channel
    nw = b * (dp // ws[0]) * (hp // ws[1]) * (wp // ws[2])
    wb = _choose_block_windows(nw, block_windows)
    steps = -(-nw // wb)
    nw_pad = steps * wb

    # One fused reshape+transpose per input: channels-first -> (C, N, NW).
    xk = _to_kernel_layout(x, ws)
    yk = _to_kernel_layout(y, ws)
    if nw_pad > nw:
        lane_pad = ((0, 0), (0, 0), (0, nw_pad - nw))
        xk = jnp.pad(xk, lane_pad)
        yk = jnp.pad(yk, lane_pad)

    prm = jnp.stack([params['gamma_x'], params['beta_x'],
                     params['gamma_y'], params['beta_y']]).astype(jnp.float32)

    operands = [xk, yk, prm]
    in_specs = [
        pl.BlockSpec((c, n_tok, wb), lambda i: (0, 0, i)),
        pl.BlockSpec((c, n_tok, wb), lambda i: (0, 0, i)),
        pl.BlockSpec(memory_space=pltpu.MemorySpace.SMEM),
    ]
    if has_pad:
        m = jnp.ones((b, 1, d, h, w), jnp.float32)
        m = jnp.pad(m, pads)
        mk = _to_kernel_layout(m, ws)[0]                       # (N, NW)
        if nw_pad > nw:
            mk = jnp.pad(mk, ((0, 0), (0, nw_pad - nw)))
        operands.append(mk)
        in_specs.append(pl.BlockSpec((n_tok, wb), lambda i: (0, i)))

    kernel = _make_sim_kernel(c, n_tok, wb, _grid_vals(window_size), has_pad)

    out_k = pl.pallas_call(
        kernel,
        out_shape=jax.ShapeDtypeStruct((3, n_tok, nw_pad), jnp.float32),
        grid=(steps,),
        in_specs=in_specs,
        out_specs=pl.BlockSpec((3, n_tok, wb), lambda i: (0, 0, i)),
        compiler_params=pltpu.CompilerParams(
            dimension_semantics=("parallel",)),
    )(*operands)

    out = _from_kernel_layout(out_k[:, :, :nw], ws, (b, dp, hp, wp))
    if has_pad:
        out = out[:, :, :d, :h, :w]
    return out


# ---------------------------------------------------------------------------
# Pure-JAX replica of the torch forward (independent sanity check)
# ---------------------------------------------------------------------------
def _window_partition_ref(x, ws):
    B, D, H, W, C = x.shape
    w0, w1, w2 = ws
    x = x.reshape(B, D // w0, w0, H // w1, w1, W // w2, w2, C)
    x = jnp.transpose(x, (0, 1, 3, 5, 2, 4, 6, 7))
    return x.reshape(-1, w0 * w1 * w2, C)


def _window_reverse_ref(windows, ws, dims, C):
    B, D, H, W = dims
    w0, w1, w2 = ws
    x = windows.reshape(B, D // w0, H // w1, W // w2, w0, w1, w2, C)
    x = jnp.transpose(x, (0, 1, 4, 2, 5, 3, 6, 7))
    return x.reshape(B, D, H, W, C)


def reference_forward(x_in, y_in, params, window_size=(2, 2, 2)):
    b, c, d, h, w = x_in.shape
    n = d * h * w
    channel = window_size[0] * window_size[1] * window_size[2]

    def ln(t, g, bb):
        mu = jnp.mean(t, axis=-1, keepdims=True)
        var = jnp.mean((t - mu) ** 2, axis=-1, keepdims=True)
        return (t - mu) / jnp.sqrt(var + _EPS) * g + bb

    x = jnp.transpose(x_in, (0, 2, 3, 4, 1)).astype(jnp.float32)
    y = jnp.transpose(y_in, (0, 2, 3, 4, 1)).astype(jnp.float32)
    x = ln(x, params['gamma_x'], params['beta_x'])
    y = ln(y, params['gamma_y'], params['beta_y'])

    ws = tuple(min(sp, wsz) for sp, wsz in zip((d, h, w), window_size))
    pd = (ws[0] - d % ws[0]) % ws[0]
    ph = (ws[1] - h % ws[1]) % ws[1]
    pw = (ws[2] - w % ws[2]) % ws[2]
    pads = ((0, 0), (0, pd), (0, ph), (0, pw), (0, 0))
    x = jnp.pad(x, pads)
    y = jnp.pad(y, pads)
    dp, hp, wp = d + pd, h + ph, w + pw

    xw = _window_partition_ref(x, ws)
    yw = _window_partition_ref(y, ws)

    a_sq = jnp.sum(xw ** 2, axis=-1)[:, :, None]                 # (NW, p, 1)
    ab = jnp.einsum('bpc,bqc->bpq', xw, yw)                      # (NW, p, q)
    aff = (2 * ab - a_sq) / math.sqrt(c)
    aff = aff - jnp.max(aff, axis=1, keepdims=True)
    e = jnp.exp(aff)
    aff = e / jnp.sum(e, axis=1, keepdims=True)
    aff = jnp.transpose(aff, (0, 2, 1))                          # (NW, q, p)

    affR = _window_reverse_ref(aff, ws, (b, dp, hp, wp), channel)
    affR = affR[:, :d, :h, :w, :].reshape(b, n, channel)
    v = jnp.asarray(_grid_vals(window_size), jnp.float32)        # (channel, 3)
    out = jnp.einsum('bnp,pd->bnd', affR, v).reshape(b, d, h, w, 3)
    return jnp.transpose(out, (0, 4, 1, 2, 3))


if __name__ == "__main__":
    B, C, D, H, W = 2, 32, 4, 4, 4
    key = jax.random.PRNGKey(0)
    ks = jax.random.split(key, 8)
    params = {
        'gamma_x': 1.0 + 0.1 * jax.random.normal(ks[0], (C,), jnp.float32),
        'beta_x': 0.1 * jax.random.normal(ks[1], (C,), jnp.float32),
        'gamma_y': 1.0 + 0.1 * jax.random.normal(ks[2], (C,), jnp.float32),
        'beta_y': 0.1 * jax.random.normal(ks[3], (C,), jnp.float32),
    }

    # Case 1: window-aligned spatial dims (no padding, no mask DMA).
    x1 = jax.random.normal(ks[4], (B, C, D, H, W), jnp.float32)
    y1 = jax.random.normal(ks[5], (B, C, D, H, W), jnp.float32)
    out1 = jax.block_until_ready(sim_forward(x1, y1, params))
    assert out1.shape == (B, 3, D, H, W), out1.shape
    ref1 = jax.block_until_ready(reference_forward(x1, y1, params))
    err1 = float(jnp.max(jnp.abs(out1 - ref1)))
    assert err1 < 1e-3, f"unpadded case: max abs err {err1}"

    # Case 2: odd spatial dims exercise the padded/masked path.
    D2, H2, W2 = 3, 4, 5
    x2 = jax.random.normal(ks[6], (B, C, D2, H2, W2), jnp.float32)
    y2 = jax.random.normal(ks[7], (B, C, D2, H2, W2), jnp.float32)
    out2 = jax.block_until_ready(sim_forward(x2, y2, params))
    assert out2.shape == (B, 3, D2, H2, W2), out2.shape
    ref2 = jax.block_until_ready(reference_forward(x2, y2, params))
    err2 = float(jnp.max(jnp.abs(out2 - ref2)))
    assert err2 < 1e-3, f"padded case: max abs err {err2}"

    print("KERNEL_OK")
</pallas_src>

<mosaic_0001>
module attributes {stable_mosaic.version = 11 : i64} {
  func.func @kernel(%arg0: i32, %arg1: memref<32x8x128xf32, #tpu.memory_space<vmem>>, %arg2: memref<32x8x128xf32, #tpu.memory_space<vmem>>, %arg3: memref<4x32xf32, #tpu.memory_space<smem>>, %arg4: memref<3x8x128xf32, #tpu.memory_space<vmem>>) attributes {dimension_semantics = [#tpu.dimension_semantics<parallel>], iteration_bounds = array<i64: 1>, scalar_prefetch = 0 : i64, scratch_operands = 0 : i64, tpu.core_type = #tpu.core_type<tc>, window_params = [{transform_indices = @transform_0, window_bounds = array<i64: 32, 8, 128>}, {transform_indices = @transform_1, window_bounds = array<i64: 32, 8, 128>}, {transform_indices = @transform_2, window_bounds = array<i64: 4, 32>}, {transform_indices = @transform_3, window_bounds = array<i64: 3, 8, 128>}]} {
    %cst = arith.constant 0.000000e+00 : f32
    %0 = vector.broadcast %cst : f32 to vector<8x128xf32>
    %cst_0 = arith.constant 0.000000e+00 : f32
    %1 = vector.broadcast %cst_0 : f32 to vector<8x128xf32>
    %cst_1 = arith.constant 0.000000e+00 : f32
    %2 = vector.broadcast %cst_1 : f32 to vector<8x128xf32>
    %cst_2 = arith.constant 0.000000e+00 : f32
    %3 = vector.broadcast %cst_2 : f32 to vector<8x128xf32>
    %c0 = arith.constant 0 : index
    %c0_3 = arith.constant 0 : index
    %c0_4 = arith.constant 0 : index
    %4 = vector.load %arg1[%c0, %c0_3, %c0_4] : memref<32x8x128xf32, #tpu.memory_space<vmem>>, vector<1x8x128xf32>
    %5 = vector.shape_cast %4 : vector<1x8x128xf32> to vector<8x128xf32>
    %c0_5 = arith.constant 0 : index
    %c0_6 = arith.constant 0 : index
    %c0_7 = arith.constant 0 : index
    %6 = vector.load %arg2[%c0_5, %c0_6, %c0_7] : memref<32x8x128xf32, #tpu.memory_space<vmem>>, vector<1x8x128xf32>
    %7 = vector.shape_cast %6 : vector<1x8x128xf32> to vector<8x128xf32>
    %8 = arith.addf %0, %5 : vector<8x128xf32>
    %9 = arith.mulf %5, %5 : vector<8x128xf32>
    %10 = arith.addf %1, %9 : vector<8x128xf32>
    %11 = arith.addf %2, %7 : vector<8x128xf32>
    %12 = arith.mulf %7, %7 : vector<8x128xf32>
    %13 = arith.addf %3, %12 : vector<8x128xf32>
    %c1 = arith.constant 1 : index
    %c0_8 = arith.constant 0 : index
    %c0_9 = arith.constant 0 : index
    %14 = vector.load %arg1[%c1, %c0_8, %c0_9] : memref<32x8x128xf32, #tpu.memory_space<vmem>>, vector<1x8x128xf32>
    %15 = vector.shape_cast %14 : vector<1x8x128xf32> to vector<8x128xf32>
    %c1_10 = arith.constant 1 : index
    %c0_11 = arith.constant 0 : index
    %c0_12 = arith.constant 0 : index
    %16 = vector.load %arg2[%c1_10, %c0_11, %c0_12] : memref<32x8x128xf32, #tpu.memory_space<vmem>>, vector<1x8x128xf32>
    %17 = vector.shape_cast %16 : vector<1x8x128xf32> to vector<8x128xf32>
    %18 = arith.addf %8, %15 : vector<8x128xf32>
    %19 = arith.mulf %15, %15 : vector<8x128xf32>
    %20 = arith.addf %10, %19 : vector<8x128xf32>
    %21 = arith.addf %11, %17 : vector<8x128xf32>
    %22 = arith.mulf %17, %17 : vector<8x128xf32>
    %23 = arith.addf %13, %22 : vector<8x128xf32>
    %c2 = arith.constant 2 : index
    %c0_13 = arith.constant 0 : index
    %c0_14 = arith.constant 0 : index
    %24 = vector.load %arg1[%c2, %c0_13, %c0_14] : memref<32x8x128xf32, #tpu.memory_space<vmem>>, vector<1x8x128xf32>
    %25 = vector.shape_cast %24 : vector<1x8x128xf32> to vector<8x128xf32>
    %c2_15 = arith.constant 2 : index
    %c0_16 = arith.constant 0 : index
    %c0_17 = arith.constant 0 : index
    %26 = vector.load %arg2[%c2_15, %c0_16, %c0_17] : memref<32x8x128xf32, #tpu.memory_space<vmem>>, vector<1x8x128xf32>
    %27 = vector.shape_cast %26 : vector<1x8x128xf32> to vector<8x128xf32>
    %28 = arith.addf %18, %25 : vector<8x128xf32>
    %29 = arith.mulf %25, %25 : vector<8x128xf32>
    %30 = arith.addf %20, %29 : vector<8x128xf32>
    %31 = arith.addf %21, %27 : vector<8x128xf32>
    %32 = arith.mulf %27, %27 : vector<8x128xf32>
    %33 = arith.addf %23, %32 : vector<8x128xf32>
    %c3 = arith.constant 3 : index
    %c0_18 = arith.constant 0 : index
    %c0_19 = arith.constant 0 : index
    %34 = vector.load %arg1[%c3, %c0_18, %c0_19] : memref<32x8x128xf32, #tpu.memory_space<vmem>>, vector<1x8x128xf32>
    %35 = vector.shape_cast %34 : vector<1x8x128xf32> to vector<8x128xf32>
    %c3_20 = arith.constant 3 : index
    %c0_21 = arith.constant 0 : index
    %c0_22 = arith.constant 0 : index
    %36 = vector.load %arg2[%c3_20, %c0_21, %c0_22] : memref<32x8x128xf32, #tpu.memory_space<vmem>>, vector<1x8x128xf32>
    %37 = vector.shape_cast %36 : vector<1x8x128xf32> to vector<8x128xf32>
    %38 = arith.addf %28, %35 : vector<8x128xf32>
    %39 = arith.mulf %35, %35 : vector<8x128xf32>
    %40 = arith.addf %30, %39 : vector<8x128xf32>
    %41 = arith.addf %31, %37 : vector<8x128xf32>
    %42 = arith.mulf %37, %37 : vector<8x128xf32>
    %43 = arith.addf %33, %42 : vector<8x128xf32>
    %c4 = arith.constant 4 : index
    %c0_23 = arith.constant 0 : index
    %c0_24 = arith.constant 0 : index
    %44 = vector.load %arg1[%c4, %c0_23, %c0_24] : memref<32x8x128xf32, #tpu.memory_space<vmem>>, vector<1x8x128xf32>
    %45 = vector.shape_cast %44 : vector<1x8x128xf32> to vector<8x128xf32>
    %c4_25 = arith.constant 4 : index
    %c0_26 = arith.constant 0 : index
    %c0_27 = arith.constant 0 : index
    %46 = vector.load %arg2[%c4_25, %c0_26, %c0_27] : memref<32x8x128xf32, #tpu.memory_space<vmem>>, vector<1x8x128xf32>
    %47 = vector.shape_cast %46 : vector<1x8x128xf32> to vector<8x128xf32>
    %48 = arith.addf %38, %45 : vector<8x128xf32>
    %49 = arith.mulf %45, %45 : vector<8x128xf32>
    %50 = arith.addf %40, %49 : vector<8x128xf32>
    %51 = arith.addf %41, %47 : vector<8x128xf32>
    %52 = arith.mulf %47, %47 : vector<8x128xf32>
    %53 = arith.addf %43, %52 : vector<8x128xf32>
    %c5 = arith.constant 5 : index
    %c0_28 = arith.constant 0 : index
    %c0_29 = arith.constant 0 : index
    %54 = vector.load %arg1[%c5, %c0_28, %c0_29] : memref<32x8x128xf32, #tpu.memory_space<vmem>>, vector<1x8x128xf32>
    %55 = vector.shape_cast %54 : vector<1x8x128xf32> to vector<8x128xf32>
    %c5_30 = arith.constant 5 : index
    %c0_31 = arith.constant 0 : index
    %c0_32 = arith.constant 0 : index
    %56 = vector.load %arg2[%c5_30, %c0_31, %c0_32] : memref<32x8x128xf32, #tpu.memory_space<vmem>>, vector<1x8x128xf32>
    %57 = vector.shape_cast %56 : vector<1x8x128xf32> to vector<8x128xf32>
    %58 = arith.addf %48, %55 : vector<8x128xf32>
    %59 = arith.mulf %55, %55 : vector<8x128xf32>
    %60 = arith.addf %50, %59 : vector<8x128xf32>
    %61 = arith.addf %51, %57 : vector<8x128xf32>
    %62 = arith.mulf %57, %57 : vector<8x128xf32>
    %63 = arith.addf %53, %62 : vector<8x128xf32>
    %c6 = arith.constant 6 : index
    %c0_33 = arith.constant 0 : index
    %c0_34 = arith.constant 0 : index
    %64 = vector.load %arg1[%c6, %c0_33, %c0_34] : memref<32x8x128xf32, #tpu.memory_space<vmem>>, vector<1x8x128xf32>
    %65 = vector.shape_cast %64 : vector<1x8x128xf32> to vector<8x128xf32>
    %c6_35 = arith.constant 6 : index
    %c0_36 = arith.constant 0 : index
    %c0_37 = arith.constant 0 : index
    %66 = vector.load %arg2[%c6_35, %c0_36, %c0_37] : memref<32x8x128xf32, #tpu.memory_space<vmem>>, vector<1x8x128xf32>
    %67 = vector.shape_cast %66 : vector<1x8x128xf32> to vector<8x128xf32>
    %68 = arith.addf %58, %65 : vector<8x128xf32>
    %69 = arith.mulf %65, %65 : vector<8x128xf32>
    %70 = arith.addf %60, %69 : vector<8x128xf32>
    %71 = arith.addf %61, %67 : vector<8x128xf32>
    %72 = arith.mulf %67, %67 : vector<8x128xf32>
    %73 = arith.addf %63, %72 : vector<8x128xf32>
    %c7 = arith.constant 7 : index
    %c0_38 = arith.constant 0 : index
    %c0_39 = arith.constant 0 : index
    %74 = vector.load %arg1[%c7, %c0_38, %c0_39] : memref<32x8x128xf32, #tpu.memory_space<vmem>>, vector<1x8x128xf32>
    %75 = vector.shape_cast %74 : vector<1x8x128xf32> to vector<8x128xf32>
    %c7_40 = arith.constant 7 : index
    %c0_41 = arith.constant 0 : index
    %c0_42 = arith.constant 0 : index
    %76 = vector.load %arg2[%c7_40, %c0_41, %c0_42] : memref<32x8x128xf32, #tpu.memory_space<vmem>>, vector<1x8x128xf32>
    %77 = vector.shape_cast %76 : vector<1x8x128xf32> to vector<8x128xf32>
    %78 = arith.addf %68, %75 : vector<8x128xf32>
    %79 = arith.mulf %75, %75 : vector<8x128xf32>
    %80 = arith.addf %70, %79 : vector<8x128xf32>
    %81 = arith.addf %71, %77 : vector<8x128xf32>
    %82 = arith.mulf %77, %77 : vector<8x128xf32>
    %83 = arith.addf %73, %82 : vector<8x128xf32>
    %c8 = arith.constant 8 : index
    %c0_43 = arith.constant 0 : index
    %c0_44 = arith.constant 0 : index
    %84 = vector.load %arg1[%c8, %c0_43, %c0_44] : memref<32x8x128xf32, #tpu.memory_space<vmem>>, vector<1x8x128xf32>
    %85 = vector.shape_cast %84 : vector<1x8x128xf32> to vector<8x128xf32>
    %c8_45 = arith.constant 8 : index
    %c0_46 = arith.constant 0 : index
    %c0_47 = arith.constant 0 : index
    %86 = vector.load %arg2[%c8_45, %c0_46, %c0_47] : memref<32x8x128xf32, #tpu.memory_space<vmem>>, vector<1x8x128xf32>
    %87 = vector.shape_cast %86 : vector<1x8x128xf32> to vector<8x128xf32>
    %88 = arith.addf %78, %85 : vector<8x128xf32>
    %89 = arith.mulf %85, %85 : vector<8x128xf32>
    %90 = arith.addf %80, %89 : vector<8x128xf32>
    %91 = arith.addf %81, %87 : vector<8x128xf32>
    %92 = arith.mulf %87, %87 : vector<8x128xf32>
    %93 = arith.addf %83, %92 : vector<8x128xf32>
    %c9 = arith.constant 9 : index
    %c0_48 = arith.constant 0 : index
    %c0_49 = arith.constant 0 : index
    %94 = vector.load %arg1[%c9, %c0_48, %c0_49] : memref<32x8x128xf32, #tpu.memory_space<vmem>>, vector<1x8x128xf32>
    %95 = vector.shape_cast %94 : vector<1x8x128xf32> to vector<8x128xf32>
    %c9_50 = arith.constant 9 : index
    %c0_51 = arith.constant 0 : index
    %c0_52 = arith.constant 0 : index
    %96 = vector.load %arg2[%c9_50, %c0_51, %c0_52] : memref<32x8x128xf32, #tpu.memory_space<vmem>>, vector<1x8x128xf32>
    %97 = vector.shape_cast %96 : vector<1x8x128xf32> to vector<8x128xf32>
    %98 = arith.addf %88, %95 : vector<8x128xf32>
    %99 = arith.mulf %95, %95 : vector<8x128xf32>
    %100 = arith.addf %90, %99 : vector<8x128xf32>
    %101 = arith.addf %91, %97 : vector<8x128xf32>
    %102 = arith.mulf %97, %97 : vector<8x128xf32>
    %103 = arith.addf %93, %102 : vector<8x128xf32>
    %c10 = arith.constant 10 : index
    %c0_53 = arith.constant 0 : index
    %c0_54 = arith.constant 0 : index
    %104 = vector.load %arg1[%c10, %c0_53, %c0_54] : memref<32x8x128xf32, #tpu.memory_space<vmem>>, vector<1x8x128xf32>
    %105 = vector.shape_cast %104 : vector<1x8x128xf32> to vector<8x128xf32>
    %c10_55 = arith.constant 10 : index
    %c0_56 = arith.constant 0 : index
    %c0_57 = arith.constant 0 : index
    %106 = vector.load %arg2[%c10_55, %c0_56, %c0_57] : memref<32x8x128xf32, #tpu.memory_space<vmem>>, vector<1x8x128xf32>
    %107 = vector.shape_cast %106 : vector<1x8x128xf32> to vector<8x128xf32>
    %108 = arith.addf %98, %105 : vector<8x128xf32>
    %109 = arith.mulf %105, %105 : vector<8x128xf32>
    %110 = arith.addf %100, %109 : vector<8x128xf32>
    %111 = arith.addf %101, %107 : vector<8x128xf32>
    %112 = arith.mulf %107, %107 : vector<8x128xf32>
    %113 = arith.addf %103, %112 : vector<8x128xf32>
    %c11 = arith.constant 11 : index
    %c0_58 = arith.constant 0 : index
    %c0_59 = arith.constant 0 : index
    %114 = vector.load %arg1[%c11, %c0_58, %c0_59] : memref<32x8x128xf32, #tpu.memory_space<vmem>>, vector<1x8x128xf32>
    %115 = vector.shape_cast %114 : vector<1x8x128xf32> to vector<8x128xf32>
    %c11_60 = arith.constant 11 : index
    %c0_61 = arith.constant 0 : index
    %c0_62 = arith.constant 0 : index
    %116 = vector.load %arg2[%c11_60, %c0_61, %c0_62] : memref<32x8x128xf32, #tpu.memory_space<vmem>>, vector<1x8x128xf32>
    %117 = vector.shape_cast %116 : vector<1x8x128xf32> to vector<8x128xf32>
    %118 = arith.addf %108, %115 : vector<8x128xf32>
    %119 = arith.mulf %115, %115 : vector<8x128xf32>
    %120 = arith.addf %110, %119 : vector<8x128xf32>
    %121 = arith.addf %111, %117 : vector<8x128xf32>
    %122 = arith.mulf %117, %117 : vector<8x128xf32>
    %123 = arith.addf %113, %122 : vector<8x128xf32>
    %c12 = arith.constant 12 : index
    %c0_63 = arith.constant 0 : index
    %c0_64 = arith.constant 0 : index
    %124 = vector.load %arg1[%c12, %c0_63, %c0_64] : memref<32x8x128xf32, #tpu.memory_space<vmem>>, vector<1x8x128xf32>
    %125 = vector.shape_cast %124 : vector<1x8x128xf32> to vector<8x128xf32>
    %c12_65 = arith.constant 12 : index
    %c0_66 = arith.constant 0 : index
    %c0_67 = arith.constant 0 : index
    %126 = vector.load %arg2[%c12_65, %c0_66, %c0_67] : memref<32x8x128xf32, #tpu.memory_space<vmem>>, vector<1x8x128xf32>
    %127 = vector.shape_cast %126 : vector<1x8x128xf32> to vector<8x128xf32>
    %128 = arith.addf %118, %125 : vector<8x128xf32>
    %129 = arith.mulf %125, %125 : vector<8x128xf32>
    %130 = arith.addf %120, %129 : vector<8x128xf32>
    %131 = arith.addf %121, %127 : vector<8x128xf32>
    %132 = arith.mulf %127, %127 : vector<8x128xf32>
    %133 = arith.addf %123, %132 : vector<8x128xf32>
    %c13 = arith.constant 13 : index
    %c0_68 = arith.constant 0 : index
    %c0_69 = arith.constant 0 : index
    %134 = vector.load %arg1[%c13, %c0_68, %c0_69] : memref<32x8x128xf32, #tpu.memory_space<vmem>>, vector<1x8x128xf32>
    %135 = vector.shape_cast %134 : vector<1x8x128xf32> to vector<8x128xf32>
    %c13_70 = arith.constant 13 : index
    %c0_71 = arith.constant 0 : index
    %c0_72 = arith.constant 0 : index
    %136 = vector.load %arg2[%c13_70, %c0_71, %c0_72] : memref<32x8x128xf32, #tpu.memory_space<vmem>>, vector<1x8x128xf32>
    %137 = vector.shape_cast %136 : vector<1x8x128xf32> to vector<8x128xf32>
    %138 = arith.addf %128, %135 : vector<8x128xf32>
    %139 = arith.mulf %135, %135 : vector<8x128xf32>
    %140 = arith.addf %130, %139 : vector<8x128xf32>
    %141 = arith.addf %131, %137 : vector<8x128xf32>
    %142 = arith.mulf %137, %137 : vector<8x128xf32>
    %143 = arith.addf %133, %142 : vector<8x128xf32>
    %c14 = arith.constant 14 : index
    %c0_73 = arith.constant 0 : index
    %c0_74 = arith.constant 0 : index
    %144 = vector.load %arg1[%c14, %c0_73, %c0_74] : memref<32x8x128xf32, #tpu.memory_space<vmem>>, vector<1x8x128xf32>
    %145 = vector.shape_cast %144 : vector<1x8x128xf32> to vector<8x128xf32>
    %c14_75 = arith.constant 14 : index
    %c0_76 = arith.constant 0 : index
    %c0_77 = arith.constant 0 : index
    %146 = vector.load %arg2[%c14_75, %c0_76, %c0_77] : memref<32x8x128xf32, #tpu.memory_space<vmem>>, vector<1x8x128xf32>
    %147 = vector.shape_cast %146 : vector<1x8x128xf32> to vector<8x128xf32>
    %148 = arith.addf %138, %145 : vector<8x128xf32>
    %149 = arith.mulf %145, %145 : vector<8x128xf32>
    %150 = arith.addf %140, %149 : vector<8x128xf32>
    %151 = arith.addf %141, %147 : vector<8x128xf32>
    %152 = arith.mulf %147, %147 : vector<8x128xf32>
    %153 = arith.addf %143, %152 : vector<8x128xf32>
    %c15 = arith.constant 15 : index
    %c0_78 = arith.constant 0 : index
    %c0_79 = arith.constant 0 : index
    %154 = vector.load %arg1[%c15, %c0_78, %c0_79] : memref<32x8x128xf32, #tpu.memory_space<vmem>>, vector<1x8x128xf32>
    %155 = vector.shape_cast %154 : vector<1x8x128xf32> to vector<8x128xf32>
    %c15_80 = arith.constant 15 : index
    %c0_81 = arith.constant 0 : index
    %c0_82 = arith.constant 0 : index
    %156 = vector.load %arg2[%c15_80, %c0_81, %c0_82] : memref<32x8x128xf32, #tpu.memory_space<vmem>>, vector<1x8x128xf32>
    %157 = vector.shape_cast %156 : vector<1x8x128xf32> to vector<8x128xf32>
    %158 = arith.addf %148, %155 : vector<8x128xf32>
    %159 = arith.mulf %155, %155 : vector<8x128xf32>
    %160 = arith.addf %150, %159 : vector<8x128xf32>
    %161 = arith.addf %151, %157 : vector<8x128xf32>
    %162 = arith.mulf %157, %157 : vector<8x128xf32>
    %163 = arith.addf %153, %162 : vector<8x128xf32>
    %c16 = arith.constant 16 : index
    %c0_83 = arith.constant 0 : index
    %c0_84 = arith.constant 0 : index
    %164 = vector.load %arg1[%c16, %c0_83, %c0_84] : memref<32x8x128xf32, #tpu.memory_space<vmem>>, vector<1x8x128xf32>
    %165 = vector.shape_cast %164 : vector<1x8x128xf32> to vector<8x128xf32>
    %c16_85 = arith.constant 16 : index
    %c0_86 = arith.constant 0 : index
    %c0_87 = arith.constant 0 : index
    %166 = vector.load %arg2[%c16_85, %c0_86, %c0_87] : memref<32x8x128xf32, #tpu.memory_space<vmem>>, vector<1x8x128xf32>
    %167 = vector.shape_cast %166 : vector<1x8x128xf32> to vector<8x128xf32>
    %168 = arith.addf %158, %165 : vector<8x128xf32>
    %169 = arith.mulf %165, %165 : vector<8x128xf32>
    %170 = arith.addf %160, %169 : vector<8x128xf32>
    %171 = arith.addf %161, %167 : vector<8x128xf32>
    %172 = arith.mulf %167, %167 : vector<8x128xf32>
    %173 = arith.addf %163, %172 : vector<8x128xf32>
    %c17 = arith.constant 17 : index
    %c0_88 = arith.constant 0 : index
    %c0_89 = arith.constant 0 : index
    %174 = vector.load %arg1[%c17, %c0_88, %c0_89] : memref<32x8x128xf32, #tpu.memory_space<vmem>>, vector<1x8x128xf32>
    %175 = vector.shape_cast %174 : vector<1x8x128xf32> to vector<8x128xf32>
    %c17_90 = arith.constant 17 : index
    %c0_91 = arith.constant 0 : index
    %c0_92 = arith.constant 0 : index
    %176 = vector.load %arg2[%c17_90, %c0_91, %c0_92] : memref<32x8x128xf32, #tpu.memory_space<vmem>>, vector<1x8x128xf32>
    %177 = vector.shape_cast %176 : vector<1x8x128xf32> to vector<8x128xf32>
    %178 = arith.addf %168, %175 : vector<8x128xf32>
    %179 = arith.mulf %175, %175 : vector<8x128xf32>
    %180 = arith.addf %170, %179 : vector<8x128xf32>
    %181 = arith.addf %171, %177 : vector<8x128xf32>
    %182 = arith.mulf %177, %177 : vector<8x128xf32>
    %183 = arith.addf %173, %182 : vector<8x128xf32>
    %c18 = arith.constant 18 : index
    %c0_93 = arith.constant 0 : index
    %c0_94 = arith.constant 0 : index
    %184 = vector.load %arg1[%c18, %c0_93, %c0_94] : memref<32x8x128xf32, #tpu.memory_space<vmem>>, vector<1x8x128xf32>
    %185 = vector.shape_cast %184 : vector<1x8x128xf32> to vector<8x128xf32>
    %c18_95 = arith.constant 18 : index
    %c0_96 = arith.constant 0 : index
    %c0_97 = arith.constant 0 : index
    %186 = vector.load %arg2[%c18_95, %c0_96, %c0_97] : memref<32x8x128xf32, #tpu.memory_space<vmem>>, vector<1x8x128xf32>
    %187 = vector.shape_cast %186 : vector<1x8x128xf32> to vector<8x128xf32>
    %188 = arith.addf %178, %185 : vector<8x128xf32>
    %189 = arith.mulf %185, %185 : vector<8x128xf32>
    %190 = arith.addf %180, %189 : vector<8x128xf32>
    %191 = arith.addf %181, %187 : vector<8x128xf32>
    %192 = arith.mulf %187, %187 : vector<8x128xf32>
    %193 = arith.addf %183, %192 : vector<8x128xf32>
    %c19 = arith.constant 19 : index
    %c0_98 = arith.constant 0 : index
    %c0_99 = arith.constant 0 : index
    %194 = vector.load %arg1[%c19, %c0_98, %c0_99] : memref<32x8x128xf32, #tpu.memory_space<vmem>>, vector<1x8x128xf32>
    %195 = vector.shape_cast %194 : vector<1x8x128xf32> to vector<8x128xf32>
    %c19_100 = arith.constant 19 : index
    %c0_101 = arith.constant 0 : index
    %c0_102 = arith.constant 0 : index
    %196 = vector.load %arg2[%c19_100, %c0_101, %c0_102] : memref<32x8x128xf32, #tpu.memory_space<vmem>>, vector<1x8x128xf32>
    %197 = vector.shape_cast %196 : vector<1x8x128xf32> to vector<8x128xf32>
    %198 = arith.addf %188, %195 : vector<8x128xf32>
    %199 = arith.mulf %195, %195 : vector<8x128xf32>
    %200 = arith.addf %190, %199 : vector<8x128xf32>
    %201 = arith.addf %191, %197 : vector<8x128xf32>
    %202 = arith.mulf %197, %197 : vector<8x128xf32>
    %203 = arith.addf %193, %202 : vector<8x128xf32>
    %c20 = arith.constant 20 : index
    %c0_103 = arith.constant 0 : index
    %c0_104 = arith.constant 0 : index
    %204 = vector.load %arg1[%c20, %c0_103, %c0_104] : memref<32x8x128xf32, #tpu.memory_space<vmem>>, vector<1x8x128xf32>
    %205 = vector.shape_cast %204 : vector<1x8x128xf32> to vector<8x128xf32>
    %c20_105 = arith.constant 20 : index
    %c0_106 = arith.constant 0 : index
    %c0_107 = arith.constant 0 : index
    %206 = vector.load %arg2[%c20_105, %c0_106, %c0_107] : memref<32x8x128xf32, #tpu.memory_space<vmem>>, vector<1x8x128xf32>
    %207 = vector.shape_cast %206 : vector<1x8x128xf32> to vector<8x128xf32>
    %208 = arith.addf %198, %205 : vector<8x128xf32>
    %209 = arith.mulf %205, %205 : vector<8x128xf32>
    %210 = arith.addf %200, %209 : vector<8x128xf32>
    %211 = arith.addf %201, %207 : vector<8x128xf32>
    %212 = arith.mulf %207, %207 : vector<8x128xf32>
    %213 = arith.addf %203, %212 : vector<8x128xf32>
    %c21 = arith.constant 21 : index
    %c0_108 = arith.constant 0 : index
    %c0_109 = arith.constant 0 : index
    %214 = vector.load %arg1[%c21, %c0_108, %c0_109] : memref<32x8x128xf32, #tpu.memory_space<vmem>>, vector<1x8x128xf32>
    %215 = vector.shape_cast %214 : vector<1x8x128xf32> to vector<8x128xf32>
    %c21_110 = arith.constant 21 : index
    %c0_111 = arith.constant 0 : index
    %c0_112 = arith.constant 0 : index
    %216 = vector.load %arg2[%c21_110, %c0_111, %c0_112] : memref<32x8x128xf32, #tpu.memory_space<vmem>>, vector<1x8x128xf32>
    %217 = vector.shape_cast %216 : vector<1x8x128xf32> to vector<8x128xf32>
    %218 = arith.addf %208, %215 : vector<8x128xf32>
    %219 = arith.mulf %215, %215 : vector<8x128xf32>
    %220 = arith.addf %210, %219 : vector<8x128xf32>
    %221 = arith.addf %211, %217 : vector<8x128xf32>
    %222 = arith.mulf %217, %217 : vector<8x128xf32>
    %223 = arith.addf %213, %222 : vector<8x128xf32>
    %c22 = arith.constant 22 : index
    %c0_113 = arith.constant 0 : index
    %c0_114 = arith.constant 0 : index
    %224 = vector.load %arg1[%c22, %c0_113, %c0_114] : memref<32x8x128xf32, #tpu.memory_space<vmem>>, vector<1x8x128xf32>
    %225 = vector.shape_cast %224 : vector<1x8x128xf32> to vector<8x128xf32>
    %c22_115 = arith.constant 22 : index
    %c0_116 = arith.constant 0 : index
    %c0_117 = arith.constant 0 : index
    %226 = vector.load %arg2[%c22_115, %c0_116, %c0_117] : memref<32x8x128xf32, #tpu.memory_space<vmem>>, vector<1x8x128xf32>
    %227 = vector.shape_cast %226 : vector<1x8x128xf32> to vector<8x128xf32>
    %228 = arith.addf %218, %225 : vector<8x128xf32>
    %229 = arith.mulf %225, %225 : vector<8x128xf32>
    %230 = arith.addf %220, %229 : vector<8x128xf32>
    %231 = arith.addf %221, %227 : vector<8x128xf32>
    %232 = arith.mulf %227, %227 : vector<8x128xf32>
    %233 = arith.addf %223, %232 : vector<8x128xf32>
    %c23 = arith.constant 23 : index
    %c0_118 = arith.constant 0 : index
    %c0_119 = arith.constant 0 : index
    %234 = vector.load %arg1[%c23, %c0_118, %c0_119] : memref<32x8x128xf32, #tpu.memory_space<vmem>>, vector<1x8x128xf32>
    %235 = vector.shape_cast %234 : vector<1x8x128xf32> to vector<8x128xf32>
    %c23_120 = arith.constant 23 : index
    %c0_121 = arith.constant 0 : index
    %c0_122 = arith.constant 0 : index
    %236 = vector.load %arg2[%c23_120, %c0_121, %c0_122] : memref<32x8x128xf32, #tpu.memory_space<vmem>>, vector<1x8x128xf32>
    %237 = vector.shape_cast %236 : vector<1x8x128xf32> to vector<8x128xf32>
    %238 = arith.addf %228, %235 : vector<8x128xf32>
    %239 = arith.mulf %235, %235 : vector<8x128xf32>
    %240 = arith.addf %230, %239 : vector<8x128xf32>
    %241 = arith.addf %231, %237 : vector<8x128xf32>
    %242 = arith.mulf %237, %237 : vector<8x128xf32>
    %243 = arith.addf %233, %242 : vector<8x128xf32>
    %c24 = arith.constant 24 : index
    %c0_123 = arith.constant 0 : index
    %c0_124 = arith.constant 0 : index
    %244 = vector.load %arg1[%c24, %c0_123, %c0_124] : memref<32x8x128xf32, #tpu.memory_space<vmem>>, vector<1x8x128xf32>
    %245 = vector.shape_cast %244 : vector<1x8x128xf32> to vector<8x128xf32>
    %c24_125 = arith.constant 24 : index
    %c0_126 = arith.constant 0 : index
    %c0_127 = arith.constant 0 : index
    %246 = vector.load %arg2[%c24_125, %c0_126, %c0_127] : memref<32x8x128xf32, #tpu.memory_space<vmem>>, vector<1x8x128xf32>
    %247 = vector.shape_cast %246 : vector<1x8x128xf32> to vector<8x128xf32>
    %248 = arith.addf %238, %245 : vector<8x128xf32>
    %249 = arith.mulf %245, %245 : vector<8x128xf32>
    %250 = arith.addf %240, %249 : vector<8x128xf32>
    %251 = arith.addf %241, %247 : vector<8x128xf32>
    %252 = arith.mulf %247, %247 : vector<8x128xf32>
    %253 = arith.addf %243, %252 : vector<8x128xf32>
    %c25 = arith.constant 25 : index
    %c0_128 = arith.constant 0 : index
    %c0_129 = arith.constant 0 : index
    %254 = vector.load %arg1[%c25, %c0_128, %c0_129] : memref<32x8x128xf32, #tpu.memory_space<vmem>>, vector<1x8x128xf32>
    %255 = vector.shape_cast %254 : vector<1x8x128xf32> to vector<8x128xf32>
    %c25_130 = arith.constant 25 : index
    %c0_131 = arith.constant 0 : index
    %c0_132 = arith.constant 0 : index
    %256 = vector.load %arg2[%c25_130, %c0_131, %c0_132] : memref<32x8x128xf32, #tpu.memory_space<vmem>>, vector<1x8x128xf32>
    %257 = vector.shape_cast %256 : vector<1x8x128xf32> to vector<8x128xf32>
    %258 = arith.addf %248, %255 : vector<8x128xf32>
    %259 = arith.mulf %255, %255 : vector<8x128xf32>
    %260 = arith.addf %250, %259 : vector<8x128xf32>
    %261 = arith.addf %251, %257 : vector<8x128xf32>
    %262 = arith.mulf %257, %257 : vector<8x128xf32>
    %263 = arith.addf %253, %262 : vector<8x128xf32>
    %c26 = arith.constant 26 : index
    %c0_133 = arith.constant 0 : index
    %c0_134 = arith.constant 0 : index
    %264 = vector.load %arg1[%c26, %c0_133, %c0_134] : memref<32x8x128xf32, #tpu.memory_space<vmem>>, vector<1x8x128xf32>
    %265 = vector.shape_cast %264 : vector<1x8x128xf32> to vector<8x128xf32>
    %c26_135 = arith.constant 26 : index
    %c0_136 = arith.constant 0 : index
    %c0_137 = arith.constant 0 : index
    %266 = vector.load %arg2[%c26_135, %c0_136, %c0_137] : memref<32x8x128xf32, #tpu.memory_space<vmem>>, vector<1x8x128xf32>
    %267 = vector.shape_cast %266 : vector<1x8x128xf32> to vector<8x128xf32>
    %268 = arith.addf %258, %265 : vector<8x128xf32>
    %269 = arith.mulf %265, %265 : vector<8x128xf32>
    %270 = arith.addf %260, %269 : vector<8x128xf32>
    %271 = arith.addf %261, %267 : vector<8x128xf32>
    %272 = arith.mulf %267, %267 : vector<8x128xf32>
    %273 = arith.addf %263, %272 : vector<8x128xf32>
    %c27 = arith.constant 27 : index
    %c0_138 = arith.constant 0 : index
    %c0_139 = arith.constant 0 : index
    %274 = vector.load %arg1[%c27, %c0_138, %c0_139] : memref<32x8x128xf32, #tpu.memory_space<vmem>>, vector<1x8x128xf32>
    %275 = vector.shape_cast %274 : vector<1x8x128xf32> to vector<8x128xf32>
    %c27_140 = arith.constant 27 : index
    %c0_141 = arith.constant 0 : index
    %c0_142 = arith.constant 0 : index
    %276 = vector.load %arg2[%c27_140, %c0_141, %c0_142] : memref<32x8x128xf32, #tpu.memory_space<vmem>>, vector<1x8x128xf32>
    %277 = vector.shape_cast %276 : vector<1x8x128xf32> to vector<8x128xf32>
    %278 = arith.addf %268, %275 : vector<8x128xf32>
    %279 = arith.mulf %275, %275 : vector<8x128xf32>
    %280 = arith.addf %270, %279 : vector<8x128xf32>
    %281 = arith.addf %271, %277 : vector<8x128xf32>
    %282 = arith.mulf %277, %277 : vector<8x128xf32>
    %283 = arith.addf %273, %282 : vector<8x128xf32>
    %c28 = arith.constant 28 : index
    %c0_143 = arith.constant 0 : index
    %c0_144 = arith.constant 0 : index
    %284 = vector.load %arg1[%c28, %c0_143, %c0_144] : memref<32x8x128xf32, #tpu.memory_space<vmem>>, vector<1x8x128xf32>
    %285 = vector.shape_cast %284 : vector<1x8x128xf32> to vector<8x128xf32>
    %c28_145 = arith.constant 28 : index
    %c0_146 = arith.constant 0 : index
    %c0_147 = arith.constant 0 : index
    %286 = vector.load %arg2[%c28_145, %c0_146, %c0_147] : memref<32x8x128xf32, #tpu.memory_space<vmem>>, vector<1x8x128xf32>
    %287 = vector.shape_cast %286 : vector<1x8x128xf32> to vector<8x128xf32>
    %288 = arith.addf %278, %285 : vector<8x128xf32>
    %289 = arith.mulf %285, %285 : vector<8x128xf32>
    %290 = arith.addf %280, %289 : vector<8x128xf32>
    %291 = arith.addf %281, %287 : vector<8x128xf32>
    %292 = arith.mulf %287, %287 : vector<8x128xf32>
    %293 = arith.addf %283, %292 : vector<8x128xf32>
    %c29 = arith.constant 29 : index
    %c0_148 = arith.constant 0 : index
    %c0_149 = arith.constant 0 : index
    %294 = vector.load %arg1[%c29, %c0_148, %c0_149] : memref<32x8x128xf32, #tpu.memory_space<vmem>>, vector<1x8x128xf32>
    %295 = vector.shape_cast %294 : vector<1x8x128xf32> to vector<8x128xf32>
    %c29_150 = arith.constant 29 : index
    %c0_151 = arith.constant 0 : index
    %c0_152 = arith.constant 0 : index
    %296 = vector.load %arg2[%c29_150, %c0_151, %c0_152] : memref<32x8x128xf32, #tpu.memory_space<vmem>>, vector<1x8x128xf32>
    %297 = vector.shape_cast %296 : vector<1x8x128xf32> to vector<8x128xf32>
    %298 = arith.addf %288, %295 : vector<8x128xf32>
    %299 = arith.mulf %295, %295 : vector<8x128xf32>
    %300 = arith.addf %290, %299 : vector<8x128xf32>
    %301 = arith.addf %291, %297 : vector<8x128xf32>
    %302 = arith.mulf %297, %297 : vector<8x128xf32>
    %303 = arith.addf %293, %302 : vector<8x128xf32>
    %c30 = arith.constant 30 : index
    %c0_153 = arith.constant 0 : index
    %c0_154 = arith.constant 0 : index
    %304 = vector.load %arg1[%c30, %c0_153, %c0_154] : memref<32x8x128xf32, #tpu.memory_space<vmem>>, vector<1x8x128xf32>
    %305 = vector.shape_cast %304 : vector<1x8x128xf32> to vector<8x128xf32>
    %c30_155 = arith.constant 30 : index
    %c0_156 = arith.constant 0 : index
    %c0_157 = arith.constant 0 : index
    %306 = vector.load %arg2[%c30_155, %c0_156, %c0_157] : memref<32x8x128xf32, #tpu.memory_space<vmem>>, vector<1x8x128xf32>
    %307 = vector.shape_cast %306 : vector<1x8x128xf32> to vector<8x128xf32>
    %308 = arith.addf %298, %305 : vector<8x128xf32>
    %309 = arith.mulf %305, %305 : vector<8x128xf32>
    %310 = arith.addf %300, %309 : vector<8x128xf32>
    %311 = arith.addf %301, %307 : vector<8x128xf32>
    %312 = arith.mulf %307, %307 : vector<8x128xf32>
    %313 = arith.addf %303, %312 : vector<8x128xf32>
    %c31 = arith.constant 31 : index
    %c0_158 = arith.constant 0 : index
    %c0_159 = arith.constant 0 : index
    %314 = vector.load %arg1[%c31, %c0_158, %c0_159] : memref<32x8x128xf32, #tpu.memory_space<vmem>>, vector<1x8x128xf32>
    %315 = vector.shape_cast %314 : vector<1x8x128xf32> to vector<8x128xf32>
    %c31_160 = arith.constant 31 : index
    %c0_161 = arith.constant 0 : index
    %c0_162 = arith.constant 0 : index
    %316 = vector.load %arg2[%c31_160, %c0_161, %c0_162] : memref<32x8x128xf32, #tpu.memory_space<vmem>>, vector<1x8x128xf32>
    %317 = vector.shape_cast %316 : vector<1x8x128xf32> to vector<8x128xf32>
    %318 = arith.addf %308, %315 : vector<8x128xf32>
    %319 = arith.mulf %315, %315 : vector<8x128xf32>
    %320 = arith.addf %310, %319 : vector<8x128xf32>
    %321 = arith.addf %311, %317 : vector<8x128xf32>
    %322 = arith.mulf %317, %317 : vector<8x128xf32>
    %323 = arith.addf %313, %322 : vector<8x128xf32>
    %cst_163 = arith.constant 3.125000e-02 : f32
    %324 = vector.broadcast %cst_163 : f32 to vector<8x128xf32>
    %325 = arith.mulf %318, %324 : vector<8x128xf32>
    %cst_164 = arith.constant 3.125000e-02 : f32
    %326 = vector.broadcast %cst_164 : f32 to vector<8x128xf32>
    %327 = arith.mulf %321, %326 : vector<8x128xf32>
    %cst_165 = arith.constant 3.125000e-02 : f32
    %328 = vector.broadcast %cst_165 : f32 to vector<8x128xf32>
    %329 = arith.mulf %320, %328 : vector<8x128xf32>
    %330 = arith.mulf %325, %325 : vector<8x128xf32>
    %331 = arith.subf %329, %330 : vector<8x128xf32>
    %cst_166 = arith.constant 0.000000e+00 : f32
    %332 = vector.broadcast %cst_166 : f32 to vector<8x128xf32>
    %333 = arith.maximumf %331, %332 : vector<8x128xf32>
    %cst_167 = arith.constant 3.125000e-02 : f32
    %334 = vector.broadcast %cst_167 : f32 to vector<8x128xf32>
    %335 = arith.mulf %323, %334 : vector<8x128xf32>
    %336 = arith.mulf %327, %327 : vector<8x128xf32>
    %337 = arith.subf %335, %336 : vector<8x128xf32>
    %cst_168 = arith.constant 0.000000e+00 : f32
    %338 = vector.broadcast %cst_168 : f32 to vector<8x128xf32>
    %339 = arith.maximumf %337, %338 : vector<8x128xf32>
    %cst_169 = arith.constant 9.99999974E-6 : f32
    %340 = vector.broadcast %cst_169 : f32 to vector<8x128xf32>
    %341 = arith.addf %333, %340 : vector<8x128xf32>
    %342 = math.rsqrt %341 : vector<8x128xf32>
    %cst_170 = arith.constant 9.99999974E-6 : f32
    %343 = vector.broadcast %cst_170 : f32 to vector<8x128xf32>
    %344 = arith.addf %339, %343 : vector<8x128xf32>
    %345 = math.rsqrt %344 : vector<8x128xf32>
    %cst_171 = arith.constant 0.000000e+00 : f32
    %346 = vector.broadcast %cst_171 : f32 to vector<8x128xf32>
    %cst_172 = arith.constant 0.000000e+00 : f32
    %347 = vector.broadcast %cst_172 : f32 to vector<8x128xf32>
    %cst_173 = arith.constant 0.000000e+00 : f32
    %348 = vector.broadcast %cst_173 : f32 to vector<8x128xf32>
    %cst_174 = arith.constant 0.000000e+00 : f32
    %349 = vector.broadcast %cst_174 : f32 to vector<8x128xf32>
    %cst_175 = arith.constant 0.000000e+00 : f32
    %350 = vector.broadcast %cst_175 : f32 to vector<8x128xf32>
    %cst_176 = arith.constant 0.000000e+00 : f32
    %351 = vector.broadcast %cst_176 : f32 to vector<8x128xf32>
    %cst_177 = arith.constant 0.000000e+00 : f32
    %352 = vector.broadcast %cst_177 : f32 to vector<8x128xf32>
    %cst_178 = arith.constant 0.000000e+00 : f32
    %353 = vector.broadcast %cst_178 : f32 to vector<8x128xf32>
    %cst_179 = arith.constant 0.000000e+00 : f32
    %354 = vector.broadcast %cst_179 : f32 to vector<8x128xf32>
    %c0_180 = arith.constant 0 : index
    %c0_181 = arith.constant 0 : index
    %355 = memref.load %arg3[%c0_180, %c0_181] : memref<4x32xf32, #tpu.memory_space<smem>>
    %c1_182 = arith.constant 1 : index
    %c0_183 = arith.constant 0 : index
    %356 = memref.load %arg3[%c1_182, %c0_183] : memref<4x32xf32, #tpu.memory_space<smem>>
    %c2_184 = arith.constant 2 : index
    %c0_185 = arith.constant 0 : index
    %357 = memref.load %arg3[%c2_184, %c0_185] : memref<4x32xf32, #tpu.memory_space<smem>>
    %c3_186 = arith.constant 3 : index
    %c0_187 = arith.constant 0 : index
    %358 = memref.load %arg3[%c3_186, %c0_187] : memref<4x32xf32, #tpu.memory_space<smem>>
    %c0_188 = arith.constant 0 : index
    %c0_189 = arith.constant 0 : index
    %c0_190 = arith.constant 0 : index
    %359 = vector.load %arg1[%c0_188, %c0_189, %c0_190] : memref<32x8x128xf32, #tpu.memory_space<vmem>>, vector<1x8x128xf32>
    %360 = vector.shape_cast %359 : vector<1x8x128xf32> to vector<8x128xf32>
    %361 = arith.subf %360, %325 : vector<8x128xf32>
    %362 = arith.mulf %361, %342 : vector<8x128xf32>
    %363 = vector.broadcast %355 : f32 to vector<8x128xf32>
    %364 = arith.mulf %362, %363 : vector<8x128xf32>
    %365 = vector.broadcast %356 : f32 to vector<8x128xf32>
    %366 = arith.addf %364, %365 : vector<8x128xf32>
    %c0_191 = arith.constant 0 : index
    %c0_192 = arith.constant 0 : index
    %c0_193 = arith.constant 0 : index
    %367 = vector.load %arg2[%c0_191, %c0_192, %c0_193] : memref<32x8x128xf32, #tpu.memory_space<vmem>>, vector<1x8x128xf32>
    %368 = vector.shape_cast %367 : vector<1x8x128xf32> to vector<8x128xf32>
    %369 = arith.subf %368, %327 : vector<8x128xf32>
    %370 = arith.mulf %369, %345 : vector<8x128xf32>
    %371 = vector.broadcast %357 : f32 to vector<8x128xf32>
    %372 = arith.mulf %370, %371 : vector<8x128xf32>
    %373 = vector.broadcast %358 : f32 to vector<8x128xf32>
    %374 = arith.addf %372, %373 : vector<8x128xf32>
    %375 = arith.mulf %366, %366 : vector<8x128xf32>
    %376 = arith.addf %346, %375 : vector<8x128xf32>
    %377 = vector.extract_strided_slice %366 {offsets = [0, 0], sizes = [1, 128], strides = [1, 1]} : vector<8x128xf32> to vector<1x128xf32>
    %378 = vector.broadcast %377 : vector<1x128xf32> to vector<8x128xf32>
    %379 = arith.mulf %374, %378 : vector<8x128xf32>
    %380 = arith.addf %347, %379 : vector<8x128xf32>
    %381 = vector.extract_strided_slice %366 {offsets = [1, 0], sizes = [1, 128], strides = [1, 1]} : vector<8x128xf32> to vector<1x128xf32>
    %382 = vector.broadcast %381 : vector<1x128xf32> to vector<8x128xf32>
    %383 = arith.mulf %374, %382 : vector<8x128xf32>
    %384 = arith.addf %348, %383 : vector<8x128xf32>
    %385 = vector.extract_strided_slice %366 {offsets = [2, 0], sizes = [1, 128], strides = [1, 1]} : vector<8x128xf32> to vector<1x128xf32>
    %386 = vector.broadcast %385 : vector<1x128xf32> to vector<8x128xf32>
    %387 = arith.mulf %374, %386 : vector<8x128xf32>
    %388 = arith.addf %349, %387 : vector<8x128xf32>
    %389 = vector.extract_strided_slice %366 {offsets = [3, 0], sizes = [1, 128], strides = [1, 1]} : vector<8x128xf32> to vector<1x128xf32>
    %390 = vector.broadcast %389 : vector<1x128xf32> to vector<8x128xf32>
    %391 = arith.mulf %374, %390 : vector<8x128xf32>
    %392 = arith.addf %350, %391 : vector<8x128xf32>
    %393 = vector.extract_strided_slice %366 {offsets = [4, 0], sizes = [1, 128], strides = [1, 1]} : vector<8x128xf32> to vector<1x128xf32>
    %394 = vector.broadcast %393 : vector<1x128xf32> to vector<8x128xf32>
    %395 = arith.mulf %374, %394 : vector<8x128xf32>
    %396 = arith.addf %351, %395 : vector<8x128xf32>
    %397 = vector.extract_strided_slice %366 {offsets = [5, 0], sizes = [1, 128], strides = [1, 1]} : vector<8x128xf32> to vector<1x128xf32>
    %398 = vector.broadcast %397 : vector<1x128xf32> to vector<8x128xf32>
    %399 = arith.mulf %374, %398 : vector<8x128xf32>
    %400 = arith.addf %352, %399 : vector<8x128xf32>
    %401 = vector.extract_strided_slice %366 {offsets = [6, 0], sizes = [1, 128], strides = [1, 1]} : vector<8x128xf32> to vector<1x128xf32>
    %402 = vector.broadcast %401 : vector<1x128xf32> to vector<8x128xf32>
    %403 = arith.mulf %374, %402 : vector<8x128xf32>
    %404 = arith.addf %353, %403 : vector<8x128xf32>
    %405 = vector.extract_strided_slice %366 {offsets = [7, 0], sizes = [1, 128], strides = [1, 1]} : vector<8x128xf32> to vector<1x128xf32>
    %406 = vector.broadcast %405 : vector<1x128xf32> to vector<8x128xf32>
    %407 = arith.mulf %374, %406 : vector<8x128xf32>
    %408 = arith.addf %354, %407 : vector<8x128xf32>
    %c0_194 = arith.constant 0 : index
    %c1_195 = arith.constant 1 : index
    %409 = memref.load %arg3[%c0_194, %c1_195] : memref<4x32xf32, #tpu.memory_space<smem>>
    %c1_196 = arith.constant 1 : index
    %c1_197 = arith.constant 1 : index
    %410 = memref.load %arg3[%c1_196, %c1_197] : memref<4x32xf32, #tpu.memory_space<smem>>
    %c2_198 = arith.constant 2 : index
    %c1_199 = arith.constant 1 : index
    %411 = memref.load %arg3[%c2_198, %c1_199] : memref<4x32xf32, #tpu.memory_space<smem>>
    %c3_200 = arith.constant 3 : index
    %c1_201 = arith.constant 1 : index
    %412 = memref.load %arg3[%c3_200, %c1_201] : memref<4x32xf32, #tpu.memory_space<smem>>
    %c1_202 = arith.constant 1 : index
    %c0_203 = arith.constant 0 : index
    %c0_204 = arith.constant 0 : index
    %413 = vector.load %arg1[%c1_202, %c0_203, %c0_204] : memref<32x8x128xf32, #tpu.memory_space<vmem>>, vector<1x8x128xf32>
    %414 = vector.shape_cast %413 : vector<1x8x128xf32> to vector<8x128xf32>
    %415 = arith.subf %414, %325 : vector<8x128xf32>
    %416 = arith.mulf %415, %342 : vector<8x128xf32>
    %417 = vector.broadcast %409 : f32 to vector<8x128xf32>
    %418 = arith.mulf %416, %417 : vector<8x128xf32>
    %419 = vector.broadcast %410 : f32 to vector<8x128xf32>
    %420 = arith.addf %418, %419 : vector<8x128xf32>
    %c1_205 = arith.constant 1 : index
    %c0_206 = arith.constant 0 : index
    %c0_207 = arith.constant 0 : index
    %421 = vector.load %arg2[%c1_205, %c0_206, %c0_207] : memref<32x8x128xf32, #tpu.memory_space<vmem>>, vector<1x8x128xf32>
    %422 = vector.shape_cast %421 : vector<1x8x128xf32> to vector<8x128xf32>
    %423 = arith.subf %422, %327 : vector<8x128xf32>
    %424 = arith.mulf %423, %345 : vector<8x128xf32>
    %425 = vector.broadcast %411 : f32 to vector<8x128xf32>
    %426 = arith.mulf %424, %425 : vector<8x128xf32>
    %427 = vector.broadcast %412 : f32 to vector<8x128xf32>
    %428 = arith.addf %426, %427 : vector<8x128xf32>
    %429 = arith.mulf %420, %420 : vector<8x128xf32>
    %430 = arith.addf %376, %429 : vector<8x128xf32>
    %431 = vector.extract_strided_slice %420 {offsets = [0, 0], sizes = [1, 128], strides = [1, 1]} : vector<8x128xf32> to vector<1x128xf32>
    %432 = vector.broadcast %431 : vector<1x128xf32> to vector<8x128xf32>
    %433 = arith.mulf %428, %432 : vector<8x128xf32>
    %434 = arith.addf %380, %433 : vector<8x128xf32>
    %435 = vector.extract_strided_slice %420 {offsets = [1, 0], sizes = [1, 128], strides = [1, 1]} : vector<8x128xf32> to vector<1x128xf32>
    %436 = vector.broadcast %435 : vector<1x128xf32> to vector<8x128xf32>
    %437 = arith.mulf %428, %436 : vector<8x128xf32>
    %438 = arith.addf %384, %437 : vector<8x128xf32>
    %439 = vector.extract_strided_slice %420 {offsets = [2, 0], sizes = [1, 128], strides = [1, 1]} : vector<8x128xf32> to vector<1x128xf32>
    %440 = vector.broadcast %439 : vector<1x128xf32> to vector<8x128xf32>
    %441 = arith.mulf %428, %440 : vector<8x128xf32>
    %442 = arith.addf %388, %441 : vector<8x128xf32>
    %443 = vector.extract_strided_slice %420 {offsets = [3, 0], sizes = [1, 128], strides = [1, 1]} : vector<8x128xf32> to vector<1x128xf32>
    %444 = vector.broadcast %443 : vector<1x128xf32> to vector<8x128xf32>
    %445 = arith.mulf %428, %444 : vector<8x128xf32>
    %446 = arith.addf %392, %445 : vector<8x128xf32>
    %447 = vector.extract_strided_slice %420 {offsets = [4, 0], sizes = [1, 128], strides = [1, 1]} : vector<8x128xf32> to vector<1x128xf32>
    %448 = vector.broadcast %447 : vector<1x128xf32> to vector<8x128xf32>
    %449 = arith.mulf %428, %448 : vector<8x128xf32>
    %450 = arith.addf %396, %449 : vector<8x128xf32>
    %451 = vector.extract_strided_slice %420 {offsets = [5, 0], sizes = [1, 128], strides = [1, 1]} : vector<8x128xf32> to vector<1x128xf32>
    %452 = vector.broadcast %451 : vector<1x128xf32> to vector<8x128xf32>
    %453 = arith.mulf %428, %452 : vector<8x128xf32>
    %454 = arith.addf %400, %453 : vector<8x128xf32>
    %455 = vector.extract_strided_slice %420 {offsets = [6, 0], sizes = [1, 128], strides = [1, 1]} : vector<8x128xf32> to vector<1x128xf32>
    %456 = vector.broadcast %455 : vector<1x128xf32> to vector<8x128xf32>
    %457 = arith.mulf %428, %456 : vector<8x128xf32>
    %458 = arith.addf %404, %457 : vector<8x128xf32>
    %459 = vector.extract_strided_slice %420 {offsets = [7, 0], sizes = [1, 128], strides = [1, 1]} : vector<8x128xf32> to vector<1x128xf32>
    %460 = vector.broadcast %459 : vector<1x128xf32> to vector<8x128xf32>
    %461 = arith.mulf %428, %460 : vector<8x128xf32>
    %462 = arith.addf %408, %461 : vector<8x128xf32>
    %c0_208 = arith.constant 0 : index
    %c2_209 = arith.constant 2 : index
    %463 = memref.load %arg3[%c0_208, %c2_209] : memref<4x32xf32, #tpu.memory_space<smem>>
    %c1_210 = arith.constant 1 : index
    %c2_211 = arith.constant 2 : index
    %464 = memref.load %arg3[%c1_210, %c2_211] : memref<4x32xf32, #tpu.memory_space<smem>>
    %c2_212 = arith.constant 2 : index
    %c2_213 = arith.constant 2 : index
    %465 = memref.load %arg3[%c2_212, %c2_213] : memref<4x32xf32, #tpu.memory_space<smem>>
    %c3_214 = arith.constant 3 : index
    %c2_215 = arith.constant 2 : index
    %466 = memref.load %arg3[%c3_214, %c2_215] : memref<4x32xf32, #tpu.memory_space<smem>>
    %c2_216 = arith.constant 2 : index
    %c0_217 = arith.constant 0 : index
    %c0_218 = arith.constant 0 : index
    %467 = vector.load %arg1[%c2_216, %c0_217, %c0_218] : memref<32x8x128xf32, #tpu.memory_space<vmem>>, vector<1x8x128xf32>
    %468 = vector.shape_cast %467 : vector<1x8x128xf32> to vector<8x128xf32>
    %469 = arith.subf %468, %325 : vector<8x128xf32>
    %470 = arith.mulf %469, %342 : vector<8x128xf32>
    %471 = vector.broadcast %463 : f32 to vector<8x128xf32>
    %472 = arith.mulf %470, %471 : vector<8x128xf32>
    %473 = vector.broadcast %464 : f32 to vector<8x128xf32>
    %474 = arith.addf %472, %473 : vector<8x128xf32>
    %c2_219 = arith.constant 2 : index
    %c0_220 = arith.constant 0 : index
    %c0_221 = arith.constant 0 : index
    %475 = vector.load %arg2[%c2_219, %c0_220, %c0_221] : memref<32x8x128xf32, #tpu.memory_space<vmem>>, vector<1x8x128xf32>
    %476 = vector.shape_cast %475 : vector<1x8x128xf32> to vector<8x128xf32>
    %477 = arith.subf %476, %327 : vector<8x128xf32>
    %478 = arith.mulf %477, %345 : vector<8x128xf32>
    %479 = vector.broadcast %465 : f32 to vector<8x128xf32>
    %480 = arith.mulf %478, %479 : vector<8x128xf32>
    %481 = vector.broadcast %466 : f32 to vector<8x128xf32>
    %482 = arith.addf %480, %481 : vector<8x128xf32>
    %483 = arith.mulf %474, %474 : vector<8x128xf32>
    %484 = arith.addf %430, %483 : vector<8x128xf32>
    %485 = vector.extract_strided_slice %474 {offsets = [0, 0], sizes = [1, 128], strides = [1, 1]} : vector<8x128xf32> to vector<1x128xf32>
    %486 = vector.broadcast %485 : vector<1x128xf32> to vector<8x128xf32>
    %487 = arith.mulf %482, %486 : vector<8x128xf32>
    %488 = arith.addf %434, %487 : vector<8x128xf32>
    %489 = vector.extract_strided_slice %474 {offsets = [1, 0], sizes = [1, 128], strides = [1, 1]} : vector<8x128xf32> to vector<1x128xf32>
    %490 = vector.broadcast %489 : vector<1x128xf32> to vector<8x128xf32>
    %491 = arith.mulf %482, %490 : vector<8x128xf32>
    %492 = arith.addf %438, %491 : vector<8x128xf32>
    %493 = vector.extract_strided_slice %474 {offsets = [2, 0], sizes = [1, 128], strides = [1, 1]} : vector<8x128xf32> to vector<1x128xf32>
    %494 = vector.broadcast %493 : vector<1x128xf32> to vector<8x128xf32>
    %495 = arith.mulf %482, %494 : vector<8x128xf32>
    %496 = arith.addf %442, %495 : vector<8x128xf32>
    %497 = vector.extract_strided_slice %474 {offsets = [3, 0], sizes = [1, 128], strides = [1, 1]} : vector<8x128xf32> to vector<1x128xf32>
    %498 = vector.broadcast %497 : vector<1x128xf32> to vector<8x128xf32>
    %499 = arith.mulf %482, %498 : vector<8x128xf32>
    %500 = arith.addf %446, %499 : vector<8x128xf32>
    %501 = vector.extract_strided_slice %474 {offsets = [4, 0], sizes = [1, 128], strides = [1, 1]} : vector<8x128xf32> to vector<1x128xf32>
    %502 = vector.broadcast %501 : vector<1x128xf32> to vector<8x128xf32>
    %503 = arith.mulf %482, %502 : vector<8x128xf32>
    %504 = arith.addf %450, %503 : vector<8x128xf32>
    %505 = vector.extract_strided_slice %474 {offsets = [5, 0], sizes = [1, 128], strides = [1, 1]} : vector<8x128xf32> to vector<1x128xf32>
    %506 = vector.broadcast %505 : vector<1x128xf32> to vector<8x128xf32>
    %507 = arith.mulf %482, %506 : vector<8x128xf32>
    %508 = arith.addf %454, %507 : vector<8x128xf32>
    %509 = vector.extract_strided_slice %474 {offsets = [6, 0], sizes = [1, 128], strides = [1, 1]} : vector<8x128xf32> to vector<1x128xf32>
    %510 = vector.broadcast %509 : vector<1x128xf32> to vector<8x128xf32>
    %511 = arith.mulf %482, %510 : vector<8x128xf32>
    %512 = arith.addf %458, %511 : vector<8x128xf32>
    %513 = vector.extract_strided_slice %474 {offsets = [7, 0], sizes = [1, 128], strides = [1, 1]} : vector<8x128xf32> to vector<1x128xf32>
    %514 = vector.broadcast %513 : vector<1x128xf32> to vector<8x128xf32>
    %515 = arith.mulf %482, %514 : vector<8x128xf32>
    %516 = arith.addf %462, %515 : vector<8x128xf32>
    %c0_222 = arith.constant 0 : index
    %c3_223 = arith.constant 3 : index
    %517 = memref.load %arg3[%c0_222, %c3_223] : memref<4x32xf32, #tpu.memory_space<smem>>
    %c1_224 = arith.constant 1 : index
    %c3_225 = arith.constant 3 : index
    %518 = memref.load %arg3[%c1_224, %c3_225] : memref<4x32xf32, #tpu.memory_space<smem>>
    %c2_226 = arith.constant 2 : index
    %c3_227 = arith.constant 3 : index
    %519 = memref.load %arg3[%c2_226, %c3_227] : memref<4x32xf32, #tpu.memory_space<smem>>
    %c3_228 = arith.constant 3 : index
    %c3_229 = arith.constant 3 : index
    %520 = memref.load %arg3[%c3_228, %c3_229] : memref<4x32xf32, #tpu.memory_space<smem>>
    %c3_230 = arith.constant 3 : index
    %c0_231 = arith.constant 0 : index
    %c0_232 = arith.constant 0 : index
    %521 = vector.load %arg1[%c3_230, %c0_231, %c0_232] : memref<32x8x128xf32, #tpu.memory_space<vmem>>, vector<1x8x128xf32>
    %522 = vector.shape_cast %521 : vector<1x8x128xf32> to vector<8x128xf32>
    %523 = arith.subf %522, %325 : vector<8x128xf32>
    %524 = arith.mulf %523, %342 : vector<8x128xf32>
    %525 = vector.broadcast %517 : f32 to vector<8x128xf32>
    %526 = arith.mulf %524, %525 : vector<8x128xf32>
    %527 = vector.broadcast %518 : f32 to vector<8x128xf32>
    %528 = arith.addf %526, %527 : vector<8x128xf32>
    %c3_233 = arith.constant 3 : index
    %c0_234 = arith.constant 0 : index
    %c0_235 = arith.constant 0 : index
    %529 = vector.load %arg2[%c3_233, %c0_234, %c0_235] : memref<32x8x128xf32, #tpu.memory_space<vmem>>, vector<1x8x128xf32>
    %530 = vector.shape_cast %529 : vector<1x8x128xf32> to vector<8x128xf32>
    %531 = arith.subf %530, %327 : vector<8x128xf32>
    %532 = arith.mulf %531, %345 : vector<8x128xf32>
    %533 = vector.broadcast %519 : f32 to vector<8x128xf32>
    %534 = arith.mulf %532, %533 : vector<8x128xf32>
    %535 = vector.broadcast %520 : f32 to vector<8x128xf32>
    %536 = arith.addf %534, %535 : vector<8x128xf32>
    %537 = arith.mulf %528, %528 : vector<8x128xf32>
    %538 = arith.addf %484, %537 : vector<8x128xf32>
    %539 = vector.extract_strided_slice %528 {offsets = [0, 0], sizes = [1, 128], strides = [1, 1]} : vector<8x128xf32> to vector<1x128xf32>
    %540 = vector.broadcast %539 : vector<1x128xf32> to vector<8x128xf32>
    %541 = arith.mulf %536, %540 : vector<8x128xf32>
    %542 = arith.addf %488, %541 : vector<8x128xf32>
    %543 = vector.extract_strided_slice %528 {offsets = [1, 0], sizes = [1, 128], strides = [1, 1]} : vector<8x128xf32> to vector<1x128xf32>
    %544 = vector.broadcast %543 : vector<1x128xf32> to vector<8x128xf32>
    %545 = arith.mulf %536, %544 : vector<8x128xf32>
    %546 = arith.addf %492, %545 : vector<8x128xf32>
    %547 = vector.extract_strided_slice %528 {offsets = [2, 0], sizes = [1, 128], strides = [1, 1]} : vector<8x128xf32> to vector<1x128xf32>
    %548 = vector.broadcast %547 : vector<1x128xf32> to vector<8x128xf32>
    %549 = arith.mulf %536, %548 : vector<8x128xf32>
    %550 = arith.addf %496, %549 : vector<8x128xf32>
    %551 = vector.extract_strided_slice %528 {offsets = [3, 0], sizes = [1, 128], strides = [1, 1]} : vector<8x128xf32> to vector<1x128xf32>
    %552 = vector.broadcast %551 : vector<1x128xf32> to vector<8x128xf32>
    %553 = arith.mulf %536, %552 : vector<8x128xf32>
    %554 = arith.addf %500, %553 : vector<8x128xf32>
    %555 = vector.extract_strided_slice %528 {offsets = [4, 0], sizes = [1, 128], strides = [1, 1]} : vector<8x128xf32> to vector<1x128xf32>
    %556 = vector.broadcast %555 : vector<1x128xf32> to vector<8x128xf32>
    %557 = arith.mulf %536, %556 : vector<8x128xf32>
    %558 = arith.addf %504, %557 : vector<8x128xf32>
    %559 = vector.extract_strided_slice %528 {offsets = [5, 0], sizes = [1, 128], strides = [1, 1]} : vector<8x128xf32> to vector<1x128xf32>
    %560 = vector.broadcast %559 : vector<1x128xf32> to vector<8x128xf32>
    %561 = arith.mulf %536, %560 : vector<8x128xf32>
    %562 = arith.addf %508, %561 : vector<8x128xf32>
    %563 = vector.extract_strided_slice %528 {offsets = [6, 0], sizes = [1, 128], strides = [1, 1]} : vector<8x128xf32> to vector<1x128xf32>
    %564 = vector.broadcast %563 : vector<1x128xf32> to vector<8x128xf32>
    %565 = arith.mulf %536, %564 : vector<8x128xf32>
    %566 = arith.addf %512, %565 : vector<8x128xf32>
    %567 = vector.extract_strided_slice %528 {offsets = [7, 0], sizes = [1, 128], strides = [1, 1]} : vector<8x128xf32> to vector<1x128xf32>
    %568 = vector.broadcast %567 : vector<1x128xf32> to vector<8x128xf32>
    %569 = arith.mulf %536, %568 : vector<8x128xf32>
    %570 = arith.addf %516, %569 : vector<8x128xf32>
    %c0_236 = arith.constant 0 : index
    %c4_237 = arith.constant 4 : index
    %571 = memref.load %arg3[%c0_236, %c4_237] : memref<4x32xf32, #tpu.memory_space<smem>>
    %c1_238 = arith.constant 1 : index
    %c4_239 = arith.constant 4 : index
    %572 = memref.load %arg3[%c1_238, %c4_239] : memref<4x32xf32, #tpu.memory_space<smem>>
    %c2_240 = arith.constant 2 : index
    %c4_241 = arith.constant 4 : index
    %573 = memref.load %arg3[%c2_240, %c4_241] : memref<4x32xf32, #tpu.memory_space<smem>>
    %c3_242 = arith.constant 3 : index
    %c4_243 = arith.constant 4 : index
    %574 = memref.load %arg3[%c3_242, %c4_243] : memref<4x32xf32, #tpu.memory_space<smem>>
    %c4_244 = arith.constant 4 : index
    %c0_245 = arith.constant 0 : index
    %c0_246 = arith.constant 0 : index
    %575 = vector.load %arg1[%c4_244, %c0_245, %c0_246] : memref<32x8x128xf32, #tpu.memory_space<vmem>>, vector<1x8x128xf32>
    %576 = vector.shape_cast %575 : vector<1x8x128xf32> to vector<8x128xf32>
    %577 = arith.subf %576, %325 : vector<8x128xf32>
    %578 = arith.mulf %577, %342 : vector<8x128xf32>
    %579 = vector.broadcast %571 : f32 to vector<8x128xf32>
    %580 = arith.mulf %578, %579 : vector<8x128xf32>
    %581 = vector.broadcast %572 : f32 to vector<8x128xf32>
    %582 = arith.addf %580, %581 : vector<8x128xf32>
    %c4_247 = arith.constant 4 : index
    %c0_248 = arith.constant 0 : index
    %c0_249 = arith.constant 0 : index
    %583 = vector.load %arg2[%c4_247, %c0_248, %c0_249] : memref<32x8x128xf32, #tpu.memory_space<vmem>>, vector<1x8x128xf32>
    %584 = vector.shape_cast %583 : vector<1x8x128xf32> to vector<8x128xf32>
    %585 = arith.subf %584, %327 : vector<8x128xf32>
    %586 = arith.mulf %585, %345 : vector<8x128xf32>
    %587 = vector.broadcast %573 : f32 to vector<8x128xf32>
    %588 = arith.mulf %586, %587 : vector<8x128xf32>
    %589 = vector.broadcast %574 : f32 to vector<8x128xf32>
    %590 = arith.addf %588, %589 : vector<8x128xf32>
    %591 = arith.mulf %582, %582 : vector<8x128xf32>
    %592 = arith.addf %538, %591 : vector<8x128xf32>
    %593 = vector.extract_strided_slice %582 {offsets = [0, 0], sizes = [1, 128], strides = [1, 1]} : vector<8x128xf32> to vector<1x128xf32>
    %594 = vector.broadcast %593 : vector<1x128xf32> to vector<8x128xf32>
    %595 = arith.mulf %590, %594 : vector<8x128xf32>
    %596 = arith.addf %542, %595 : vector<8x128xf32>
    %597 = vector.extract_strided_slice %582 {offsets = [1, 0], sizes = [1, 128], strides = [1, 1]} : vector<8x128xf32> to vector<1x128xf32>
    %598 = vector.broadcast %597 : vector<1x128xf32> to vector<8x128xf32>
    %599 = arith.mulf %590, %598 : vector<8x128xf32>
    %600 = arith.addf %546, %599 : vector<8x128xf32>
    %601 = vector.extract_strided_slice %582 {offsets = [2, 0], sizes = [1, 128], strides = [1, 1]} : vector<8x128xf32> to vector<1x128xf32>
    %602 = vector.broadcast %601 : vector<1x128xf32> to vector<8x128xf32>
    %603 = arith.mulf %590, %602 : vector<8x128xf32>
    %604 = arith.addf %550, %603 : vector<8x128xf32>
    %605 = vector.extract_strided_slice %582 {offsets = [3, 0], sizes = [1, 128], strides = [1, 1]} : vector<8x128xf32> to vector<1x128xf32>
    %606 = vector.broadcast %605 : vector<1x128xf32> to vector<8x128xf32>
    %607 = arith.mulf %590, %606 : vector<8x128xf32>
    %608 = arith.addf %554, %607 : vector<8x128xf32>
    %609 = vector.extract_strided_slice %582 {offsets = [4, 0], sizes = [1, 128], strides = [1, 1]} : vector<8x128xf32> to vector<1x128xf32>
    %610 = vector.broadcast %609 : vector<1x128xf32> to vector<8x128xf32>
    %611 = arith.mulf %590, %610 : vector<8x128xf32>
    %612 = arith.addf %558, %611 : vector<8x128xf32>
    %613 = vector.extract_strided_slice %582 {offsets = [5, 0], sizes = [1, 128], strides = [1, 1]} : vector<8x128xf32> to vector<1x128xf32>
    %614 = vector.broadcast %613 : vector<1x128xf32> to vector<8x128xf32>
    %615 = arith.mulf %590, %614 : vector<8x128xf32>
    %616 = arith.addf %562, %615 : vector<8x128xf32>
    %617 = vector.extract_strided_slice %582 {offsets = [6, 0], sizes = [1, 128], strides = [1, 1]} : vector<8x128xf32> to vector<1x128xf32>
    %618 = vector.broadcast %617 : vector<1x128xf32> to vector<8x128xf32>
    %619 = arith.mulf %590, %618 : vector<8x128xf32>
    %620 = arith.addf %566, %619 : vector<8x128xf32>
    %621 = vector.extract_strided_slice %582 {offsets = [7, 0], sizes = [1, 128], strides = [1, 1]} : vector<8x128xf32> to vector<1x128xf32>
    %622 = vector.broadcast %621 : vector<1x128xf32> to vector<8x128xf32>
    %623 = arith.mulf %590, %622 : vector<8x128xf32>
    %624 = arith.addf %570, %623 : vector<8x128xf32>
    %c0_250 = arith.constant 0 : index
    %c5_251 = arith.constant 5 : index
    %625 = memref.load %arg3[%c0_250, %c5_251] : memref<4x32xf32, #tpu.memory_space<smem>>
    %c1_252 = arith.constant 1 : index
    %c5_253 = arith.constant 5 : index
    %626 = memref.load %arg3[%c1_252, %c5_253] : memref<4x32xf32, #tpu.memory_space<smem>>
    %c2_254 = arith.constant 2 : index
    %c5_255 = arith.constant 5 : index
    %627 = memref.load %arg3[%c2_254, %c5_255] : memref<4x32xf32, #tpu.memory_space<smem>>
    %c3_256 = arith.constant 3 : index
    %c5_257 = arith.constant 5 : index
    %628 = memref.load %arg3[%c3_256, %c5_257] : memref<4x32xf32, #tpu.memory_space<smem>>
    %c5_258 = arith.constant 5 : index
    %c0_259 = arith.constant 0 : index
    %c0_260 = arith.constant 0 : index
    %629 = vector.load %arg1[%c5_258, %c0_259, %c0_260] : memref<32x8x128xf32, #tpu.memory_space<vmem>>, vector<1x8x128xf32>
    %630 = vector.shape_cast %629 : vector<1x8x128xf32> to vector<8x128xf32>
    %631 = arith.subf %630, %325 : vector<8x128xf32>
    %632 = arith.mulf %631, %342 : vector<8x128xf32>
    %633 = vector.broadcast %625 : f32 to vector<8x128xf32>
    %634 = arith.mulf %632, %633 : vector<8x128xf32>
    %635 = vector.broadcast %626 : f32 to vector<8x128xf32>
    %636 = arith.addf %634, %635 : vector<8x128xf32>
    %c5_261 = arith.constant 5 : index
    %c0_262 = arith.constant 0 : index
    %c0_263 = arith.constant 0 : index
    %637 = vector.load %arg2[%c5_261, %c0_262, %c0_263] : memref<32x8x128xf32, #tpu.memory_space<vmem>>, vector<1x8x128xf32>
    %638 = vector.shape_cast %637 : vector<1x8x128xf32> to vector<8x128xf32>
    %639 = arith.subf %638, %327 : vector<8x128xf32>
    %640 = arith.mulf %639, %345 : vector<8x128xf32>
    %641 = vector.broadcast %627 : f32 to vector<8x128xf32>
    %642 = arith.mulf %640, %641 : vector<8x128xf32>
    %643 = vector.broadcast %628 : f32 to vector<8x128xf32>
    %644 = arith.addf %642, %643 : vector<8x128xf32>
    %645 = arith.mulf %636, %636 : vector<8x128xf32>
    %646 = arith.addf %592, %645 : vector<8x128xf32>
    %647 = vector.extract_strided_slice %636 {offsets = [0, 0], sizes = [1, 128], strides = [1, 1]} : vector<8x128xf32> to vector<1x128xf32>
    %648 = vector.broadcast %647 : vector<1x128xf32> to vector<8x128xf32>
    %649 = arith.mulf %644, %648 : vector<8x128xf32>
    %650 = arith.addf %596, %649 : vector<8x128xf32>
    %651 = vector.extract_strided_slice %636 {offsets = [1, 0], sizes = [1, 128], strides = [1, 1]} : vector<8x128xf32> to vector<1x128xf32>
    %652 = vector.broadcast %651 : vector<1x128xf32> to vector<8x128xf32>
    %653 = arith.mulf %644, %652 : vector<8x128xf32>
    %654 = arith.addf %600, %653 : vector<8x128xf32>
    %655 = vector.extract_strided_slice %636 {offsets = [2, 0], sizes = [1, 128], strides = [1, 1]} : vector<8x128xf32> to vector<1x128xf32>
    %656 = vector.broadcast %655 : vector<1x128xf32> to vector<8x128xf32>
    %657 = arith.mulf %644, %656 : vector<8x128xf32>
    %658 = arith.addf %604, %657 : vector<8x128xf32>
    %659 = vector.extract_strided_slice %636 {offsets = [3, 0], sizes = [1, 128], strides = [1, 1]} : vector<8x128xf32> to vector<1x128xf32>
    %660 = vector.broadcast %659 : vector<1x128xf32> to vector<8x128xf32>
    %661 = arith.mulf %644, %660 : vector<8x128xf32>
    %662 = arith.addf %608, %661 : vector<8x128xf32>
    %663 = vector.extract_strided_slice %636 {offsets = [4, 0], sizes = [1, 128], strides = [1, 1]} : vector<8x128xf32> to vector<1x128xf32>
    %664 = vector.broadcast %663 : vector<1x128xf32> to vector<8x128xf32>
    %665 = arith.mulf %644, %664 : vector<8x128xf32>
    %666 = arith.addf %612, %665 : vector<8x128xf32>
    %667 = vector.extract_strided_slice %636 {offsets = [5, 0], sizes = [1, 128], strides = [1, 1]} : vector<8x128xf32> to vector<1x128xf32>
    %668 = vector.broadcast %667 : vector<1x128xf32> to vector<8x128xf32>
    %669 = arith.mulf %644, %668 : vector<8x128xf32>
    %670 = arith.addf %616, %669 : vector<8x128xf32>
    %671 = vector.extract_strided_slice %636 {offsets = [6, 0], sizes = [1, 128], strides = [1, 1]} : vector<8x128xf32> to vector<1x128xf32>
    %672 = vector.broadcast %671 : vector<1x128xf32> to vector<8x128xf32>
    %673 = arith.mulf %644, %672 : vector<8x128xf32>
    %674 = arith.addf %620, %673 : vector<8x128xf32>
    %675 = vector.extract_strided_slice %636 {offsets = [7, 0], sizes = [1, 128], strides = [1, 1]} : vector<8x128xf32> to vector<1x128xf32>
    %676 = vector.broadcast %675 : vector<1x128xf32> to vector<8x128xf32>
    %677 = arith.mulf %644, %676 : vector<8x128xf32>
    %678 = arith.addf %624, %677 : vector<8x128xf32>
    %c0_264 = arith.constant 0 : index
    %c6_265 = arith.constant 6 : index
    %679 = memref.load %arg3[%c0_264, %c6_265] : memref<4x32xf32, #tpu.memory_space<smem>>
    %c1_266 = arith.constant 1 : index
    %c6_267 = arith.constant 6 : index
    %680 = memref.load %arg3[%c1_266, %c6_267] : memref<4x32xf32, #tpu.memory_space<smem>>
    %c2_268 = arith.constant 2 : index
    %c6_269 = arith.constant 6 : index
    %681 = memref.load %arg3[%c2_268, %c6_269] : memref<4x32xf32, #tpu.memory_space<smem>>
    %c3_270 = arith.constant 3 : index
    %c6_271 = arith.constant 6 : index
    %682 = memref.load %arg3[%c3_270, %c6_271] : memref<4x32xf32, #tpu.memory_space<smem>>
    %c6_272 = arith.constant 6 : index
    %c0_273 = arith.constant 0 : index
    %c0_274 = arith.constant 0 : index
    %683 = vector.load %arg1[%c6_272, %c0_273, %c0_274] : memref<32x8x128xf32, #tpu.memory_space<vmem>>, vector<1x8x128xf32>
    %684 = vector.shape_cast %683 : vector<1x8x128xf32> to vector<8x128xf32>
    %685 = arith.subf %684, %325 : vector<8x128xf32>
    %686 = arith.mulf %685, %342 : vector<8x128xf32>
    %687 = vector.broadcast %679 : f32 to vector<8x128xf32>
    %688 = arith.mulf %686, %687 : vector<8x128xf32>
    %689 = vector.broadcast %680 : f32 to vector<8x128xf32>
    %690 = arith.addf %688, %689 : vector<8x128xf32>
    %c6_275 = arith.constant 6 : index
    %c0_276 = arith.constant 0 : index
    %c0_277 = arith.constant 0 : index
    %691 = vector.load %arg2[%c6_275, %c0_276, %c0_277] : memref<32x8x128xf32, #tpu.memory_space<vmem>>, vector<1x8x128xf32>
    %692 = vector.shape_cast %691 : vector<1x8x128xf32> to vector<8x128xf32>
    %693 = arith.subf %692, %327 : vector<8x128xf32>
    %694 = arith.mulf %693, %345 : vector<8x128xf32>
    %695 = vector.broadcast %681 : f32 to vector<8x128xf32>
    %696 = arith.mulf %694, %695 : vector<8x128xf32>
    %697 = vector.broadcast %682 : f32 to vector<8x128xf32>
    %698 = arith.addf %696, %697 : vector<8x128xf32>
    %699 = arith.mulf %690, %690 : vector<8x128xf32>
    %700 = arith.addf %646, %699 : vector<8x128xf32>
    %701 = vector.extract_strided_slice %690 {offsets = [0, 0], sizes = [1, 128], strides = [1, 1]} : vector<8x128xf32> to vector<1x128xf32>
    %702 = vector.broadcast %701 : vector<1x128xf32> to vector<8x128xf32>
    %703 = arith.mulf %698, %702 : vector<8x128xf32>
    %704 = arith.addf %650, %703 : vector<8x128xf32>
    %705 = vector.extract_strided_slice %690 {offsets = [1, 0], sizes = [1, 128], strides = [1, 1]} : vector<8x128xf32> to vector<1x128xf32>
    %706 = vector.broadcast %705 : vector<1x128xf32> to vector<8x128xf32>
    %707 = arith.mulf %698, %706 : vector<8x128xf32>
    %708 = arith.addf %654, %707 : vector<8x128xf32>
    %709 = vector.extract_strided_slice %690 {offsets = [2, 0], sizes = [1, 128], strides = [1, 1]} : vector<8x128xf32> to vector<1x128xf32>
    %710 = vector.broadcast %709 : vector<1x128xf32> to vector<8x128xf32>
    %711 = arith.mulf %698, %710 : vector<8x128xf32>
    %712 = arith.addf %658, %711 : vector<8x128xf32>
    %713 = vector.extract_strided_slice %690 {offsets = [3, 0], sizes = [1, 128], strides = [1, 1]} : vector<8x128xf32> to vector<1x128xf32>
    %714 = vector.broadcast %713 : vector<1x128xf32> to vector<8x128xf32>
    %715 = arith.mulf %698, %714 : vector<8x128xf32>
    %716 = arith.addf %662, %715 : vector<8x128xf32>
    %717 = vector.extract_strided_slice %690 {offsets = [4, 0], sizes = [1, 128], strides = [1, 1]} : vector<8x128xf32> to vector<1x128xf32>
    %718 = vector.broadcast %717 : vector<1x128xf32> to vector<8x128xf32>
    %719 = arith.mulf %698, %718 : vector<8x128xf32>
    %720 = arith.addf %666, %719 : vector<8x128xf32>
    %721 = vector.extract_strided_slice %690 {offsets = [5, 0], sizes = [1, 128], strides = [1, 1]} : vector<8x128xf32> to vector<1x128xf32>
    %722 = vector.broadcast %721 : vector<1x128xf32> to vector<8x128xf32>
    %723 = arith.mulf %698, %722 : vector<8x128xf32>
    %724 = arith.addf %670, %723 : vector<8x128xf32>
    %725 = vector.extract_strided_slice %690 {offsets = [6, 0], sizes = [1, 128], strides = [1, 1]} : vector<8x128xf32> to vector<1x128xf32>
    %726 = vector.broadcast %725 : vector<1x128xf32> to vector<8x128xf32>
    %727 = arith.mulf %698, %726 : vector<8x128xf32>
    %728 = arith.addf %674, %727 : vector<8x128xf32>
    %729 = vector.extract_strided_slice %690 {offsets = [7, 0], sizes = [1, 128], strides = [1, 1]} : vector<8x128xf32> to vector<1x128xf32>
    %730 = vector.broadcast %729 : vector<1x128xf32> to vector<8x128xf32>
    %731 = arith.mulf %698, %730 : vector<8x128xf32>
    %732 = arith.addf %678, %731 : vector<8x128xf32>
    %c0_278 = arith.constant 0 : index
    %c7_279 = arith.constant 7 : index
    %733 = memref.load %arg3[%c0_278, %c7_279] : memref<4x32xf32, #tpu.memory_space<smem>>
    %c1_280 = arith.constant 1 : index
    %c7_281 = arith.constant 7 : index
    %734 = memref.load %arg3[%c1_280, %c7_281] : memref<4x32xf32, #tpu.memory_space<smem>>
    %c2_282 = arith.constant 2 : index
    %c7_283 = arith.constant 7 : index
    %735 = memref.load %arg3[%c2_282, %c7_283] : memref<4x32xf32, #tpu.memory_space<smem>>
    %c3_284 = arith.constant 3 : index
    %c7_285 = arith.constant 7 : index
    %736 = memref.load %arg3[%c3_284, %c7_285] : memref<4x32xf32, #tpu.memory_space<smem>>
    %c7_286 = arith.constant 7 : index
    %c0_287 = arith.constant 0 : index
    %c0_288 = arith.constant 0 : index
    %737 = vector.load %arg1[%c7_286, %c0_287, %c0_288] : memref<32x8x128xf32, #tpu.memory_space<vmem>>, vector<1x8x128xf32>
    %738 = vector.shape_cast %737 : vector<1x8x128xf32> to vector<8x128xf32>
    %739 = arith.subf %738, %325 : vector<8x128xf32>
    %740 = arith.mulf %739, %342 : vector<8x128xf32>
    %741 = vector.broadcast %733 : f32 to vector<8x128xf32>
    %742 = arith.mulf %740, %741 : vector<8x128xf32>
    %743 = vector.broadcast %734 : f32 to vector<8x128xf32>
    %744 = arith.addf %742, %743 : vector<8x128xf32>
    %c7_289 = arith.constant 7 : index
    %c0_290 = arith.constant 0 : index
    %c0_291 = arith.constant 0 : index
    %745 = vector.load %arg2[%c7_289, %c0_290, %c0_291] : memref<32x8x128xf32, #tpu.memory_space<vmem>>, vector<1x8x128xf32>
    %746 = vector.shape_cast %745 : vector<1x8x128xf32> to vector<8x128xf32>
    %747 = arith.subf %746, %327 : vector<8x128xf32>
    %748 = arith.mulf %747, %345 : vector<8x128xf32>
    %749 = vector.broadcast %735 : f32 to vector<8x128xf32>
    %750 = arith.mulf %748, %749 : vector<8x128xf32>
    %751 = vector.broadcast %736 : f32 to vector<8x128xf32>
    %752 = arith.addf %750, %751 : vector<8x128xf32>
    %753 = arith.mulf %744, %744 : vector<8x128xf32>
    %754 = arith.addf %700, %753 : vector<8x128xf32>
    %755 = vector.extract_strided_slice %744 {offsets = [0, 0], sizes = [1, 128], strides = [1, 1]} : vector<8x128xf32> to vector<1x128xf32>
    %756 = vector.broadcast %755 : vector<1x128xf32> to vector<8x128xf32>
    %757 = arith.mulf %752, %756 : vector<8x128xf32>
    %758 = arith.addf %704, %757 : vector<8x128xf32>
    %759 = vector.extract_strided_slice %744 {offsets = [1, 0], sizes = [1, 128], strides = [1, 1]} : vector<8x128xf32> to vector<1x128xf32>
    %760 = vector.broadcast %759 : vector<1x128xf32> to vector<8x128xf32>
    %761 = arith.mulf %752, %760 : vector<8x128xf32>
    %762 = arith.addf %708, %761 : vector<8x128xf32>
    %763 = vector.extract_strided_slice %744 {offsets = [2, 0], sizes = [1, 128], strides = [1, 1]} : vector<8x128xf32> to vector<1x128xf32>
    %764 = vector.broadcast %763 : vector<1x128xf32> to vector<8x128xf32>
    %765 = arith.mulf %752, %764 : vector<8x128xf32>
    %766 = arith.addf %712, %765 : vector<8x128xf32>
    %767 = vector.extract_strided_slice %744 {offsets = [3, 0], sizes = [1, 128], strides = [1, 1]} : vector<8x128xf32> to vector<1x128xf32>
    %768 = vector.broadcast %767 : vector<1x128xf32> to vector<8x128xf32>
    %769 = arith.mulf %752, %768 : vector<8x128xf32>
    %770 = arith.addf %716, %769 : vector<8x128xf32>
    %771 = vector.extract_strided_slice %744 {offsets = [4, 0], sizes = [1, 128], strides = [1, 1]} : vector<8x128xf32> to vector<1x128xf32>
    %772 = vector.broadcast %771 : vector<1x128xf32> to vector<8x128xf32>
    %773 = arith.mulf %752, %772 : vector<8x128xf32>
    %774 = arith.addf %720, %773 : vector<8x128xf32>
    %775 = vector.extract_strided_slice %744 {offsets = [5, 0], sizes = [1, 128], strides = [1, 1]} : vector<8x128xf32> to vector<1x128xf32>
    %776 = vector.broadcast %775 : vector<1x128xf32> to vector<8x128xf32>
    %777 = arith.mulf %752, %776 : vector<8x128xf32>
    %778 = arith.addf %724, %777 : vector<8x128xf32>
    %779 = vector.extract_strided_slice %744 {offsets = [6, 0], sizes = [1, 128], strides = [1, 1]} : vector<8x128xf32> to vector<1x128xf32>
    %780 = vector.broadcast %779 : vector<1x128xf32> to vector<8x128xf32>
    %781 = arith.mulf %752, %780 : vector<8x128xf32>
    %782 = arith.addf %728, %781 : vector<8x128xf32>
    %783 = vector.extract_strided_slice %744 {offsets = [7, 0], sizes = [1, 128], strides = [1, 1]} : vector<8x128xf32> to vector<1x128xf32>
    %784 = vector.broadcast %783 : vector<1x128xf32> to vector<8x128xf32>
    %785 = arith.mulf %752, %784 : vector<8x128xf32>
    %786 = arith.addf %732, %785 : vector<8x128xf32>
    %c0_292 = arith.constant 0 : index
    %c8_293 = arith.constant 8 : index
    %787 = memref.load %arg3[%c0_292, %c8_293] : memref<4x32xf32, #tpu.memory_space<smem>>
    %c1_294 = arith.constant 1 : index
    %c8_295 = arith.constant 8 : index
    %788 = memref.load %arg3[%c1_294, %c8_295] : memref<4x32xf32, #tpu.memory_space<smem>>
    %c2_296 = arith.constant 2 : index
    %c8_297 = arith.constant 8 : index
    %789 = memref.load %arg3[%c2_296, %c8_297] : memref<4x32xf32, #tpu.memory_space<smem>>
    %c3_298 = arith.constant 3 : index
    %c8_299 = arith.constant 8 : index
    %790 = memref.load %arg3[%c3_298, %c8_299] : memref<4x32xf32, #tpu.memory_space<smem>>
    %c8_300 = arith.constant 8 : index
    %c0_301 = arith.constant 0 : index
    %c0_302 = arith.constant 0 : index
    %791 = vector.load %arg1[%c8_300, %c0_301, %c0_302] : memref<32x8x128xf32, #tpu.memory_space<vmem>>, vector<1x8x128xf32>
    %792 = vector.shape_cast %791 : vector<1x8x128xf32> to vector<8x128xf32>
    %793 = arith.subf %792, %325 : vector<8x128xf32>
    %794 = arith.mulf %793, %342 : vector<8x128xf32>
    %795 = vector.broadcast %787 : f32 to vector<8x128xf32>
    %796 = arith.mulf %794, %795 : vector<8x128xf32>
    %797 = vector.broadcast %788 : f32 to vector<8x128xf32>
    %798 = arith.addf %796, %797 : vector<8x128xf32>
    %c8_303 = arith.constant 8 : index
    %c0_304 = arith.constant 0 : index
    %c0_305 = arith.constant 0 : index
    %799 = vector.load %arg2[%c8_303, %c0_304, %c0_305] : memref<32x8x128xf32, #tpu.memory_space<vmem>>, vector<1x8x128xf32>
    %800 = vector.shape_cast %799 : vector<1x8x128xf32> to vector<8x128xf32>
    %801 = arith.subf %800, %327 : vector<8x128xf32>
    %802 = arith.mulf %801, %345 : vector<8x128xf32>
    %803 = vector.broadcast %789 : f32 to vector<8x128xf32>
    %804 = arith.mulf %802, %803 : vector<8x128xf32>
    %805 = vector.broadcast %790 : f32 to vector<8x128xf32>
    %806 = arith.addf %804, %805 : vector<8x128xf32>
    %807 = arith.mulf %798, %798 : vector<8x128xf32>
    %808 = arith.addf %754, %807 : vector<8x128xf32>
    %809 = vector.extract_strided_slice %798 {offsets = [0, 0], sizes = [1, 128], strides = [1, 1]} : vector<8x128xf32> to vector<1x128xf32>
    %810 = vector.broadcast %809 : vector<1x128xf32> to vector<8x128xf32>
    %811 = arith.mulf %806, %810 : vector<8x128xf32>
    %812 = arith.addf %758, %811 : vector<8x128xf32>
    %813 = vector.extract_strided_slice %798 {offsets = [1, 0], sizes = [1, 128], strides = [1, 1]} : vector<8x128xf32> to vector<1x128xf32>
    %814 = vector.broadcast %813 : vector<1x128xf32> to vector<8x128xf32>
    %815 = arith.mulf %806, %814 : vector<8x128xf32>
    %816 = arith.addf %762, %815 : vector<8x128xf32>
    %817 = vector.extract_strided_slice %798 {offsets = [2, 0], sizes = [1, 128], strides = [1, 1]} : vector<8x128xf32> to vector<1x128xf32>
    %818 = vector.broadcast %817 : vector<1x128xf32> to vector<8x128xf32>
    %819 = arith.mulf %806, %818 : vector<8x128xf32>
    %820 = arith.addf %766, %819 : vector<8x128xf32>
    %821 = vector.extract_strided_slice %798 {offsets = [3, 0], sizes = [1, 128], strides = [1, 1]} : vector<8x128xf32> to vector<1x128xf32>
    %822 = vector.broadcast %821 : vector<1x128xf32> to vector<8x128xf32>
    %823 = arith.mulf %806, %822 : vector<8x128xf32>
    %824 = arith.addf %770, %823 : vector<8x128xf32>
    %825 = vector.extract_strided_slice %798 {offsets = [4, 0], sizes = [1, 128], strides = [1, 1]} : vector<8x128xf32> to vector<1x128xf32>
    %826 = vector.broadcast %825 : vector<1x128xf32> to vector<8x128xf32>
    %827 = arith.mulf %806, %826 : vector<8x128xf32>
    %828 = arith.addf %774, %827 : vector<8x128xf32>
    %829 = vector.extract_strided_slice %798 {offsets = [5, 0], sizes = [1, 128], strides = [1, 1]} : vector<8x128xf32> to vector<1x128xf32>
    %830 = vector.broadcast %829 : vector<1x128xf32> to vector<8x128xf32>
    %831 = arith.mulf %806, %830 : vector<8x128xf32>
    %832 = arith.addf %778, %831 : vector<8x128xf32>
    %833 = vector.extract_strided_slice %798 {offsets = [6, 0], sizes = [1, 128], strides = [1, 1]} : vector<8x128xf32> to vector<1x128xf32>
    %834 = vector.broadcast %833 : vector<1x128xf32> to vector<8x128xf32>
    %835 = arith.mulf %806, %834 : vector<8x128xf32>
    %836 = arith.addf %782, %835 : vector<8x128xf32>
    %837 = vector.extract_strided_slice %798 {offsets = [7, 0], sizes = [1, 128], strides = [1, 1]} : vector<8x128xf32> to vector<1x128xf32>
    %838 = vector.broadcast %837 : vector<1x128xf32> to vector<8x128xf32>
    %839 = arith.mulf %806, %838 : vector<8x128xf32>
    %840 = arith.addf %786, %839 : vector<8x128xf32>
    %c0_306 = arith.constant 0 : index
    %c9_307 = arith.constant 9 : index
    %841 = memref.load %arg3[%c0_306, %c9_307] : memref<4x32xf32, #tpu.memory_space<smem>>
    %c1_308 = arith.constant 1 : index
    %c9_309 = arith.constant 9 : index
    %842 = memref.load %arg3[%c1_308, %c9_309] : memref<4x32xf32, #tpu.memory_space<smem>>
    %c2_310 = arith.constant 2 : index
    %c9_311 = arith.constant 9 : index
    %843 = memref.load %arg3[%c2_310, %c9_311] : memref<4x32xf32, #tpu.memory_space<smem>>
    %c3_312 = arith.constant 3 : index
    %c9_313 = arith.constant 9 : index
    %844 = memref.load %arg3[%c3_312, %c9_313] : memref<4x32xf32, #tpu.memory_space<smem>>
    %c9_314 = arith.constant 9 : index
    %c0_315 = arith.constant 0 : index
    %c0_316 = arith.constant 0 : index
    %845 = vector.load %arg1[%c9_314, %c0_315, %c0_316] : memref<32x8x128xf32, #tpu.memory_space<vmem>>, vector<1x8x128xf32>
    %846 = vector.shape_cast %845 : vector<1x8x128xf32> to vector<8x128xf32>
    %847 = arith.subf %846, %325 : vector<8x128xf32>
    %848 = arith.mulf %847, %342 : vector<8x128xf32>
    %849 = vector.broadcast %841 : f32 to vector<8x128xf32>
    %850 = arith.mulf %848, %849 : vector<8x128xf32>
    %851 = vector.broadcast %842 : f32 to vector<8x128xf32>
    %852 = arith.addf %850, %851 : vector<8x128xf32>
    %c9_317 = arith.constant 9 : index
    %c0_318 = arith.constant 0 : index
    %c0_319 = arith.constant 0 : index
    %853 = vector.load %arg2[%c9_317, %c0_318, %c0_319] : memref<32x8x128xf32, #tpu.memory_space<vmem>>, vector<1x8x128xf32>
    %854 = vector.shape_cast %853 : vector<1x8x128xf32> to vector<8x128xf32>
    %855 = arith.subf %854, %327 : vector<8x128xf32>
    %856 = arith.mulf %855, %345 : vector<8x128xf32>
    %857 = vector.broadcast %843 : f32 to vector<8x128xf32>
    %858 = arith.mulf %856, %857 : vector<8x128xf32>
    %859 = vector.broadcast %844 : f32 to vector<8x128xf32>
    %860 = arith.addf %858, %859 : vector<8x128xf32>
    %861 = arith.mulf %852, %852 : vector<8x128xf32>
    %862 = arith.addf %808, %861 : vector<8x128xf32>
    %863 = vector.extract_strided_slice %852 {offsets = [0, 0], sizes = [1, 128], strides = [1, 1]} : vector<8x128xf32> to vector<1x128xf32>
    %864 = vector.broadcast %863 : vector<1x128xf32> to vector<8x128xf32>
    %865 = arith.mulf %860, %864 : vector<8x128xf32>
    %866 = arith.addf %812, %865 : vector<8x128xf32>
    %867 = vector.extract_strided_slice %852 {offsets = [1, 0], sizes = [1, 128], strides = [1, 1]} : vector<8x128xf32> to vector<1x128xf32>
    %868 = vector.broadcast %867 : vector<1x128xf32> to vector<8x128xf32>
    %869 = arith.mulf %860, %868 : vector<8x128xf32>
    %870 = arith.addf %816, %869 : vector<8x128xf32>
    %871 = vector.extract_strided_slice %852 {offsets = [2, 0], sizes = [1, 128], strides = [1, 1]} : vector<8x128xf32> to vector<1x128xf32>
    %872 = vector.broadcast %871 : vector<1x128xf32> to vector<8x128xf32>
    %873 = arith.mulf %860, %872 : vector<8x128xf32>
    %874 = arith.addf %820, %873 : vector<8x128xf32>
    %875 = vector.extract_strided_slice %852 {offsets = [3, 0], sizes = [1, 128], strides = [1, 1]} : vector<8x128xf32> to vector<1x128xf32>
    %876 = vector.broadcast %875 : vector<1x128xf32> to vector<8x128xf32>
    %877 = arith.mulf %860, %876 : vector<8x128xf32>
    %878 = arith.addf %824, %877 : vector<8x128xf32>
    %879 = vector.extract_strided_slice %852 {offsets = [4, 0], sizes = [1, 128], strides = [1, 1]} : vector<8x128xf32> to vector<1x128xf32>
    %880 = vector.broadcast %879 : vector<1x128xf32> to vector<8x128xf32>
    %881 = arith.mulf %860, %880 : vector<8x128xf32>
    %882 = arith.addf %828, %881 : vector<8x128xf32>
    %883 = vector.extract_strided_slice %852 {offsets = [5, 0], sizes = [1, 128], strides = [1, 1]} : vector<8x128xf32> to vector<1x128xf32>
    %884 = vector.broadcast %883 : vector<1x128xf32> to vector<8x128xf32>
    %885 = arith.mulf %860, %884 : vector<8x128xf32>
    %886 = arith.addf %832, %885 : vector<8x128xf32>
    %887 = vector.extract_strided_slice %852 {offsets = [6, 0], sizes = [1, 128], strides = [1, 1]} : vector<8x128xf32> to vector<1x128xf32>
    %888 = vector.broadcast %887 : vector<1x128xf32> to vector<8x128xf32>
    %889 = arith.mulf %860, %888 : vector<8x128xf32>
    %890 = arith.addf %836, %889 : vector<8x128xf32>
    %891 = vector.extract_strided_slice %852 {offsets = [7, 0], sizes = [1, 128], strides = [1, 1]} : vector<8x128xf32> to vector<1x128xf32>
    %892 = vector.broadcast %891 : vector<1x128xf32> to vector<8x128xf32>
    %893 = arith.mulf %860, %892 : vector<8x128xf32>
    %894 = arith.addf %840, %893 : vector<8x128xf32>
    %c0_320 = arith.constant 0 : index
    %c10_321 = arith.constant 10 : index
    %895 = memref.load %arg3[%c0_320, %c10_321] : memref<4x32xf32, #tpu.memory_space<smem>>
    %c1_322 = arith.constant 1 : index
    %c10_323 = arith.constant 10 : index
    %896 = memref.load %arg3[%c1_322, %c10_323] : memref<4x32xf32, #tpu.memory_space<smem>>
    %c2_324 = arith.constant 2 : index
    %c10_325 = arith.constant 10 : index
    %897 = memref.load %arg3[%c2_324, %c10_325] : memref<4x32xf32, #tpu.memory_space<smem>>
    %c3_326 = arith.constant 3 : index
    %c10_327 = arith.constant 10 : index
    %898 = memref.load %arg3[%c3_326, %c10_327] : memref<4x32xf32, #tpu.memory_space<smem>>
    %c10_328 = arith.constant 10 : index
    %c0_329 = arith.constant 0 : index
    %c0_330 = arith.constant 0 : index
    %899 = vector.load %arg1[%c10_328, %c0_329, %c0_330] : memref<32x8x128xf32, #tpu.memory_space<vmem>>, vector<1x8x128xf32>
    %900 = vector.shape_cast %899 : vector<1x8x128xf32> to vector<8x128xf32>
    %901 = arith.subf %900, %325 : vector<8x128xf32>
    %902 = arith.mulf %901, %342 : vector<8x128xf32>
    %903 = vector.broadcast %895 : f32 to vector<8x128xf32>
    %904 = arith.mulf %902, %903 : vector<8x128xf32>
    %905 = vector.broadcast %896 : f32 to vector<8x128xf32>
    %906 = arith.addf %904, %905 : vector<8x128xf32>
    %c10_331 = arith.constant 10 : index
    %c0_332 = arith.constant 0 : index
    %c0_333 = arith.constant 0 : index
    %907 = vector.load %arg2[%c10_331, %c0_332, %c0_333] : memref<32x8x128xf32, #tpu.memory_space<vmem>>, vector<1x8x128xf32>
    %908 = vector.shape_cast %907 : vector<1x8x128xf32> to vector<8x128xf32>
    %909 = arith.subf %908, %327 : vector<8x128xf32>
    %910 = arith.mulf %909, %345 : vector<8x128xf32>
    %911 = vector.broadcast %897 : f32 to vector<8x128xf32>
    %912 = arith.mulf %910, %911 : vector<8x128xf32>
    %913 = vector.broadcast %898 : f32 to vector<8x128xf32>
    %914 = arith.addf %912, %913 : vector<8x128xf32>
    %915 = arith.mulf %906, %906 : vector<8x128xf32>
    %916 = arith.addf %862, %915 : vector<8x128xf32>
    %917 = vector.extract_strided_slice %906 {offsets = [0, 0], sizes = [1, 128], strides = [1, 1]} : vector<8x128xf32> to vector<1x128xf32>
    %918 = vector.broadcast %917 : vector<1x128xf32> to vector<8x128xf32>
    %919 = arith.mulf %914, %918 : vector<8x128xf32>
    %920 = arith.addf %866, %919 : vector<8x128xf32>
    %921 = vector.extract_strided_slice %906 {offsets = [1, 0], sizes = [1, 128], strides = [1, 1]} : vector<8x128xf32> to vector<1x128xf32>
    %922 = vector.broadcast %921 : vector<1x128xf32> to vector<8x128xf32>
    %923 = arith.mulf %914, %922 : vector<8x128xf32>
    %924 = arith.addf %870, %923 : vector<8x128xf32>
    %925 = vector.extract_strided_slice %906 {offsets = [2, 0], sizes = [1, 128], strides = [1, 1]} : vector<8x128xf32> to vector<1x128xf32>
    %926 = vector.broadcast %925 : vector<1x128xf32> to vector<8x128xf32>
    %927 = arith.mulf %914, %926 : vector<8x128xf32>
    %928 = arith.addf %874, %927 : vector<8x128xf32>
    %929 = vector.extract_strided_slice %906 {offsets = [3, 0], sizes = [1, 128], strides = [1, 1]} : vector<8x128xf32> to vector<1x128xf32>
    %930 = vector.broadcast %929 : vector<1x128xf32> to vector<8x128xf32>
    %931 = arith.mulf %914, %930 : vector<8x128xf32>
    %932 = arith.addf %878, %931 : vector<8x128xf32>
    %933 = vector.extract_strided_slice %906 {offsets = [4, 0], sizes = [1, 128], strides = [1, 1]} : vector<8x128xf32> to vector<1x128xf32>
    %934 = vector.broadcast %933 : vector<1x128xf32> to vector<8x128xf32>
    %935 = arith.mulf %914, %934 : vector<8x128xf32>
    %936 = arith.addf %882, %935 : vector<8x128xf32>
    %937 = vector.extract_strided_slice %906 {offsets = [5, 0], sizes = [1, 128], strides = [1, 1]} : vector<8x128xf32> to vector<1x128xf32>
    %938 = vector.broadcast %937 : vector<1x128xf32> to vector<8x128xf32>
    %939 = arith.mulf %914, %938 : vector<8x128xf32>
    %940 = arith.addf %886, %939 : vector<8x128xf32>
    %941 = vector.extract_strided_slice %906 {offsets = [6, 0], sizes = [1, 128], strides = [1, 1]} : vector<8x128xf32> to vector<1x128xf32>
    %942 = vector.broadcast %941 : vector<1x128xf32> to vector<8x128xf32>
    %943 = arith.mulf %914, %942 : vector<8x128xf32>
    %944 = arith.addf %890, %943 : vector<8x128xf32>
    %945 = vector.extract_strided_slice %906 {offsets = [7, 0], sizes = [1, 128], strides = [1, 1]} : vector<8x128xf32> to vector<1x128xf32>
    %946 = vector.broadcast %945 : vector<1x128xf32> to vector<8x128xf32>
    %947 = arith.mulf %914, %946 : vector<8x128xf32>
    %948 = arith.addf %894, %947 : vector<8x128xf32>
    %c0_334 = arith.constant 0 : index
    %c11_335 = arith.constant 11 : index
    %949 = memref.load %arg3[%c0_334, %c11_335] : memref<4x32xf32, #tpu.memory_space<smem>>
    %c1_336 = arith.constant 1 : index
    %c11_337 = arith.constant 11 : index
    %950 = memref.load %arg3[%c1_336, %c11_337] : memref<4x32xf32, #tpu.memory_space<smem>>
    %c2_338 = arith.constant 2 : index
    %c11_339 = arith.constant 11 : index
    %951 = memref.load %arg3[%c2_338, %c11_339] : memref<4x32xf32, #tpu.memory_space<smem>>
    %c3_340 = arith.constant 3 : index
    %c11_341 = arith.constant 11 : index
    %952 = memref.load %arg3[%c3_340, %c11_341] : memref<4x32xf32, #tpu.memory_space<smem>>
    %c11_342 = arith.constant 11 : index
    %c0_343 = arith.constant 0 : index
    %c0_344 = arith.constant 0 : index
    %953 = vector.load %arg1[%c11_342, %c0_343, %c0_344] : memref<32x8x128xf32, #tpu.memory_space<vmem>>, vector<1x8x128xf32>
    %954 = vector.shape_cast %953 : vector<1x8x128xf32> to vector<8x128xf32>
    %955 = arith.subf %954, %325 : vector<8x128xf32>
    %956 = arith.mulf %955, %342 : vector<8x128xf32>
    %957 = vector.broadcast %949 : f32 to vector<8x128xf32>
    %958 = arith.mulf %956, %957 : vector<8x128xf32>
    %959 = vector.broadcast %950 : f32 to vector<8x128xf32>
    %960 = arith.addf %958, %959 : vector<8x128xf32>
    %c11_345 = arith.constant 11 : index
    %c0_346 = arith.constant 0 : index
    %c0_347 = arith.constant 0 : index
    %961 = vector.load %arg2[%c11_345, %c0_346, %c0_347] : memref<32x8x128xf32, #tpu.memory_space<vmem>>, vector<1x8x128xf32>
    %962 = vector.shape_cast %961 : vector<1x8x128xf32> to vector<8x128xf32>
    %963 = arith.subf %962, %327 : vector<8x128xf32>
    %964 = arith.mulf %963, %345 : vector<8x128xf32>
    %965 = vector.broadcast %951 : f32 to vector<8x128xf32>
    %966 = arith.mulf %964, %965 : vector<8x128xf32>
    %967 = vector.broadcast %952 : f32 to vector<8x128xf32>
    %968 = arith.addf %966, %967 : vector<8x128xf32>
    %969 = arith.mulf %960, %960 : vector<8x128xf32>
    %970 = arith.addf %916, %969 : vector<8x128xf32>
    %971 = vector.extract_strided_slice %960 {offsets = [0, 0], sizes = [1, 128], strides = [1, 1]} : vector<8x128xf32> to vector<1x128xf32>
    %972 = vector.broadcast %971 : vector<1x128xf32> to vector<8x128xf32>
    %973 = arith.mulf %968, %972 : vector<8x128xf32>
    %974 = arith.addf %920, %973 : vector<8x128xf32>
    %975 = vector.extract_strided_slice %960 {offsets = [1, 0], sizes = [1, 128], strides = [1, 1]} : vector<8x128xf32> to vector<1x128xf32>
    %976 = vector.broadcast %975 : vector<1x128xf32> to vector<8x128xf32>
    %977 = arith.mulf %968, %976 : vector<8x128xf32>
    %978 = arith.addf %924, %977 : vector<8x128xf32>
    %979 = vector.extract_strided_slice %960 {offsets = [2, 0], sizes = [1, 128], strides = [1, 1]} : vector<8x128xf32> to vector<1x128xf32>
    %980 = vector.broadcast %979 : vector<1x128xf32> to vector<8x128xf32>
    %981 = arith.mulf %968, %980 : vector<8x128xf32>
    %982 = arith.addf %928, %981 : vector<8x128xf32>
    %983 = vector.extract_strided_slice %960 {offsets = [3, 0], sizes = [1, 128], strides = [1, 1]} : vector<8x128xf32> to vector<1x128xf32>
    %984 = vector.broadcast %983 : vector<1x128xf32> to vector<8x128xf32>
    %985 = arith.mulf %968, %984 : vector<8x128xf32>
    %986 = arith.addf %932, %985 : vector<8x128xf32>
    %987 = vector.extract_strided_slice %960 {offsets = [4, 0], sizes = [1, 128], strides = [1, 1]} : vector<8x128xf32> to vector<1x128xf32>
    %988 = vector.broadcast %987 : vector<1x128xf32> to vector<8x128xf32>
    %989 = arith.mulf %968, %988 : vector<8x128xf32>
    %990 = arith.addf %936, %989 : vector<8x128xf32>
    %991 = vector.extract_strided_slice %960 {offsets = [5, 0], sizes = [1, 128], strides = [1, 1]} : vector<8x128xf32> to vector<1x128xf32>
    %992 = vector.broadcast %991 : vector<1x128xf32> to vector<8x128xf32>
    %993 = arith.mulf %968, %992 : vector<8x128xf32>
    %994 = arith.addf %940, %993 : vector<8x128xf32>
    %995 = vector.extract_strided_slice %960 {offsets = [6, 0], sizes = [1, 128], strides = [1, 1]} : vector<8x128xf32> to vector<1x128xf32>
    %996 = vector.broadcast %995 : vector<1x128xf32> to vector<8x128xf32>
    %997 = arith.mulf %968, %996 : vector<8x128xf32>
    %998 = arith.addf %944, %997 : vector<8x128xf32>
    %999 = vector.extract_strided_slice %960 {offsets = [7, 0], sizes = [1, 128], strides = [1, 1]} : vector<8x128xf32> to vector<1x128xf32>
    %1000 = vector.broadcast %999 : vector<1x128xf32> to vector<8x128xf32>
    %1001 = arith.mulf %968, %1000 : vector<8x128xf32>
    %1002 = arith.addf %948, %1001 : vector<8x128xf32>
    %c0_348 = arith.constant 0 : index
    %c12_349 = arith.constant 12 : index
    %1003 = memref.load %arg3[%c0_348, %c12_349] : memref<4x32xf32, #tpu.memory_space<smem>>
    %c1_350 = arith.constant 1 : index
    %c12_351 = arith.constant 12 : index
    %1004 = memref.load %arg3[%c1_350, %c12_351] : memref<4x32xf32, #tpu.memory_space<smem>>
    %c2_352 = arith.constant 2 : index
    %c12_353 = arith.constant 12 : index
    %1005 = memref.load %arg3[%c2_352, %c12_353] : memref<4x32xf32, #tpu.memory_space<smem>>
    %c3_354 = arith.constant 3 : index
    %c12_355 = arith.constant 12 : index
    %1006 = memref.load %arg3[%c3_354, %c12_355] : memref<4x32xf32, #tpu.memory_space<smem>>
    %c12_356 = arith.constant 12 : index
    %c0_357 = arith.constant 0 : index
    %c0_358 = arith.constant 0 : index
    %1007 = vector.load %arg1[%c12_356, %c0_357, %c0_358] : memref<32x8x128xf32, #tpu.memory_space<vmem>>, vector<1x8x128xf32>
    %1008 = vector.shape_cast %1007 : vector<1x8x128xf32> to vector<8x128xf32>
    %1009 = arith.subf %1008, %325 : vector<8x128xf32>
    %1010 = arith.mulf %1009, %342 : vector<8x128xf32>
    %1011 = vector.broadcast %1003 : f32 to vector<8x128xf32>
    %1012 = arith.mulf %1010, %1011 : vector<8x128xf32>
    %1013 = vector.broadcast %1004 : f32 to vector<8x128xf32>
    %1014 = arith.addf %1012, %1013 : vector<8x128xf32>
    %c12_359 = arith.constant 12 : index
    %c0_360 = arith.constant 0 : index
    %c0_361 = arith.constant 0 : index
    %1015 = vector.load %arg2[%c12_359, %c0_360, %c0_361] : memref<32x8x128xf32, #tpu.memory_space<vmem>>, vector<1x8x128xf32>
    %1016 = vector.shape_cast %1015 : vector<1x8x128xf32> to vector<8x128xf32>
    %1017 = arith.subf %1016, %327 : vector<8x128xf32>
    %1018 = arith.mulf %1017, %345 : vector<8x128xf32>
    %1019 = vector.broadcast %1005 : f32 to vector<8x128xf32>
    %1020 = arith.mulf %1018, %1019 : vector<8x128xf32>
    %1021 = vector.broadcast %1006 : f32 to vector<8x128xf32>
    %1022 = arith.addf %1020, %1021 : vector<8x128xf32>
    %1023 = arith.mulf %1014, %1014 : vector<8x128xf32>
    %1024 = arith.addf %970, %1023 : vector<8x128xf32>
    %1025 = vector.extract_strided_slice %1014 {offsets = [0, 0], sizes = [1, 128], strides = [1, 1]} : vector<8x128xf32> to vector<1x128xf32>
    %1026 = vector.broadcast %1025 : vector<1x128xf32> to vector<8x128xf32>
    %1027 = arith.mulf %1022, %1026 : vector<8x128xf32>
    %1028 = arith.addf %974, %1027 : vector<8x128xf32>
    %1029 = vector.extract_strided_slice %1014 {offsets = [1, 0], sizes = [1, 128], strides = [1, 1]} : vector<8x128xf32> to vector<1x128xf32>
    %1030 = vector.broadcast %1029 : vector<1x128xf32> to vector<8x128xf32>
    %1031 = arith.mulf %1022, %1030 : vector<8x128xf32>
    %1032 = arith.addf %978, %1031 : vector<8x128xf32>
    %1033 = vector.extract_strided_slice %1014 {offsets = [2, 0], sizes = [1, 128], strides = [1, 1]} : vector<8x128xf32> to vector<1x128xf32>
    %1034 = vector.broadcast %1033 : vector<1x128xf32> to vector<8x128xf32>
    %1035 = arith.mulf %1022, %1034 : vector<8x128xf32>
    %1036 = arith.addf %982, %1035 : vector<8x128xf32>
    %1037 = vector.extract_strided_slice %1014 {offsets = [3, 0], sizes = [1, 128], strides = [1, 1]} : vector<8x128xf32> to vector<1x128xf32>
    %1038 = vector.broadcast %1037 : vector<1x128xf32> to vector<8x128xf32>
    %1039 = arith.mulf %1022, %1038 : vector<8x128xf32>
    %1040 = arith.addf %986, %1039 : vector<8x128xf32>
    %1041 = vector.extract_strided_slice %1014 {offsets = [4, 0], sizes = [1, 128], strides = [1, 1]} : vector<8x128xf32> to vector<1x128xf32>
    %1042 = vector.broadcast %1041 : vector<1x128xf32> to vector<8x128xf32>
    %1043 = arith.mulf %1022, %1042 : vector<8x128xf32>
    %1044 = arith.addf %990, %1043 : vector<8x128xf32>
    %1045 = vector.extract_strided_slice %1014 {offsets = [5, 0], sizes = [1, 128], strides = [1, 1]} : vector<8x128xf32> to vector<1x128xf32>
    %1046 = vector.broadcast %1045 : vector<1x128xf32> to vector<8x128xf32>
    %1047 = arith.mulf %1022, %1046 : vector<8x128xf32>
    %1048 = arith.addf %994, %1047 : vector<8x128xf32>
    %1049 = vector.extract_strided_slice %1014 {offsets = [6, 0], sizes = [1, 128], strides = [1, 1]} : vector<8x128xf32> to vector<1x128xf32>
    %1050 = vector.broadcast %1049 : vector<1x128xf32> to vector<8x128xf32>
    %1051 = arith.mulf %1022, %1050 : vector<8x128xf32>
    %1052 = arith.addf %998, %1051 : vector<8x128xf32>
    %1053 = vector.extract_strided_slice %1014 {offsets = [7, 0], sizes = [1, 128], strides = [1, 1]} : vector<8x128xf32> to vector<1x128xf32>
    %1054 = vector.broadcast %1053 : vector<1x128xf32> to vector<8x128xf32>
    %1055 = arith.mulf %1022, %1054 : vector<8x128xf32>
    %1056 = arith.addf %1002, %1055 : vector<8x128xf32>
    %c0_362 = arith.constant 0 : index
    %c13_363 = arith.constant 13 : index
    %1057 = memref.load %arg3[%c0_362, %c13_363] : memref<4x32xf32, #tpu.memory_space<smem>>
    %c1_364 = arith.constant 1 : index
    %c13_365 = arith.constant 13 : index
    %1058 = memref.load %arg3[%c1_364, %c13_365] : memref<4x32xf32, #tpu.memory_space<smem>>
    %c2_366 = arith.constant 2 : index
    %c13_367 = arith.constant 13 : index
    %1059 = memref.load %arg3[%c2_366, %c13_367] : memref<4x32xf32, #tpu.memory_space<smem>>
    %c3_368 = arith.constant 3 : index
    %c13_369 = arith.constant 13 : index
    %1060 = memref.load %arg3[%c3_368, %c13_369] : memref<4x32xf32, #tpu.memory_space<smem>>
    %c13_370 = arith.constant 13 : index
    %c0_371 = arith.constant 0 : index
    %c0_372 = arith.constant 0 : index
    %1061 = vector.load %arg1[%c13_370, %c0_371, %c0_372] : memref<32x8x128xf32, #tpu.memory_space<vmem>>, vector<1x8x128xf32>
    %1062 = vector.shape_cast %1061 : vector<1x8x128xf32> to vector<8x128xf32>
    %1063 = arith.subf %1062, %325 : vector<8x128xf32>
    %1064 = arith.mulf %1063, %342 : vector<8x128xf32>
    %1065 = vector.broadcast %1057 : f32 to vector<8x128xf32>
    %1066 = arith.mulf %1064, %1065 : vector<8x128xf32>
    %1067 = vector.broadcast %1058 : f32 to vector<8x128xf32>
    %1068 = arith.addf %1066, %1067 : vector<8x128xf32>
    %c13_373 = arith.constant 13 : index
    %c0_374 = arith.constant 0 : index
    %c0_375 = arith.constant 0 : index
    %1069 = vector.load %arg2[%c13_373, %c0_374, %c0_375] : memref<32x8x128xf32, #tpu.memory_space<vmem>>, vector<1x8x128xf32>
    %1070 = vector.shape_cast %1069 : vector<1x8x128xf32> to vector<8x128xf32>
    %1071 = arith.subf %1070, %327 : vector<8x128xf32>
    %1072 = arith.mulf %1071, %345 : vector<8x128xf32>
    %1073 = vector.broadcast %1059 : f32 to vector<8x128xf32>
    %1074 = arith.mulf %1072, %1073 : vector<8x128xf32>
    %1075 = vector.broadcast %1060 : f32 to vector<8x128xf32>
    %1076 = arith.addf %1074, %1075 : vector<8x128xf32>
    %1077 = arith.mulf %1068, %1068 : vector<8x128xf32>
    %1078 = arith.addf %1024, %1077 : vector<8x128xf32>
    %1079 = vector.extract_strided_slice %1068 {offsets = [0, 0], sizes = [1, 128], strides = [1, 1]} : vector<8x128xf32> to vector<1x128xf32>
    %1080 = vector.broadcast %1079 : vector<1x128xf32> to vector<8x128xf32>
    %1081 = arith.mulf %1076, %1080 : vector<8x128xf32>
    %1082 = arith.addf %1028, %1081 : vector<8x128xf32>
    %1083 = vector.extract_strided_slice %1068 {offsets = [1, 0], sizes = [1, 128], strides = [1, 1]} : vector<8x128xf32> to vector<1x128xf32>
    %1084 = vector.broadcast %1083 : vector<1x128xf32> to vector<8x128xf32>
    %1085 = arith.mulf %1076, %1084 : vector<8x128xf32>
    %1086 = arith.addf %1032, %1085 : vector<8x128xf32>
    %1087 = vector.extract_strided_slice %1068 {offsets = [2, 0], sizes = [1, 128], strides = [1, 1]} : vector<8x128xf32> to vector<1x128xf32>
    %1088 = vector.broadcast %1087 : vector<1x128xf32> to vector<8x128xf32>
    %1089 = arith.mulf %1076, %1088 : vector<8x128xf32>
    %1090 = arith.addf %1036, %1089 : vector<8x128xf32>
    %1091 = vector.extract_strided_slice %1068 {offsets = [3, 0], sizes = [1, 128], strides = [1, 1]} : vector<8x128xf32> to vector<1x128xf32>
    %1092 = vector.broadcast %1091 : vector<1x128xf32> to vector<8x128xf32>
    %1093 = arith.mulf %1076, %1092 : vector<8x128xf32>
    %1094 = arith.addf %1040, %1093 : vector<8x128xf32>
    %1095 = vector.extract_strided_slice %1068 {offsets = [4, 0], sizes = [1, 128], strides = [1, 1]} : vector<8x128xf32> to vector<1x128xf32>
    %1096 = vector.broadcast %1095 : vector<1x128xf32> to vector<8x128xf32>
    %1097 = arith.mulf %1076, %1096 : vector<8x128xf32>
    %1098 = arith.addf %1044, %1097 : vector<8x128xf32>
    %1099 = vector.extract_strided_slice %1068 {offsets = [5, 0], sizes = [1, 128], strides = [1, 1]} : vector<8x128xf32> to vector<1x128xf32>
    %1100 = vector.broadcast %1099 : vector<1x128xf32> to vector<8x128xf32>
    %1101 = arith.mulf %1076, %1100 : vector<8x128xf32>
    %1102 = arith.addf %1048, %1101 : vector<8x128xf32>
    %1103 = vector.extract_strided_slice %1068 {offsets = [6, 0], sizes = [1, 128], strides = [1, 1]} : vector<8x128xf32> to vector<1x128xf32>
    %1104 = vector.broadcast %1103 : vector<1x128xf32> to vector<8x128xf32>
    %1105 = arith.mulf %1076, %1104 : vector<8x128xf32>
    %1106 = arith.addf %1052, %1105 : vector<8x128xf32>
    %1107 = vector.extract_strided_slice %1068 {offsets = [7, 0], sizes = [1, 128], strides = [1, 1]} : vector<8x128xf32> to vector<1x128xf32>
    %1108 = vector.broadcast %1107 : vector<1x128xf32> to vector<8x128xf32>
    %1109 = arith.mulf %1076, %1108 : vector<8x128xf32>
    %1110 = arith.addf %1056, %1109 : vector<8x128xf32>
    %c0_376 = arith.constant 0 : index
    %c14_377 = arith.constant 14 : index
    %1111 = memref.load %arg3[%c0_376, %c14_377] : memref<4x32xf32, #tpu.memory_space<smem>>
    %c1_378 = arith.constant 1 : index
    %c14_379 = arith.constant 14 : index
    %1112 = memref.load %arg3[%c1_378, %c14_379] : memref<4x32xf32, #tpu.memory_space<smem>>
    %c2_380 = arith.constant 2 : index
    %c14_381 = arith.constant 14 : index
    %1113 = memref.load %arg3[%c2_380, %c14_381] : memref<4x32xf32, #tpu.memory_space<smem>>
    %c3_382 = arith.constant 3 : index
    %c14_383 = arith.constant 14 : index
    %1114 = memref.load %arg3[%c3_382, %c14_383] : memref<4x32xf32, #tpu.memory_space<smem>>
    %c14_384 = arith.constant 14 : index
    %c0_385 = arith.constant 0 : index
    %c0_386 = arith.constant 0 : index
    %1115 = vector.load %arg1[%c14_384, %c0_385, %c0_386] : memref<32x8x128xf32, #tpu.memory_space<vmem>>, vector<1x8x128xf32>
    %1116 = vector.shape_cast %1115 : vector<1x8x128xf32> to vector<8x128xf32>
    %1117 = arith.subf %1116, %325 : vector<8x128xf32>
    %1118 = arith.mulf %1117, %342 : vector<8x128xf32>
    %1119 = vector.broadcast %1111 : f32 to vector<8x128xf32>
    %1120 = arith.mulf %1118, %1119 : vector<8x128xf32>
    %1121 = vector.broadcast %1112 : f32 to vector<8x128xf32>
    %1122 = arith.addf %1120, %1121 : vector<8x128xf32>
    %c14_387 = arith.constant 14 : index
    %c0_388 = arith.constant 0 : index
    %c0_389 = arith.constant 0 : index
    %1123 = vector.load %arg2[%c14_387, %c0_388, %c0_389] : memref<32x8x128xf32, #tpu.memory_space<vmem>>, vector<1x8x128xf32>
    %1124 = vector.shape_cast %1123 : vector<1x8x128xf32> to vector<8x128xf32>
    %1125 = arith.subf %1124, %327 : vector<8x128xf32>
    %1126 = arith.mulf %1125, %345 : vector<8x128xf32>
    %1127 = vector.broadcast %1113 : f32 to vector<8x128xf32>
    %1128 = arith.mulf %1126, %1127 : vector<8x128xf32>
    %1129 = vector.broadcast %1114 : f32 to vector<8x128xf32>
    %1130 = arith.addf %1128, %1129 : vector<8x128xf32>
    %1131 = arith.mulf %1122, %1122 : vector<8x128xf32>
    %1132 = arith.addf %1078, %1131 : vector<8x128xf32>
    %1133 = vector.extract_strided_slice %1122 {offsets = [0, 0], sizes = [1, 128], strides = [1, 1]} : vector<8x128xf32> to vector<1x128xf32>
    %1134 = vector.broadcast %1133 : vector<1x128xf32> to vector<8x128xf32>
    %1135 = arith.mulf %1130, %1134 : vector<8x128xf32>
    %1136 = arith.addf %1082, %1135 : vector<8x128xf32>
    %1137 = vector.extract_strided_slice %1122 {offsets = [1, 0], sizes = [1, 128], strides = [1, 1]} : vector<8x128xf32> to vector<1x128xf32>
    %1138 = vector.broadcast %1137 : vector<1x128xf32> to vector<8x128xf32>
    %1139 = arith.mulf %1130, %1138 : vector<8x128xf32>
    %1140 = arith.addf %1086, %1139 : vector<8x128xf32>
    %1141 = vector.extract_strided_slice %1122 {offsets = [2, 0], sizes = [1, 128], strides = [1, 1]} : vector<8x128xf32> to vector<1x128xf32>
    %1142 = vector.broadcast %1141 : vector<1x128xf32> to vector<8x128xf32>
    %1143 = arith.mulf %1130, %1142 : vector<8x128xf32>
    %1144 = arith.addf %1090, %1143 : vector<8x128xf32>
    %1145 = vector.extract_strided_slice %1122 {offsets = [3, 0], sizes = [1, 128], strides = [1, 1]} : vector<8x128xf32> to vector<1x128xf32>
    %1146 = vector.broadcast %1145 : vector<1x128xf32> to vector<8x128xf32>
    %1147 = arith.mulf %1130, %1146 : vector<8x128xf32>
    %1148 = arith.addf %1094, %1147 : vector<8x128xf32>
    %1149 = vector.extract_strided_slice %1122 {offsets = [4, 0], sizes = [1, 128], strides = [1, 1]} : vector<8x128xf32> to vector<1x128xf32>
    %1150 = vector.broadcast %1149 : vector<1x128xf32> to vector<8x128xf32>
    %1151 = arith.mulf %1130, %1150 : vector<8x128xf32>
    %1152 = arith.addf %1098, %1151 : vector<8x128xf32>
    %1153 = vector.extract_strided_slice %1122 {offsets = [5, 0], sizes = [1, 128], strides = [1, 1]} : vector<8x128xf32> to vector<1x128xf32>
    %1154 = vector.broadcast %1153 : vector<1x128xf32> to vector<8x128xf32>
    %1155 = arith.mulf %1130, %1154 : vector<8x128xf32>
    %1156 = arith.addf %1102, %1155 : vector<8x128xf32>
    %1157 = vector.extract_strided_slice %1122 {offsets = [6, 0], sizes = [1, 128], strides = [1, 1]} : vector<8x128xf32> to vector<1x128xf32>
    %1158 = vector.broadcast %1157 : vector<1x128xf32> to vector<8x128xf32>
    %1159 = arith.mulf %1130, %1158 : vector<8x128xf32>
    %1160 = arith.addf %1106, %1159 : vector<8x128xf32>
    %1161 = vector.extract_strided_slice %1122 {offsets = [7, 0], sizes = [1, 128], strides = [1, 1]} : vector<8x128xf32> to vector<1x128xf32>
    %1162 = vector.broadcast %1161 : vector<1x128xf32> to vector<8x128xf32>
    %1163 = arith.mulf %1130, %1162 : vector<8x128xf32>
    %1164 = arith.addf %1110, %1163 : vector<8x128xf32>
    %c0_390 = arith.constant 0 : index
    %c15_391 = arith.constant 15 : index
    %1165 = memref.load %arg3[%c0_390, %c15_391] : memref<4x32xf32, #tpu.memory_space<smem>>
    %c1_392 = arith.constant 1 : index
    %c15_393 = arith.constant 15 : index
    %1166 = memref.load %arg3[%c1_392, %c15_393] : memref<4x32xf32, #tpu.memory_space<smem>>
    %c2_394 = arith.constant 2 : index
    %c15_395 = arith.constant 15 : index
    %1167 = memref.load %arg3[%c2_394, %c15_395] : memref<4x32xf32, #tpu.memory_space<smem>>
    %c3_396 = arith.constant 3 : index
    %c15_397 = arith.constant 15 : index
    %1168 = memref.load %arg3[%c3_396, %c15_397] : memref<4x32xf32, #tpu.memory_space<smem>>
    %c15_398 = arith.constant 15 : index
    %c0_399 = arith.constant 0 : index
    %c0_400 = arith.constant 0 : index
    %1169 = vector.load %arg1[%c15_398, %c0_399, %c0_400] : memref<32x8x128xf32, #tpu.memory_space<vmem>>, vector<1x8x128xf32>
    %1170 = vector.shape_cast %1169 : vector<1x8x128xf32> to vector<8x128xf32>
    %1171 = arith.subf %1170, %325 : vector<8x128xf32>
    %1172 = arith.mulf %1171, %342 : vector<8x128xf32>
    %1173 = vector.broadcast %1165 : f32 to vector<8x128xf32>
    %1174 = arith.mulf %1172, %1173 : vector<8x128xf32>
    %1175 = vector.broadcast %1166 : f32 to vector<8x128xf32>
    %1176 = arith.addf %1174, %1175 : vector<8x128xf32>
    %c15_401 = arith.constant 15 : index
    %c0_402 = arith.constant 0 : index
    %c0_403 = arith.constant 0 : index
    %1177 = vector.load %arg2[%c15_401, %c0_402, %c0_403] : memref<32x8x128xf32, #tpu.memory_space<vmem>>, vector<1x8x128xf32>
    %1178 = vector.shape_cast %1177 : vector<1x8x128xf32> to vector<8x128xf32>
    %1179 = arith.subf %1178, %327 : vector<8x128xf32>
    %1180 = arith.mulf %1179, %345 : vector<8x128xf32>
    %1181 = vector.broadcast %1167 : f32 to vector<8x128xf32>
    %1182 = arith.mulf %1180, %1181 : vector<8x128xf32>
    %1183 = vector.broadcast %1168 : f32 to vector<8x128xf32>
    %1184 = arith.addf %1182, %1183 : vector<8x128xf32>
    %1185 = arith.mulf %1176, %1176 : vector<8x128xf32>
    %1186 = arith.addf %1132, %1185 : vector<8x128xf32>
    %1187 = vector.extract_strided_slice %1176 {offsets = [0, 0], sizes = [1, 128], strides = [1, 1]} : vector<8x128xf32> to vector<1x128xf32>
    %1188 = vector.broadcast %1187 : vector<1x128xf32> to vector<8x128xf32>
    %1189 = arith.mulf %1184, %1188 : vector<8x128xf32>
    %1190 = arith.addf %1136, %1189 : vector<8x128xf32>
    %1191 = vector.extract_strided_slice %1176 {offsets = [1, 0], sizes = [1, 128], strides = [1, 1]} : vector<8x128xf32> to vector<1x128xf32>
    %1192 = vector.broadcast %1191 : vector<1x128xf32> to vector<8x128xf32>
    %1193 = arith.mulf %1184, %1192 : vector<8x128xf32>
    %1194 = arith.addf %1140, %1193 : vector<8x128xf32>
    %1195 = vector.extract_strided_slice %1176 {offsets = [2, 0], sizes = [1, 128], strides = [1, 1]} : vector<8x128xf32> to vector<1x128xf32>
    %1196 = vector.broadcast %1195 : vector<1x128xf32> to vector<8x128xf32>
    %1197 = arith.mulf %1184, %1196 : vector<8x128xf32>
    %1198 = arith.addf %1144, %1197 : vector<8x128xf32>
    %1199 = vector.extract_strided_slice %1176 {offsets = [3, 0], sizes = [1, 128], strides = [1, 1]} : vector<8x128xf32> to vector<1x128xf32>
    %1200 = vector.broadcast %1199 : vector<1x128xf32> to vector<8x128xf32>
    %1201 = arith.mulf %1184, %1200 : vector<8x128xf32>
    %1202 = arith.addf %1148, %1201 : vector<8x128xf32>
    %1203 = vector.extract_strided_slice %1176 {offsets = [4, 0], sizes = [1, 128], strides = [1, 1]} : vector<8x128xf32> to vector<1x128xf32>
    %1204 = vector.broadcast %1203 : vector<1x128xf32> to vector<8x128xf32>
    %1205 = arith.mulf %1184, %1204 : vector<8x128xf32>
    %1206 = arith.addf %1152, %1205 : vector<8x128xf32>
    %1207 = vector.extract_strided_slice %1176 {offsets = [5, 0], sizes = [1, 128], strides = [1, 1]} : vector<8x128xf32> to vector<1x128xf32>
    %1208 = vector.broadcast %1207 : vector<1x128xf32> to vector<8x128xf32>
    %1209 = arith.mulf %1184, %1208 : vector<8x128xf32>
    %1210 = arith.addf %1156, %1209 : vector<8x128xf32>
    %1211 = vector.extract_strided_slice %1176 {offsets = [6, 0], sizes = [1, 128], strides = [1, 1]} : vector<8x128xf32> to vector<1x128xf32>
    %1212 = vector.broadcast %1211 : vector<1x128xf32> to vector<8x128xf32>
    %1213 = arith.mulf %1184, %1212 : vector<8x128xf32>
    %1214 = arith.addf %1160, %1213 : vector<8x128xf32>
    %1215 = vector.extract_strided_slice %1176 {offsets = [7, 0], sizes = [1, 128], strides = [1, 1]} : vector<8x128xf32> to vector<1x128xf32>
    %1216 = vector.broadcast %1215 : vector<1x128xf32> to vector<8x128xf32>
    %1217 = arith.mulf %1184, %1216 : vector<8x128xf32>
    %1218 = arith.addf %1164, %1217 : vector<8x128xf32>
    %c0_404 = arith.constant 0 : index
    %c16_405 = arith.constant 16 : index
    %1219 = memref.load %arg3[%c0_404, %c16_405] : memref<4x32xf32, #tpu.memory_space<smem>>
    %c1_406 = arith.constant 1 : index
    %c16_407 = arith.constant 16 : index
    %1220 = memref.load %arg3[%c1_406, %c16_407] : memref<4x32xf32, #tpu.memory_space<smem>>
    %c2_408 = arith.constant 2 : index
    %c16_409 = arith.constant 16 : index
    %1221 = memref.load %arg3[%c2_408, %c16_409] : memref<4x32xf32, #tpu.memory_space<smem>>
    %c3_410 = arith.constant 3 : index
    %c16_411 = arith.constant 16 : index
    %1222 = memref.load %arg3[%c3_410, %c16_411] : memref<4x32xf32, #tpu.memory_space<smem>>
    %c16_412 = arith.constant 16 : index
    %c0_413 = arith.constant 0 : index
    %c0_414 = arith.constant 0 : index
    %1223 = vector.load %arg1[%c16_412, %c0_413, %c0_414] : memref<32x8x128xf32, #tpu.memory_space<vmem>>, vector<1x8x128xf32>
    %1224 = vector.shape_cast %1223 : vector<1x8x128xf32> to vector<8x128xf32>
    %1225 = arith.subf %1224, %325 : vector<8x128xf32>
    %1226 = arith.mulf %1225, %342 : vector<8x128xf32>
    %1227 = vector.broadcast %1219 : f32 to vector<8x128xf32>
    %1228 = arith.mulf %1226, %1227 : vector<8x128xf32>
    %1229 = vector.broadcast %1220 : f32 to vector<8x128xf32>
    %1230 = arith.addf %1228, %1229 : vector<8x128xf32>
    %c16_415 = arith.constant 16 : index
    %c0_416 = arith.constant 0 : index
    %c0_417 = arith.constant 0 : index
    %1231 = vector.load %arg2[%c16_415, %c0_416, %c0_417] : memref<32x8x128xf32, #tpu.memory_space<vmem>>, vector<1x8x128xf32>
    %1232 = vector.shape_cast %1231 : vector<1x8x128xf32> to vector<8x128xf32>
    %1233 = arith.subf %1232, %327 : vector<8x128xf32>
    %1234 = arith.mulf %1233, %345 : vector<8x128xf32>
    %1235 = vector.broadcast %1221 : f32 to vector<8x128xf32>
    %1236 = arith.mulf %1234, %1235 : vector<8x128xf32>
    %1237 = vector.broadcast %1222 : f32 to vector<8x128xf32>
    %1238 = arith.addf %1236, %1237 : vector<8x128xf32>
    %1239 = arith.mulf %1230, %1230 : vector<8x128xf32>
    %1240 = arith.addf %1186, %1239 : vector<8x128xf32>
    %1241 = vector.extract_strided_slice %1230 {offsets = [0, 0], sizes = [1, 128], strides = [1, 1]} : vector<8x128xf32> to vector<1x128xf32>
    %1242 = vector.broadcast %1241 : vector<1x128xf32> to vector<8x128xf32>
    %1243 = arith.mulf %1238, %1242 : vector<8x128xf32>
    %1244 = arith.addf %1190, %1243 : vector<8x128xf32>
    %1245 = vector.extract_strided_slice %1230 {offsets = [1, 0], sizes = [1, 128], strides = [1, 1]} : vector<8x128xf32> to vector<1x128xf32>
    %1246 = vector.broadcast %1245 : vector<1x128xf32> to vector<8x128xf32>
    %1247 = arith.mulf %1238, %1246 : vector<8x128xf32>
    %1248 = arith.addf %1194, %1247 : vector<8x128xf32>
    %1249 = vector.extract_strided_slice %1230 {offsets = [2, 0], sizes = [1, 128], strides = [1, 1]} : vector<8x128xf32> to vector<1x128xf32>
    %1250 = vector.broadcast %1249 : vector<1x128xf32> to vector<8x128xf32>
    %1251 = arith.mulf %1238, %1250 : vector<8x128xf32>
    %1252 = arith.addf %1198, %1251 : vector<8x128xf32>
    %1253 = vector.extract_strided_slice %1230 {offsets = [3, 0], sizes = [1, 128], strides = [1, 1]} : vector<8x128xf32> to vector<1x128xf32>
    %1254 = vector.broadcast %1253 : vector<1x128xf32> to vector<8x128xf32>
    %1255 = arith.mulf %1238, %1254 : vector<8x128xf32>
    %1256 = arith.addf %1202, %1255 : vector<8x128xf32>
    %1257 = vector.extract_strided_slice %1230 {offsets = [4, 0], sizes = [1, 128], strides = [1, 1]} : vector<8x128xf32> to vector<1x128xf32>
    %1258 = vector.broadcast %1257 : vector<1x128xf32> to vector<8x128xf32>
    %1259 = arith.mulf %1238, %1258 : vector<8x128xf32>
    %1260 = arith.addf %1206, %1259 : vector<8x128xf32>
    %1261 = vector.extract_strided_slice %1230 {offsets = [5, 0], sizes = [1, 128], strides = [1, 1]} : vector<8x128xf32> to vector<1x128xf32>
    %1262 = vector.broadcast %1261 : vector<1x128xf32> to vector<8x128xf32>
    %1263 = arith.mulf %1238, %1262 : vector<8x128xf32>
    %1264 = arith.addf %1210, %1263 : vector<8x128xf32>
    %1265 = vector.extract_strided_slice %1230 {offsets = [6, 0], sizes = [1, 128], strides = [1, 1]} : vector<8x128xf32> to vector<1x128xf32>
    %1266 = vector.broadcast %1265 : vector<1x128xf32> to vector<8x128xf32>
    %1267 = arith.mulf %1238, %1266 : vector<8x128xf32>
    %1268 = arith.addf %1214, %1267 : vector<8x128xf32>
    %1269 = vector.extract_strided_slice %1230 {offsets = [7, 0], sizes = [1, 128], strides = [1, 1]} : vector<8x128xf32> to vector<1x128xf32>
    %1270 = vector.broadcast %1269 : vector<1x128xf32> to vector<8x128xf32>
    %1271 = arith.mulf %1238, %1270 : vector<8x128xf32>
    %1272 = arith.addf %1218, %1271 : vector<8x128xf32>
    %c0_418 = arith.constant 0 : index
    %c17_419 = arith.constant 17 : index
    %1273 = memref.load %arg3[%c0_418, %c17_419] : memref<4x32xf32, #tpu.memory_space<smem>>
    %c1_420 = arith.constant 1 : index
    %c17_421 = arith.constant 17 : index
    %1274 = memref.load %arg3[%c1_420, %c17_421] : memref<4x32xf32, #tpu.memory_space<smem>>
    %c2_422 = arith.constant 2 : index
    %c17_423 = arith.constant 17 : index
    %1275 = memref.load %arg3[%c2_422, %c17_423] : memref<4x32xf32, #tpu.memory_space<smem>>
    %c3_424 = arith.constant 3 : index
    %c17_425 = arith.constant 17 : index
    %1276 = memref.load %arg3[%c3_424, %c17_425] : memref<4x32xf32, #tpu.memory_space<smem>>
    %c17_426 = arith.constant 17 : index
    %c0_427 = arith.constant 0 : index
    %c0_428 = arith.constant 0 : index
    %1277 = vector.load %arg1[%c17_426, %c0_427, %c0_428] : memref<32x8x128xf32, #tpu.memory_space<vmem>>, vector<1x8x128xf32>
    %1278 = vector.shape_cast %1277 : vector<1x8x128xf32> to vector<8x128xf32>
    %1279 = arith.subf %1278, %325 : vector<8x128xf32>
    %1280 = arith.mulf %1279, %342 : vector<8x128xf32>
    %1281 = vector.broadcast %1273 : f32 to vector<8x128xf32>
    %1282 = arith.mulf %1280, %1281 : vector<8x128xf32>
    %1283 = vector.broadcast %1274 : f32 to vector<8x128xf32>
    %1284 = arith.addf %1282, %1283 : vector<8x128xf32>
    %c17_429 = arith.constant 17 : index
    %c0_430 = arith.constant 0 : index
    %c0_431 = arith.constant 0 : index
    %1285 = vector.load %arg2[%c17_429, %c0_430, %c0_431] : memref<32x8x128xf32, #tpu.memory_space<vmem>>, vector<1x8x128xf32>
    %1286 = vector.shape_cast %1285 : vector<1x8x128xf32> to vector<8x128xf32>
    %1287 = arith.subf %1286, %327 : vector<8x128xf32>
    %1288 = arith.mulf %1287, %345 : vector<8x128xf32>
    %1289 = vector.broadcast %1275 : f32 to vector<8x128xf32>
    %1290 = arith.mulf %1288, %1289 : vector<8x128xf32>
    %1291 = vector.broadcast %1276 : f32 to vector<8x128xf32>
    %1292 = arith.addf %1290, %1291 : vector<8x128xf32>
    %1293 = arith.mulf %1284, %1284 : vector<8x128xf32>
    %1294 = arith.addf %1240, %1293 : vector<8x128xf32>
    %1295 = vector.extract_strided_slice %1284 {offsets = [0, 0], sizes = [1, 128], strides = [1, 1]} : vector<8x128xf32> to vector<1x128xf32>
    %1296 = vector.broadcast %1295 : vector<1x128xf32> to vector<8x128xf32>
    %1297 = arith.mulf %1292, %1296 : vector<8x128xf32>
    %1298 = arith.addf %1244, %1297 : vector<8x128xf32>
    %1299 = vector.extract_strided_slice %1284 {offsets = [1, 0], sizes = [1, 128], strides = [1, 1]} : vector<8x128xf32> to vector<1x128xf32>
    %1300 = vector.broadcast %1299 : vector<1x128xf32> to vector<8x128xf32>
    %1301 = arith.mulf %1292, %1300 : vector<8x128xf32>
    %1302 = arith.addf %1248, %1301 : vector<8x128xf32>
    %1303 = vector.extract_strided_slice %1284 {offsets = [2, 0], sizes = [1, 128], strides = [1, 1]} : vector<8x128xf32> to vector<1x128xf32>
    %1304 = vector.broadcast %1303 : vector<1x128xf32> to vector<8x128xf32>
    %1305 = arith.mulf %1292, %1304 : vector<8x128xf32>
    %1306 = arith.addf %1252, %1305 : vector<8x128xf32>
    %1307 = vector.extract_strided_slice %1284 {offsets = [3, 0], sizes = [1, 128], strides = [1, 1]} : vector<8x128xf32> to vector<1x128xf32>
    %1308 = vector.broadcast %1307 : vector<1x128xf32> to vector<8x128xf32>
    %1309 = arith.mulf %1292, %1308 : vector<8x128xf32>
    %1310 = arith.addf %1256, %1309 : vector<8x128xf32>
    %1311 = vector.extract_strided_slice %1284 {offsets = [4, 0], sizes = [1, 128], strides = [1, 1]} : vector<8x128xf32> to vector<1x128xf32>
    %1312 = vector.broadcast %1311 : vector<1x128xf32> to vector<8x128xf32>
    %1313 = arith.mulf %1292, %1312 : vector<8x128xf32>
    %1314 = arith.addf %1260, %1313 : vector<8x128xf32>
    %1315 = vector.extract_strided_slice %1284 {offsets = [5, 0], sizes = [1, 128], strides = [1, 1]} : vector<8x128xf32> to vector<1x128xf32>
    %1316 = vector.broadcast %1315 : vector<1x128xf32> to vector<8x128xf32>
    %1317 = arith.mulf %1292, %1316 : vector<8x128xf32>
    %1318 = arith.addf %1264, %1317 : vector<8x128xf32>
    %1319 = vector.extract_strided_slice %1284 {offsets = [6, 0], sizes = [1, 128], strides = [1, 1]} : vector<8x128xf32> to vector<1x128xf32>
    %1320 = vector.broadcast %1319 : vector<1x128xf32> to vector<8x128xf32>
    %1321 = arith.mulf %1292, %1320 : vector<8x128xf32>
    %1322 = arith.addf %1268, %1321 : vector<8x128xf32>
    %1323 = vector.extract_strided_slice %1284 {offsets = [7, 0], sizes = [1, 128], strides = [1, 1]} : vector<8x128xf32> to vector<1x128xf32>
    %1324 = vector.broadcast %1323 : vector<1x128xf32> to vector<8x128xf32>
    %1325 = arith.mulf %1292, %1324 : vector<8x128xf32>
    %1326 = arith.addf %1272, %1325 : vector<8x128xf32>
    %c0_432 = arith.constant 0 : index
    %c18_433 = arith.constant 18 : index
    %1327 = memref.load %arg3[%c0_432, %c18_433] : memref<4x32xf32, #tpu.memory_space<smem>>
    %c1_434 = arith.constant 1 : index
    %c18_435 = arith.constant 18 : index
    %1328 = memref.load %arg3[%c1_434, %c18_435] : memref<4x32xf32, #tpu.memory_space<smem>>
    %c2_436 = arith.constant 2 : index
    %c18_437 = arith.constant 18 : index
    %1329 = memref.load %arg3[%c2_436, %c18_437] : memref<4x32xf32, #tpu.memory_space<smem>>
    %c3_438 = arith.constant 3 : index
    %c18_439 = arith.constant 18 : index
    %1330 = memref.load %arg3[%c3_438, %c18_439] : memref<4x32xf32, #tpu.memory_space<smem>>
    %c18_440 = arith.constant 18 : index
    %c0_441 = arith.constant 0 : index
    %c0_442 = arith.constant 0 : index
    %1331 = vector.load %arg1[%c18_440, %c0_441, %c0_442] : memref<32x8x128xf32, #tpu.memory_space<vmem>>, vector<1x8x128xf32>
    %1332 = vector.shape_cast %1331 : vector<1x8x128xf32> to vector<8x128xf32>
    %1333 = arith.subf %1332, %325 : vector<8x128xf32>
    %1334 = arith.mulf %1333, %342 : vector<8x128xf32>
    %1335 = vector.broadcast %1327 : f32 to vector<8x128xf32>
    %1336 = arith.mulf %1334, %1335 : vector<8x128xf32>
    %1337 = vector.broadcast %1328 : f32 to vector<8x128xf32>
    %1338 = arith.addf %1336, %1337 : vector<8x128xf32>
    %c18_443 = arith.constant 18 : index
    %c0_444 = arith.constant 0 : index
    %c0_445 = arith.constant 0 : index
    %1339 = vector.load %arg2[%c18_443, %c0_444, %c0_445] : memref<32x8x128xf32, #tpu.memory_space<vmem>>, vector<1x8x128xf32>
    %1340 = vector.shape_cast %1339 : vector<1x8x128xf32> to vector<8x128xf32>
    %1341 = arith.subf %1340, %327 : vector<8x128xf32>
    %1342 = arith.mulf %1341, %345 : vector<8x128xf32>
    %1343 = vector.broadcast %1329 : f32 to vector<8x128xf32>
    %1344 = arith.mulf %1342, %1343 : vector<8x128xf32>
    %1345 = vector.broadcast %1330 : f32 to vector<8x128xf32>
    %1346 = arith.addf %1344, %1345 : vector<8x128xf32>
    %1347 = arith.mulf %1338, %1338 : vector<8x128xf32>
    %1348 = arith.addf %1294, %1347 : vector<8x128xf32>
    %1349 = vector.extract_strided_slice %1338 {offsets = [0, 0], sizes = [1, 128], strides = [1, 1]} : vector<8x128xf32> to vector<1x128xf32>
    %1350 = vector.broadcast %1349 : vector<1x128xf32> to vector<8x128xf32>
    %1351 = arith.mulf %1346, %1350 : vector<8x128xf32>
    %1352 = arith.addf %1298, %1351 : vector<8x128xf32>
    %1353 = vector.extract_strided_slice %1338 {offsets = [1, 0], sizes = [1, 128], strides = [1, 1]} : vector<8x128xf32> to vector<1x128xf32>
    %1354 = vector.broadcast %1353 : vector<1x128xf32> to vector<8x128xf32>
    %1355 = arith.mulf %1346, %1354 : vector<8x128xf32>
    %1356 = arith.addf %1302, %1355 : vector<8x128xf32>
    %1357 = vector.extract_strided_slice %1338 {offsets = [2, 0], sizes = [1, 128], strides = [1, 1]} : vector<8x128xf32> to vector<1x128xf32>
    %1358 = vector.broadcast %1357 : vector<1x128xf32> to vector<8x128xf32>
    %1359 = arith.mulf %1346, %1358 : vector<8x128xf32>
    %1360 = arith.addf %1306, %1359 : vector<8x128xf32>
    %1361 = vector.extract_strided_slice %1338 {offsets = [3, 0], sizes = [1, 128], strides = [1, 1]} : vector<8x128xf32> to vector<1x128xf32>
    %1362 = vector.broadcast %1361 : vector<1x128xf32> to vector<8x128xf32>
    %1363 = arith.mulf %1346, %1362 : vector<8x128xf32>
    %1364 = arith.addf %1310, %1363 : vector<8x128xf32>
    %1365 = vector.extract_strided_slice %1338 {offsets = [4, 0], sizes = [1, 128], strides = [1, 1]} : vector<8x128xf32> to vector<1x128xf32>
    %1366 = vector.broadcast %1365 : vector<1x128xf32> to vector<8x128xf32>
    %1367 = arith.mulf %1346, %1366 : vector<8x128xf32>
    %1368 = arith.addf %1314, %1367 : vector<8x128xf32>
    %1369 = vector.extract_strided_slice %1338 {offsets = [5, 0], sizes = [1, 128], strides = [1, 1]} : vector<8x128xf32> to vector<1x128xf32>
    %1370 = vector.broadcast %1369 : vector<1x128xf32> to vector<8x128xf32>
    %1371 = arith.mulf %1346, %1370 : vector<8x128xf32>
    %1372 = arith.addf %1318, %1371 : vector<8x128xf32>
    %1373 = vector.extract_strided_slice %1338 {offsets = [6, 0], sizes = [1, 128], strides = [1, 1]} : vector<8x128xf32> to vector<1x128xf32>
    %1374 = vector.broadcast %1373 : vector<1x128xf32> to vector<8x128xf32>
    %1375 = arith.mulf %1346, %1374 : vector<8x128xf32>
    %1376 = arith.addf %1322, %1375 : vector<8x128xf32>
    %1377 = vector.extract_strided_slice %1338 {offsets = [7, 0], sizes = [1, 128], strides = [1, 1]} : vector<8x128xf32> to vector<1x128xf32>
    %1378 = vector.broadcast %1377 : vector<1x128xf32> to vector<8x128xf32>
    %1379 = arith.mulf %1346, %1378 : vector<8x128xf32>
    %1380 = arith.addf %1326, %1379 : vector<8x128xf32>
    %c0_446 = arith.constant 0 : index
    %c19_447 = arith.constant 19 : index
    %1381 = memref.load %arg3[%c0_446, %c19_447] : memref<4x32xf32, #tpu.memory_space<smem>>
    %c1_448 = arith.constant 1 : index
    %c19_449 = arith.constant 19 : index
    %1382 = memref.load %arg3[%c1_448, %c19_449] : memref<4x32xf32, #tpu.memory_space<smem>>
    %c2_450 = arith.constant 2 : index
    %c19_451 = arith.constant 19 : index
    %1383 = memref.load %arg3[%c2_450, %c19_451] : memref<4x32xf32, #tpu.memory_space<smem>>
    %c3_452 = arith.constant 3 : index
    %c19_453 = arith.constant 19 : index
    %1384 = memref.load %arg3[%c3_452, %c19_453] : memref<4x32xf32, #tpu.memory_space<smem>>
    %c19_454 = arith.constant 19 : index
    %c0_455 = arith.constant 0 : index
    %c0_456 = arith.constant 0 : index
    %1385 = vector.load %arg1[%c19_454, %c0_455, %c0_456] : memref<32x8x128xf32, #tpu.memory_space<vmem>>, vector<1x8x128xf32>
    %1386 = vector.shape_cast %1385 : vector<1x8x128xf32> to vector<8x128xf32>
    %1387 = arith.subf %1386, %325 : vector<8x128xf32>
    %1388 = arith.mulf %1387, %342 : vector<8x128xf32>
    %1389 = vector.broadcast %1381 : f32 to vector<8x128xf32>
    %1390 = arith.mulf %1388, %1389 : vector<8x128xf32>
    %1391 = vector.broadcast %1382 : f32 to vector<8x128xf32>
    %1392 = arith.addf %1390, %1391 : vector<8x128xf32>
    %c19_457 = arith.constant 19 : index
    %c0_458 = arith.constant 0 : index
    %c0_459 = arith.constant 0 : index
    %1393 = vector.load %arg2[%c19_457, %c0_458, %c0_459] : memref<32x8x128xf32, #tpu.memory_space<vmem>>, vector<1x8x128xf32>
    %1394 = vector.shape_cast %1393 : vector<1x8x128xf32> to vector<8x128xf32>
    %1395 = arith.subf %1394, %327 : vector<8x128xf32>
    %1396 = arith.mulf %1395, %345 : vector<8x128xf32>
    %1397 = vector.broadcast %1383 : f32 to vector<8x128xf32>
    %1398 = arith.mulf %1396, %1397 : vector<8x128xf32>
    %1399 = vector.broadcast %1384 : f32 to vector<8x128xf32>
    %1400 = arith.addf %1398, %1399 : vector<8x128xf32>
    %1401 = arith.mulf %1392, %1392 : vector<8x128xf32>
    %1402 = arith.addf %1348, %1401 : vector<8x128xf32>
    %1403 = vector.extract_strided_slice %1392 {offsets = [0, 0], sizes = [1, 128], strides = [1, 1]} : vector<8x128xf32> to vector<1x128xf32>
    %1404 = vector.broadcast %1403 : vector<1x128xf32> to vector<8x128xf32>
    %1405 = arith.mulf %1400, %1404 : vector<8x128xf32>
    %1406 = arith.addf %1352, %1405 : vector<8x128xf32>
    %1407 = vector.extract_strided_slice %1392 {offsets = [1, 0], sizes = [1, 128], strides = [1, 1]} : vector<8x128xf32> to vector<1x128xf32>
    %1408 = vector.broadcast %1407 : vector<1x128xf32> to vector<8x128xf32>
    %1409 = arith.mulf %1400, %1408 : vector<8x128xf32>
    %1410 = arith.addf %1356, %1409 : vector<8x128xf32>
    %1411 = vector.extract_strided_slice %1392 {offsets = [2, 0], sizes = [1, 128], strides = [1, 1]} : vector<8x128xf32> to vector<1x128xf32>
    %1412 = vector.broadcast %1411 : vector<1x128xf32> to vector<8x128xf32>
    %1413 = arith.mulf %1400, %1412 : vector<8x128xf32>
    %1414 = arith.addf %1360, %1413 : vector<8x128xf32>
    %1415 = vector.extract_strided_slice %1392 {offsets = [3, 0], sizes = [1, 128], strides = [1, 1]} : vector<8x128xf32> to vector<1x128xf32>
    %1416 = vector.broadcast %1415 : vector<1x128xf32> to vector<8x128xf32>
    %1417 = arith.mulf %1400, %1416 : vector<8x128xf32>
    %1418 = arith.addf %1364, %1417 : vector<8x128xf32>
    %1419 = vector.extract_strided_slice %1392 {offsets = [4, 0], sizes = [1, 128], strides = [1, 1]} : vector<8x128xf32> to vector<1x128xf32>
    %1420 = vector.broadcast %1419 : vector<1x128xf32> to vector<8x128xf32>
    %1421 = arith.mulf %1400, %1420 : vector<8x128xf32>
    %1422 = arith.addf %1368, %1421 : vector<8x128xf32>
    %1423 = vector.extract_strided_slice %1392 {offsets = [5, 0], sizes = [1, 128], strides = [1, 1]} : vector<8x128xf32> to vector<1x128xf32>
    %1424 = vector.broadcast %1423 : vector<1x128xf32> to vector<8x128xf32>
    %1425 = arith.mulf %1400, %1424 : vector<8x128xf32>
    %1426 = arith.addf %1372, %1425 : vector<8x128xf32>
    %1427 = vector.extract_strided_slice %1392 {offsets = [6, 0], sizes = [1, 128], strides = [1, 1]} : vector<8x128xf32> to vector<1x128xf32>
    %1428 = vector.broadcast %1427 : vector<1x128xf32> to vector<8x128xf32>
    %1429 = arith.mulf %1400, %1428 : vector<8x128xf32>
    %1430 = arith.addf %1376, %1429 : vector<8x128xf32>
    %1431 = vector.extract_strided_slice %1392 {offsets = [7, 0], sizes = [1, 128], strides = [1, 1]} : vector<8x128xf32> to vector<1x128xf32>
    %1432 = vector.broadcast %1431 : vector<1x128xf32> to vector<8x128xf32>
    %1433 = arith.mulf %1400, %1432 : vector<8x128xf32>
    %1434 = arith.addf %1380, %1433 : vector<8x128xf32>
    %c0_460 = arith.constant 0 : index
    %c20_461 = arith.constant 20 : index
    %1435 = memref.load %arg3[%c0_460, %c20_461] : memref<4x32xf32, #tpu.memory_space<smem>>
    %c1_462 = arith.constant 1 : index
    %c20_463 = arith.constant 20 : index
    %1436 = memref.load %arg3[%c1_462, %c20_463] : memref<4x32xf32, #tpu.memory_space<smem>>
    %c2_464 = arith.constant 2 : index
    %c20_465 = arith.constant 20 : index
    %1437 = memref.load %arg3[%c2_464, %c20_465] : memref<4x32xf32, #tpu.memory_space<smem>>
    %c3_466 = arith.constant 3 : index
    %c20_467 = arith.constant 20 : index
    %1438 = memref.load %arg3[%c3_466, %c20_467] : memref<4x32xf32, #tpu.memory_space<smem>>
    %c20_468 = arith.constant 20 : index
    %c0_469 = arith.constant 0 : index
    %c0_470 = arith.constant 0 : index
    %1439 = vector.load %arg1[%c20_468, %c0_469, %c0_470] : memref<32x8x128xf32, #tpu.memory_space<vmem>>, vector<1x8x128xf32>
    %1440 = vector.shape_cast %1439 : vector<1x8x128xf32> to vector<8x128xf32>
    %1441 = arith.subf %1440, %325 : vector<8x128xf32>
    %1442 = arith.mulf %1441, %342 : vector<8x128xf32>
    %1443 = vector.broadcast %1435 : f32 to vector<8x128xf32>
    %1444 = arith.mulf %1442, %1443 : vector<8x128xf32>
    %1445 = vector.broadcast %1436 : f32 to vector<8x128xf32>
    %1446 = arith.addf %1444, %1445 : vector<8x128xf32>
    %c20_471 = arith.constant 20 : index
    %c0_472 = arith.constant 0 : index
    %c0_473 = arith.constant 0 : index
    %1447 = vector.load %arg2[%c20_471, %c0_472, %c0_473] : memref<32x8x128xf32, #tpu.memory_space<vmem>>, vector<1x8x128xf32>
    %1448 = vector.shape_cast %1447 : vector<1x8x128xf32> to vector<8x128xf32>
    %1449 = arith.subf %1448, %327 : vector<8x128xf32>
    %1450 = arith.mulf %1449, %345 : vector<8x128xf32>
    %1451 = vector.broadcast %1437 : f32 to vector<8x128xf32>
    %1452 = arith.mulf %1450, %1451 : vector<8x128xf32>
    %1453 = vector.broadcast %1438 : f32 to vector<8x128xf32>
    %1454 = arith.addf %1452, %1453 : vector<8x128xf32>
    %1455 = arith.mulf %1446, %1446 : vector<8x128xf32>
    %1456 = arith.addf %1402, %1455 : vector<8x128xf32>
    %1457 = vector.extract_strided_slice %1446 {offsets = [0, 0], sizes = [1, 128], strides = [1, 1]} : vector<8x128xf32> to vector<1x128xf32>
    %1458 = vector.broadcast %1457 : vector<1x128xf32> to vector<8x128xf32>
    %1459 = arith.mulf %1454, %1458 : vector<8x128xf32>
    %1460 = arith.addf %1406, %1459 : vector<8x128xf32>
    %1461 = vector.extract_strided_slice %1446 {offsets = [1, 0], sizes = [1, 128], strides = [1, 1]} : vector<8x128xf32> to vector<1x128xf32>
    %1462 = vector.broadcast %1461 : vector<1x128xf32> to vector<8x128xf32>
    %1463 = arith.mulf %1454, %1462 : vector<8x128xf32>
    %1464 = arith.addf %1410, %1463 : vector<8x128xf32>
    %1465 = vector.extract_strided_slice %1446 {offsets = [2, 0], sizes = [1, 128], strides = [1, 1]} : vector<8x128xf32> to vector<1x128xf32>
    %1466 = vector.broadcast %1465 : vector<1x128xf32> to vector<8x128xf32>
    %1467 = arith.mulf %1454, %1466 : vector<8x128xf32>
    %1468 = arith.addf %1414, %1467 : vector<8x128xf32>
    %1469 = vector.extract_strided_slice %1446 {offsets = [3, 0], sizes = [1, 128], strides = [1, 1]} : vector<8x128xf32> to vector<1x128xf32>
    %1470 = vector.broadcast %1469 : vector<1x128xf32> to vector<8x128xf32>
    %1471 = arith.mulf %1454, %1470 : vector<8x128xf32>
    %1472 = arith.addf %1418, %1471 : vector<8x128xf32>
    %1473 = vector.extract_strided_slice %1446 {offsets = [4, 0], sizes = [1, 128], strides = [1, 1]} : vector<8x128xf32> to vector<1x128xf32>
    %1474 = vector.broadcast %1473 : vector<1x128xf32> to vector<8x128xf32>
    %1475 = arith.mulf %1454, %1474 : vector<8x128xf32>
    %1476 = arith.addf %1422, %1475 : vector<8x128xf32>
    %1477 = vector.extract_strided_slice %1446 {offsets = [5, 0], sizes = [1, 128], strides = [1, 1]} : vector<8x128xf32> to vector<1x128xf32>
    %1478 = vector.broadcast %1477 : vector<1x128xf32> to vector<8x128xf32>
    %1479 = arith.mulf %1454, %1478 : vector<8x128xf32>
    %1480 = arith.addf %1426, %1479 : vector<8x128xf32>
    %1481 = vector.extract_strided_slice %1446 {offsets = [6, 0], sizes = [1, 128], strides = [1, 1]} : vector<8x128xf32> to vector<1x128xf32>
    %1482 = vector.broadcast %1481 : vector<1x128xf32> to vector<8x128xf32>
    %1483 = arith.mulf %1454, %1482 : vector<8x128xf32>
    %1484 = arith.addf %1430, %1483 : vector<8x128xf32>
    %1485 = vector.extract_strided_slice %1446 {offsets = [7, 0], sizes = [1, 128], strides = [1, 1]} : vector<8x128xf32> to vector<1x128xf32>
    %1486 = vector.broadcast %1485 : vector<1x128xf32> to vector<8x128xf32>
    %1487 = arith.mulf %1454, %1486 : vector<8x128xf32>
    %1488 = arith.addf %1434, %1487 : vector<8x128xf32>
    %c0_474 = arith.constant 0 : index
    %c21_475 = arith.constant 21 : index
    %1489 = memref.load %arg3[%c0_474, %c21_475] : memref<4x32xf32, #tpu.memory_space<smem>>
    %c1_476 = arith.constant 1 : index
    %c21_477 = arith.constant 21 : index
    %1490 = memref.load %arg3[%c1_476, %c21_477] : memref<4x32xf32, #tpu.memory_space<smem>>
    %c2_478 = arith.constant 2 : index
    %c21_479 = arith.constant 21 : index
    %1491 = memref.load %arg3[%c2_478, %c21_479] : memref<4x32xf32, #tpu.memory_space<smem>>
    %c3_480 = arith.constant 3 : index
    %c21_481 = arith.constant 21 : index
    %1492 = memref.load %arg3[%c3_480, %c21_481] : memref<4x32xf32, #tpu.memory_space<smem>>
    %c21_482 = arith.constant 21 : index
    %c0_483 = arith.constant 0 : index
    %c0_484 = arith.constant 0 : index
    %1493 = vector.load %arg1[%c21_482, %c0_483, %c0_484] : memref<32x8x128xf32, #tpu.memory_space<vmem>>, vector<1x8x128xf32>
    %1494 = vector.shape_cast %1493 : vector<1x8x128xf32> to vector<8x128xf32>
    %1495 = arith.subf %1494, %325 : vector<8x128xf32>
    %1496 = arith.mulf %1495, %342 : vector<8x128xf32>
    %1497 = vector.broadcast %1489 : f32 to vector<8x128xf32>
    %1498 = arith.mulf %1496, %1497 : vector<8x128xf32>
    %1499 = vector.broadcast %1490 : f32 to vector<8x128xf32>
    %1500 = arith.addf %1498, %1499 : vector<8x128xf32>
    %c21_485 = arith.constant 21 : index
    %c0_486 = arith.constant 0 : index
    %c0_487 = arith.constant 0 : index
    %1501 = vector.load %arg2[%c21_485, %c0_486, %c0_487] : memref<32x8x128xf32, #tpu.memory_space<vmem>>, vector<1x8x128xf32>
    %1502 = vector.shape_cast %1501 : vector<1x8x128xf32> to vector<8x128xf32>
    %1503 = arith.subf %1502, %327 : vector<8x128xf32>
    %1504 = arith.mulf %1503, %345 : vector<8x128xf32>
    %1505 = vector.broadcast %1491 : f32 to vector<8x128xf32>
    %1506 = arith.mulf %1504, %1505 : vector<8x128xf32>
    %1507 = vector.broadcast %1492 : f32 to vector<8x128xf32>
    %1508 = arith.addf %1506, %1507 : vector<8x128xf32>
    %1509 = arith.mulf %1500, %1500 : vector<8x128xf32>
    %1510 = arith.addf %1456, %1509 : vector<8x128xf32>
    %1511 = vector.extract_strided_slice %1500 {offsets = [0, 0], sizes = [1, 128], strides = [1, 1]} : vector<8x128xf32> to vector<1x128xf32>
    %1512 = vector.broadcast %1511 : vector<1x128xf32> to vector<8x128xf32>
    %1513 = arith.mulf %1508, %1512 : vector<8x128xf32>
    %1514 = arith.addf %1460, %1513 : vector<8x128xf32>
    %1515 = vector.extract_strided_slice %1500 {offsets = [1, 0], sizes = [1, 128], strides = [1, 1]} : vector<8x128xf32> to vector<1x128xf32>
    %1516 = vector.broadcast %1515 : vector<1x128xf32> to vector<8x128xf32>
    %1517 = arith.mulf %1508, %1516 : vector<8x128xf32>
    %1518 = arith.addf %1464, %1517 : vector<8x128xf32>
    %1519 = vector.extract_strided_slice %1500 {offsets = [2, 0], sizes = [1, 128], strides = [1, 1]} : vector<8x128xf32> to vector<1x128xf32>
    %1520 = vector.broadcast %1519 : vector<1x128xf32> to vector<8x128xf32>
    %1521 = arith.mulf %1508, %1520 : vector<8x128xf32>
    %1522 = arith.addf %1468, %1521 : vector<8x128xf32>
    %1523 = vector.extract_strided_slice %1500 {offsets = [3, 0], sizes = [1, 128], strides = [1, 1]} : vector<8x128xf32> to vector<1x128xf32>
    %1524 = vector.broadcast %1523 : vector<1x128xf32> to vector<8x128xf32>
    %1525 = arith.mulf %1508, %1524 : vector<8x128xf32>
    %1526 = arith.addf %1472, %1525 : vector<8x128xf32>
    %1527 = vector.extract_strided_slice %1500 {offsets = [4, 0], sizes = [1, 128], strides = [1, 1]} : vector<8x128xf32> to vector<1x128xf32>
    %1528 = vector.broadcast %1527 : vector<1x128xf32> to vector<8x128xf32>
    %1529 = arith.mulf %1508, %1528 : vector<8x128xf32>
    %1530 = arith.addf %1476, %1529 : vector<8x128xf32>
    %1531 = vector.extract_strided_slice %1500 {offsets = [5, 0], sizes = [1, 128], strides = [1, 1]} : vector<8x128xf32> to vector<1x128xf32>
    %1532 = vector.broadcast %1531 : vector<1x128xf32> to vector<8x128xf32>
    %1533 = arith.mulf %1508, %1532 : vector<8x128xf32>
    %1534 = arith.addf %1480, %1533 : vector<8x128xf32>
    %1535 = vector.extract_strided_slice %1500 {offsets = [6, 0], sizes = [1, 128], strides = [1, 1]} : vector<8x128xf32> to vector<1x128xf32>
    %1536 = vector.broadcast %1535 : vector<1x128xf32> to vector<8x128xf32>
    %1537 = arith.mulf %1508, %1536 : vector<8x128xf32>
    %1538 = arith.addf %1484, %1537 : vector<8x128xf32>
    %1539 = vector.extract_strided_slice %1500 {offsets = [7, 0], sizes = [1, 128], strides = [1, 1]} : vector<8x128xf32> to vector<1x128xf32>
    %1540 = vector.broadcast %1539 : vector<1x128xf32> to vector<8x128xf32>
    %1541 = arith.mulf %1508, %1540 : vector<8x128xf32>
    %1542 = arith.addf %1488, %1541 : vector<8x128xf32>
    %c0_488 = arith.constant 0 : index
    %c22_489 = arith.constant 22 : index
    %1543 = memref.load %arg3[%c0_488, %c22_489] : memref<4x32xf32, #tpu.memory_space<smem>>
    %c1_490 = arith.constant 1 : index
    %c22_491 = arith.constant 22 : index
    %1544 = memref.load %arg3[%c1_490, %c22_491] : memref<4x32xf32, #tpu.memory_space<smem>>
    %c2_492 = arith.constant 2 : index
    %c22_493 = arith.constant 22 : index
    %1545 = memref.load %arg3[%c2_492, %c22_493] : memref<4x32xf32, #tpu.memory_space<smem>>
    %c3_494 = arith.constant 3 : index
    %c22_495 = arith.constant 22 : index
    %1546 = memref.load %arg3[%c3_494, %c22_495] : memref<4x32xf32, #tpu.memory_space<smem>>
    %c22_496 = arith.constant 22 : index
    %c0_497 = arith.constant 0 : index
    %c0_498 = arith.constant 0 : index
    %1547 = vector.load %arg1[%c22_496, %c0_497, %c0_498] : memref<32x8x128xf32, #tpu.memory_space<vmem>>, vector<1x8x128xf32>
    %1548 = vector.shape_cast %1547 : vector<1x8x128xf32> to vector<8x128xf32>
    %1549 = arith.subf %1548, %325 : vector<8x128xf32>
    %1550 = arith.mulf %1549, %342 : vector<8x128xf32>
    %1551 = vector.broadcast %1543 : f32 to vector<8x128xf32>
    %1552 = arith.mulf %1550, %1551 : vector<8x128xf32>
    %1553 = vector.broadcast %1544 : f32 to vector<8x128xf32>
    %1554 = arith.addf %1552, %1553 : vector<8x128xf32>
    %c22_499 = arith.constant 22 : index
    %c0_500 = arith.constant 0 : index
    %c0_501 = arith.constant 0 : index
    %1555 = vector.load %arg2[%c22_499, %c0_500, %c0_501] : memref<32x8x128xf32, #tpu.memory_space<vmem>>, vector<1x8x128xf32>
    %1556 = vector.shape_cast %1555 : vector<1x8x128xf32> to vector<8x128xf32>
    %1557 = arith.subf %1556, %327 : vector<8x128xf32>
    %1558 = arith.mulf %1557, %345 : vector<8x128xf32>
    %1559 = vector.broadcast %1545 : f32 to vector<8x128xf32>
    %1560 = arith.mulf %1558, %1559 : vector<8x128xf32>
    %1561 = vector.broadcast %1546 : f32 to vector<8x128xf32>
    %1562 = arith.addf %1560, %1561 : vector<8x128xf32>
    %1563 = arith.mulf %1554, %1554 : vector<8x128xf32>
    %1564 = arith.addf %1510, %1563 : vector<8x128xf32>
    %1565 = vector.extract_strided_slice %1554 {offsets = [0, 0], sizes = [1, 128], strides = [1, 1]} : vector<8x128xf32> to vector<1x128xf32>
    %1566 = vector.broadcast %1565 : vector<1x128xf32> to vector<8x128xf32>
    %1567 = arith.mulf %1562, %1566 : vector<8x128xf32>
    %1568 = arith.addf %1514, %1567 : vector<8x128xf32>
    %1569 = vector.extract_strided_slice %1554 {offsets = [1, 0], sizes = [1, 128], strides = [1, 1]} : vector<8x128xf32> to vector<1x128xf32>
    %1570 = vector.broadcast %1569 : vector<1x128xf32> to vector<8x128xf32>
    %1571 = arith.mulf %1562, %1570 : vector<8x128xf32>
    %1572 = arith.addf %1518, %1571 : vector<8x128xf32>
    %1573 = vector.extract_strided_slice %1554 {offsets = [2, 0], sizes = [1, 128], strides = [1, 1]} : vector<8x128xf32> to vector<1x128xf32>
    %1574 = vector.broadcast %1573 : vector<1x128xf32> to vector<8x128xf32>
    %1575 = arith.mulf %1562, %1574 : vector<8x128xf32>
    %1576 = arith.addf %1522, %1575 : vector<8x128xf32>
    %1577 = vector.extract_strided_slice %1554 {offsets = [3, 0], sizes = [1, 128], strides = [1, 1]} : vector<8x128xf32> to vector<1x128xf32>
    %1578 = vector.broadcast %1577 : vector<1x128xf32> to vector<8x128xf32>
    %1579 = arith.mulf %1562, %1578 : vector<8x128xf32>
    %1580 = arith.addf %1526, %1579 : vector<8x128xf32>
    %1581 = vector.extract_strided_slice %1554 {offsets = [4, 0], sizes = [1, 128], strides = [1, 1]} : vector<8x128xf32> to vector<1x128xf32>
    %1582 = vector.broadcast %1581 : vector<1x128xf32> to vector<8x128xf32>
    %1583 = arith.mulf %1562, %1582 : vector<8x128xf32>
    %1584 = arith.addf %1530, %1583 : vector<8x128xf32>
    %1585 = vector.extract_strided_slice %1554 {offsets = [5, 0], sizes = [1, 128], strides = [1, 1]} : vector<8x128xf32> to vector<1x128xf32>
    %1586 = vector.broadcast %1585 : vector<1x128xf32> to vector<8x128xf32>
    %1587 = arith.mulf %1562, %1586 : vector<8x128xf32>
    %1588 = arith.addf %1534, %1587 : vector<8x128xf32>
    %1589 = vector.extract_strided_slice %1554 {offsets = [6, 0], sizes = [1, 128], strides = [1, 1]} : vector<8x128xf32> to vector<1x128xf32>
    %1590 = vector.broadcast %1589 : vector<1x128xf32> to vector<8x128xf32>
    %1591 = arith.mulf %1562, %1590 : vector<8x128xf32>
    %1592 = arith.addf %1538, %1591 : vector<8x128xf32>
    %1593 = vector.extract_strided_slice %1554 {offsets = [7, 0], sizes = [1, 128], strides = [1, 1]} : vector<8x128xf32> to vector<1x128xf32>
    %1594 = vector.broadcast %1593 : vector<1x128xf32> to vector<8x128xf32>
    %1595 = arith.mulf %1562, %1594 : vector<8x128xf32>
    %1596 = arith.addf %1542, %1595 : vector<8x128xf32>
    %c0_502 = arith.constant 0 : index
    %c23_503 = arith.constant 23 : index
    %1597 = memref.load %arg3[%c0_502, %c23_503] : memref<4x32xf32, #tpu.memory_space<smem>>
    %c1_504 = arith.constant 1 : index
    %c23_505 = arith.constant 23 : index
    %1598 = memref.load %arg3[%c1_504, %c23_505] : memref<4x32xf32, #tpu.memory_space<smem>>
    %c2_506 = arith.constant 2 : index
    %c23_507 = arith.constant 23 : index
    %1599 = memref.load %arg3[%c2_506, %c23_507] : memref<4x32xf32, #tpu.memory_space<smem>>
    %c3_508 = arith.constant 3 : index
    %c23_509 = arith.constant 23 : index
    %1600 = memref.load %arg3[%c3_508, %c23_509] : memref<4x32xf32, #tpu.memory_space<smem>>
    %c23_510 = arith.constant 23 : index
    %c0_511 = arith.constant 0 : index
    %c0_512 = arith.constant 0 : index
    %1601 = vector.load %arg1[%c23_510, %c0_511, %c0_512] : memref<32x8x128xf32, #tpu.memory_space<vmem>>, vector<1x8x128xf32>
    %1602 = vector.shape_cast %1601 : vector<1x8x128xf32> to vector<8x128xf32>
    %1603 = arith.subf %1602, %325 : vector<8x128xf32>
    %1604 = arith.mulf %1603, %342 : vector<8x128xf32>
    %1605 = vector.broadcast %1597 : f32 to vector<8x128xf32>
    %1606 = arith.mulf %1604, %1605 : vector<8x128xf32>
    %1607 = vector.broadcast %1598 : f32 to vector<8x128xf32>
    %1608 = arith.addf %1606, %1607 : vector<8x128xf32>
    %c23_513 = arith.constant 23 : index
    %c0_514 = arith.constant 0 : index
    %c0_515 = arith.constant 0 : index
    %1609 = vector.load %arg2[%c23_513, %c0_514, %c0_515] : memref<32x8x128xf32, #tpu.memory_space<vmem>>, vector<1x8x128xf32>
    %1610 = vector.shape_cast %1609 : vector<1x8x128xf32> to vector<8x128xf32>
    %1611 = arith.subf %1610, %327 : vector<8x128xf32>
    %1612 = arith.mulf %1611, %345 : vector<8x128xf32>
    %1613 = vector.broadcast %1599 : f32 to vector<8x128xf32>
    %1614 = arith.mulf %1612, %1613 : vector<8x128xf32>
    %1615 = vector.broadcast %1600 : f32 to vector<8x128xf32>
    %1616 = arith.addf %1614, %1615 : vector<8x128xf32>
    %1617 = arith.mulf %1608, %1608 : vector<8x128xf32>
    %1618 = arith.addf %1564, %1617 : vector<8x128xf32>
    %1619 = vector.extract_strided_slice %1608 {offsets = [0, 0], sizes = [1, 128], strides = [1, 1]} : vector<8x128xf32> to vector<1x128xf32>
    %1620 = vector.broadcast %1619 : vector<1x128xf32> to vector<8x128xf32>
    %1621 = arith.mulf %1616, %1620 : vector<8x128xf32>
    %1622 = arith.addf %1568, %1621 : vector<8x128xf32>
    %1623 = vector.extract_strided_slice %1608 {offsets = [1, 0], sizes = [1, 128], strides = [1, 1]} : vector<8x128xf32> to vector<1x128xf32>
    %1624 = vector.broadcast %1623 : vector<1x128xf32> to vector<8x128xf32>
    %1625 = arith.mulf %1616, %1624 : vector<8x128xf32>
    %1626 = arith.addf %1572, %1625 : vector<8x128xf32>
    %1627 = vector.extract_strided_slice %1608 {offsets = [2, 0], sizes = [1, 128], strides = [1, 1]} : vector<8x128xf32> to vector<1x128xf32>
    %1628 = vector.broadcast %1627 : vector<1x128xf32> to vector<8x128xf32>
    %1629 = arith.mulf %1616, %1628 : vector<8x128xf32>
    %1630 = arith.addf %1576, %1629 : vector<8x128xf32>
    %1631 = vector.extract_strided_slice %1608 {offsets = [3, 0], sizes = [1, 128], strides = [1, 1]} : vector<8x128xf32> to vector<1x128xf32>
    %1632 = vector.broadcast %1631 : vector<1x128xf32> to vector<8x128xf32>
    %1633 = arith.mulf %1616, %1632 : vector<8x128xf32>
    %1634 = arith.addf %1580, %1633 : vector<8x128xf32>
    %1635 = vector.extract_strided_slice %1608 {offsets = [4, 0], sizes = [1, 128], strides = [1, 1]} : vector<8x128xf32> to vector<1x128xf32>
    %1636 = vector.broadcast %1635 : vector<1x128xf32> to vector<8x128xf32>
    %1637 = arith.mulf %1616, %1636 : vector<8x128xf32>
    %1638 = arith.addf %1584, %1637 : vector<8x128xf32>
    %1639 = vector.extract_strided_slice %1608 {offsets = [5, 0], sizes = [1, 128], strides = [1, 1]} : vector<8x128xf32> to vector<1x128xf32>
    %1640 = vector.broadcast %1639 : vector<1x128xf32> to vector<8x128xf32>
    %1641 = arith.mulf %1616, %1640 : vector<8x128xf32>
    %1642 = arith.addf %1588, %1641 : vector<8x128xf32>
    %1643 = vector.extract_strided_slice %1608 {offsets = [6, 0], sizes = [1, 128], strides = [1, 1]} : vector<8x128xf32> to vector<1x128xf32>
    %1644 = vector.broadcast %1643 : vector<1x128xf32> to vector<8x128xf32>
    %1645 = arith.mulf %1616, %1644 : vector<8x128xf32>
    %1646 = arith.addf %1592, %1645 : vector<8x128xf32>
    %1647 = vector.extract_strided_slice %1608 {offsets = [7, 0], sizes = [1, 128], strides = [1, 1]} : vector<8x128xf32> to vector<1x128xf32>
    %1648 = vector.broadcast %1647 : vector<1x128xf32> to vector<8x128xf32>
    %1649 = arith.mulf %1616, %1648 : vector<8x128xf32>
    %1650 = arith.addf %1596, %1649 : vector<8x128xf32>
    %c0_516 = arith.constant 0 : index
    %c24_517 = arith.constant 24 : index
    %1651 = memref.load %arg3[%c0_516, %c24_517] : memref<4x32xf32, #tpu.memory_space<smem>>
    %c1_518 = arith.constant 1 : index
    %c24_519 = arith.constant 24 : index
    %1652 = memref.load %arg3[%c1_518, %c24_519] : memref<4x32xf32, #tpu.memory_space<smem>>
    %c2_520 = arith.constant 2 : index
    %c24_521 = arith.constant 24 : index
    %1653 = memref.load %arg3[%c2_520, %c24_521] : memref<4x32xf32, #tpu.memory_space<smem>>
    %c3_522 = arith.constant 3 : index
    %c24_523 = arith.constant 24 : index
    %1654 = memref.load %arg3[%c3_522, %c24_523] : memref<4x32xf32, #tpu.memory_space<smem>>
    %c24_524 = arith.constant 24 : index
    %c0_525 = arith.constant 0 : index
    %c0_526 = arith.constant 0 : index
    %1655 = vector.load %arg1[%c24_524, %c0_525, %c0_526] : memref<32x8x128xf32, #tpu.memory_space<vmem>>, vector<1x8x128xf32>
    %1656 = vector.shape_cast %1655 : vector<1x8x128xf32> to vector<8x128xf32>
    %1657 = arith.subf %1656, %325 : vector<8x128xf32>
    %1658 = arith.mulf %1657, %342 : vector<8x128xf32>
    %1659 = vector.broadcast %1651 : f32 to vector<8x128xf32>
    %1660 = arith.mulf %1658, %1659 : vector<8x128xf32>
    %1661 = vector.broadcast %1652 : f32 to vector<8x128xf32>
    %1662 = arith.addf %1660, %1661 : vector<8x128xf32>
    %c24_527 = arith.constant 24 : index
    %c0_528 = arith.constant 0 : index
    %c0_529 = arith.constant 0 : index
    %1663 = vector.load %arg2[%c24_527, %c0_528, %c0_529] : memref<32x8x128xf32, #tpu.memory_space<vmem>>, vector<1x8x128xf32>
    %1664 = vector.shape_cast %1663 : vector<1x8x128xf32> to vector<8x128xf32>
    %1665 = arith.subf %1664, %327 : vector<8x128xf32>
    %1666 = arith.mulf %1665, %345 : vector<8x128xf32>
    %1667 = vector.broadcast %1653 : f32 to vector<8x128xf32>
    %1668 = arith.mulf %1666, %1667 : vector<8x128xf32>
    %1669 = vector.broadcast %1654 : f32 to vector<8x128xf32>
    %1670 = arith.addf %1668, %1669 : vector<8x128xf32>
    %1671 = arith.mulf %1662, %1662 : vector<8x128xf32>
    %1672 = arith.addf %1618, %1671 : vector<8x128xf32>
    %1673 = vector.extract_strided_slice %1662 {offsets = [0, 0], sizes = [1, 128], strides = [1, 1]} : vector<8x128xf32> to vector<1x128xf32>
    %1674 = vector.broadcast %1673 : vector<1x128xf32> to vector<8x128xf32>
    %1675 = arith.mulf %1670, %1674 : vector<8x128xf32>
    %1676 = arith.addf %1622, %1675 : vector<8x128xf32>
    %1677 = vector.extract_strided_slice %1662 {offsets = [1, 0], sizes = [1, 128], strides = [1, 1]} : vector<8x128xf32> to vector<1x128xf32>
    %1678 = vector.broadcast %1677 : vector<1x128xf32> to vector<8x128xf32>
    %1679 = arith.mulf %1670, %1678 : vector<8x128xf32>
    %1680 = arith.addf %1626, %1679 : vector<8x128xf32>
    %1681 = vector.extract_strided_slice %1662 {offsets = [2, 0], sizes = [1, 128], strides = [1, 1]} : vector<8x128xf32> to vector<1x128xf32>
    %1682 = vector.broadcast %1681 : vector<1x128xf32> to vector<8x128xf32>
    %1683 = arith.mulf %1670, %1682 : vector<8x128xf32>
    %1684 = arith.addf %1630, %1683 : vector<8x128xf32>
    %1685 = vector.extract_strided_slice %1662 {offsets = [3, 0], sizes = [1, 128], strides = [1, 1]} : vector<8x128xf32> to vector<1x128xf32>
    %1686 = vector.broadcast %1685 : vector<1x128xf32> to vector<8x128xf32>
    %1687 = arith.mulf %1670, %1686 : vector<8x128xf32>
    %1688 = arith.addf %1634, %1687 : vector<8x128xf32>
    %1689 = vector.extract_strided_slice %1662 {offsets = [4, 0], sizes = [1, 128], strides = [1, 1]} : vector<8x128xf32> to vector<1x128xf32>
    %1690 = vector.broadcast %1689 : vector<1x128xf32> to vector<8x128xf32>
    %1691 = arith.mulf %1670, %1690 : vector<8x128xf32>
    %1692 = arith.addf %1638, %1691 : vector<8x128xf32>
    %1693 = vector.extract_strided_slice %1662 {offsets = [5, 0], sizes = [1, 128], strides = [1, 1]} : vector<8x128xf32> to vector<1x128xf32>
    %1694 = vector.broadcast %1693 : vector<1x128xf32> to vector<8x128xf32>
    %1695 = arith.mulf %1670, %1694 : vector<8x128xf32>
    %1696 = arith.addf %1642, %1695 : vector<8x128xf32>
    %1697 = vector.extract_strided_slice %1662 {offsets = [6, 0], sizes = [1, 128], strides = [1, 1]} : vector<8x128xf32> to vector<1x128xf32>
    %1698 = vector.broadcast %1697 : vector<1x128xf32> to vector<8x128xf32>
    %1699 = arith.mulf %1670, %1698 : vector<8x128xf32>
    %1700 = arith.addf %1646, %1699 : vector<8x128xf32>
    %1701 = vector.extract_strided_slice %1662 {offsets = [7, 0], sizes = [1, 128], strides = [1, 1]} : vector<8x128xf32> to vector<1x128xf32>
    %1702 = vector.broadcast %1701 : vector<1x128xf32> to vector<8x128xf32>
    %1703 = arith.mulf %1670, %1702 : vector<8x128xf32>
    %1704 = arith.addf %1650, %1703 : vector<8x128xf32>
    %c0_530 = arith.constant 0 : index
    %c25_531 = arith.constant 25 : index
    %1705 = memref.load %arg3[%c0_530, %c25_531] : memref<4x32xf32, #tpu.memory_space<smem>>
    %c1_532 = arith.constant 1 : index
    %c25_533 = arith.constant 25 : index
    %1706 = memref.load %arg3[%c1_532, %c25_533] : memref<4x32xf32, #tpu.memory_space<smem>>
    %c2_534 = arith.constant 2 : index
    %c25_535 = arith.constant 25 : index
    %1707 = memref.load %arg3[%c2_534, %c25_535] : memref<4x32xf32, #tpu.memory_space<smem>>
    %c3_536 = arith.constant 3 : index
    %c25_537 = arith.constant 25 : index
    %1708 = memref.load %arg3[%c3_536, %c25_537] : memref<4x32xf32, #tpu.memory_space<smem>>
    %c25_538 = arith.constant 25 : index
    %c0_539 = arith.constant 0 : index
    %c0_540 = arith.constant 0 : index
    %1709 = vector.load %arg1[%c25_538, %c0_539, %c0_540] : memref<32x8x128xf32, #tpu.memory_space<vmem>>, vector<1x8x128xf32>
    %1710 = vector.shape_cast %1709 : vector<1x8x128xf32> to vector<8x128xf32>
    %1711 = arith.subf %1710, %325 : vector<8x128xf32>
    %1712 = arith.mulf %1711, %342 : vector<8x128xf32>
    %1713 = vector.broadcast %1705 : f32 to vector<8x128xf32>
    %1714 = arith.mulf %1712, %1713 : vector<8x128xf32>
    %1715 = vector.broadcast %1706 : f32 to vector<8x128xf32>
    %1716 = arith.addf %1714, %1715 : vector<8x128xf32>
    %c25_541 = arith.constant 25 : index
    %c0_542 = arith.constant 0 : index
    %c0_543 = arith.constant 0 : index
    %1717 = vector.load %arg2[%c25_541, %c0_542, %c0_543] : memref<32x8x128xf32, #tpu.memory_space<vmem>>, vector<1x8x128xf32>
    %1718 = vector.shape_cast %1717 : vector<1x8x128xf32> to vector<8x128xf32>
    %1719 = arith.subf %1718, %327 : vector<8x128xf32>
    %1720 = arith.mulf %1719, %345 : vector<8x128xf32>
    %1721 = vector.broadcast %1707 : f32 to vector<8x128xf32>
    %1722 = arith.mulf %1720, %1721 : vector<8x128xf32>
    %1723 = vector.broadcast %1708 : f32 to vector<8x128xf32>
    %1724 = arith.addf %1722, %1723 : vector<8x128xf32>
    %1725 = arith.mulf %1716, %1716 : vector<8x128xf32>
    %1726 = arith.addf %1672, %1725 : vector<8x128xf32>
    %1727 = vector.extract_strided_slice %1716 {offsets = [0, 0], sizes = [1, 128], strides = [1, 1]} : vector<8x128xf32> to vector<1x128xf32>
    %1728 = vector.broadcast %1727 : vector<1x128xf32> to vector<8x128xf32>
    %1729 = arith.mulf %1724, %1728 : vector<8x128xf32>
    %1730 = arith.addf %1676, %1729 : vector<8x128xf32>
    %1731 = vector.extract_strided_slice %1716 {offsets = [1, 0], sizes = [1, 128], strides = [1, 1]} : vector<8x128xf32> to vector<1x128xf32>
    %1732 = vector.broadcast %1731 : vector<1x128xf32> to vector<8x128xf32>
    %1733 = arith.mulf %1724, %1732 : vector<8x128xf32>
    %1734 = arith.addf %1680, %1733 : vector<8x128xf32>
    %1735 = vector.extract_strided_slice %1716 {offsets = [2, 0], sizes = [1, 128], strides = [1, 1]} : vector<8x128xf32> to vector<1x128xf32>
    %1736 = vector.broadcast %1735 : vector<1x128xf32> to vector<8x128xf32>
    %1737 = arith.mulf %1724, %1736 : vector<8x128xf32>
    %1738 = arith.addf %1684, %1737 : vector<8x128xf32>
    %1739 = vector.extract_strided_slice %1716 {offsets = [3, 0], sizes = [1, 128], strides = [1, 1]} : vector<8x128xf32> to vector<1x128xf32>
    %1740 = vector.broadcast %1739 : vector<1x128xf32> to vector<8x128xf32>
    %1741 = arith.mulf %1724, %1740 : vector<8x128xf32>
    %1742 = arith.addf %1688, %1741 : vector<8x128xf32>
    %1743 = vector.extract_strided_slice %1716 {offsets = [4, 0], sizes = [1, 128], strides = [1, 1]} : vector<8x128xf32> to vector<1x128xf32>
    %1744 = vector.broadcast %1743 : vector<1x128xf32> to vector<8x128xf32>
    %1745 = arith.mulf %1724, %1744 : vector<8x128xf32>
    %1746 = arith.addf %1692, %1745 : vector<8x128xf32>
    %1747 = vector.extract_strided_slice %1716 {offsets = [5, 0], sizes = [1, 128], strides = [1, 1]} : vector<8x128xf32> to vector<1x128xf32>
    %1748 = vector.broadcast %1747 : vector<1x128xf32> to vector<8x128xf32>
    %1749 = arith.mulf %1724, %1748 : vector<8x128xf32>
    %1750 = arith.addf %1696, %1749 : vector<8x128xf32>
    %1751 = vector.extract_strided_slice %1716 {offsets = [6, 0], sizes = [1, 128], strides = [1, 1]} : vector<8x128xf32> to vector<1x128xf32>
    %1752 = vector.broadcast %1751 : vector<1x128xf32> to vector<8x128xf32>
    %1753 = arith.mulf %1724, %1752 : vector<8x128xf32>
    %1754 = arith.addf %1700, %1753 : vector<8x128xf32>
    %1755 = vector.extract_strided_slice %1716 {offsets = [7, 0], sizes = [1, 128], strides = [1, 1]} : vector<8x128xf32> to vector<1x128xf32>
    %1756 = vector.broadcast %1755 : vector<1x128xf32> to vector<8x128xf32>
    %1757 = arith.mulf %1724, %1756 : vector<8x128xf32>
    %1758 = arith.addf %1704, %1757 : vector<8x128xf32>
    %c0_544 = arith.constant 0 : index
    %c26_545 = arith.constant 26 : index
    %1759 = memref.load %arg3[%c0_544, %c26_545] : memref<4x32xf32, #tpu.memory_space<smem>>
    %c1_546 = arith.constant 1 : index
    %c26_547 = arith.constant 26 : index
    %1760 = memref.load %arg3[%c1_546, %c26_547] : memref<4x32xf32, #tpu.memory_space<smem>>
    %c2_548 = arith.constant 2 : index
    %c26_549 = arith.constant 26 : index
    %1761 = memref.load %arg3[%c2_548, %c26_549] : memref<4x32xf32, #tpu.memory_space<smem>>
    %c3_550 = arith.constant 3 : index
    %c26_551 = arith.constant 26 : index
    %1762 = memref.load %arg3[%c3_550, %c26_551] : memref<4x32xf32, #tpu.memory_space<smem>>
    %c26_552 = arith.constant 26 : index
    %c0_553 = arith.constant 0 : index
    %c0_554 = arith.constant 0 : index
    %1763 = vector.load %arg1[%c26_552, %c0_553, %c0_554] : memref<32x8x128xf32, #tpu.memory_space<vmem>>, vector<1x8x128xf32>
    %1764 = vector.shape_cast %1763 : vector<1x8x128xf32> to vector<8x128xf32>
    %1765 = arith.subf %1764, %325 : vector<8x128xf32>
    %1766 = arith.mulf %1765, %342 : vector<8x128xf32>
    %1767 = vector.broadcast %1759 : f32 to vector<8x128xf32>
    %1768 = arith.mulf %1766, %1767 : vector<8x128xf32>
    %1769 = vector.broadcast %1760 : f32 to vector<8x128xf32>
    %1770 = arith.addf %1768, %1769 : vector<8x128xf32>
    %c26_555 = arith.constant 26 : index
    %c0_556 = arith.constant 0 : index
    %c0_557 = arith.constant 0 : index
    %1771 = vector.load %arg2[%c26_555, %c0_556, %c0_557] : memref<32x8x128xf32, #tpu.memory_space<vmem>>, vector<1x8x128xf32>
    %1772 = vector.shape_cast %1771 : vector<1x8x128xf32> to vector<8x128xf32>
    %1773 = arith.subf %1772, %327 : vector<8x128xf32>
    %1774 = arith.mulf %1773, %345 : vector<8x128xf32>
    %1775 = vector.broadcast %1761 : f32 to vector<8x128xf32>
    %1776 = arith.mulf %1774, %1775 : vector<8x128xf32>
    %1777 = vector.broadcast %1762 : f32 to vector<8x128xf32>
    %1778 = arith.addf %1776, %1777 : vector<8x128xf32>
    %1779 = arith.mulf %1770, %1770 : vector<8x128xf32>
    %1780 = arith.addf %1726, %1779 : vector<8x128xf32>
    %1781 = vector.extract_strided_slice %1770 {offsets = [0, 0], sizes = [1, 128], strides = [1, 1]} : vector<8x128xf32> to vector<1x128xf32>
    %1782 = vector.broadcast %1781 : vector<1x128xf32> to vector<8x128xf32>
    %1783 = arith.mulf %1778, %1782 : vector<8x128xf32>
    %1784 = arith.addf %1730, %1783 : vector<8x128xf32>
    %1785 = vector.extract_strided_slice %1770 {offsets = [1, 0], sizes = [1, 128], strides = [1, 1]} : vector<8x128xf32> to vector<1x128xf32>
    %1786 = vector.broadcast %1785 : vector<1x128xf32> to vector<8x128xf32>
    %1787 = arith.mulf %1778, %1786 : vector<8x128xf32>
    %1788 = arith.addf %1734, %1787 : vector<8x128xf32>
    %1789 = vector.extract_strided_slice %1770 {offsets = [2, 0], sizes = [1, 128], strides = [1, 1]} : vector<8x128xf32> to vector<1x128xf32>
    %1790 = vector.broadcast %1789 : vector<1x128xf32> to vector<8x128xf32>
    %1791 = arith.mulf %1778, %1790 : vector<8x128xf32>
    %1792 = arith.addf %1738, %1791 : vector<8x128xf32>
    %1793 = vector.extract_strided_slice %1770 {offsets = [3, 0], sizes = [1, 128], strides = [1, 1]} : vector<8x128xf32> to vector<1x128xf32>
    %1794 = vector.broadcast %1793 : vector<1x128xf32> to vector<8x128xf32>
    %1795 = arith.mulf %1778, %1794 : vector<8x128xf32>
    %1796 = arith.addf %1742, %1795 : vector<8x128xf32>
    %1797 = vector.extract_strided_slice %1770 {offsets = [4, 0], sizes = [1, 128], strides = [1, 1]} : vector<8x128xf32> to vector<1x128xf32>
    %1798 = vector.broadcast %1797 : vector<1x128xf32> to vector<8x128xf32>
    %1799 = arith.mulf %1778, %1798 : vector<8x128xf32>
    %1800 = arith.addf %1746, %1799 : vector<8x128xf32>
    %1801 = vector.extract_strided_slice %1770 {offsets = [5, 0], sizes = [1, 128], strides = [1, 1]} : vector<8x128xf32> to vector<1x128xf32>
    %1802 = vector.broadcast %1801 : vector<1x128xf32> to vector<8x128xf32>
    %1803 = arith.mulf %1778, %1802 : vector<8x128xf32>
    %1804 = arith.addf %1750, %1803 : vector<8x128xf32>
    %1805 = vector.extract_strided_slice %1770 {offsets = [6, 0], sizes = [1, 128], strides = [1, 1]} : vector<8x128xf32> to vector<1x128xf32>
    %1806 = vector.broadcast %1805 : vector<1x128xf32> to vector<8x128xf32>
    %1807 = arith.mulf %1778, %1806 : vector<8x128xf32>
    %1808 = arith.addf %1754, %1807 : vector<8x128xf32>
    %1809 = vector.extract_strided_slice %1770 {offsets = [7, 0], sizes = [1, 128], strides = [1, 1]} : vector<8x128xf32> to vector<1x128xf32>
    %1810 = vector.broadcast %1809 : vector<1x128xf32> to vector<8x128xf32>
    %1811 = arith.mulf %1778, %1810 : vector<8x128xf32>
    %1812 = arith.addf %1758, %1811 : vector<8x128xf32>
    %c0_558 = arith.constant 0 : index
    %c27_559 = arith.constant 27 : index
    %1813 = memref.load %arg3[%c0_558, %c27_559] : memref<4x32xf32, #tpu.memory_space<smem>>
    %c1_560 = arith.constant 1 : index
    %c27_561 = arith.constant 27 : index
    %1814 = memref.load %arg3[%c1_560, %c27_561] : memref<4x32xf32, #tpu.memory_space<smem>>
    %c2_562 = arith.constant 2 : index
    %c27_563 = arith.constant 27 : index
    %1815 = memref.load %arg3[%c2_562, %c27_563] : memref<4x32xf32, #tpu.memory_space<smem>>
    %c3_564 = arith.constant 3 : index
    %c27_565 = arith.constant 27 : index
    %1816 = memref.load %arg3[%c3_564, %c27_565] : memref<4x32xf32, #tpu.memory_space<smem>>
    %c27_566 = arith.constant 27 : index
    %c0_567 = arith.constant 0 : index
    %c0_568 = arith.constant 0 : index
    %1817 = vector.load %arg1[%c27_566, %c0_567, %c0_568] : memref<32x8x128xf32, #tpu.memory_space<vmem>>, vector<1x8x128xf32>
    %1818 = vector.shape_cast %1817 : vector<1x8x128xf32> to vector<8x128xf32>
    %1819 = arith.subf %1818, %325 : vector<8x128xf32>
    %1820 = arith.mulf %1819, %342 : vector<8x128xf32>
    %1821 = vector.broadcast %1813 : f32 to vector<8x128xf32>
    %1822 = arith.mulf %1820, %1821 : vector<8x128xf32>
    %1823 = vector.broadcast %1814 : f32 to vector<8x128xf32>
    %1824 = arith.addf %1822, %1823 : vector<8x128xf32>
    %c27_569 = arith.constant 27 : index
    %c0_570 = arith.constant 0 : index
    %c0_571 = arith.constant 0 : index
    %1825 = vector.load %arg2[%c27_569, %c0_570, %c0_571] : memref<32x8x128xf32, #tpu.memory_space<vmem>>, vector<1x8x128xf32>
    %1826 = vector.shape_cast %1825 : vector<1x8x128xf32> to vector<8x128xf32>
    %1827 = arith.subf %1826, %327 : vector<8x128xf32>
    %1828 = arith.mulf %1827, %345 : vector<8x128xf32>
    %1829 = vector.broadcast %1815 : f32 to vector<8x128xf32>
    %1830 = arith.mulf %1828, %1829 : vector<8x128xf32>
    %1831 = vector.broadcast %1816 : f32 to vector<8x128xf32>
    %1832 = arith.addf %1830, %1831 : vector<8x128xf32>
    %1833 = arith.mulf %1824, %1824 : vector<8x128xf32>
    %1834 = arith.addf %1780, %1833 : vector<8x128xf32>
    %1835 = vector.extract_strided_slice %1824 {offsets = [0, 0], sizes = [1, 128], strides = [1, 1]} : vector<8x128xf32> to vector<1x128xf32>
    %1836 = vector.broadcast %1835 : vector<1x128xf32> to vector<8x128xf32>
    %1837 = arith.mulf %1832, %1836 : vector<8x128xf32>
    %1838 = arith.addf %1784, %1837 : vector<8x128xf32>
    %1839 = vector.extract_strided_slice %1824 {offsets = [1, 0], sizes = [1, 128], strides = [1, 1]} : vector<8x128xf32> to vector<1x128xf32>
    %1840 = vector.broadcast %1839 : vector<1x128xf32> to vector<8x128xf32>
    %1841 = arith.mulf %1832, %1840 : vector<8x128xf32>
    %1842 = arith.addf %1788, %1841 : vector<8x128xf32>
    %1843 = vector.extract_strided_slice %1824 {offsets = [2, 0], sizes = [1, 128], strides = [1, 1]} : vector<8x128xf32> to vector<1x128xf32>
    %1844 = vector.broadcast %1843 : vector<1x128xf32> to vector<8x128xf32>
    %1845 = arith.mulf %1832, %1844 : vector<8x128xf32>
    %1846 = arith.addf %1792, %1845 : vector<8x128xf32>
    %1847 = vector.extract_strided_slice %1824 {offsets = [3, 0], sizes = [1, 128], strides = [1, 1]} : vector<8x128xf32> to vector<1x128xf32>
    %1848 = vector.broadcast %1847 : vector<1x128xf32> to vector<8x128xf32>
    %1849 = arith.mulf %1832, %1848 : vector<8x128xf32>
    %1850 = arith.addf %1796, %1849 : vector<8x128xf32>
    %1851 = vector.extract_strided_slice %1824 {offsets = [4, 0], sizes = [1, 128], strides = [1, 1]} : vector<8x128xf32> to vector<1x128xf32>
    %1852 = vector.broadcast %1851 : vector<1x128xf32> to vector<8x128xf32>
    %1853 = arith.mulf %1832, %1852 : vector<8x128xf32>
    %1854 = arith.addf %1800, %1853 : vector<8x128xf32>
    %1855 = vector.extract_strided_slice %1824 {offsets = [5, 0], sizes = [1, 128], strides = [1, 1]} : vector<8x128xf32> to vector<1x128xf32>
    %1856 = vector.broadcast %1855 : vector<1x128xf32> to vector<8x128xf32>
    %1857 = arith.mulf %1832, %1856 : vector<8x128xf32>
    %1858 = arith.addf %1804, %1857 : vector<8x128xf32>
    %1859 = vector.extract_strided_slice %1824 {offsets = [6, 0], sizes = [1, 128], strides = [1, 1]} : vector<8x128xf32> to vector<1x128xf32>
    %1860 = vector.broadcast %1859 : vector<1x128xf32> to vector<8x128xf32>
    %1861 = arith.mulf %1832, %1860 : vector<8x128xf32>
    %1862 = arith.addf %1808, %1861 : vector<8x128xf32>
    %1863 = vector.extract_strided_slice %1824 {offsets = [7, 0], sizes = [1, 128], strides = [1, 1]} : vector<8x128xf32> to vector<1x128xf32>
    %1864 = vector.broadcast %1863 : vector<1x128xf32> to vector<8x128xf32>
    %1865 = arith.mulf %1832, %1864 : vector<8x128xf32>
    %1866 = arith.addf %1812, %1865 : vector<8x128xf32>
    %c0_572 = arith.constant 0 : index
    %c28_573 = arith.constant 28 : index
    %1867 = memref.load %arg3[%c0_572, %c28_573] : memref<4x32xf32, #tpu.memory_space<smem>>
    %c1_574 = arith.constant 1 : index
    %c28_575 = arith.constant 28 : index
    %1868 = memref.load %arg3[%c1_574, %c28_575] : memref<4x32xf32, #tpu.memory_space<smem>>
    %c2_576 = arith.constant 2 : index
    %c28_577 = arith.constant 28 : index
    %1869 = memref.load %arg3[%c2_576, %c28_577] : memref<4x32xf32, #tpu.memory_space<smem>>
    %c3_578 = arith.constant 3 : index
    %c28_579 = arith.constant 28 : index
    %1870 = memref.load %arg3[%c3_578, %c28_579] : memref<4x32xf32, #tpu.memory_space<smem>>
    %c28_580 = arith.constant 28 : index
    %c0_581 = arith.constant 0 : index
    %c0_582 = arith.constant 0 : index
    %1871 = vector.load %arg1[%c28_580, %c0_581, %c0_582] : memref<32x8x128xf32, #tpu.memory_space<vmem>>, vector<1x8x128xf32>
    %1872 = vector.shape_cast %1871 : vector<1x8x128xf32> to vector<8x128xf32>
    %1873 = arith.subf %1872, %325 : vector<8x128xf32>
    %1874 = arith.mulf %1873, %342 : vector<8x128xf32>
    %1875 = vector.broadcast %1867 : f32 to vector<8x128xf32>
    %1876 = arith.mulf %1874, %1875 : vector<8x128xf32>
    %1877 = vector.broadcast %1868 : f32 to vector<8x128xf32>
    %1878 = arith.addf %1876, %1877 : vector<8x128xf32>
    %c28_583 = arith.constant 28 : index
    %c0_584 = arith.constant 0 : index
    %c0_585 = arith.constant 0 : index
    %1879 = vector.load %arg2[%c28_583, %c0_584, %c0_585] : memref<32x8x128xf32, #tpu.memory_space<vmem>>, vector<1x8x128xf32>
    %1880 = vector.shape_cast %1879 : vector<1x8x128xf32> to vector<8x128xf32>
    %1881 = arith.subf %1880, %327 : vector<8x128xf32>
    %1882 = arith.mulf %1881, %345 : vector<8x128xf32>
    %1883 = vector.broadcast %1869 : f32 to vector<8x128xf32>
    %1884 = arith.mulf %1882, %1883 : vector<8x128xf32>
    %1885 = vector.broadcast %1870 : f32 to vector<8x128xf32>
    %1886 = arith.addf %1884, %1885 : vector<8x128xf32>
    %1887 = arith.mulf %1878, %1878 : vector<8x128xf32>
    %1888 = arith.addf %1834, %1887 : vector<8x128xf32>
    %1889 = vector.extract_strided_slice %1878 {offsets = [0, 0], sizes = [1, 128], strides = [1, 1]} : vector<8x128xf32> to vector<1x128xf32>
    %1890 = vector.broadcast %1889 : vector<1x128xf32> to vector<8x128xf32>
    %1891 = arith.mulf %1886, %1890 : vector<8x128xf32>
    %1892 = arith.addf %1838, %1891 : vector<8x128xf32>
    %1893 = vector.extract_strided_slice %1878 {offsets = [1, 0], sizes = [1, 128], strides = [1, 1]} : vector<8x128xf32> to vector<1x128xf32>
    %1894 = vector.broadcast %1893 : vector<1x128xf32> to vector<8x128xf32>
    %1895 = arith.mulf %1886, %1894 : vector<8x128xf32>
    %1896 = arith.addf %1842, %1895 : vector<8x128xf32>
    %1897 = vector.extract_strided_slice %1878 {offsets = [2, 0], sizes = [1, 128], strides = [1, 1]} : vector<8x128xf32> to vector<1x128xf32>
    %1898 = vector.broadcast %1897 : vector<1x128xf32> to vector<8x128xf32>
    %1899 = arith.mulf %1886, %1898 : vector<8x128xf32>
    %1900 = arith.addf %1846, %1899 : vector<8x128xf32>
    %1901 = vector.extract_strided_slice %1878 {offsets = [3, 0], sizes = [1, 128], strides = [1, 1]} : vector<8x128xf32> to vector<1x128xf32>
    %1902 = vector.broadcast %1901 : vector<1x128xf32> to vector<8x128xf32>
    %1903 = arith.mulf %1886, %1902 : vector<8x128xf32>
    %1904 = arith.addf %1850, %1903 : vector<8x128xf32>
    %1905 = vector.extract_strided_slice %1878 {offsets = [4, 0], sizes = [1, 128], strides = [1, 1]} : vector<8x128xf32> to vector<1x128xf32>
    %1906 = vector.broadcast %1905 : vector<1x128xf32> to vector<8x128xf32>
    %1907 = arith.mulf %1886, %1906 : vector<8x128xf32>
    %1908 = arith.addf %1854, %1907 : vector<8x128xf32>
    %1909 = vector.extract_strided_slice %1878 {offsets = [5, 0], sizes = [1, 128], strides = [1, 1]} : vector<8x128xf32> to vector<1x128xf32>
    %1910 = vector.broadcast %1909 : vector<1x128xf32> to vector<8x128xf32>
    %1911 = arith.mulf %1886, %1910 : vector<8x128xf32>
    %1912 = arith.addf %1858, %1911 : vector<8x128xf32>
    %1913 = vector.extract_strided_slice %1878 {offsets = [6, 0], sizes = [1, 128], strides = [1, 1]} : vector<8x128xf32> to vector<1x128xf32>
    %1914 = vector.broadcast %1913 : vector<1x128xf32> to vector<8x128xf32>
    %1915 = arith.mulf %1886, %1914 : vector<8x128xf32>
    %1916 = arith.addf %1862, %1915 : vector<8x128xf32>
    %1917 = vector.extract_strided_slice %1878 {offsets = [7, 0], sizes = [1, 128], strides = [1, 1]} : vector<8x128xf32> to vector<1x128xf32>
    %1918 = vector.broadcast %1917 : vector<1x128xf32> to vector<8x128xf32>
    %1919 = arith.mulf %1886, %1918 : vector<8x128xf32>
    %1920 = arith.addf %1866, %1919 : vector<8x128xf32>
    %c0_586 = arith.constant 0 : index
    %c29_587 = arith.constant 29 : index
    %1921 = memref.load %arg3[%c0_586, %c29_587] : memref<4x32xf32, #tpu.memory_space<smem>>
    %c1_588 = arith.constant 1 : index
    %c29_589 = arith.constant 29 : index
    %1922 = memref.load %arg3[%c1_588, %c29_589] : memref<4x32xf32, #tpu.memory_space<smem>>
    %c2_590 = arith.constant 2 : index
    %c29_591 = arith.constant 29 : index
    %1923 = memref.load %arg3[%c2_590, %c29_591] : memref<4x32xf32, #tpu.memory_space<smem>>
    %c3_592 = arith.constant 3 : index
    %c29_593 = arith.constant 29 : index
    %1924 = memref.load %arg3[%c3_592, %c29_593] : memref<4x32xf32, #tpu.memory_space<smem>>
    %c29_594 = arith.constant 29 : index
    %c0_595 = arith.constant 0 : index
    %c0_596 = arith.constant 0 : index
    %1925 = vector.load %arg1[%c29_594, %c0_595, %c0_596] : memref<32x8x128xf32, #tpu.memory_space<vmem>>, vector<1x8x128xf32>
    %1926 = vector.shape_cast %1925 : vector<1x8x128xf32> to vector<8x128xf32>
    %1927 = arith.subf %1926, %325 : vector<8x128xf32>
    %1928 = arith.mulf %1927, %342 : vector<8x128xf32>
    %1929 = vector.broadcast %1921 : f32 to vector<8x128xf32>
    %1930 = arith.mulf %1928, %1929 : vector<8x128xf32>
    %1931 = vector.broadcast %1922 : f32 to vector<8x128xf32>
    %1932 = arith.addf %1930, %1931 : vector<8x128xf32>
    %c29_597 = arith.constant 29 : index
    %c0_598 = arith.constant 0 : index
    %c0_599 = arith.constant 0 : index
    %1933 = vector.load %arg2[%c29_597, %c0_598, %c0_599] : memref<32x8x128xf32, #tpu.memory_space<vmem>>, vector<1x8x128xf32>
    %1934 = vector.shape_cast %1933 : vector<1x8x128xf32> to vector<8x128xf32>
    %1935 = arith.subf %1934, %327 : vector<8x128xf32>
    %1936 = arith.mulf %1935, %345 : vector<8x128xf32>
    %1937 = vector.broadcast %1923 : f32 to vector<8x128xf32>
    %1938 = arith.mulf %1936, %1937 : vector<8x128xf32>
    %1939 = vector.broadcast %1924 : f32 to vector<8x128xf32>
    %1940 = arith.addf %1938, %1939 : vector<8x128xf32>
    %1941 = arith.mulf %1932, %1932 : vector<8x128xf32>
    %1942 = arith.addf %1888, %1941 : vector<8x128xf32>
    %1943 = vector.extract_strided_slice %1932 {offsets = [0, 0], sizes = [1, 128], strides = [1, 1]} : vector<8x128xf32> to vector<1x128xf32>
    %1944 = vector.broadcast %1943 : vector<1x128xf32> to vector<8x128xf32>
    %1945 = arith.mulf %1940, %1944 : vector<8x128xf32>
    %1946 = arith.addf %1892, %1945 : vector<8x128xf32>
    %1947 = vector.extract_strided_slice %1932 {offsets = [1, 0], sizes = [1, 128], strides = [1, 1]} : vector<8x128xf32> to vector<1x128xf32>
    %1948 = vector.broadcast %1947 : vector<1x128xf32> to vector<8x128xf32>
    %1949 = arith.mulf %1940, %1948 : vector<8x128xf32>
    %1950 = arith.addf %1896, %1949 : vector<8x128xf32>
    %1951 = vector.extract_strided_slice %1932 {offsets = [2, 0], sizes = [1, 128], strides = [1, 1]} : vector<8x128xf32> to vector<1x128xf32>
    %1952 = vector.broadcast %1951 : vector<1x128xf32> to vector<8x128xf32>
    %1953 = arith.mulf %1940, %1952 : vector<8x128xf32>
    %1954 = arith.addf %1900, %1953 : vector<8x128xf32>
    %1955 = vector.extract_strided_slice %1932 {offsets = [3, 0], sizes = [1, 128], strides = [1, 1]} : vector<8x128xf32> to vector<1x128xf32>
    %1956 = vector.broadcast %1955 : vector<1x128xf32> to vector<8x128xf32>
    %1957 = arith.mulf %1940, %1956 : vector<8x128xf32>
    %1958 = arith.addf %1904, %1957 : vector<8x128xf32>
    %1959 = vector.extract_strided_slice %1932 {offsets = [4, 0], sizes = [1, 128], strides = [1, 1]} : vector<8x128xf32> to vector<1x128xf32>
    %1960 = vector.broadcast %1959 : vector<1x128xf32> to vector<8x128xf32>
    %1961 = arith.mulf %1940, %1960 : vector<8x128xf32>
    %1962 = arith.addf %1908, %1961 : vector<8x128xf32>
    %1963 = vector.extract_strided_slice %1932 {offsets = [5, 0], sizes = [1, 128], strides = [1, 1]} : vector<8x128xf32> to vector<1x128xf32>
    %1964 = vector.broadcast %1963 : vector<1x128xf32> to vector<8x128xf32>
    %1965 = arith.mulf %1940, %1964 : vector<8x128xf32>
    %1966 = arith.addf %1912, %1965 : vector<8x128xf32>
    %1967 = vector.extract_strided_slice %1932 {offsets = [6, 0], sizes = [1, 128], strides = [1, 1]} : vector<8x128xf32> to vector<1x128xf32>
    %1968 = vector.broadcast %1967 : vector<1x128xf32> to vector<8x128xf32>
    %1969 = arith.mulf %1940, %1968 : vector<8x128xf32>
    %1970 = arith.addf %1916, %1969 : vector<8x128xf32>
    %1971 = vector.extract_strided_slice %1932 {offsets = [7, 0], sizes = [1, 128], strides = [1, 1]} : vector<8x128xf32> to vector<1x128xf32>
    %1972 = vector.broadcast %1971 : vector<1x128xf32> to vector<8x128xf32>
    %1973 = arith.mulf %1940, %1972 : vector<8x128xf32>
    %1974 = arith.addf %1920, %1973 : vector<8x128xf32>
    %c0_600 = arith.constant 0 : index
    %c30_601 = arith.constant 30 : index
    %1975 = memref.load %arg3[%c0_600, %c30_601] : memref<4x32xf32, #tpu.memory_space<smem>>
    %c1_602 = arith.constant 1 : index
    %c30_603 = arith.constant 30 : index
    %1976 = memref.load %arg3[%c1_602, %c30_603] : memref<4x32xf32, #tpu.memory_space<smem>>
    %c2_604 = arith.constant 2 : index
    %c30_605 = arith.constant 30 : index
    %1977 = memref.load %arg3[%c2_604, %c30_605] : memref<4x32xf32, #tpu.memory_space<smem>>
    %c3_606 = arith.constant 3 : index
    %c30_607 = arith.constant 30 : index
    %1978 = memref.load %arg3[%c3_606, %c30_607] : memref<4x32xf32, #tpu.memory_space<smem>>
    %c30_608 = arith.constant 30 : index
    %c0_609 = arith.constant 0 : index
    %c0_610 = arith.constant 0 : index
    %1979 = vector.load %arg1[%c30_608, %c0_609, %c0_610] : memref<32x8x128xf32, #tpu.memory_space<vmem>>, vector<1x8x128xf32>
    %1980 = vector.shape_cast %1979 : vector<1x8x128xf32> to vector<8x128xf32>
    %1981 = arith.subf %1980, %325 : vector<8x128xf32>
    %1982 = arith.mulf %1981, %342 : vector<8x128xf32>
    %1983 = vector.broadcast %1975 : f32 to vector<8x128xf32>
    %1984 = arith.mulf %1982, %1983 : vector<8x128xf32>
    %1985 = vector.broadcast %1976 : f32 to vector<8x128xf32>
    %1986 = arith.addf %1984, %1985 : vector<8x128xf32>
    %c30_611 = arith.constant 30 : index
    %c0_612 = arith.constant 0 : index
    %c0_613 = arith.constant 0 : index
    %1987 = vector.load %arg2[%c30_611, %c0_612, %c0_613] : memref<32x8x128xf32, #tpu.memory_space<vmem>>, vector<1x8x128xf32>
    %1988 = vector.shape_cast %1987 : vector<1x8x128xf32> to vector<8x128xf32>
    %1989 = arith.subf %1988, %327 : vector<8x128xf32>
    %1990 = arith.mulf %1989, %345 : vector<8x128xf32>
    %1991 = vector.broadcast %1977 : f32 to vector<8x128xf32>
    %1992 = arith.mulf %1990, %1991 : vector<8x128xf32>
    %1993 = vector.broadcast %1978 : f32 to vector<8x128xf32>
    %1994 = arith.addf %1992, %1993 : vector<8x128xf32>
    %1995 = arith.mulf %1986, %1986 : vector<8x128xf32>
    %1996 = arith.addf %1942, %1995 : vector<8x128xf32>
    %1997 = vector.extract_strided_slice %1986 {offsets = [0, 0], sizes = [1, 128], strides = [1, 1]} : vector<8x128xf32> to vector<1x128xf32>
    %1998 = vector.broadcast %1997 : vector<1x128xf32> to vector<8x128xf32>
    %1999 = arith.mulf %1994, %1998 : vector<8x128xf32>
    %2000 = arith.addf %1946, %1999 : vector<8x128xf32>
    %2001 = vector.extract_strided_slice %1986 {offsets = [1, 0], sizes = [1, 128], strides = [1, 1]} : vector<8x128xf32> to vector<1x128xf32>
    %2002 = vector.broadcast %2001 : vector<1x128xf32> to vector<8x128xf32>
    %2003 = arith.mulf %1994, %2002 : vector<8x128xf32>
    %2004 = arith.addf %1950, %2003 : vector<8x128xf32>
    %2005 = vector.extract_strided_slice %1986 {offsets = [2, 0], sizes = [1, 128], strides = [1, 1]} : vector<8x128xf32> to vector<1x128xf32>
    %2006 = vector.broadcast %2005 : vector<1x128xf32> to vector<8x128xf32>
    %2007 = arith.mulf %1994, %2006 : vector<8x128xf32>
    %2008 = arith.addf %1954, %2007 : vector<8x128xf32>
    %2009 = vector.extract_strided_slice %1986 {offsets = [3, 0], sizes = [1, 128], strides = [1, 1]} : vector<8x128xf32> to vector<1x128xf32>
    %2010 = vector.broadcast %2009 : vector<1x128xf32> to vector<8x128xf32>
    %2011 = arith.mulf %1994, %2010 : vector<8x128xf32>
    %2012 = arith.addf %1958, %2011 : vector<8x128xf32>
    %2013 = vector.extract_strided_slice %1986 {offsets = [4, 0], sizes = [1, 128], strides = [1, 1]} : vector<8x128xf32> to vector<1x128xf32>
    %2014 = vector.broadcast %2013 : vector<1x128xf32> to vector<8x128xf32>
    %2015 = arith.mulf %1994, %2014 : vector<8x128xf32>
    %2016 = arith.addf %1962, %2015 : vector<8x128xf32>
    %2017 = vector.extract_strided_slice %1986 {offsets = [5, 0], sizes = [1, 128], strides = [1, 1]} : vector<8x128xf32> to vector<1x128xf32>
    %2018 = vector.broadcast %2017 : vector<1x128xf32> to vector<8x128xf32>
    %2019 = arith.mulf %1994, %2018 : vector<8x128xf32>
    %2020 = arith.addf %1966, %2019 : vector<8x128xf32>
    %2021 = vector.extract_strided_slice %1986 {offsets = [6, 0], sizes = [1, 128], strides = [1, 1]} : vector<8x128xf32> to vector<1x128xf32>
    %2022 = vector.broadcast %2021 : vector<1x128xf32> to vector<8x128xf32>
    %2023 = arith.mulf %1994, %2022 : vector<8x128xf32>
    %2024 = arith.addf %1970, %2023 : vector<8x128xf32>
    %2025 = vector.extract_strided_slice %1986 {offsets = [7, 0], sizes = [1, 128], strides = [1, 1]} : vector<8x128xf32> to vector<1x128xf32>
    %2026 = vector.broadcast %2025 : vector<1x128xf32> to vector<8x128xf32>
    %2027 = arith.mulf %1994, %2026 : vector<8x128xf32>
    %2028 = arith.addf %1974, %2027 : vector<8x128xf32>
    %c0_614 = arith.constant 0 : index
    %c31_615 = arith.constant 31 : index
    %2029 = memref.load %arg3[%c0_614, %c31_615] : memref<4x32xf32, #tpu.memory_space<smem>>
    %c1_616 = arith.constant 1 : index
    %c31_617 = arith.constant 31 : index
    %2030 = memref.load %arg3[%c1_616, %c31_617] : memref<4x32xf32, #tpu.memory_space<smem>>
    %c2_618 = arith.constant 2 : index
    %c31_619 = arith.constant 31 : index
    %2031 = memref.load %arg3[%c2_618, %c31_619] : memref<4x32xf32, #tpu.memory_space<smem>>
    %c3_620 = arith.constant 3 : index
    %c31_621 = arith.constant 31 : index
    %2032 = memref.load %arg3[%c3_620, %c31_621] : memref<4x32xf32, #tpu.memory_space<smem>>
    %c31_622 = arith.constant 31 : index
    %c0_623 = arith.constant 0 : index
    %c0_624 = arith.constant 0 : index
    %2033 = vector.load %arg1[%c31_622, %c0_623, %c0_624] : memref<32x8x128xf32, #tpu.memory_space<vmem>>, vector<1x8x128xf32>
    %2034 = vector.shape_cast %2033 : vector<1x8x128xf32> to vector<8x128xf32>
    %2035 = arith.subf %2034, %325 : vector<8x128xf32>
    %2036 = arith.mulf %2035, %342 : vector<8x128xf32>
    %2037 = vector.broadcast %2029 : f32 to vector<8x128xf32>
    %2038 = arith.mulf %2036, %2037 : vector<8x128xf32>
    %2039 = vector.broadcast %2030 : f32 to vector<8x128xf32>
    %2040 = arith.addf %2038, %2039 : vector<8x128xf32>
    %c31_625 = arith.constant 31 : index
    %c0_626 = arith.constant 0 : index
    %c0_627 = arith.constant 0 : index
    %2041 = vector.load %arg2[%c31_625, %c0_626, %c0_627] : memref<32x8x128xf32, #tpu.memory_space<vmem>>, vector<1x8x128xf32>
    %2042 = vector.shape_cast %2041 : vector<1x8x128xf32> to vector<8x128xf32>
    %2043 = arith.subf %2042, %327 : vector<8x128xf32>
    %2044 = arith.mulf %2043, %345 : vector<8x128xf32>
    %2045 = vector.broadcast %2031 : f32 to vector<8x128xf32>
    %2046 = arith.mulf %2044, %2045 : vector<8x128xf32>
    %2047 = vector.broadcast %2032 : f32 to vector<8x128xf32>
    %2048 = arith.addf %2046, %2047 : vector<8x128xf32>
    %2049 = arith.mulf %2040, %2040 : vector<8x128xf32>
    %2050 = arith.addf %1996, %2049 : vector<8x128xf32>
    %2051 = vector.extract_strided_slice %2040 {offsets = [0, 0], sizes = [1, 128], strides = [1, 1]} : vector<8x128xf32> to vector<1x128xf32>
    %2052 = vector.broadcast %2051 : vector<1x128xf32> to vector<8x128xf32>
    %2053 = arith.mulf %2048, %2052 : vector<8x128xf32>
    %2054 = arith.addf %2000, %2053 : vector<8x128xf32>
    %2055 = vector.extract_strided_slice %2040 {offsets = [1, 0], sizes = [1, 128], strides = [1, 1]} : vector<8x128xf32> to vector<1x128xf32>
    %2056 = vector.broadcast %2055 : vector<1x128xf32> to vector<8x128xf32>
    %2057 = arith.mulf %2048, %2056 : vector<8x128xf32>
    %2058 = arith.addf %2004, %2057 : vector<8x128xf32>
    %2059 = vector.extract_strided_slice %2040 {offsets = [2, 0], sizes = [1, 128], strides = [1, 1]} : vector<8x128xf32> to vector<1x128xf32>
    %2060 = vector.broadcast %2059 : vector<1x128xf32> to vector<8x128xf32>
    %2061 = arith.mulf %2048, %2060 : vector<8x128xf32>
    %2062 = arith.addf %2008, %2061 : vector<8x128xf32>
    %2063 = vector.extract_strided_slice %2040 {offsets = [3, 0], sizes = [1, 128], strides = [1, 1]} : vector<8x128xf32> to vector<1x128xf32>
    %2064 = vector.broadcast %2063 : vector<1x128xf32> to vector<8x128xf32>
    %2065 = arith.mulf %2048, %2064 : vector<8x128xf32>
    %2066 = arith.addf %2012, %2065 : vector<8x128xf32>
    %2067 = vector.extract_strided_slice %2040 {offsets = [4, 0], sizes = [1, 128], strides = [1, 1]} : vector<8x128xf32> to vector<1x128xf32>
    %2068 = vector.broadcast %2067 : vector<1x128xf32> to vector<8x128xf32>
    %2069 = arith.mulf %2048, %2068 : vector<8x128xf32>
    %2070 = arith.addf %2016, %2069 : vector<8x128xf32>
    %2071 = vector.extract_strided_slice %2040 {offsets = [5, 0], sizes = [1, 128], strides = [1, 1]} : vector<8x128xf32> to vector<1x128xf32>
    %2072 = vector.broadcast %2071 : vector<1x128xf32> to vector<8x128xf32>
    %2073 = arith.mulf %2048, %2072 : vector<8x128xf32>
    %2074 = arith.addf %2020, %2073 : vector<8x128xf32>
    %2075 = vector.extract_strided_slice %2040 {offsets = [6, 0], sizes = [1, 128], strides = [1, 1]} : vector<8x128xf32> to vector<1x128xf32>
    %2076 = vector.broadcast %2075 : vector<1x128xf32> to vector<8x128xf32>
    %2077 = arith.mulf %2048, %2076 : vector<8x128xf32>
    %2078 = arith.addf %2024, %2077 : vector<8x128xf32>
    %2079 = vector.extract_strided_slice %2040 {offsets = [7, 0], sizes = [1, 128], strides = [1, 1]} : vector<8x128xf32> to vector<1x128xf32>
    %2080 = vector.broadcast %2079 : vector<1x128xf32> to vector<8x128xf32>
    %2081 = arith.mulf %2048, %2080 : vector<8x128xf32>
    %2082 = arith.addf %2028, %2081 : vector<8x128xf32>
    %cst_628 = arith.constant 2.000000e+00 : f32
    %2083 = vector.broadcast %cst_628 : f32 to vector<8x128xf32>
    %2084 = arith.mulf %2083, %2054 : vector<8x128xf32>
    %2085 = vector.extract_strided_slice %2050 {offsets = [0, 0], sizes = [1, 128], strides = [1, 1]} : vector<8x128xf32> to vector<1x128xf32>
    %2086 = vector.broadcast %2085 : vector<1x128xf32> to vector<8x128xf32>
    %2087 = arith.subf %2084, %2086 : vector<8x128xf32>
    %cst_629 = arith.constant 0.176776692 : f32
    %2088 = vector.broadcast %cst_629 : f32 to vector<8x128xf32>
    %2089 = arith.mulf %2087, %2088 : vector<8x128xf32>
    %cst_630 = arith.constant 2.000000e+00 : f32
    %2090 = vector.broadcast %cst_630 : f32 to vector<8x128xf32>
    %2091 = arith.mulf %2090, %2058 : vector<8x128xf32>
    %2092 = vector.extract_strided_slice %2050 {offsets = [1, 0], sizes = [1, 128], strides = [1, 1]} : vector<8x128xf32> to vector<1x128xf32>
    %2093 = vector.broadcast %2092 : vector<1x128xf32> to vector<8x128xf32>
    %2094 = arith.subf %2091, %2093 : vector<8x128xf32>
    %cst_631 = arith.constant 0.176776692 : f32
    %2095 = vector.broadcast %cst_631 : f32 to vector<8x128xf32>
    %2096 = arith.mulf %2094, %2095 : vector<8x128xf32>
    %cst_632 = arith.constant 2.000000e+00 : f32
    %2097 = vector.broadcast %cst_632 : f32 to vector<8x128xf32>
    %2098 = arith.mulf %2097, %2062 : vector<8x128xf32>
    %2099 = vector.extract_strided_slice %2050 {offsets = [2, 0], sizes = [1, 128], strides = [1, 1]} : vector<8x128xf32> to vector<1x128xf32>
    %2100 = vector.broadcast %2099 : vector<1x128xf32> to vector<8x128xf32>
    %2101 = arith.subf %2098, %2100 : vector<8x128xf32>
    %cst_633 = arith.constant 0.176776692 : f32
    %2102 = vector.broadcast %cst_633 : f32 to vector<8x128xf32>
    %2103 = arith.mulf %2101, %2102 : vector<8x128xf32>
    %cst_634 = arith.constant 2.000000e+00 : f32
    %2104 = vector.broadcast %cst_634 : f32 to vector<8x128xf32>
    %2105 = arith.mulf %2104, %2066 : vector<8x128xf32>
    %2106 = vector.extract_strided_slice %2050 {offsets = [3, 0], sizes = [1, 128], strides = [1, 1]} : vector<8x128xf32> to vector<1x128xf32>
    %2107 = vector.broadcast %2106 : vector<1x128xf32> to vector<8x128xf32>
    %2108 = arith.subf %2105, %2107 : vector<8x128xf32>
    %cst_635 = arith.constant 0.176776692 : f32
    %2109 = vector.broadcast %cst_635 : f32 to vector<8x128xf32>
    %2110 = arith.mulf %2108, %2109 : vector<8x128xf32>
    %cst_636 = arith.constant 2.000000e+00 : f32
    %2111 = vector.broadcast %cst_636 : f32 to vector<8x128xf32>
    %2112 = arith.mulf %2111, %2070 : vector<8x128xf32>
    %2113 = vector.extract_strided_slice %2050 {offsets = [4, 0], sizes = [1, 128], strides = [1, 1]} : vector<8x128xf32> to vector<1x128xf32>
    %2114 = vector.broadcast %2113 : vector<1x128xf32> to vector<8x128xf32>
    %2115 = arith.subf %2112, %2114 : vector<8x128xf32>
    %cst_637 = arith.constant 0.176776692 : f32
    %2116 = vector.broadcast %cst_637 : f32 to vector<8x128xf32>
    %2117 = arith.mulf %2115, %2116 : vector<8x128xf32>
    %cst_638 = arith.constant 2.000000e+00 : f32
    %2118 = vector.broadcast %cst_638 : f32 to vector<8x128xf32>
    %2119 = arith.mulf %2118, %2074 : vector<8x128xf32>
    %2120 = vector.extract_strided_slice %2050 {offsets = [5, 0], sizes = [1, 128], strides = [1, 1]} : vector<8x128xf32> to vector<1x128xf32>
    %2121 = vector.broadcast %2120 : vector<1x128xf32> to vector<8x128xf32>
    %2122 = arith.subf %2119, %2121 : vector<8x128xf32>
    %cst_639 = arith.constant 0.176776692 : f32
    %2123 = vector.broadcast %cst_639 : f32 to vector<8x128xf32>
    %2124 = arith.mulf %2122, %2123 : vector<8x128xf32>
    %cst_640 = arith.constant 2.000000e+00 : f32
    %2125 = vector.broadcast %cst_640 : f32 to vector<8x128xf32>
    %2126 = arith.mulf %2125, %2078 : vector<8x128xf32>
    %2127 = vector.extract_strided_slice %2050 {offsets = [6, 0], sizes = [1, 128], strides = [1, 1]} : vector<8x128xf32> to vector<1x128xf32>
    %2128 = vector.broadcast %2127 : vector<1x128xf32> to vector<8x128xf32>
    %2129 = arith.subf %2126, %2128 : vector<8x128xf32>
    %cst_641 = arith.constant 0.176776692 : f32
    %2130 = vector.broadcast %cst_641 : f32 to vector<8x128xf32>
    %2131 = arith.mulf %2129, %2130 : vector<8x128xf32>
    %cst_642 = arith.constant 2.000000e+00 : f32
    %2132 = vector.broadcast %cst_642 : f32 to vector<8x128xf32>
    %2133 = arith.mulf %2132, %2082 : vector<8x128xf32>
    %2134 = vector.extract_strided_slice %2050 {offsets = [7, 0], sizes = [1, 128], strides = [1, 1]} : vector<8x128xf32> to vector<1x128xf32>
    %2135 = vector.broadcast %2134 : vector<1x128xf32> to vector<8x128xf32>
    %2136 = arith.subf %2133, %2135 : vector<8x128xf32>
    %cst_643 = arith.constant 0.176776692 : f32
    %2137 = vector.broadcast %cst_643 : f32 to vector<8x128xf32>
    %2138 = arith.mulf %2136, %2137 : vector<8x128xf32>
    %2139 = arith.maximumf %2089, %2096 : vector<8x128xf32>
    %2140 = arith.maximumf %2139, %2103 : vector<8x128xf32>
    %2141 = arith.maximumf %2140, %2110 : vector<8x128xf32>
    %2142 = arith.maximumf %2141, %2117 : vector<8x128xf32>
    %2143 = arith.maximumf %2142, %2124 : vector<8x128xf32>
    %2144 = arith.maximumf %2143, %2131 : vector<8x128xf32>
    %2145 = arith.maximumf %2144, %2138 : vector<8x128xf32>
    %2146 = arith.subf %2089, %2145 : vector<8x128xf32>
    %2147 = math.exp %2146 : vector<8x128xf32>
    %2148 = arith.subf %2096, %2145 : vector<8x128xf32>
    %2149 = math.exp %2148 : vector<8x128xf32>
    %2150 = arith.subf %2103, %2145 : vector<8x128xf32>
    %2151 = math.exp %2150 : vector<8x128xf32>
    %2152 = arith.subf %2110, %2145 : vector<8x128xf32>
    %2153 = math.exp %2152 : vector<8x128xf32>
    %2154 = arith.subf %2117, %2145 : vector<8x128xf32>
    %2155 = math.exp %2154 : vector<8x128xf32>
    %2156 = arith.subf %2124, %2145 : vector<8x128xf32>
    %2157 = math.exp %2156 : vector<8x128xf32>
    %2158 = arith.subf %2131, %2145 : vector<8x128xf32>
    %2159 = math.exp %2158 : vector<8x128xf32>
    %2160 = arith.subf %2138, %2145 : vector<8x128xf32>
    %2161 = math.exp %2160 : vector<8x128xf32>
    %2162 = arith.addf %2147, %2149 : vector<8x128xf32>
    %2163 = arith.addf %2162, %2151 : vector<8x128xf32>
    %2164 = arith.addf %2163, %2153 : vector<8x128xf32>
    %2165 = arith.addf %2164, %2155 : vector<8x128xf32>
    %2166 = arith.addf %2165, %2157 : vector<8x128xf32>
    %2167 = arith.addf %2166, %2159 : vector<8x128xf32>
    %2168 = arith.addf %2167, %2161 : vector<8x128xf32>
    %cst_644 = arith.constant 1.000000e+00 : f32
    %2169 = vector.broadcast %cst_644 : f32 to vector<8x128xf32>
    %2170 = arith.divf %2169, %2168 : vector<8x128xf32>
    %2171 = arith.mulf %2149, %2170 : vector<8x128xf32>
    %2172 = arith.mulf %2151, %2170 : vector<8x128xf32>
    %2173 = arith.mulf %2153, %2170 : vector<8x128xf32>
    %2174 = arith.mulf %2155, %2170 : vector<8x128xf32>
    %2175 = arith.mulf %2157, %2170 : vector<8x128xf32>
    %2176 = arith.mulf %2159, %2170 : vector<8x128xf32>
    %2177 = arith.mulf %2161, %2170 : vector<8x128xf32>
    %2178 = arith.addf %2174, %2175 : vector<8x128xf32>
    %2179 = arith.addf %2178, %2176 : vector<8x128xf32>
    %2180 = arith.addf %2179, %2177 : vector<8x128xf32>
    %c0_645 = arith.constant 0 : index
    %c0_646 = arith.constant 0 : index
    %c0_647 = arith.constant 0 : index
    %2181 = vector.load %arg4[%c0_645, %c0_646, %c0_647] : memref<3x8x128xf32, #tpu.memory_space<vmem>>, vector<1x8x128xf32>
    %2182 = vector.shape_cast %2181 : vector<1x8x128xf32> to vector<8x128xf32>
    %2183 = vector.shape_cast %2180 : vector<8x128xf32> to vector<1x8x128xf32>
    tpu.vector_store %arg4[%c0_645, %c0_646, %c0_647], %2183 {strides = array<i32>} : memref<3x8x128xf32, #tpu.memory_space<vmem>>, vector<1x8x128xf32>,
    %2184 = arith.addf %2172, %2173 : vector<8x128xf32>
    %2185 = arith.addf %2184, %2176 : vector<8x128xf32>
    %2186 = arith.addf %2185, %2177 : vector<8x128xf32>
    %c1_648 = arith.constant 1 : index
    %c0_649 = arith.constant 0 : index
    %c0_650 = arith.constant 0 : index
    %2187 = vector.load %arg4[%c1_648, %c0_649, %c0_650] : memref<3x8x128xf32, #tpu.memory_space<vmem>>, vector<1x8x128xf32>
    %2188 = vector.shape_cast %2187 : vector<1x8x128xf32> to vector<8x128xf32>
    %2189 = vector.shape_cast %2186 : vector<8x128xf32> to vector<1x8x128xf32>
    tpu.vector_store %arg4[%c1_648, %c0_649, %c0_650], %2189 {strides = array<i32>} : memref<3x8x128xf32, #tpu.memory_space<vmem>>, vector<1x8x128xf32>,
    %2190 = arith.addf %2171, %2173 : vector<8x128xf32>
    %2191 = arith.addf %2190, %2175 : vector<8x128xf32>
    %2192 = arith.addf %2191, %2177 : vector<8x128xf32>
    %c2_651 = arith.constant 2 : index
    %c0_652 = arith.constant 0 : index
    %c0_653 = arith.constant 0 : index
    %2193 = vector.load %arg4[%c2_651, %c0_652, %c0_653] : memref<3x8x128xf32, #tpu.memory_space<vmem>>, vector<1x8x128xf32>
    %2194 = vector.shape_cast %2193 : vector<1x8x128xf32> to vector<8x128xf32>
    %2195 = vector.shape_cast %2192 : vector<8x128xf32> to vector<1x8x128xf32>
    tpu.vector_store %arg4[%c2_651, %c0_652, %c0_653], %2195 {strides = array<i32>} : memref<3x8x128xf32, #tpu.memory_space<vmem>>, vector<1x8x128xf32>,
    return
  }
  func.func @transform_0(%arg0: i32) -> (i32, i32, i32) {
    %c0_i32 = arith.constant 0 : i32
    %c0_i32_0 = arith.constant 0 : i32
    %c0_i32_1 = arith.constant 0 : i32
    return %c0_i32, %c0_i32_0, %arg0 : i32, i32, i32
  }
  func.func @transform_1(%arg0: i32) -> (i32, i32, i32) {
    %c0_i32 = arith.constant 0 : i32
    %c0_i32_0 = arith.constant 0 : i32
    %c0_i32_1 = arith.constant 0 : i32
    return %c0_i32, %c0_i32_0, %arg0 : i32, i32, i32
  }
  func.func @transform_2(%arg0: i32) -> (i32, i32) {
    %c0_i32 = arith.constant 0 : i32
    %c0_i32_0 = arith.constant 0 : i32
    %c0_i32_1 = arith.constant 0 : i32
    return %c0_i32, %c0_i32_0 : i32, i32
  }
  func.func @transform_3(%arg0: i32) -> (i32, i32, i32) {
    %c0_i32 = arith.constant 0 : i32
    %c0_i32_0 = arith.constant 0 : i32
    %c0_i32_1 = arith.constant 0 : i32
    return %c0_i32, %c0_i32_0, %arg0 : i32, i32, i32
  }
}

</mosaic_0001>

<llo_original>
// kernel: tpu_custom_call.1
$region0: #{tpu_custom_call.1}
  #allocation0 [shape = 'u32[]', space=smem, size = 0x4, offset = 0x4, fixed_abs, tag = 'smem constant byte address 0x4 - core index']
  #allocation1 [shape = 'u32[144,128]{1,0:T(1,128)}', space=vmem, size = 0x12000, scoped, tag = 'internal scratch']
  %s0 = inlined_call_operand.hbm [shape: f32[32,8,128], index: 0, kind: input, shape index: {}]
  %s1 = inlined_call_operand.hbm [shape: f32[32,8,128], index: 1, kind: input, shape index: {}]
  %s2 = inlined_call_operand.vmem [shape: f32[4,32], index: 2, kind: input, shape index: {}]
  %s3 = inlined_call_operand.hbm [shape: f32[3,8,128], index: 3, kind: output, shape index: {}]
  %s4 = sld [smem:[#allocation0]]
  $region34: #{tpu_custom_call.1} parent=0
    _
  %s6 = ssub.s32 1, %s4
  %s7 = scalar_select 0, %s6, %s4
  $region1: #{tpu_custom_call.1} parent=0
    #allocation2 [shape = 'u8[131072]{0}', space=vmem, size = 0x20000, scoped, tag = 'input window, operand 0, single buffered']
    #allocation3 [shape = 's32[1]{0}', space=sflag, size = 0x4, scoped, tag = 'scoped memory for tpu_custom_call.1']
    #allocation4 [shape = 's32[1]{0}', space=sflag, size = 0x4, scoped, tag = 'scoped memory for tpu_custom_call.1']
    #allocation5 [shape = 's32[1]{0}', space=sflag, size = 0x4, scoped, tag = 'scoped memory for tpu_custom_call.1']
    #allocation6 [shape = 'u8[131072]{0}', space=vmem, size = 0x20000, scoped, tag = 'input window, operand 1, single buffered']
    #allocation7 [shape = 's32[1]{0}', space=sflag, size = 0x4, scoped, tag = 'scoped memory for tpu_custom_call.1']
    #allocation8 [shape = 'u8[2048]{0}', space=smem, size = 0x800, scoped, tag = 'input window, operand 2, single buffered']
    #allocation9 [shape = 'u8[12288]{0}', space=vmem, size = 0x3000, scoped, tag = 'output window, operand 0, single buffered']
    %8 = vsyncpa [#allocation3], 0
    %9 = vsyncpa [#allocation7], 0
    %10 = vsyncpa [#allocation5], 0
    %11 = vsyncpa [#allocation4], 0
    // Predicated region
    $region2: #{tpu_custom_call.1} parent=1 // pred_check
      _
    $region3: #{tpu_custom_call.1} parent=1 // pred_check_branch
      %13 = sbr.rel (0) target = $region5
    $region4: #{tpu_custom_call.1} parent=1 // pred_region
      %s15 = ssub.s32 4096, 4096
      %16 = vsyncadd [#allocation3], %s15
      %s17 = sshll.u32 [#allocation2], 4
      %s18 = int_to_ptr.vmem [resolvable:$true] %s17
      %23 = dma.hbm_to_vmem [thread:$0]  %s0, 4096, %s18, [#allocation3], 128, 128, 8
    $region5: #{tpu_custom_call.1} parent=1 // pred_fallthru
      _
    // Predicated region
    $region6: #{tpu_custom_call.1} parent=1 // pred_check
      _
    $region7: #{tpu_custom_call.1} parent=1 // pred_check_branch
      %25 = sbr.rel (0) target = $region9
    $region8: #{tpu_custom_call.1} parent=1 // pred_region
      %s27 = ssub.s32 4096, 4096
      %28 = vsyncadd [#allocation7], %s27
      %s29 = sshll.u32 [#allocation6], 4
      %s30 = int_to_ptr.vmem [resolvable:$true] %s29
      %35 = dma.hbm_to_vmem [thread:$0]  %s1, 4096, %s30, [#allocation7], 128, 128, 8
    $region9: #{tpu_custom_call.1} parent=1 // pred_fallthru
      _
    // Predicated region
    $region10: #{tpu_custom_call.1} parent=1 // pred_check
      _
    $region11: #{tpu_custom_call.1} parent=1 // pred_check_branch
      %37 = sbr.rel (0) target = $region13
    $region12: #{tpu_custom_call.1} parent=1 // pred_region
      %s39 = ssub.s32 64, 64
      %40 = vsyncadd [#allocation5], %s39
      %s42 = sshll.u32 %s2, 4
      %s43 = int_to_ptr.vmem [resolvable:$true] %s42
      %45 = dma.vmem_to_smem %s43, 64, [#allocation8], [#allocation5]
    $region13: #{tpu_custom_call.1} parent=1 // pred_fallthru
      _
    // Predicated region
    $region14: #{tpu_custom_call.1} parent=1 // pred_check
      _
    $region15: #{tpu_custom_call.1} parent=1 // pred_check_branch
      %47 = sbr.rel (0) target = $region17
    $region16: #{tpu_custom_call.1} parent=1 // pred_region
      %48 = dma.done [#allocation3], 4096
    $region17: #{tpu_custom_call.1} parent=1 // pred_fallthru
      _
    // Predicated region
    $region18: #{tpu_custom_call.1} parent=1 // pred_check
      _
    $region19: #{tpu_custom_call.1} parent=1 // pred_check_branch
      %50 = sbr.rel (0) target = $region21
    $region20: #{tpu_custom_call.1} parent=1 // pred_region
      %51 = dma.done [#allocation7], 4096
    $region21: #{tpu_custom_call.1} parent=1 // pred_fallthru
      _
    // Predicated region
    $region22: #{tpu_custom_call.1} parent=1 // pred_check
      _
    $region23: #{tpu_custom_call.1} parent=1 // pred_check_branch
      %53 = sbr.rel (0) target = $region25
    $region24: #{tpu_custom_call.1} parent=1 // pred_region
      %54 = dma.done [#allocation5], 64
    $region25: #{tpu_custom_call.1} parent=1 // pred_fallthru
      _
    %55 = sfence
    %v56 = vld [vmem:[#allocation2] sm:$0xff]
    %v57 = vld [vmem:[#allocation6] sm:$0xff]
    %v58 = vadd.f32 %v56, 0.0
    %v59 = vmul.f32 %v56, %v56
    %v60 = vadd.f32 %v59, 0.0
    %v61 = vadd.f32 %v57, 0.0
    %v62 = vmul.f32 %v57, %v57
    %v63 = vadd.f32 %v62, 0.0
    %s64 = scalar_lea.vmem [#allocation2], 8
    %v65 = vld [vmem:[%s64] sm:$0xff]
    %s66 = scalar_lea.vmem [#allocation6], 8
    %v67 = vld [vmem:[%s66] sm:$0xff]
    %v68 = vadd.f32 %v58, %v65
    %v69 = vmul.f32 %v65, %v65
    %v70 = vadd.f32 %v60, %v69
    %v71 = vadd.f32 %v61, %v67
    %v72 = vmul.f32 %v67, %v67
    %v73 = vadd.f32 %v63, %v72
    %s74 = scalar_lea.vmem [#allocation2], 16
    %v75 = vld [vmem:[%s74] sm:$0xff]
    %s76 = scalar_lea.vmem [#allocation6], 16
    %v77 = vld [vmem:[%s76] sm:$0xff]
    %v78 = vadd.f32 %v68, %v75
    %v79 = vmul.f32 %v75, %v75
    %v80 = vadd.f32 %v70, %v79
    %v81 = vadd.f32 %v71, %v77
    %v82 = vmul.f32 %v77, %v77
    %v83 = vadd.f32 %v73, %v82
    %s84 = scalar_lea.vmem [#allocation2], 24
    %v85 = vld [vmem:[%s84] sm:$0xff]
    %s86 = scalar_lea.vmem [#allocation6], 24
    %v87 = vld [vmem:[%s86] sm:$0xff]
    %v88 = vadd.f32 %v78, %v85
    %v89 = vmul.f32 %v85, %v85
    %v90 = vadd.f32 %v80, %v89
    %v91 = vadd.f32 %v81, %v87
    %v92 = vmul.f32 %v87, %v87
    %v93 = vadd.f32 %v83, %v92
    %s94 = scalar_lea.vmem [#allocation2], 32
    %v95 = vld [vmem:[%s94] sm:$0xff]
    %s96 = scalar_lea.vmem [#allocation6], 32
    %v97 = vld [vmem:[%s96] sm:$0xff]
    %v98 = vadd.f32 %v88, %v95
    %v99 = vmul.f32 %v95, %v95
    %v100 = vadd.f32 %v90, %v99
    %v101 = vadd.f32 %v91, %v97
    %v102 = vmul.f32 %v97, %v97
    %v103 = vadd.f32 %v93, %v102
    %s104 = scalar_lea.vmem [#allocation2], 40
    %v105 = vld [vmem:[%s104] sm:$0xff]
    %s106 = scalar_lea.vmem [#allocation6], 40
    %v107 = vld [vmem:[%s106] sm:$0xff]
    %v108 = vadd.f32 %v98, %v105
    %v109 = vmul.f32 %v105, %v105
    %v110 = vadd.f32 %v100, %v109
    %v111 = vadd.f32 %v101, %v107
    %v112 = vmul.f32 %v107, %v107
    %v113 = vadd.f32 %v103, %v112
    %s114 = scalar_lea.vmem [#allocation2], 48
    %v115 = vld [vmem:[%s114] sm:$0xff]
    %s116 = scalar_lea.vmem [#allocation6], 48
    %v117 = vld [vmem:[%s116] sm:$0xff]
    %v118 = vadd.f32 %v108, %v115
    %v119 = vmul.f32 %v115, %v115
    %v120 = vadd.f32 %v110, %v119
    %v121 = vadd.f32 %v111, %v117
    %v122 = vmul.f32 %v117, %v117
    %v123 = vadd.f32 %v113, %v122
    %s124 = scalar_lea.vmem [#allocation2], 56
    %v125 = vld [vmem:[%s124] sm:$0xff]
    %s126 = scalar_lea.vmem [#allocation6], 56
    %v127 = vld [vmem:[%s126] sm:$0xff]
    %v128 = vadd.f32 %v118, %v125
    %v129 = vmul.f32 %v125, %v125
    %v130 = vadd.f32 %v120, %v129
    %v131 = vadd.f32 %v121, %v127
    %v132 = vmul.f32 %v127, %v127
    %v133 = vadd.f32 %v123, %v132
    %s134 = scalar_lea.vmem [#allocation2], 64
    %v135 = vld [vmem:[%s134] sm:$0xff]
    %s136 = scalar_lea.vmem [#allocation6], 64
    %v137 = vld [vmem:[%s136] sm:$0xff]
    %v138 = vadd.f32 %v128, %v135
    %v139 = vmul.f32 %v135, %v135
    %v140 = vadd.f32 %v130, %v139
    %v141 = vadd.f32 %v131, %v137
    %v142 = vmul.f32 %v137, %v137
    %v143 = vadd.f32 %v133, %v142
    %s144 = scalar_lea.vmem [#allocation2], 72
    %v145 = vld [vmem:[%s144] sm:$0xff]
    %s146 = scalar_lea.vmem [#allocation6], 72
    %v147 = vld [vmem:[%s146] sm:$0xff]
    %v148 = vadd.f32 %v138, %v145
    %v149 = vmul.f32 %v145, %v145
    %v150 = vadd.f32 %v140, %v149
    %v151 = vadd.f32 %v141, %v147
    %v152 = vmul.f32 %v147, %v147
    %v153 = vadd.f32 %v143, %v152
    %s154 = scalar_lea.vmem [#allocation2], 80
    %v155 = vld [vmem:[%s154] sm:$0xff]
    %s156 = scalar_lea.vmem [#allocation6], 80
    %v157 = vld [vmem:[%s156] sm:$0xff]
    %v158 = vadd.f32 %v148, %v155
    %v159 = vmul.f32 %v155, %v155
    %v160 = vadd.f32 %v150, %v159
    %v161 = vadd.f32 %v151, %v157
    %v162 = vmul.f32 %v157, %v157
    %v163 = vadd.f32 %v153, %v162
    %s164 = scalar_lea.vmem [#allocation2], 88
    %v165 = vld [vmem:[%s164] sm:$0xff]
    %s166 = scalar_lea.vmem [#allocation6], 88
    %v167 = vld [vmem:[%s166] sm:$0xff]
    %v168 = vadd.f32 %v158, %v165
    %v169 = vmul.f32 %v165, %v165
    %v170 = vadd.f32 %v160, %v169
    %v171 = vadd.f32 %v161, %v167
    %v172 = vmul.f32 %v167, %v167
    %v173 = vadd.f32 %v163, %v172
    %s174 = scalar_lea.vmem [#allocation2], 96
    %v175 = vld [vmem:[%s174] sm:$0xff]
    %s176 = scalar_lea.vmem [#allocation6], 96
    %v177 = vld [vmem:[%s176] sm:$0xff]
    %v178 = vadd.f32 %v168, %v175
    %v179 = vmul.f32 %v175, %v175
    %v180 = vadd.f32 %v170, %v179
    %v181 = vadd.f32 %v171, %v177
    %v182 = vmul.f32 %v177, %v177
    %v183 = vadd.f32 %v173, %v182
    %s184 = scalar_lea.vmem [#allocation2], 104
    %v185 = vld [vmem:[%s184] sm:$0xff]
    %s186 = scalar_lea.vmem [#allocation6], 104
    %v187 = vld [vmem:[%s186] sm:$0xff]
    %v188 = vadd.f32 %v178, %v185
    %v189 = vmul.f32 %v185, %v185
    %v190 = vadd.f32 %v180, %v189
    %v191 = vadd.f32 %v181, %v187
    %v192 = vmul.f32 %v187, %v187
    %v193 = vadd.f32 %v183, %v192
    %s194 = scalar_lea.vmem [#allocation2], 112
    %v195 = vld [vmem:[%s194] sm:$0xff]
    %s196 = scalar_lea.vmem [#allocation6], 112
    %v197 = vld [vmem:[%s196] sm:$0xff]
    %v198 = vadd.f32 %v188, %v195
    %v199 = vmul.f32 %v195, %v195
    %v200 = vadd.f32 %v190, %v199
    %v201 = vadd.f32 %v191, %v197
    %v202 = vmul.f32 %v197, %v197
    %v203 = vadd.f32 %v193, %v202
    %s204 = scalar_lea.vmem [#allocation2], 120
    %v205 = vld [vmem:[%s204] sm:$0xff]
    %s206 = scalar_lea.vmem [#allocation6], 120
    %v207 = vld [vmem:[%s206] sm:$0xff]
    %v208 = vadd.f32 %v198, %v205
    %v209 = vmul.f32 %v205, %v205
    %v210 = vadd.f32 %v200, %v209
    %v211 = vadd.f32 %v201, %v207
    %v212 = vmul.f32 %v207, %v207
    %v213 = vadd.f32 %v203, %v212
    %s214 = scalar_lea.vmem [#allocation2], 128
    %v215 = vld [vmem:[%s214] sm:$0xff]
    %s216 = scalar_lea.vmem [#allocation6], 128
    %v217 = vld [vmem:[%s216] sm:$0xff]
    %v218 = vadd.f32 %v208, %v215
    %v219 = vmul.f32 %v215, %v215
    %v220 = vadd.f32 %v210, %v219
    %v221 = vadd.f32 %v211, %v217
    %v222 = vmul.f32 %v217, %v217
    %v223 = vadd.f32 %v213, %v222
    %s224 = scalar_lea.vmem [#allocation2], 136
    %v225 = vld [vmem:[%s224] sm:$0xff]
    %s226 = scalar_lea.vmem [#allocation6], 136
    %v227 = vld [vmem:[%s226] sm:$0xff]
    %v228 = vadd.f32 %v218, %v225
    %v229 = vmul.f32 %v225, %v225
    %v230 = vadd.f32 %v220, %v229
    %v231 = vadd.f32 %v221, %v227
    %v232 = vmul.f32 %v227, %v227
    %v233 = vadd.f32 %v223, %v232
    %s234 = scalar_lea.vmem [#allocation2], 144
    %v235 = vld [vmem:[%s234] sm:$0xff]
    %s236 = scalar_lea.vmem [#allocation6], 144
    %v237 = vld [vmem:[%s236] sm:$0xff]
    %v238 = vadd.f32 %v228, %v235
    %v239 = vmul.f32 %v235, %v235
    %v240 = vadd.f32 %v230, %v239
    %v241 = vadd.f32 %v231, %v237
    %v242 = vmul.f32 %v237, %v237
    %v243 = vadd.f32 %v233, %v242
    %s244 = scalar_lea.vmem [#allocation2], 152
    %v245 = vld [vmem:[%s244] sm:$0xff]
    %s246 = scalar_lea.vmem [#allocation6], 152
    %v247 = vld [vmem:[%s246] sm:$0xff]
    %v248 = vadd.f32 %v238, %v245
    %v249 = vmul.f32 %v245, %v245
    %v250 = vadd.f32 %v240, %v249
    %v251 = vadd.f32 %v241, %v247
    %v252 = vmul.f32 %v247, %v247
    %v253 = vadd.f32 %v243, %v252
    %s254 = scalar_lea.vmem [#allocation2], 160
    %v255 = vld [vmem:[%s254] sm:$0xff]
    %s256 = scalar_lea.vmem [#allocation6], 160
    %v257 = vld [vmem:[%s256] sm:$0xff]
    %v258 = vadd.f32 %v248, %v255
    %v259 = vmul.f32 %v255, %v255
    %v260 = vadd.f32 %v250, %v259
    %v261 = vadd.f32 %v251, %v257
    %v262 = vmul.f32 %v257, %v257
    %v263 = vadd.f32 %v253, %v262
    %s264 = scalar_lea.vmem [#allocation2], 168
    %v265 = vld [vmem:[%s264] sm:$0xff]
    %s266 = scalar_lea.vmem [#allocation6], 168
    %v267 = vld [vmem:[%s266] sm:$0xff]
    %v268 = vadd.f32 %v258, %v265
    %v269 = vmul.f32 %v265, %v265
    %v270 = vadd.f32 %v260, %v269
    %v271 = vadd.f32 %v261, %v267
    %v272 = vmul.f32 %v267, %v267
    %v273 = vadd.f32 %v263, %v272
    %s274 = scalar_lea.vmem [#allocation2], 176
    %v275 = vld [vmem:[%s274] sm:$0xff]
    %s276 = scalar_lea.vmem [#allocation6], 176
    %v277 = vld [vmem:[%s276] sm:$0xff]
    %v278 = vadd.f32 %v268, %v275
    %v279 = vmul.f32 %v275, %v275
    %v280 = vadd.f32 %v270, %v279
    %v281 = vadd.f32 %v271, %v277
    %v282 = vmul.f32 %v277, %v277
    %v283 = vadd.f32 %v273, %v282
    %s284 = scalar_lea.vmem [#allocation2], 184
    %v285 = vld [vmem:[%s284] sm:$0xff]
    %s286 = scalar_lea.vmem [#allocation6], 184
    %v287 = vld [vmem:[%s286] sm:$0xff]
    %v288 = vadd.f32 %v278, %v285
    %v289 = vmul.f32 %v285, %v285
    %v290 = vadd.f32 %v280, %v289
    %v291 = vadd.f32 %v281, %v287
    %v292 = vmul.f32 %v287, %v287
    %v293 = vadd.f32 %v283, %v292
    %s294 = scalar_lea.vmem [#allocation2], 192
    %v295 = vld [vmem:[%s294] sm:$0xff]
    %s296 = scalar_lea.vmem [#allocation6], 192
    %v297 = vld [vmem:[%s296] sm:$0xff]
    %v298 = vadd.f32 %v288, %v295
    %v299 = vmul.f32 %v295, %v295
    %v300 = vadd.f32 %v290, %v299
    %v301 = vadd.f32 %v291, %v297
    %v302 = vmul.f32 %v297, %v297
    %v303 = vadd.f32 %v293, %v302
    %s304 = scalar_lea.vmem [#allocation2], 200
    %v305 = vld [vmem:[%s304] sm:$0xff]
    %s306 = scalar_lea.vmem [#allocation6], 200
    %v307 = vld [vmem:[%s306] sm:$0xff]
    %v308 = vadd.f32 %v298, %v305
    %v309 = vmul.f32 %v305, %v305
    %v310 = vadd.f32 %v300, %v309
    %v311 = vadd.f32 %v301, %v307
    %v312 = vmul.f32 %v307, %v307
    %v313 = vadd.f32 %v303, %v312
    %s314 = scalar_lea.vmem [#allocation2], 208
    %v315 = vld [vmem:[%s314] sm:$0xff]
    %s316 = scalar_lea.vmem [#allocation6], 208
    %v317 = vld [vmem:[%s316] sm:$0xff]
    %v318 = vadd.f32 %v308, %v315
    %v319 = vmul.f32 %v315, %v315
    %v320 = vadd.f32 %v310, %v319
    %v321 = vadd.f32 %v311, %v317
    %v322 = vmul.f32 %v317, %v317
    %v323 = vadd.f32 %v313, %v322
    %s324 = scalar_lea.vmem [#allocation2], 216
    %v325 = vld [vmem:[%s324] sm:$0xff]
    %s326 = scalar_lea.vmem [#allocation6], 216
    %v327 = vld [vmem:[%s326] sm:$0xff]
    %v328 = vadd.f32 %v318, %v325
    %v329 = vmul.f32 %v325, %v325
    %v330 = vadd.f32 %v320, %v329
    %v331 = vadd.f32 %v321, %v327
    %v332 = vmul.f32 %v327, %v327
    %v333 = vadd.f32 %v323, %v332
    %s334 = scalar_lea.vmem [#allocation2], 224
    %v335 = vld [vmem:[%s334] sm:$0xff]
    %s336 = scalar_lea.vmem [#allocation6], 224
    %v337 = vld [vmem:[%s336] sm:$0xff]
    %v338 = vadd.f32 %v328, %v335
    %v339 = vmul.f32 %v335, %v335
    %v340 = vadd.f32 %v330, %v339
    %v341 = vadd.f32 %v331, %v337
    %v342 = vmul.f32 %v337, %v337
    %v343 = vadd.f32 %v333, %v342
    %s344 = scalar_lea.vmem [#allocation2], 232
    %v345 = vld [vmem:[%s344] sm:$0xff]
    %s346 = scalar_lea.vmem [#allocation6], 232
    %v347 = vld [vmem:[%s346] sm:$0xff]
    %v348 = vadd.f32 %v338, %v345
    %v349 = vmul.f32 %v345, %v345
    %v350 = vadd.f32 %v340, %v349
    %v351 = vadd.f32 %v341, %v347
    %v352 = vmul.f32 %v347, %v347
    %v353 = vadd.f32 %v343, %v352
    %s354 = scalar_lea.vmem [#allocation2], 240
    %v355 = vld [vmem:[%s354] sm:$0xff]
    %s356 = scalar_lea.vmem [#allocation6], 240
    %v357 = vld [vmem:[%s356] sm:$0xff]
    %v358 = vadd.f32 %v348, %v355
    %v359 = vmul.f32 %v355, %v355
    %v360 = vadd.f32 %v350, %v359
    %v361 = vadd.f32 %v351, %v357
    %v362 = vmul.f32 %v357, %v357
    %v363 = vadd.f32 %v353, %v362
    %s364 = scalar_lea.vmem [#allocation2], 248
    %v365 = vld [vmem:[%s364] sm:$0xff]
    %s366 = scalar_lea.vmem [#allocation6], 248
    %v367 = vld [vmem:[%s366] sm:$0xff]
    %v368 = vadd.f32 %v358, %v365
    %v369 = vmul.f32 %v365, %v365
    %v370 = vadd.f32 %v360, %v369
    %v371 = vadd.f32 %v361, %v367
    %v372 = vmul.f32 %v367, %v367
    %v373 = vadd.f32 %v363, %v372
    %v374 = vmul.f32 %v368, 0.03125
    %v375 = vmul.f32 %v371, 0.03125
    %v376 = vmul.f32 %v370, 0.03125
    %v377 = vmul.f32 %v374, %v374
    %v378 = vsub.f32 %v376, %v377
    %v379 = vmax.f32 %v378, 0.0
    %v380 = vmul.f32 %v373, 0.03125
    %v381 = vmul.f32 %v375, %v375
    %v382 = vsub.f32 %v380, %v381
    %v383 = vmax.f32 %v382, 0.0
    %v384 = vadd.f32 %v379, 1e-05
    %v385 = vrsqrt.pop %v384
    %v386 = vadd.f32 %v383, 1e-05
    %v387 = vrsqrt.pop %v386
    %s388 = sld [smem:[#allocation8]]
    %s389 = sld [smem:[#allocation8 + $0x80]]
    %s390 = sld [smem:[#allocation8 + $0x100]]
    %s391 = sld [smem:[#allocation8 + $0x180]]
    %v392 = vsub.f32 %v56, %v374
    %v393 = vmul.f32 %v392, %v385
    %v394 = vstv %s388
    %v395 = vmul.f32 %v393, %v394
    %v396 = vstv %s389
    %v397 = vadd.f32 %v395, %v396
    %v398 = vsub.f32 %v57, %v375
    %v399 = vmul.f32 %v398, %v387
    %v400 = vstv %s390
    %v401 = vmul.f32 %v399, %v400
    %v402 = vstv %s391
    %v403 = vadd.f32 %v401, %v402
    %v404 = vmul.f32 %v397, %v397
    %v405 = vadd.f32 %v404, 0.0
    %v406 = vlaneseq
    %v407 = vshrl.u32 %v406, 7
    %v408 = vsub.s32 0, %v407
    %v409 = vrot.slane %v397, %v408
    %v410 = vmul.f32 %v403, %v409
    %v411 = vadd.f32 %v410, 0.0
    %v412 = vlaneseq
    %v413 = vshrl.u32 %v412, 7
    %v414 = vsub.s32 1, %v413
    %v415 = vrot.slane %v397, %v414
    %v416 = vmul.f32 %v403, %v415
    %v417 = vadd.f32 %v416, 0.0
    %v418 = vlaneseq
    %v419 = vshrl.u32 %v418, 7
    %v420 = vsub.s32 2, %v419
    %v421 = vrot.slane %v397, %v420
    %v422 = vmul.f32 %v403, %v421
    %v423 = vadd.f32 %v422, 0.0
    %v424 = vlaneseq
    %v425 = vshrl.u32 %v424, 7
    %v426 = vsub.s32 3, %v425
    %v427 = vrot.slane %v397, %v426
    %v428 = vmul.f32 %v403, %v427
    %v429 = vadd.f32 %v428, 0.0
    %v430 = vlaneseq
    %v431 = vshrl.u32 %v430, 7
    %v432 = vsub.s32 4, %v431
    %v433 = vrot.slane %v397, %v432
    %v434 = vmul.f32 %v403, %v433
    %v435 = vadd.f32 %v434, 0.0
    %v436 = vlaneseq
    %v437 = vshrl.u32 %v436, 7
    %v438 = vsub.s32 5, %v437
    %v439 = vrot.slane %v397, %v438
    %v440 = vmul.f32 %v403, %v439
    %v441 = vadd.f32 %v440, 0.0
    %v442 = vlaneseq
    %v443 = vshrl.u32 %v442, 7
    %v444 = vsub.s32 6, %v443
    %v445 = vrot.slane %v397, %v444
    %v446 = vmul.f32 %v403, %v445
    %v447 = vadd.f32 %v446, 0.0
    %v448 = vlaneseq
    %v449 = vshrl.u32 %v448, 7
    %v450 = vsub.s32 7, %v449
    %v451 = vrot.slane %v397, %v450
    %v452 = vmul.f32 %v403, %v451
    %v453 = vadd.f32 %v452, 0.0
    %s454 = sld [smem:[#allocation8 + $0x1]]
    %s455 = sld [smem:[#allocation8 + $0x81]]
    %s456 = sld [smem:[#allocation8 + $0x101]]
    %s457 = sld [smem:[#allocation8 + $0x181]]
    %v458 = vsub.f32 %v65, %v374
    %v459 = vmul.f32 %v458, %v385
    %v460 = vstv %s454
    %v461 = vmul.f32 %v459, %v460
    %v462 = vstv %s455
    %v463 = vadd.f32 %v461, %v462
    %v464 = vsub.f32 %v67, %v375
    %v465 = vmul.f32 %v464, %v387
    %v466 = vstv %s456
    %v467 = vmul.f32 %v465, %v466
    %v468 = vstv %s457
    %v469 = vadd.f32 %v467, %v468
    %v470 = vmul.f32 %v463, %v463
    %v471 = vadd.f32 %v405, %v470
    %v472 = vlaneseq
    %v473 = vshrl.u32 %v472, 7
    %v474 = vsub.s32 0, %v473
    %v475 = vrot.slane %v463, %v474
    %v476 = vmul.f32 %v469, %v475
    %v477 = vadd.f32 %v411, %v476
    %v478 = vlaneseq
    %v479 = vshrl.u32 %v478, 7
    %v480 = vsub.s32 1, %v479
    %v481 = vrot.slane %v463, %v480
    %v482 = vmul.f32 %v469, %v481
    %v483 = vadd.f32 %v417, %v482
    %v484 = vlaneseq
    %v485 = vshrl.u32 %v484, 7
    %v486 = vsub.s32 2, %v485
    %v487 = vrot.slane %v463, %v486
    %v488 = vmul.f32 %v469, %v487
    %v489 = vadd.f32 %v423, %v488
    %v490 = vlaneseq
    %v491 = vshrl.u32 %v490, 7
    %v492 = vsub.s32 3, %v491
    %v493 = vrot.slane %v463, %v492
    %v494 = vmul.f32 %v469, %v493
    %v495 = vadd.f32 %v429, %v494
    %v496 = vlaneseq
    %v497 = vshrl.u32 %v496, 7
    %v498 = vsub.s32 4, %v497
    %v499 = vrot.slane %v463, %v498
    %v500 = vmul.f32 %v469, %v499
    %v501 = vadd.f32 %v435, %v500
    %v502 = vlaneseq
    %v503 = vshrl.u32 %v502, 7
    %v504 = vsub.s32 5, %v503
    %v505 = vrot.slane %v463, %v504
    %v506 = vmul.f32 %v469, %v505
    %v507 = vadd.f32 %v441, %v506
    %v508 = vlaneseq
    %v509 = vshrl.u32 %v508, 7
    %v510 = vsub.s32 6, %v509
    %v511 = vrot.slane %v463, %v510
    %v512 = vmul.f32 %v469, %v511
    %v513 = vadd.f32 %v447, %v512
    %v514 = vlaneseq
    %v515 = vshrl.u32 %v514, 7
    %v516 = vsub.s32 7, %v515
    %v517 = vrot.slane %v463, %v516
    %v518 = vmul.f32 %v469, %v517
    %v519 = vadd.f32 %v453, %v518
    %s520 = sld [smem:[#allocation8 + $0x2]]
    %s521 = sld [smem:[#allocation8 + $0x82]]
    %s522 = sld [smem:[#allocation8 + $0x102]]
    %s523 = sld [smem:[#allocation8 + $0x182]]
    %v524 = vsub.f32 %v75, %v374
    %v525 = vmul.f32 %v524, %v385
    %v526 = vstv %s520
    %v527 = vmul.f32 %v525, %v526
    %v528 = vstv %s521
    %v529 = vadd.f32 %v527, %v528
    %v530 = vsub.f32 %v77, %v375
    %v531 = vmul.f32 %v530, %v387
    %v532 = vstv %s522
    %v533 = vmul.f32 %v531, %v532
    %v534 = vstv %s523
    %v535 = vadd.f32 %v533, %v534
    %v536 = vmul.f32 %v529, %v529
    %v537 = vadd.f32 %v471, %v536
    %v538 = vlaneseq
    %v539 = vshrl.u32 %v538, 7
    %v540 = vsub.s32 0, %v539
    %v541 = vrot.slane %v529, %v540
    %v542 = vmul.f32 %v535, %v541
    %v543 = vadd.f32 %v477, %v542
    %v544 = vlaneseq
    %v545 = vshrl.u32 %v544, 7
    %v546 = vsub.s32 1, %v545
    %v547 = vrot.slane %v529, %v546
    %v548 = vmul.f32 %v535, %v547
    %v549 = vadd.f32 %v483, %v548
    %v550 = vlaneseq
    %v551 = vshrl.u32 %v550, 7
    %v552 = vsub.s32 2, %v551
    %v553 = vrot.slane %v529, %v552
    %v554 = vmul.f32 %v535, %v553
    %v555 = vadd.f32 %v489, %v554
    %v556 = vlaneseq
    %v557 = vshrl.u32 %v556, 7
    %v558 = vsub.s32 3, %v557
    %v559 = vrot.slane %v529, %v558
    %v560 = vmul.f32 %v535, %v559
    %v561 = vadd.f32 %v495, %v560
    %v562 = vlaneseq
    %v563 = vshrl.u32 %v562, 7
    %v564 = vsub.s32 4, %v563
    %v565 = vrot.slane %v529, %v564
    %v566 = vmul.f32 %v535, %v565
    %v567 = vadd.f32 %v501, %v566
    %v568 = vlaneseq
    %v569 = vshrl.u32 %v568, 7
    %v570 = vsub.s32 5, %v569
    %v571 = vrot.slane %v529, %v570
    %v572 = vmul.f32 %v535, %v571
    %v573 = vadd.f32 %v507, %v572
    %v574 = vlaneseq
    %v575 = vshrl.u32 %v574, 7
    %v576 = vsub.s32 6, %v575
    %v577 = vrot.slane %v529, %v576
    %v578 = vmul.f32 %v535, %v577
    %v579 = vadd.f32 %v513, %v578
    %v580 = vlaneseq
    %v581 = vshrl.u32 %v580, 7
    %v582 = vsub.s32 7, %v581
    %v583 = vrot.slane %v529, %v582
    %v584 = vmul.f32 %v535, %v583
    %v585 = vadd.f32 %v519, %v584
    %s586 = sld [smem:[#allocation8 + $0x3]]
    %s587 = sld [smem:[#allocation8 + $0x83]]
    %s588 = sld [smem:[#allocation8 + $0x103]]
    %s589 = sld [smem:[#allocation8 + $0x183]]
    %v590 = vsub.f32 %v85, %v374
    %v591 = vmul.f32 %v590, %v385
    %v592 = vstv %s586
    %v593 = vmul.f32 %v591, %v592
    %v594 = vstv %s587
    %v595 = vadd.f32 %v593, %v594
    %v596 = vsub.f32 %v87, %v375
    %v597 = vmul.f32 %v596, %v387
    %v598 = vstv %s588
    %v599 = vmul.f32 %v597, %v598
    %v600 = vstv %s589
    %v601 = vadd.f32 %v599, %v600
    %v602 = vmul.f32 %v595, %v595
    %v603 = vadd.f32 %v537, %v602
    %v604 = vlaneseq
    %v605 = vshrl.u32 %v604, 7
    %v606 = vsub.s32 0, %v605
    %v607 = vrot.slane %v595, %v606
    %v608 = vmul.f32 %v601, %v607
    %v609 = vadd.f32 %v543, %v608
    %v610 = vlaneseq
    %v611 = vshrl.u32 %v610, 7
    %v612 = vsub.s32 1, %v611
    %v613 = vrot.slane %v595, %v612
    %v614 = vmul.f32 %v601, %v613
    %v615 = vadd.f32 %v549, %v614
    %v616 = vlaneseq
    %v617 = vshrl.u32 %v616, 7
    %v618 = vsub.s32 2, %v617
    %v619 = vrot.slane %v595, %v618
    %v620 = vmul.f32 %v601, %v619
    %v621 = vadd.f32 %v555, %v620
    %v622 = vlaneseq
    %v623 = vshrl.u32 %v622, 7
    %v624 = vsub.s32 3, %v623
    %v625 = vrot.slane %v595, %v624
    %v626 = vmul.f32 %v601, %v625
    %v627 = vadd.f32 %v561, %v626
    %v628 = vlaneseq
    %v629 = vshrl.u32 %v628, 7
    %v630 = vsub.s32 4, %v629
    %v631 = vrot.slane %v595, %v630
    %v632 = vmul.f32 %v601, %v631
    %v633 = vadd.f32 %v567, %v632
    %v634 = vlaneseq
    %v635 = vshrl.u32 %v634, 7
    %v636 = vsub.s32 5, %v635
    %v637 = vrot.slane %v595, %v636
    %v638 = vmul.f32 %v601, %v637
    %v639 = vadd.f32 %v573, %v638
    %v640 = vlaneseq
    %v641 = vshrl.u32 %v640, 7
    %v642 = vsub.s32 6, %v641
    %v643 = vrot.slane %v595, %v642
    %v644 = vmul.f32 %v601, %v643
    %v645 = vadd.f32 %v579, %v644
    %v646 = vlaneseq
    %v647 = vshrl.u32 %v646, 7
    %v648 = vsub.s32 7, %v647
    %v649 = vrot.slane %v595, %v648
    %v650 = vmul.f32 %v601, %v649
    %v651 = vadd.f32 %v585, %v650
    %s652 = sld [smem:[#allocation8 + $0x4]]
    %s653 = sld [smem:[#allocation8 + $0x84]]
    %s654 = sld [smem:[#allocation8 + $0x104]]
    %s655 = sld [smem:[#allocation8 + $0x184]]
    %v656 = vsub.f32 %v95, %v374
    %v657 = vmul.f32 %v656, %v385
    %v658 = vstv %s652
    %v659 = vmul.f32 %v657, %v658
    %v660 = vstv %s653
    %v661 = vadd.f32 %v659, %v660
    %v662 = vsub.f32 %v97, %v375
    %v663 = vmul.f32 %v662, %v387
    %v664 = vstv %s654
    %v665 = vmul.f32 %v663, %v664
    %v666 = vstv %s655
    %v667 = vadd.f32 %v665, %v666
    %v668 = vmul.f32 %v661, %v661
    %v669 = vadd.f32 %v603, %v668
    %v670 = vlaneseq
    %v671 = vshrl.u32 %v670, 7
    %v672 = vsub.s32 0, %v671
    %v673 = vrot.slane %v661, %v672
    %v674 = vmul.f32 %v667, %v673
    %v675 = vadd.f32 %v609, %v674
    %v676 = vlaneseq
    %v677 = vshrl.u32 %v676, 7
    %v678 = vsub.s32 1, %v677
    %v679 = vrot.slane %v661, %v678
    %v680 = vmul.f32 %v667, %v679
    %v681 = vadd.f32 %v615, %v680
    %v682 = vlaneseq
    %v683 = vshrl.u32 %v682, 7
    %v684 = vsub.s32 2, %v683
    %v685 = vrot.slane %v661, %v684
    %v686 = vmul.f32 %v667, %v685
    %v687 = vadd.f32 %v621, %v686
    %v688 = vlaneseq
    %v689 = vshrl.u32 %v688, 7
    %v690 = vsub.s32 3, %v689
    %v691 = vrot.slane %v661, %v690
    %v692 = vmul.f32 %v667, %v691
    %v693 = vadd.f32 %v627, %v692
    %v694 = vlaneseq
    %v695 = vshrl.u32 %v694, 7
    %v696 = vsub.s32 4, %v695
    %v697 = vrot.slane %v661, %v696
    %v698 = vmul.f32 %v667, %v697
    %v699 = vadd.f32 %v633, %v698
    %v700 = vlaneseq
    %v701 = vshrl.u32 %v700, 7
    %v702 = vsub.s32 5, %v701
    %v703 = vrot.slane %v661, %v702
    %v704 = vmul.f32 %v667, %v703
    %v705 = vadd.f32 %v639, %v704
    %v706 = vlaneseq
    %v707 = vshrl.u32 %v706, 7
    %v708 = vsub.s32 6, %v707
    %v709 = vrot.slane %v661, %v708
    %v710 = vmul.f32 %v667, %v709
    %v711 = vadd.f32 %v645, %v710
    %v712 = vlaneseq
    %v713 = vshrl.u32 %v712, 7
    %v714 = vsub.s32 7, %v713
    %v715 = vrot.slane %v661, %v714
    %v716 = vmul.f32 %v667, %v715
    %v717 = vadd.f32 %v651, %v716
    %s718 = sld [smem:[#allocation8 + $0x5]]
    %s719 = sld [smem:[#allocation8 + $0x85]]
    %s720 = sld [smem:[#allocation8 + $0x105]]
    %s721 = sld [smem:[#allocation8 + $0x185]]
    %v722 = vsub.f32 %v105, %v374
    %v723 = vmul.f32 %v722, %v385
    %v724 = vstv %s718
    %v725 = vmul.f32 %v723, %v724
    %v726 = vstv %s719
    %v727 = vadd.f32 %v725, %v726
    %v728 = vsub.f32 %v107, %v375
    %v729 = vmul.f32 %v728, %v387
    %v730 = vstv %s720
    %v731 = vmul.f32 %v729, %v730
    %v732 = vstv %s721
    %v733 = vadd.f32 %v731, %v732
    %v734 = vmul.f32 %v727, %v727
    %v735 = vadd.f32 %v669, %v734
    %v736 = vlaneseq
    %v737 = vshrl.u32 %v736, 7
    %v738 = vsub.s32 0, %v737
    %v739 = vrot.slane %v727, %v738
    %v740 = vmul.f32 %v733, %v739
    %v741 = vadd.f32 %v675, %v740
    %v742 = vlaneseq
    %v743 = vshrl.u32 %v742, 7
    %v744 = vsub.s32 1, %v743
    %v745 = vrot.slane %v727, %v744
    %v746 = vmul.f32 %v733, %v745
    %v747 = vadd.f32 %v681, %v746
    %v748 = vlaneseq
    %v749 = vshrl.u32 %v748, 7
    %v750 = vsub.s32 2, %v749
    %v751 = vrot.slane %v727, %v750
    %v752 = vmul.f32 %v733, %v751
    %v753 = vadd.f32 %v687, %v752
    %v754 = vlaneseq
    %v755 = vshrl.u32 %v754, 7
    %v756 = vsub.s32 3, %v755
    %v757 = vrot.slane %v727, %v756
    %v758 = vmul.f32 %v733, %v757
    %v759 = vadd.f32 %v693, %v758
    %v760 = vlaneseq
    %v761 = vshrl.u32 %v760, 7
    %v762 = vsub.s32 4, %v761
    %v763 = vrot.slane %v727, %v762
    %v764 = vmul.f32 %v733, %v763
    %v765 = vadd.f32 %v699, %v764
    %v766 = vlaneseq
    %v767 = vshrl.u32 %v766, 7
    %v768 = vsub.s32 5, %v767
    %v769 = vrot.slane %v727, %v768
    %v770 = vmul.f32 %v733, %v769
    %v771 = vadd.f32 %v705, %v770
    %v772 = vlaneseq
    %v773 = vshrl.u32 %v772, 7
    %v774 = vsub.s32 6, %v773
    %v775 = vrot.slane %v727, %v774
    %v776 = vmul.f32 %v733, %v775
    %v777 = vadd.f32 %v711, %v776
    %v778 = vlaneseq
    %v779 = vshrl.u32 %v778, 7
    %v780 = vsub.s32 7, %v779
    %v781 = vrot.slane %v727, %v780
    %v782 = vmul.f32 %v733, %v781
    %v783 = vadd.f32 %v717, %v782
    %s784 = sld [smem:[#allocation8 + $0x6]]
    %s785 = sld [smem:[#allocation8 + $0x86]]
    %s786 = sld [smem:[#allocation8 + $0x106]]
    %s787 = sld [smem:[#allocation8 + $0x186]]
    %v788 = vsub.f32 %v115, %v374
    %v789 = vmul.f32 %v788, %v385
    %v790 = vstv %s784
    %v791 = vmul.f32 %v789, %v790
    %v792 = vstv %s785
    %v793 = vadd.f32 %v791, %v792
    %v794 = vsub.f32 %v117, %v375
    %v795 = vmul.f32 %v794, %v387
    %v796 = vstv %s786
    %v797 = vmul.f32 %v795, %v796
    %v798 = vstv %s787
    %v799 = vadd.f32 %v797, %v798
    %v800 = vmul.f32 %v793, %v793
    %v801 = vadd.f32 %v735, %v800
    %v802 = vlaneseq
    %v803 = vshrl.u32 %v802, 7
    %v804 = vsub.s32 0, %v803
    %v805 = vrot.slane %v793, %v804
    %v806 = vmul.f32 %v799, %v805
    %v807 = vadd.f32 %v741, %v806
    %v808 = vlaneseq
    %v809 = vshrl.u32 %v808, 7
    %v810 = vsub.s32 1, %v809
    %v811 = vrot.slane %v793, %v810
    %v812 = vmul.f32 %v799, %v811
    %v813 = vadd.f32 %v747, %v812
    %v814 = vlaneseq
    %v815 = vshrl.u32 %v814, 7
    %v816 = vsub.s32 2, %v815
    %v817 = vrot.slane %v793, %v816
    %v818 = vmul.f32 %v799, %v817
    %v819 = vadd.f32 %v753, %v818
    %v820 = vlaneseq
    %v821 = vshrl.u32 %v820, 7
    %v822 = vsub.s32 3, %v821
    %v823 = vrot.slane %v793, %v822
    %v824 = vmul.f32 %v799, %v823
    %v825 = vadd.f32 %v759, %v824
    %v826 = vlaneseq
    %v827 = vshrl.u32 %v826, 7
    %v828 = vsub.s32 4, %v827
    %v829 = vrot.slane %v793, %v828
    %v830 = vmul.f32 %v799, %v829
    %v831 = vadd.f32 %v765, %v830
    %v832 = vlaneseq
    %v833 = vshrl.u32 %v832, 7
    %v834 = vsub.s32 5, %v833
    %v835 = vrot.slane %v793, %v834
    %v836 = vmul.f32 %v799, %v835
    %v837 = vadd.f32 %v771, %v836
    %v838 = vlaneseq
    %v839 = vshrl.u32 %v838, 7
    %v840 = vsub.s32 6, %v839
    %v841 = vrot.slane %v793, %v840
    %v842 = vmul.f32 %v799, %v841
    %v843 = vadd.f32 %v777, %v842
    %v844 = vlaneseq
    %v845 = vshrl.u32 %v844, 7
    %v846 = vsub.s32 7, %v845
    %v847 = vrot.slane %v793, %v846
    %v848 = vmul.f32 %v799, %v847
    %v849 = vadd.f32 %v783, %v848
    %s850 = sld [smem:[#allocation8 + $0x7]]
    %s851 = sld [smem:[#allocation8 + $0x87]]
    %s852 = sld [smem:[#allocation8 + $0x107]]
    %s853 = sld [smem:[#allocation8 + $0x187]]
    %v854 = vsub.f32 %v125, %v374
    %v855 = vmul.f32 %v854, %v385
    %v856 = vstv %s850
    %v857 = vmul.f32 %v855, %v856
    %v858 = vstv %s851
    %v859 = vadd.f32 %v857, %v858
    %v860 = vsub.f32 %v127, %v375
    %v861 = vmul.f32 %v860, %v387
    %v862 = vstv %s852
    %v863 = vmul.f32 %v861, %v862
    %v864 = vstv %s853
    %v865 = vadd.f32 %v863, %v864
    %v866 = vmul.f32 %v859, %v859
    %v867 = vadd.f32 %v801, %v866
    %v868 = vlaneseq
    %v869 = vshrl.u32 %v868, 7
    %v870 = vsub.s32 0, %v869
    %v871 = vrot.slane %v859, %v870
    %v872 = vmul.f32 %v865, %v871
    %v873 = vadd.f32 %v807, %v872
    %v874 = vlaneseq
    %v875 = vshrl.u32 %v874, 7
    %v876 = vsub.s32 1, %v875
    %v877 = vrot.slane %v859, %v876
    %v878 = vmul.f32 %v865, %v877
    %v879 = vadd.f32 %v813, %v878
    %v880 = vlaneseq
    %v881 = vshrl.u32 %v880, 7
    %v882 = vsub.s32 2, %v881
    %v883 = vrot.slane %v859, %v882
    %v884 = vmul.f32 %v865, %v883
    %v885 = vadd.f32 %v819, %v884
    %v886 = vlaneseq
    %v887 = vshrl.u32 %v886, 7
    %v888 = vsub.s32 3, %v887
    %v889 = vrot.slane %v859, %v888
    %v890 = vmul.f32 %v865, %v889
    %v891 = vadd.f32 %v825, %v890
    %v892 = vlaneseq
    %v893 = vshrl.u32 %v892, 7
    %v894 = vsub.s32 4, %v893
    %v895 = vrot.slane %v859, %v894
    %v896 = vmul.f32 %v865, %v895
    %v897 = vadd.f32 %v831, %v896
    %v898 = vlaneseq
    %v899 = vshrl.u32 %v898, 7
    %v900 = vsub.s32 5, %v899
    %v901 = vrot.slane %v859, %v900
    %v902 = vmul.f32 %v865, %v901
    %v903 = vadd.f32 %v837, %v902
    %v904 = vlaneseq
    %v905 = vshrl.u32 %v904, 7
    %v906 = vsub.s32 6, %v905
    %v907 = vrot.slane %v859, %v906
    %v908 = vmul.f32 %v865, %v907
    %v909 = vadd.f32 %v843, %v908
    %v910 = vlaneseq
    %v911 = vshrl.u32 %v910, 7
    %v912 = vsub.s32 7, %v911
    %v913 = vrot.slane %v859, %v912
    %v914 = vmul.f32 %v865, %v913
    %v915 = vadd.f32 %v849, %v914
    %s916 = sld [smem:[#allocation8 + $0x8]]
    %s917 = sld [smem:[#allocation8 + $0x88]]
    %s918 = sld [smem:[#allocation8 + $0x108]]
    %s919 = sld [smem:[#allocation8 + $0x188]]
    %v920 = vsub.f32 %v135, %v374
    %v921 = vmul.f32 %v920, %v385
    %v922 = vstv %s916
    %v923 = vmul.f32 %v921, %v922
    %v924 = vstv %s917
    %v925 = vadd.f32 %v923, %v924
    %v926 = vsub.f32 %v137, %v375
    %v927 = vmul.f32 %v926, %v387
    %v928 = vstv %s918
    %v929 = vmul.f32 %v927, %v928
    %v930 = vstv %s919
    %v931 = vadd.f32 %v929, %v930
    %v932 = vmul.f32 %v925, %v925
    %v933 = vadd.f32 %v867, %v932
    %v934 = vlaneseq
    %v935 = vshrl.u32 %v934, 7
    %v936 = vsub.s32 0, %v935
    %v937 = vrot.slane %v925, %v936
    %v938 = vmul.f32 %v931, %v937
    %v939 = vadd.f32 %v873, %v938
    %v940 = vlaneseq
    %v941 = vshrl.u32 %v940, 7
    %v942 = vsub.s32 1, %v941
    %v943 = vrot.slane %v925, %v942
    %v944 = vmul.f32 %v931, %v943
    %v945 = vadd.f32 %v879, %v944
    %v946 = vlaneseq
    %v947 = vshrl.u32 %v946, 7
    %v948 = vsub.s32 2, %v947
    %v949 = vrot.slane %v925, %v948
    %v950 = vmul.f32 %v931, %v949
    %v951 = vadd.f32 %v885, %v950
    %v952 = vlaneseq
    %v953 = vshrl.u32 %v952, 7
    %v954 = vsub.s32 3, %v953
    %v955 = vrot.slane %v925, %v954
    %v956 = vmul.f32 %v931, %v955
    %v957 = vadd.f32 %v891, %v956
    %v958 = vlaneseq
    %v959 = vshrl.u32 %v958, 7
    %v960 = vsub.s32 4, %v959
    %v961 = vrot.slane %v925, %v960
    %v962 = vmul.f32 %v931, %v961
    %v963 = vadd.f32 %v897, %v962
    %v964 = vlaneseq
    %v965 = vshrl.u32 %v964, 7
    %v966 = vsub.s32 5, %v965
    %v967 = vrot.slane %v925, %v966
    %v968 = vmul.f32 %v931, %v967
    %v969 = vadd.f32 %v903, %v968
    %v970 = vlaneseq
    %v971 = vshrl.u32 %v970, 7
    %v972 = vsub.s32 6, %v971
    %v973 = vrot.slane %v925, %v972
    %v974 = vmul.f32 %v931, %v973
    %v975 = vadd.f32 %v909, %v974
    %v976 = vlaneseq
    %v977 = vshrl.u32 %v976, 7
    %v978 = vsub.s32 7, %v977
    %v979 = vrot.slane %v925, %v978
    %v980 = vmul.f32 %v931, %v979
    %v981 = vadd.f32 %v915, %v980
    %s982 = sld [smem:[#allocation8 + $0x9]]
    %s983 = sld [smem:[#allocation8 + $0x89]]
    %s984 = sld [smem:[#allocation8 + $0x109]]
    %s985 = sld [smem:[#allocation8 + $0x189]]
    %v986 = vsub.f32 %v145, %v374
    %v987 = vmul.f32 %v986, %v385
    %v988 = vstv %s982
    %v989 = vmul.f32 %v987, %v988
    %v990 = vstv %s983
    %v991 = vadd.f32 %v989, %v990
    %v992 = vsub.f32 %v147, %v375
    %v993 = vmul.f32 %v992, %v387
    %v994 = vstv %s984
    %v995 = vmul.f32 %v993, %v994
    %v996 = vstv %s985
    %v997 = vadd.f32 %v995, %v996
    %v998 = vmul.f32 %v991, %v991
    %v999 = vadd.f32 %v933, %v998
    %v1000 = vlaneseq
    %v1001 = vshrl.u32 %v1000, 7
    %v1002 = vsub.s32 0, %v1001
    %v1003 = vrot.slane %v991, %v1002
    %v1004 = vmul.f32 %v997, %v1003
    %v1005 = vadd.f32 %v939, %v1004
    %v1006 = vlaneseq
    %v1007 = vshrl.u32 %v1006, 7
    %v1008 = vsub.s32 1, %v1007
    %v1009 = vrot.slane %v991, %v1008
    %v1010 = vmul.f32 %v997, %v1009
    %v1011 = vadd.f32 %v945, %v1010
    %v1012 = vlaneseq
    %v1013 = vshrl.u32 %v1012, 7
    %v1014 = vsub.s32 2, %v1013
    %v1015 = vrot.slane %v991, %v1014
    %v1016 = vmul.f32 %v997, %v1015
    %v1017 = vadd.f32 %v951, %v1016
    %v1018 = vlaneseq
    %v1019 = vshrl.u32 %v1018, 7
    %v1020 = vsub.s32 3, %v1019
    %v1021 = vrot.slane %v991, %v1020
    %v1022 = vmul.f32 %v997, %v1021
    %v1023 = vadd.f32 %v957, %v1022
    %v1024 = vlaneseq
    %v1025 = vshrl.u32 %v1024, 7
    %v1026 = vsub.s32 4, %v1025
    %v1027 = vrot.slane %v991, %v1026
    %v1028 = vmul.f32 %v997, %v1027
    %v1029 = vadd.f32 %v963, %v1028
    %v1030 = vlaneseq
    %v1031 = vshrl.u32 %v1030, 7
    %v1032 = vsub.s32 5, %v1031
    %v1033 = vrot.slane %v991, %v1032
    %v1034 = vmul.f32 %v997, %v1033
    %v1035 = vadd.f32 %v969, %v1034
    %v1036 = vlaneseq
    %v1037 = vshrl.u32 %v1036, 7
    %v1038 = vsub.s32 6, %v1037
    %v1039 = vrot.slane %v991, %v1038
    %v1040 = vmul.f32 %v997, %v1039
    %v1041 = vadd.f32 %v975, %v1040
    %v1042 = vlaneseq
    %v1043 = vshrl.u32 %v1042, 7
    %v1044 = vsub.s32 7, %v1043
    %v1045 = vrot.slane %v991, %v1044
    %v1046 = vmul.f32 %v997, %v1045
    %v1047 = vadd.f32 %v981, %v1046
    %s1048 = sld [smem:[#allocation8 + $0xa]]
    %s1049 = sld [smem:[#allocation8 + $0x8a]]
    %s1050 = sld [smem:[#allocation8 + $0x10a]]
    %s1051 = sld [smem:[#allocation8 + $0x18a]]
    %v1052 = vsub.f32 %v155, %v374
    %v1053 = vmul.f32 %v1052, %v385
    %v1054 = vstv %s1048
    %v1055 = vmul.f32 %v1053, %v1054
    %v1056 = vstv %s1049
    %v1057 = vadd.f32 %v1055, %v1056
    %v1058 = vsub.f32 %v157, %v375
    %v1059 = vmul.f32 %v1058, %v387
    %v1060 = vstv %s1050
    %v1061 = vmul.f32 %v1059, %v1060
    %v1062 = vstv %s1051
    %v1063 = vadd.f32 %v1061, %v1062
    %v1064 = vmul.f32 %v1057, %v1057
    %v1065 = vadd.f32 %v999, %v1064
    %v1066 = vlaneseq
    %v1067 = vshrl.u32 %v1066, 7
    %v1068 = vsub.s32 0, %v1067
    %v1069 = vrot.slane %v1057, %v1068
    %v1070 = vmul.f32 %v1063, %v1069
    %v1071 = vadd.f32 %v1005, %v1070
    %v1072 = vlaneseq
    %v1073 = vshrl.u32 %v1072, 7
    %v1074 = vsub.s32 1, %v1073
    %v1075 = vrot.slane %v1057, %v1074
    %v1076 = vmul.f32 %v1063, %v1075
    %v1077 = vadd.f32 %v1011, %v1076
    %v1078 = vlaneseq
    %v1079 = vshrl.u32 %v1078, 7
    %v1080 = vsub.s32 2, %v1079
    %v1081 = vrot.slane %v1057, %v1080
    %v1082 = vmul.f32 %v1063, %v1081
    %v1083 = vadd.f32 %v1017, %v1082
    %v1084 = vlaneseq
    %v1085 = vshrl.u32 %v1084, 7
    %v1086 = vsub.s32 3, %v1085
    %v1087 = vrot.slane %v1057, %v1086
    %v1088 = vmul.f32 %v1063, %v1087
    %v1089 = vadd.f32 %v1023, %v1088
    %v1090 = vlaneseq
    %v1091 = vshrl.u32 %v1090, 7
    %v1092 = vsub.s32 4, %v1091
    %v1093 = vrot.slane %v1057, %v1092
    %v1094 = vmul.f32 %v1063, %v1093
    %v1095 = vadd.f32 %v1029, %v1094
    %v1096 = vlaneseq
    %v1097 = vshrl.u32 %v1096, 7
    %v1098 = vsub.s32 5, %v1097
    %v1099 = vrot.slane %v1057, %v1098
    %v1100 = vmul.f32 %v1063, %v1099
    %v1101 = vadd.f32 %v1035, %v1100
    %v1102 = vlaneseq
    %v1103 = vshrl.u32 %v1102, 7
    %v1104 = vsub.s32 6, %v1103
    %v1105 = vrot.slane %v1057, %v1104
    %v1106 = vmul.f32 %v1063, %v1105
    %v1107 = vadd.f32 %v1041, %v1106
    %v1108 = vlaneseq
    %v1109 = vshrl.u32 %v1108, 7
    %v1110 = vsub.s32 7, %v1109
    %v1111 = vrot.slane %v1057, %v1110
    %v1112 = vmul.f32 %v1063, %v1111
    %v1113 = vadd.f32 %v1047, %v1112
    %s1114 = sld [smem:[#allocation8 + $0xb]]
    %s1115 = sld [smem:[#allocation8 + $0x8b]]
    %s1116 = sld [smem:[#allocation8 + $0x10b]]
    %s1117 = sld [smem:[#allocation8 + $0x18b]]
    %v1118 = vsub.f32 %v165, %v374
    %v1119 = vmul.f32 %v1118, %v385
    %v1120 = vstv %s1114
    %v1121 = vmul.f32 %v1119, %v1120
    %v1122 = vstv %s1115
    %v1123 = vadd.f32 %v1121, %v1122
    %v1124 = vsub.f32 %v167, %v375
    %v1125 = vmul.f32 %v1124, %v387
    %v1126 = vstv %s1116
    %v1127 = vmul.f32 %v1125, %v1126
    %v1128 = vstv %s1117
    %v1129 = vadd.f32 %v1127, %v1128
    %v1130 = vmul.f32 %v1123, %v1123
    %v1131 = vadd.f32 %v1065, %v1130
    %v1132 = vlaneseq
    %v1133 = vshrl.u32 %v1132, 7
    %v1134 = vsub.s32 0, %v1133
    %v1135 = vrot.slane %v1123, %v1134
    %v1136 = vmul.f32 %v1129, %v1135
    %v1137 = vadd.f32 %v1071, %v1136
    %v1138 = vlaneseq
    %v1139 = vshrl.u32 %v1138, 7
    %v1140 = vsub.s32 1, %v1139
    %v1141 = vrot.slane %v1123, %v1140
    %v1142 = vmul.f32 %v1129, %v1141
    %v1143 = vadd.f32 %v1077, %v1142
    %v1144 = vlaneseq
    %v1145 = vshrl.u32 %v1144, 7
    %v1146 = vsub.s32 2, %v1145
    %v1147 = vrot.slane %v1123, %v1146
    %v1148 = vmul.f32 %v1129, %v1147
    %v1149 = vadd.f32 %v1083, %v1148
    %v1150 = vlaneseq
    %v1151 = vshrl.u32 %v1150, 7
    %v1152 = vsub.s32 3, %v1151
    %v1153 = vrot.slane %v1123, %v1152
    %v1154 = vmul.f32 %v1129, %v1153
    %v1155 = vadd.f32 %v1089, %v1154
    %v1156 = vlaneseq
    %v1157 = vshrl.u32 %v1156, 7
    %v1158 = vsub.s32 4, %v1157
    %v1159 = vrot.slane %v1123, %v1158
    %v1160 = vmul.f32 %v1129, %v1159
    %v1161 = vadd.f32 %v1095, %v1160
    %v1162 = vlaneseq
    %v1163 = vshrl.u32 %v1162, 7
    %v1164 = vsub.s32 5, %v1163
    %v1165 = vrot.slane %v1123, %v1164
    %v1166 = vmul.f32 %v1129, %v1165
    %v1167 = vadd.f32 %v1101, %v1166
    %v1168 = vlaneseq
    %v1169 = vshrl.u32 %v1168, 7
    %v1170 = vsub.s32 6, %v1169
    %v1171 = vrot.slane %v1123, %v1170
    %v1172 = vmul.f32 %v1129, %v1171
    %v1173 = vadd.f32 %v1107, %v1172
    %v1174 = vlaneseq
    %v1175 = vshrl.u32 %v1174, 7
    %v1176 = vsub.s32 7, %v1175
    %v1177 = vrot.slane %v1123, %v1176
    %v1178 = vmul.f32 %v1129, %v1177
    %v1179 = vadd.f32 %v1113, %v1178
    %s1180 = sld [smem:[#allocation8 + $0xc]]
    %s1181 = sld [smem:[#allocation8 + $0x8c]]
    %s1182 = sld [smem:[#allocation8 + $0x10c]]
    %s1183 = sld [smem:[#allocation8 + $0x18c]]
    %v1184 = vsub.f32 %v175, %v374
    %v1185 = vmul.f32 %v1184, %v385
    %v1186 = vstv %s1180
    %v1187 = vmul.f32 %v1185, %v1186
    %v1188 = vstv %s1181
    %v1189 = vadd.f32 %v1187, %v1188
    %v1190 = vsub.f32 %v177, %v375
    %v1191 = vmul.f32 %v1190, %v387
    %v1192 = vstv %s1182
    %v1193 = vmul.f32 %v1191, %v1192
    %v1194 = vstv %s1183
    %v1195 = vadd.f32 %v1193, %v1194
    %v1196 = vmul.f32 %v1189, %v1189
    %v1197 = vadd.f32 %v1131, %v1196
    %v1198 = vlaneseq
    %v1199 = vshrl.u32 %v1198, 7
    %v1200 = vsub.s32 0, %v1199
    %v1201 = vrot.slane %v1189, %v1200
    %v1202 = vmul.f32 %v1195, %v1201
    %v1203 = vadd.f32 %v1137, %v1202
    %v1204 = vlaneseq
    %v1205 = vshrl.u32 %v1204, 7
    %v1206 = vsub.s32 1, %v1205
    %v1207 = vrot.slane %v1189, %v1206
    %v1208 = vmul.f32 %v1195, %v1207
    %v1209 = vadd.f32 %v1143, %v1208
    %v1210 = vlaneseq
    %v1211 = vshrl.u32 %v1210, 7
    %v1212 = vsub.s32 2, %v1211
    %v1213 = vrot.slane %v1189, %v1212
    %v1214 = vmul.f32 %v1195, %v1213
    %v1215 = vadd.f32 %v1149, %v1214
    %v1216 = vlaneseq
    %v1217 = vshrl.u32 %v1216, 7
    %v1218 = vsub.s32 3, %v1217
    %v1219 = vrot.slane %v1189, %v1218
    %v1220 = vmul.f32 %v1195, %v1219
    %v1221 = vadd.f32 %v1155, %v1220
    %v1222 = vlaneseq
    %v1223 = vshrl.u32 %v1222, 7
    %v1224 = vsub.s32 4, %v1223
    %v1225 = vrot.slane %v1189, %v1224
    %v1226 = vmul.f32 %v1195, %v1225
    %v1227 = vadd.f32 %v1161, %v1226
    %v1228 = vlaneseq
    %v1229 = vshrl.u32 %v1228, 7
    %v1230 = vsub.s32 5, %v1229
    %v1231 = vrot.slane %v1189, %v1230
    %v1232 = vmul.f32 %v1195, %v1231
    %v1233 = vadd.f32 %v1167, %v1232
    %v1234 = vlaneseq
    %v1235 = vshrl.u32 %v1234, 7
    %v1236 = vsub.s32 6, %v1235
    %v1237 = vrot.slane %v1189, %v1236
    %v1238 = vmul.f32 %v1195, %v1237
    %v1239 = vadd.f32 %v1173, %v1238
    %v1240 = vlaneseq
    %v1241 = vshrl.u32 %v1240, 7
    %v1242 = vsub.s32 7, %v1241
    %v1243 = vrot.slane %v1189, %v1242
    %v1244 = vmul.f32 %v1195, %v1243
    %v1245 = vadd.f32 %v1179, %v1244
    %s1246 = sld [smem:[#allocation8 + $0xd]]
    %s1247 = sld [smem:[#allocation8 + $0x8d]]
    %s1248 = sld [smem:[#allocation8 + $0x10d]]
    %s1249 = sld [smem:[#allocation8 + $0x18d]]
    %v1250 = vsub.f32 %v185, %v374
    %v1251 = vmul.f32 %v1250, %v385
    %v1252 = vstv %s1246
    %v1253 = vmul.f32 %v1251, %v1252
    %v1254 = vstv %s1247
    %v1255 = vadd.f32 %v1253, %v1254
    %v1256 = vsub.f32 %v187, %v375
    %v1257 = vmul.f32 %v1256, %v387
    %v1258 = vstv %s1248
    %v1259 = vmul.f32 %v1257, %v1258
    %v1260 = vstv %s1249
    %v1261 = vadd.f32 %v1259, %v1260
    %v1262 = vmul.f32 %v1255, %v1255
    %v1263 = vadd.f32 %v1197, %v1262
    %v1264 = vlaneseq
    %v1265 = vshrl.u32 %v1264, 7
    %v1266 = vsub.s32 0, %v1265
    %v1267 = vrot.slane %v1255, %v1266
    %v1268 = vmul.f32 %v1261, %v1267
    %v1269 = vadd.f32 %v1203, %v1268
    %v1270 = vlaneseq
    %v1271 = vshrl.u32 %v1270, 7
    %v1272 = vsub.s32 1, %v1271
    %v1273 = vrot.slane %v1255, %v1272
    %v1274 = vmul.f32 %v1261, %v1273
    %v1275 = vadd.f32 %v1209, %v1274
    %v1276 = vlaneseq
    %v1277 = vshrl.u32 %v1276, 7
    %v1278 = vsub.s32 2, %v1277
    %v1279 = vrot.slane %v1255, %v1278
    %v1280 = vmul.f32 %v1261, %v1279
    %v1281 = vadd.f32 %v1215, %v1280
    %v1282 = vlaneseq
    %v1283 = vshrl.u32 %v1282, 7
    %v1284 = vsub.s32 3, %v1283
    %v1285 = vrot.slane %v1255, %v1284
    %v1286 = vmul.f32 %v1261, %v1285
    %v1287 = vadd.f32 %v1221, %v1286
    %v1288 = vlaneseq
    %v1289 = vshrl.u32 %v1288, 7
    %v1290 = vsub.s32 4, %v1289
    %v1291 = vrot.slane %v1255, %v1290
    %v1292 = vmul.f32 %v1261, %v1291
    %v1293 = vadd.f32 %v1227, %v1292
    %v1294 = vlaneseq
    %v1295 = vshrl.u32 %v1294, 7
    %v1296 = vsub.s32 5, %v1295
    %v1297 = vrot.slane %v1255, %v1296
    %v1298 = vmul.f32 %v1261, %v1297
    %v1299 = vadd.f32 %v1233, %v1298
    %v1300 = vlaneseq
    %v1301 = vshrl.u32 %v1300, 7
    %v1302 = vsub.s32 6, %v1301
    %v1303 = vrot.slane %v1255, %v1302
    %v1304 = vmul.f32 %v1261, %v1303
    %v1305 = vadd.f32 %v1239, %v1304
    %v1306 = vlaneseq
    %v1307 = vshrl.u32 %v1306, 7
    %v1308 = vsub.s32 7, %v1307
    %v1309 = vrot.slane %v1255, %v1308
    %v1310 = vmul.f32 %v1261, %v1309
    %v1311 = vadd.f32 %v1245, %v1310
    %s1312 = sld [smem:[#allocation8 + $0xe]]
    %s1313 = sld [smem:[#allocation8 + $0x8e]]
    %s1314 = sld [smem:[#allocation8 + $0x10e]]
    %s1315 = sld [smem:[#allocation8 + $0x18e]]
    %v1316 = vsub.f32 %v195, %v374
    %v1317 = vmul.f32 %v1316, %v385
    %v1318 = vstv %s1312
    %v1319 = vmul.f32 %v1317, %v1318
    %v1320 = vstv %s1313
    %v1321 = vadd.f32 %v1319, %v1320
    %v1322 = vsub.f32 %v197, %v375
    %v1323 = vmul.f32 %v1322, %v387
    %v1324 = vstv %s1314
    %v1325 = vmul.f32 %v1323, %v1324
    %v1326 = vstv %s1315
    %v1327 = vadd.f32 %v1325, %v1326
    %v1328 = vmul.f32 %v1321, %v1321
    %v1329 = vadd.f32 %v1263, %v1328
    %v1330 = vlaneseq
    %v1331 = vshrl.u32 %v1330, 7
    %v1332 = vsub.s32 0, %v1331
    %v1333 = vrot.slane %v1321, %v1332
    %v1334 = vmul.f32 %v1327, %v1333
    %v1335 = vadd.f32 %v1269, %v1334
    %v1336 = vlaneseq
    %v1337 = vshrl.u32 %v1336, 7
    %v1338 = vsub.s32 1, %v1337
    %v1339 = vrot.slane %v1321, %v1338
    %v1340 = vmul.f32 %v1327, %v1339
    %v1341 = vadd.f32 %v1275, %v1340
    %v1342 = vlaneseq
    %v1343 = vshrl.u32 %v1342, 7
    %v1344 = vsub.s32 2, %v1343
    %v1345 = vrot.slane %v1321, %v1344
    %v1346 = vmul.f32 %v1327, %v1345
    %v1347 = vadd.f32 %v1281, %v1346
    %v1348 = vlaneseq
    %v1349 = vshrl.u32 %v1348, 7
    %v1350 = vsub.s32 3, %v1349
    %v1351 = vrot.slane %v1321, %v1350
    %v1352 = vmul.f32 %v1327, %v1351
    %v1353 = vadd.f32 %v1287, %v1352
    %v1354 = vlaneseq
    %v1355 = vshrl.u32 %v1354, 7
    %v1356 = vsub.s32 4, %v1355
    %v1357 = vrot.slane %v1321, %v1356
    %v1358 = vmul.f32 %v1327, %v1357
    %v1359 = vadd.f32 %v1293, %v1358
    %v1360 = vlaneseq
    %v1361 = vshrl.u32 %v1360, 7
    %v1362 = vsub.s32 5, %v1361
    %v1363 = vrot.slane %v1321, %v1362
    %v1364 = vmul.f32 %v1327, %v1363
    %v1365 = vadd.f32 %v1299, %v1364
    %v1366 = vlaneseq
    %v1367 = vshrl.u32 %v1366, 7
    %v1368 = vsub.s32 6, %v1367
    %v1369 = vrot.slane %v1321, %v1368
    %v1370 = vmul.f32 %v1327, %v1369
    %v1371 = vadd.f32 %v1305, %v1370
    %v1372 = vlaneseq
    %v1373 = vshrl.u32 %v1372, 7
    %v1374 = vsub.s32 7, %v1373
    %v1375 = vrot.slane %v1321, %v1374
    %v1376 = vmul.f32 %v1327, %v1375
    %v1377 = vadd.f32 %v1311, %v1376
    %s1378 = sld [smem:[#allocation8 + $0xf]]
    %s1379 = sld [smem:[#allocation8 + $0x8f]]
    %s1380 = sld [smem:[#allocation8 + $0x10f]]
    %s1381 = sld [smem:[#allocation8 + $0x18f]]
    %v1382 = vsub.f32 %v205, %v374
    %v1383 = vmul.f32 %v1382, %v385
    %v1384 = vstv %s1378
    %v1385 = vmul.f32 %v1383, %v1384
    %v1386 = vstv %s1379
    %v1387 = vadd.f32 %v1385, %v1386
    %v1388 = vsub.f32 %v207, %v375
    %v1389 = vmul.f32 %v1388, %v387
    %v1390 = vstv %s1380
    %v1391 = vmul.f32 %v1389, %v1390
    %v1392 = vstv %s1381
    %v1393 = vadd.f32 %v1391, %v1392
    %v1394 = vmul.f32 %v1387, %v1387
    %v1395 = vadd.f32 %v1329, %v1394
    %v1396 = vlaneseq
    %v1397 = vshrl.u32 %v1396, 7
    %v1398 = vsub.s32 0, %v1397
    %v1399 = vrot.slane %v1387, %v1398
    %v1400 = vmul.f32 %v1393, %v1399
    %v1401 = vadd.f32 %v1335, %v1400
    %v1402 = vlaneseq
    %v1403 = vshrl.u32 %v1402, 7
    %v1404 = vsub.s32 1, %v1403
    %v1405 = vrot.slane %v1387, %v1404
    %v1406 = vmul.f32 %v1393, %v1405
    %v1407 = vadd.f32 %v1341, %v1406
    %v1408 = vlaneseq
    %v1409 = vshrl.u32 %v1408, 7
    %v1410 = vsub.s32 2, %v1409
    %v1411 = vrot.slane %v1387, %v1410
    %v1412 = vmul.f32 %v1393, %v1411
    %v1413 = vadd.f32 %v1347, %v1412
    %v1414 = vlaneseq
    %v1415 = vshrl.u32 %v1414, 7
    %v1416 = vsub.s32 3, %v1415
    %v1417 = vrot.slane %v1387, %v1416
    %v1418 = vmul.f32 %v1393, %v1417
    %v1419 = vadd.f32 %v1353, %v1418
    %v1420 = vlaneseq
    %v1421 = vshrl.u32 %v1420, 7
    %v1422 = vsub.s32 4, %v1421
    %v1423 = vrot.slane %v1387, %v1422
    %v1424 = vmul.f32 %v1393, %v1423
    %v1425 = vadd.f32 %v1359, %v1424
    %v1426 = vlaneseq
    %v1427 = vshrl.u32 %v1426, 7
    %v1428 = vsub.s32 5, %v1427
    %v1429 = vrot.slane %v1387, %v1428
    %v1430 = vmul.f32 %v1393, %v1429
    %v1431 = vadd.f32 %v1365, %v1430
    %v1432 = vlaneseq
    %v1433 = vshrl.u32 %v1432, 7
    %v1434 = vsub.s32 6, %v1433
    %v1435 = vrot.slane %v1387, %v1434
    %v1436 = vmul.f32 %v1393, %v1435
    %v1437 = vadd.f32 %v1371, %v1436
    %v1438 = vlaneseq
    %v1439 = vshrl.u32 %v1438, 7
    %v1440 = vsub.s32 7, %v1439
    %v1441 = vrot.slane %v1387, %v1440
    %v1442 = vmul.f32 %v1393, %v1441
    %v1443 = vadd.f32 %v1377, %v1442
    %s1444 = sld [smem:[#allocation8 + $0x10]]
    %s1445 = sld [smem:[#allocation8 + $0x90]]
    %s1446 = sld [smem:[#allocation8 + $0x110]]
    %s1447 = sld [smem:[#allocation8 + $0x190]]
    %v1448 = vsub.f32 %v215, %v374
    %v1449 = vmul.f32 %v1448, %v385
    %v1450 = vstv %s1444
    %v1451 = vmul.f32 %v1449, %v1450
    %v1452 = vstv %s1445
    %v1453 = vadd.f32 %v1451, %v1452
    %v1454 = vsub.f32 %v217, %v375
    %v1455 = vmul.f32 %v1454, %v387
    %v1456 = vstv %s1446
    %v1457 = vmul.f32 %v1455, %v1456
    %v1458 = vstv %s1447
    %v1459 = vadd.f32 %v1457, %v1458
    %v1460 = vmul.f32 %v1453, %v1453
    %v1461 = vadd.f32 %v1395, %v1460
    %v1462 = vlaneseq
    %v1463 = vshrl.u32 %v1462, 7
    %v1464 = vsub.s32 0, %v1463
    %v1465 = vrot.slane %v1453, %v1464
    %v1466 = vmul.f32 %v1459, %v1465
    %v1467 = vadd.f32 %v1401, %v1466
    %v1468 = vlaneseq
    %v1469 = vshrl.u32 %v1468, 7
    %v1470 = vsub.s32 1, %v1469
    %v1471 = vrot.slane %v1453, %v1470
    %v1472 = vmul.f32 %v1459, %v1471
    %v1473 = vadd.f32 %v1407, %v1472
    %v1474 = vlaneseq
    %v1475 = vshrl.u32 %v1474, 7
    %v1476 = vsub.s32 2, %v1475
    %v1477 = vrot.slane %v1453, %v1476
    %v1478 = vmul.f32 %v1459, %v1477
    %v1479 = vadd.f32 %v1413, %v1478
    %v1480 = vlaneseq
    %v1481 = vshrl.u32 %v1480, 7
    %v1482 = vsub.s32 3, %v1481
    %v1483 = vrot.slane %v1453, %v1482
    %v1484 = vmul.f32 %v1459, %v1483
    %v1485 = vadd.f32 %v1419, %v1484
    %v1486 = vlaneseq
    %v1487 = vshrl.u32 %v1486, 7
    %v1488 = vsub.s32 4, %v1487
    %v1489 = vrot.slane %v1453, %v1488
    %v1490 = vmul.f32 %v1459, %v1489
    %v1491 = vadd.f32 %v1425, %v1490
    %v1492 = vlaneseq
    %v1493 = vshrl.u32 %v1492, 7
    %v1494 = vsub.s32 5, %v1493
    %v1495 = vrot.slane %v1453, %v1494
    %v1496 = vmul.f32 %v1459, %v1495
    %v1497 = vadd.f32 %v1431, %v1496
    %v1498 = vlaneseq
    %v1499 = vshrl.u32 %v1498, 7
    %v1500 = vsub.s32 6, %v1499
    %v1501 = vrot.slane %v1453, %v1500
    %v1502 = vmul.f32 %v1459, %v1501
    %v1503 = vadd.f32 %v1437, %v1502
    %v1504 = vlaneseq
    %v1505 = vshrl.u32 %v1504, 7
    %v1506 = vsub.s32 7, %v1505
    %v1507 = vrot.slane %v1453, %v1506
    %v1508 = vmul.f32 %v1459, %v1507
    %v1509 = vadd.f32 %v1443, %v1508
    %s1510 = sld [smem:[#allocation8 + $0x11]]
    %s1511 = sld [smem:[#allocation8 + $0x91]]
    %s1512 = sld [smem:[#allocation8 + $0x111]]
    %s1513 = sld [smem:[#allocation8 + $0x191]]
    %v1514 = vsub.f32 %v225, %v374
    %v1515 = vmul.f32 %v1514, %v385
    %v1516 = vstv %s1510
    %v1517 = vmul.f32 %v1515, %v1516
    %v1518 = vstv %s1511
    %v1519 = vadd.f32 %v1517, %v1518
    %v1520 = vsub.f32 %v227, %v375
    %v1521 = vmul.f32 %v1520, %v387
    %v1522 = vstv %s1512
    %v1523 = vmul.f32 %v1521, %v1522
    %v1524 = vstv %s1513
    %v1525 = vadd.f32 %v1523, %v1524
    %v1526 = vmul.f32 %v1519, %v1519
    %v1527 = vadd.f32 %v1461, %v1526
    %v1528 = vlaneseq
    %v1529 = vshrl.u32 %v1528, 7
    %v1530 = vsub.s32 0, %v1529
    %v1531 = vrot.slane %v1519, %v1530
    %v1532 = vmul.f32 %v1525, %v1531
    %v1533 = vadd.f32 %v1467, %v1532
    %v1534 = vlaneseq
    %v1535 = vshrl.u32 %v1534, 7
    %v1536 = vsub.s32 1, %v1535
    %v1537 = vrot.slane %v1519, %v1536
    %v1538 = vmul.f32 %v1525, %v1537
    %v1539 = vadd.f32 %v1473, %v1538
    %v1540 = vlaneseq
    %v1541 = vshrl.u32 %v1540, 7
    %v1542 = vsub.s32 2, %v1541
    %v1543 = vrot.slane %v1519, %v1542
    %v1544 = vmul.f32 %v1525, %v1543
    %v1545 = vadd.f32 %v1479, %v1544
    %v1546 = vlaneseq
    %v1547 = vshrl.u32 %v1546, 7
    %v1548 = vsub.s32 3, %v1547
    %v1549 = vrot.slane %v1519, %v1548
    %v1550 = vmul.f32 %v1525, %v1549
    %v1551 = vadd.f32 %v1485, %v1550
    %v1552 = vlaneseq
    %v1553 = vshrl.u32 %v1552, 7
    %v1554 = vsub.s32 4, %v1553
    %v1555 = vrot.slane %v1519, %v1554
    %v1556 = vmul.f32 %v1525, %v1555
    %v1557 = vadd.f32 %v1491, %v1556
    %v1558 = vlaneseq
    %v1559 = vshrl.u32 %v1558, 7
    %v1560 = vsub.s32 5, %v1559
    %v1561 = vrot.slane %v1519, %v1560
    %v1562 = vmul.f32 %v1525, %v1561
    %v1563 = vadd.f32 %v1497, %v1562
    %v1564 = vlaneseq
    %v1565 = vshrl.u32 %v1564, 7
    %v1566 = vsub.s32 6, %v1565
    %v1567 = vrot.slane %v1519, %v1566
    %v1568 = vmul.f32 %v1525, %v1567
    %v1569 = vadd.f32 %v1503, %v1568
    %v1570 = vlaneseq
    %v1571 = vshrl.u32 %v1570, 7
    %v1572 = vsub.s32 7, %v1571
    %v1573 = vrot.slane %v1519, %v1572
    %v1574 = vmul.f32 %v1525, %v1573
    %v1575 = vadd.f32 %v1509, %v1574
    %s1576 = sld [smem:[#allocation8 + $0x12]]
    %s1577 = sld [smem:[#allocation8 + $0x92]]
    %s1578 = sld [smem:[#allocation8 + $0x112]]
    %s1579 = sld [smem:[#allocation8 + $0x192]]
    %v1580 = vsub.f32 %v235, %v374
    %v1581 = vmul.f32 %v1580, %v385
    %v1582 = vstv %s1576
    %v1583 = vmul.f32 %v1581, %v1582
    %v1584 = vstv %s1577
    %v1585 = vadd.f32 %v1583, %v1584
    %v1586 = vsub.f32 %v237, %v375
    %v1587 = vmul.f32 %v1586, %v387
    %v1588 = vstv %s1578
    %v1589 = vmul.f32 %v1587, %v1588
    %v1590 = vstv %s1579
    %v1591 = vadd.f32 %v1589, %v1590
    %v1592 = vmul.f32 %v1585, %v1585
    %v1593 = vadd.f32 %v1527, %v1592
    %v1594 = vlaneseq
    %v1595 = vshrl.u32 %v1594, 7
    %v1596 = vsub.s32 0, %v1595
    %v1597 = vrot.slane %v1585, %v1596
    %v1598 = vmul.f32 %v1591, %v1597
    %v1599 = vadd.f32 %v1533, %v1598
    %v1600 = vlaneseq
    %v1601 = vshrl.u32 %v1600, 7
    %v1602 = vsub.s32 1, %v1601
    %v1603 = vrot.slane %v1585, %v1602
    %v1604 = vmul.f32 %v1591, %v1603
    %v1605 = vadd.f32 %v1539, %v1604
    %v1606 = vlaneseq
    %v1607 = vshrl.u32 %v1606, 7
    %v1608 = vsub.s32 2, %v1607
    %v1609 = vrot.slane %v1585, %v1608
    %v1610 = vmul.f32 %v1591, %v1609
    %v1611 = vadd.f32 %v1545, %v1610
    %v1612 = vlaneseq
    %v1613 = vshrl.u32 %v1612, 7
    %v1614 = vsub.s32 3, %v1613
    %v1615 = vrot.slane %v1585, %v1614
    %v1616 = vmul.f32 %v1591, %v1615
    %v1617 = vadd.f32 %v1551, %v1616
    %v1618 = vlaneseq
    %v1619 = vshrl.u32 %v1618, 7
    %v1620 = vsub.s32 4, %v1619
    %v1621 = vrot.slane %v1585, %v1620
    %v1622 = vmul.f32 %v1591, %v1621
    %v1623 = vadd.f32 %v1557, %v1622
    %v1624 = vlaneseq
    %v1625 = vshrl.u32 %v1624, 7
    %v1626 = vsub.s32 5, %v1625
    %v1627 = vrot.slane %v1585, %v1626
    %v1628 = vmul.f32 %v1591, %v1627
    %v1629 = vadd.f32 %v1563, %v1628
    %v1630 = vlaneseq
    %v1631 = vshrl.u32 %v1630, 7
    %v1632 = vsub.s32 6, %v1631
    %v1633 = vrot.slane %v1585, %v1632
    %v1634 = vmul.f32 %v1591, %v1633
    %v1635 = vadd.f32 %v1569, %v1634
    %v1636 = vlaneseq
    %v1637 = vshrl.u32 %v1636, 7
    %v1638 = vsub.s32 7, %v1637
    %v1639 = vrot.slane %v1585, %v1638
    %v1640 = vmul.f32 %v1591, %v1639
    %v1641 = vadd.f32 %v1575, %v1640
    %s1642 = sld [smem:[#allocation8 + $0x13]]
    %s1643 = sld [smem:[#allocation8 + $0x93]]
    %s1644 = sld [smem:[#allocation8 + $0x113]]
    %s1645 = sld [smem:[#allocation8 + $0x193]]
    %v1646 = vsub.f32 %v245, %v374
    %v1647 = vmul.f32 %v1646, %v385
    %v1648 = vstv %s1642
    %v1649 = vmul.f32 %v1647, %v1648
    %v1650 = vstv %s1643
    %v1651 = vadd.f32 %v1649, %v1650
    %v1652 = vsub.f32 %v247, %v375
    %v1653 = vmul.f32 %v1652, %v387
    %v1654 = vstv %s1644
    %v1655 = vmul.f32 %v1653, %v1654
    %v1656 = vstv %s1645
    %v1657 = vadd.f32 %v1655, %v1656
    %v1658 = vmul.f32 %v1651, %v1651
    %v1659 = vadd.f32 %v1593, %v1658
    %v1660 = vlaneseq
    %v1661 = vshrl.u32 %v1660, 7
    %v1662 = vsub.s32 0, %v1661
    %v1663 = vrot.slane %v1651, %v1662
    %v1664 = vmul.f32 %v1657, %v1663
    %v1665 = vadd.f32 %v1599, %v1664
    %v1666 = vlaneseq
    %v1667 = vshrl.u32 %v1666, 7
    %v1668 = vsub.s32 1, %v1667
    %v1669 = vrot.slane %v1651, %v1668
    %v1670 = vmul.f32 %v1657, %v1669
    %v1671 = vadd.f32 %v1605, %v1670
    %v1672 = vlaneseq
    %v1673 = vshrl.u32 %v1672, 7
    %v1674 = vsub.s32 2, %v1673
    %v1675 = vrot.slane %v1651, %v1674
    %v1676 = vmul.f32 %v1657, %v1675
    %v1677 = vadd.f32 %v1611, %v1676
    %v1678 = vlaneseq
    %v1679 = vshrl.u32 %v1678, 7
    %v1680 = vsub.s32 3, %v1679
    %v1681 = vrot.slane %v1651, %v1680
    %v1682 = vmul.f32 %v1657, %v1681
    %v1683 = vadd.f32 %v1617, %v1682
    %v1684 = vlaneseq
    %v1685 = vshrl.u32 %v1684, 7
    %v1686 = vsub.s32 4, %v1685
    %v1687 = vrot.slane %v1651, %v1686
    %v1688 = vmul.f32 %v1657, %v1687
    %v1689 = vadd.f32 %v1623, %v1688
    %v1690 = vlaneseq
    %v1691 = vshrl.u32 %v1690, 7
    %v1692 = vsub.s32 5, %v1691
    %v1693 = vrot.slane %v1651, %v1692
    %v1694 = vmul.f32 %v1657, %v1693
    %v1695 = vadd.f32 %v1629, %v1694
    %v1696 = vlaneseq
    %v1697 = vshrl.u32 %v1696, 7
    %v1698 = vsub.s32 6, %v1697
    %v1699 = vrot.slane %v1651, %v1698
    %v1700 = vmul.f32 %v1657, %v1699
    %v1701 = vadd.f32 %v1635, %v1700
    %v1702 = vlaneseq
    %v1703 = vshrl.u32 %v1702, 7
    %v1704 = vsub.s32 7, %v1703
    %v1705 = vrot.slane %v1651, %v1704
    %v1706 = vmul.f32 %v1657, %v1705
    %v1707 = vadd.f32 %v1641, %v1706
    %s1708 = sld [smem:[#allocation8 + $0x14]]
    %s1709 = sld [smem:[#allocation8 + $0x94]]
    %s1710 = sld [smem:[#allocation8 + $0x114]]
    %s1711 = sld [smem:[#allocation8 + $0x194]]
    %v1712 = vsub.f32 %v255, %v374
    %v1713 = vmul.f32 %v1712, %v385
    %v1714 = vstv %s1708
    %v1715 = vmul.f32 %v1713, %v1714
    %v1716 = vstv %s1709
    %v1717 = vadd.f32 %v1715, %v1716
    %v1718 = vsub.f32 %v257, %v375
    %v1719 = vmul.f32 %v1718, %v387
    %v1720 = vstv %s1710
    %v1721 = vmul.f32 %v1719, %v1720
    %v1722 = vstv %s1711
    %v1723 = vadd.f32 %v1721, %v1722
    %v1724 = vmul.f32 %v1717, %v1717
    %v1725 = vadd.f32 %v1659, %v1724
    %v1726 = vlaneseq
    %v1727 = vshrl.u32 %v1726, 7
    %v1728 = vsub.s32 0, %v1727
    %v1729 = vrot.slane %v1717, %v1728
    %v1730 = vmul.f32 %v1723, %v1729
    %v1731 = vadd.f32 %v1665, %v1730
    %v1732 = vlaneseq
    %v1733 = vshrl.u32 %v1732, 7
    %v1734 = vsub.s32 1, %v1733
    %v1735 = vrot.slane %v1717, %v1734
    %v1736 = vmul.f32 %v1723, %v1735
    %v1737 = vadd.f32 %v1671, %v1736
    %v1738 = vlaneseq
    %v1739 = vshrl.u32 %v1738, 7
    %v1740 = vsub.s32 2, %v1739
    %v1741 = vrot.slane %v1717, %v1740
    %v1742 = vmul.f32 %v1723, %v1741
    %v1743 = vadd.f32 %v1677, %v1742
    %v1744 = vlaneseq
    %v1745 = vshrl.u32 %v1744, 7
    %v1746 = vsub.s32 3, %v1745
    %v1747 = vrot.slane %v1717, %v1746
    %v1748 = vmul.f32 %v1723, %v1747
    %v1749 = vadd.f32 %v1683, %v1748
    %v1750 = vlaneseq
    %v1751 = vshrl.u32 %v1750, 7
    %v1752 = vsub.s32 4, %v1751
    %v1753 = vrot.slane %v1717, %v1752
    %v1754 = vmul.f32 %v1723, %v1753
    %v1755 = vadd.f32 %v1689, %v1754
    %v1756 = vlaneseq
    %v1757 = vshrl.u32 %v1756, 7
    %v1758 = vsub.s32 5, %v1757
    %v1759 = vrot.slane %v1717, %v1758
    %v1760 = vmul.f32 %v1723, %v1759
    %v1761 = vadd.f32 %v1695, %v1760
    %v1762 = vlaneseq
    %v1763 = vshrl.u32 %v1762, 7
    %v1764 = vsub.s32 6, %v1763
    %v1765 = vrot.slane %v1717, %v1764
    %v1766 = vmul.f32 %v1723, %v1765
    %v1767 = vadd.f32 %v1701, %v1766
    %v1768 = vlaneseq
    %v1769 = vshrl.u32 %v1768, 7
    %v1770 = vsub.s32 7, %v1769
    %v1771 = vrot.slane %v1717, %v1770
    %v1772 = vmul.f32 %v1723, %v1771
    %v1773 = vadd.f32 %v1707, %v1772
    %s1774 = sld [smem:[#allocation8 + $0x15]]
    %s1775 = sld [smem:[#allocation8 + $0x95]]
    %s1776 = sld [smem:[#allocation8 + $0x115]]
    %s1777 = sld [smem:[#allocation8 + $0x195]]
    %v1778 = vsub.f32 %v265, %v374
    %v1779 = vmul.f32 %v1778, %v385
    %v1780 = vstv %s1774
    %v1781 = vmul.f32 %v1779, %v1780
    %v1782 = vstv %s1775
    %v1783 = vadd.f32 %v1781, %v1782
    %v1784 = vsub.f32 %v267, %v375
    %v1785 = vmul.f32 %v1784, %v387
    %v1786 = vstv %s1776
    %v1787 = vmul.f32 %v1785, %v1786
    %v1788 = vstv %s1777
    %v1789 = vadd.f32 %v1787, %v1788
    %v1790 = vmul.f32 %v1783, %v1783
    %v1791 = vadd.f32 %v1725, %v1790
    %v1792 = vlaneseq
    %v1793 = vshrl.u32 %v1792, 7
    %v1794 = vsub.s32 0, %v1793
    %v1795 = vrot.slane %v1783, %v1794
    %v1796 = vmul.f32 %v1789, %v1795
    %v1797 = vadd.f32 %v1731, %v1796
    %v1798 = vlaneseq
    %v1799 = vshrl.u32 %v1798, 7
    %v1800 = vsub.s32 1, %v1799
    %v1801 = vrot.slane %v1783, %v1800
    %v1802 = vmul.f32 %v1789, %v1801
    %v1803 = vadd.f32 %v1737, %v1802
    %v1804 = vlaneseq
    %v1805 = vshrl.u32 %v1804, 7
    %v1806 = vsub.s32 2, %v1805
    %v1807 = vrot.slane %v1783, %v1806
    %v1808 = vmul.f32 %v1789, %v1807
    %v1809 = vadd.f32 %v1743, %v1808
    %v1810 = vlaneseq
    %v1811 = vshrl.u32 %v1810, 7
    %v1812 = vsub.s32 3, %v1811
    %v1813 = vrot.slane %v1783, %v1812
    %v1814 = vmul.f32 %v1789, %v1813
    %v1815 = vadd.f32 %v1749, %v1814
    %v1816 = vlaneseq
    %v1817 = vshrl.u32 %v1816, 7
    %v1818 = vsub.s32 4, %v1817
    %v1819 = vrot.slane %v1783, %v1818
    %v1820 = vmul.f32 %v1789, %v1819
    %v1821 = vadd.f32 %v1755, %v1820
    %v1822 = vlaneseq
    %v1823 = vshrl.u32 %v1822, 7
    %v1824 = vsub.s32 5, %v1823
    %v1825 = vrot.slane %v1783, %v1824
    %v1826 = vmul.f32 %v1789, %v1825
    %v1827 = vadd.f32 %v1761, %v1826
    %v1828 = vlaneseq
    %v1829 = vshrl.u32 %v1828, 7
    %v1830 = vsub.s32 6, %v1829
    %v1831 = vrot.slane %v1783, %v1830
    %v1832 = vmul.f32 %v1789, %v1831
    %v1833 = vadd.f32 %v1767, %v1832
    %v1834 = vlaneseq
    %v1835 = vshrl.u32 %v1834, 7
    %v1836 = vsub.s32 7, %v1835
    %v1837 = vrot.slane %v1783, %v1836
    %v1838 = vmul.f32 %v1789, %v1837
    %v1839 = vadd.f32 %v1773, %v1838
    %s1840 = sld [smem:[#allocation8 + $0x16]]
    %s1841 = sld [smem:[#allocation8 + $0x96]]
    %s1842 = sld [smem:[#allocation8 + $0x116]]
    %s1843 = sld [smem:[#allocation8 + $0x196]]
    %v1844 = vsub.f32 %v275, %v374
    %v1845 = vmul.f32 %v1844, %v385
    %v1846 = vstv %s1840
    %v1847 = vmul.f32 %v1845, %v1846
    %v1848 = vstv %s1841
    %v1849 = vadd.f32 %v1847, %v1848
    %v1850 = vsub.f32 %v277, %v375
    %v1851 = vmul.f32 %v1850, %v387
    %v1852 = vstv %s1842
    %v1853 = vmul.f32 %v1851, %v1852
    %v1854 = vstv %s1843
    %v1855 = vadd.f32 %v1853, %v1854
    %v1856 = vmul.f32 %v1849, %v1849
    %v1857 = vadd.f32 %v1791, %v1856
    %v1858 = vlaneseq
    %v1859 = vshrl.u32 %v1858, 7
    %v1860 = vsub.s32 0, %v1859
    %v1861 = vrot.slane %v1849, %v1860
    %v1862 = vmul.f32 %v1855, %v1861
    %v1863 = vadd.f32 %v1797, %v1862
    %v1864 = vlaneseq
    %v1865 = vshrl.u32 %v1864, 7
    %v1866 = vsub.s32 1, %v1865
    %v1867 = vrot.slane %v1849, %v1866
    %v1868 = vmul.f32 %v1855, %v1867
    %v1869 = vadd.f32 %v1803, %v1868
    %v1870 = vlaneseq
    %v1871 = vshrl.u32 %v1870, 7
    %v1872 = vsub.s32 2, %v1871
    %v1873 = vrot.slane %v1849, %v1872
    %v1874 = vmul.f32 %v1855, %v1873
    %v1875 = vadd.f32 %v1809, %v1874
    %v1876 = vlaneseq
    %v1877 = vshrl.u32 %v1876, 7
    %v1878 = vsub.s32 3, %v1877
    %v1879 = vrot.slane %v1849, %v1878
    %v1880 = vmul.f32 %v1855, %v1879
    %v1881 = vadd.f32 %v1815, %v1880
    %v1882 = vlaneseq
    %v1883 = vshrl.u32 %v1882, 7
    %v1884 = vsub.s32 4, %v1883
    %v1885 = vrot.slane %v1849, %v1884
    %v1886 = vmul.f32 %v1855, %v1885
    %v1887 = vadd.f32 %v1821, %v1886
    %v1888 = vlaneseq
    %v1889 = vshrl.u32 %v1888, 7
    %v1890 = vsub.s32 5, %v1889
    %v1891 = vrot.slane %v1849, %v1890
    %v1892 = vmul.f32 %v1855, %v1891
    %v1893 = vadd.f32 %v1827, %v1892
    %v1894 = vlaneseq
    %v1895 = vshrl.u32 %v1894, 7
    %v1896 = vsub.s32 6, %v1895
    %v1897 = vrot.slane %v1849, %v1896
    %v1898 = vmul.f32 %v1855, %v1897
    %v1899 = vadd.f32 %v1833, %v1898
    %v1900 = vlaneseq
    %v1901 = vshrl.u32 %v1900, 7
    %v1902 = vsub.s32 7, %v1901
    %v1903 = vrot.slane %v1849, %v1902
    %v1904 = vmul.f32 %v1855, %v1903
    %v1905 = vadd.f32 %v1839, %v1904
    %s1906 = sld [smem:[#allocation8 + $0x17]]
    %s1907 = sld [smem:[#allocation8 + $0x97]]
    %s1908 = sld [smem:[#allocation8 + $0x117]]
    %s1909 = sld [smem:[#allocation8 + $0x197]]
    %v1910 = vsub.f32 %v285, %v374
    %v1911 = vmul.f32 %v1910, %v385
    %v1912 = vstv %s1906
    %v1913 = vmul.f32 %v1911, %v1912
    %v1914 = vstv %s1907
    %v1915 = vadd.f32 %v1913, %v1914
    %v1916 = vsub.f32 %v287, %v375
    %v1917 = vmul.f32 %v1916, %v387
    %v1918 = vstv %s1908
    %v1919 = vmul.f32 %v1917, %v1918
    %v1920 = vstv %s1909
    %v1921 = vadd.f32 %v1919, %v1920
    %v1922 = vmul.f32 %v1915, %v1915
    %v1923 = vadd.f32 %v1857, %v1922
    %v1924 = vlaneseq
    %v1925 = vshrl.u32 %v1924, 7
    %v1926 = vsub.s32 0, %v1925
    %v1927 = vrot.slane %v1915, %v1926
    %v1928 = vmul.f32 %v1921, %v1927
    %v1929 = vadd.f32 %v1863, %v1928
    %v1930 = vlaneseq
    %v1931 = vshrl.u32 %v1930, 7
    %v1932 = vsub.s32 1, %v1931
    %v1933 = vrot.slane %v1915, %v1932
    %v1934 = vmul.f32 %v1921, %v1933
    %v1935 = vadd.f32 %v1869, %v1934
    %v1936 = vlaneseq
    %v1937 = vshrl.u32 %v1936, 7
    %v1938 = vsub.s32 2, %v1937
    %v1939 = vrot.slane %v1915, %v1938
    %v1940 = vmul.f32 %v1921, %v1939
    %v1941 = vadd.f32 %v1875, %v1940
    %v1942 = vlaneseq
    %v1943 = vshrl.u32 %v1942, 7
    %v1944 = vsub.s32 3, %v1943
    %v1945 = vrot.slane %v1915, %v1944
    %v1946 = vmul.f32 %v1921, %v1945
    %v1947 = vadd.f32 %v1881, %v1946
    %v1948 = vlaneseq
    %v1949 = vshrl.u32 %v1948, 7
    %v1950 = vsub.s32 4, %v1949
    %v1951 = vrot.slane %v1915, %v1950
    %v1952 = vmul.f32 %v1921, %v1951
    %v1953 = vadd.f32 %v1887, %v1952
    %v1954 = vlaneseq
    %v1955 = vshrl.u32 %v1954, 7
    %v1956 = vsub.s32 5, %v1955
    %v1957 = vrot.slane %v1915, %v1956
    %v1958 = vmul.f32 %v1921, %v1957
    %v1959 = vadd.f32 %v1893, %v1958
    %v1960 = vlaneseq
    %v1961 = vshrl.u32 %v1960, 7
    %v1962 = vsub.s32 6, %v1961
    %v1963 = vrot.slane %v1915, %v1962
    %v1964 = vmul.f32 %v1921, %v1963
    %v1965 = vadd.f32 %v1899, %v1964
    %v1966 = vlaneseq
    %v1967 = vshrl.u32 %v1966, 7
    %v1968 = vsub.s32 7, %v1967
    %v1969 = vrot.slane %v1915, %v1968
    %v1970 = vmul.f32 %v1921, %v1969
    %v1971 = vadd.f32 %v1905, %v1970
    %s1972 = sld [smem:[#allocation8 + $0x18]]
    %s1973 = sld [smem:[#allocation8 + $0x98]]
    %s1974 = sld [smem:[#allocation8 + $0x118]]
    %s1975 = sld [smem:[#allocation8 + $0x198]]
    %v1976 = vsub.f32 %v295, %v374
    %v1977 = vmul.f32 %v1976, %v385
    %v1978 = vstv %s1972
    %v1979 = vmul.f32 %v1977, %v1978
    %v1980 = vstv %s1973
    %v1981 = vadd.f32 %v1979, %v1980
    %v1982 = vsub.f32 %v297, %v375
    %v1983 = vmul.f32 %v1982, %v387
    %v1984 = vstv %s1974
    %v1985 = vmul.f32 %v1983, %v1984
    %v1986 = vstv %s1975
    %v1987 = vadd.f32 %v1985, %v1986
    %v1988 = vmul.f32 %v1981, %v1981
    %v1989 = vadd.f32 %v1923, %v1988
    %v1990 = vlaneseq
    %v1991 = vshrl.u32 %v1990, 7
    %v1992 = vsub.s32 0, %v1991
    %v1993 = vrot.slane %v1981, %v1992
    %v1994 = vmul.f32 %v1987, %v1993
    %v1995 = vadd.f32 %v1929, %v1994
    %v1996 = vlaneseq
    %v1997 = vshrl.u32 %v1996, 7
    %v1998 = vsub.s32 1, %v1997
    %v1999 = vrot.slane %v1981, %v1998
    %v2000 = vmul.f32 %v1987, %v1999
    %v2001 = vadd.f32 %v1935, %v2000
    %v2002 = vlaneseq
    %v2003 = vshrl.u32 %v2002, 7
    %v2004 = vsub.s32 2, %v2003
    %v2005 = vrot.slane %v1981, %v2004
    %v2006 = vmul.f32 %v1987, %v2005
    %v2007 = vadd.f32 %v1941, %v2006
    %v2008 = vlaneseq
    %v2009 = vshrl.u32 %v2008, 7
    %v2010 = vsub.s32 3, %v2009
    %v2011 = vrot.slane %v1981, %v2010
    %v2012 = vmul.f32 %v1987, %v2011
    %v2013 = vadd.f32 %v1947, %v2012
    %v2014 = vlaneseq
    %v2015 = vshrl.u32 %v2014, 7
    %v2016 = vsub.s32 4, %v2015
    %v2017 = vrot.slane %v1981, %v2016
    %v2018 = vmul.f32 %v1987, %v2017
    %v2019 = vadd.f32 %v1953, %v2018
    %v2020 = vlaneseq
    %v2021 = vshrl.u32 %v2020, 7
    %v2022 = vsub.s32 5, %v2021
    %v2023 = vrot.slane %v1981, %v2022
    %v2024 = vmul.f32 %v1987, %v2023
    %v2025 = vadd.f32 %v1959, %v2024
    %v2026 = vlaneseq
    %v2027 = vshrl.u32 %v2026, 7
    %v2028 = vsub.s32 6, %v2027
    %v2029 = vrot.slane %v1981, %v2028
    %v2030 = vmul.f32 %v1987, %v2029
    %v2031 = vadd.f32 %v1965, %v2030
    %v2032 = vlaneseq
    %v2033 = vshrl.u32 %v2032, 7
    %v2034 = vsub.s32 7, %v2033
    %v2035 = vrot.slane %v1981, %v2034
    %v2036 = vmul.f32 %v1987, %v2035
    %v2037 = vadd.f32 %v1971, %v2036
    %s2038 = sld [smem:[#allocation8 + $0x19]]
    %s2039 = sld [smem:[#allocation8 + $0x99]]
    %s2040 = sld [smem:[#allocation8 + $0x119]]
    %s2041 = sld [smem:[#allocation8 + $0x199]]
    %v2042 = vsub.f32 %v305, %v374
    %v2043 = vmul.f32 %v2042, %v385
    %v2044 = vstv %s2038
    %v2045 = vmul.f32 %v2043, %v2044
    %v2046 = vstv %s2039
    %v2047 = vadd.f32 %v2045, %v2046
    %v2048 = vsub.f32 %v307, %v375
    %v2049 = vmul.f32 %v2048, %v387
    %v2050 = vstv %s2040
    %v2051 = vmul.f32 %v2049, %v2050
    %v2052 = vstv %s2041
    %v2053 = vadd.f32 %v2051, %v2052
    %v2054 = vmul.f32 %v2047, %v2047
    %v2055 = vadd.f32 %v1989, %v2054
    %v2056 = vlaneseq
    %v2057 = vshrl.u32 %v2056, 7
    %v2058 = vsub.s32 0, %v2057
    %v2059 = vrot.slane %v2047, %v2058
    %v2060 = vmul.f32 %v2053, %v2059
    %v2061 = vadd.f32 %v1995, %v2060
    %v2062 = vlaneseq
    %v2063 = vshrl.u32 %v2062, 7
    %v2064 = vsub.s32 1, %v2063
    %v2065 = vrot.slane %v2047, %v2064
    %v2066 = vmul.f32 %v2053, %v2065
    %v2067 = vadd.f32 %v2001, %v2066
    %v2068 = vlaneseq
    %v2069 = vshrl.u32 %v2068, 7
    %v2070 = vsub.s32 2, %v2069
    %v2071 = vrot.slane %v2047, %v2070
    %v2072 = vmul.f32 %v2053, %v2071
    %v2073 = vadd.f32 %v2007, %v2072
    %v2074 = vlaneseq
    %v2075 = vshrl.u32 %v2074, 7
    %v2076 = vsub.s32 3, %v2075
    %v2077 = vrot.slane %v2047, %v2076
    %v2078 = vmul.f32 %v2053, %v2077
    %v2079 = vadd.f32 %v2013, %v2078
    %v2080 = vlaneseq
    %v2081 = vshrl.u32 %v2080, 7
    %v2082 = vsub.s32 4, %v2081
    %v2083 = vrot.slane %v2047, %v2082
    %v2084 = vmul.f32 %v2053, %v2083
    %v2085 = vadd.f32 %v2019, %v2084
    %v2086 = vlaneseq
    %v2087 = vshrl.u32 %v2086, 7
    %v2088 = vsub.s32 5, %v2087
    %v2089 = vrot.slane %v2047, %v2088
    %v2090 = vmul.f32 %v2053, %v2089
    %v2091 = vadd.f32 %v2025, %v2090
    %v2092 = vlaneseq
    %v2093 = vshrl.u32 %v2092, 7
    %v2094 = vsub.s32 6, %v2093
    %v2095 = vrot.slane %v2047, %v2094
    %v2096 = vmul.f32 %v2053, %v2095
    %v2097 = vadd.f32 %v2031, %v2096
    %v2098 = vlaneseq
    %v2099 = vshrl.u32 %v2098, 7
    %v2100 = vsub.s32 7, %v2099
    %v2101 = vrot.slane %v2047, %v2100
    %v2102 = vmul.f32 %v2053, %v2101
    %v2103 = vadd.f32 %v2037, %v2102
    %s2104 = sld [smem:[#allocation8 + $0x1a]]
    %s2105 = sld [smem:[#allocation8 + $0x9a]]
    %s2106 = sld [smem:[#allocation8 + $0x11a]]
    %s2107 = sld [smem:[#allocation8 + $0x19a]]
    %v2108 = vsub.f32 %v315, %v374
    %v2109 = vmul.f32 %v2108, %v385
    %v2110 = vstv %s2104
    %v2111 = vmul.f32 %v2109, %v2110
    %v2112 = vstv %s2105
    %v2113 = vadd.f32 %v2111, %v2112
    %v2114 = vsub.f32 %v317, %v375
    %v2115 = vmul.f32 %v2114, %v387
    %v2116 = vstv %s2106
    %v2117 = vmul.f32 %v2115, %v2116
    %v2118 = vstv %s2107
    %v2119 = vadd.f32 %v2117, %v2118
    %v2120 = vmul.f32 %v2113, %v2113
    %v2121 = vadd.f32 %v2055, %v2120
    %v2122 = vlaneseq
    %v2123 = vshrl.u32 %v2122, 7
    %v2124 = vsub.s32 0, %v2123
    %v2125 = vrot.slane %v2113, %v2124
    %v2126 = vmul.f32 %v2119, %v2125
    %v2127 = vadd.f32 %v2061, %v2126
    %v2128 = vlaneseq
    %v2129 = vshrl.u32 %v2128, 7
    %v2130 = vsub.s32 1, %v2129
    %v2131 = vrot.slane %v2113, %v2130
    %v2132 = vmul.f32 %v2119, %v2131
    %v2133 = vadd.f32 %v2067, %v2132
    %v2134 = vlaneseq
    %v2135 = vshrl.u32 %v2134, 7
    %v2136 = vsub.s32 2, %v2135
    %v2137 = vrot.slane %v2113, %v2136
    %v2138 = vmul.f32 %v2119, %v2137
    %v2139 = vadd.f32 %v2073, %v2138
    %v2140 = vlaneseq
    %v2141 = vshrl.u32 %v2140, 7
    %v2142 = vsub.s32 3, %v2141
    %v2143 = vrot.slane %v2113, %v2142
    %v2144 = vmul.f32 %v2119, %v2143
    %v2145 = vadd.f32 %v2079, %v2144
    %v2146 = vlaneseq
    %v2147 = vshrl.u32 %v2146, 7
    %v2148 = vsub.s32 4, %v2147
    %v2149 = vrot.slane %v2113, %v2148
    %v2150 = vmul.f32 %v2119, %v2149
    %v2151 = vadd.f32 %v2085, %v2150
    %v2152 = vlaneseq
    %v2153 = vshrl.u32 %v2152, 7
    %v2154 = vsub.s32 5, %v2153
    %v2155 = vrot.slane %v2113, %v2154
    %v2156 = vmul.f32 %v2119, %v2155
    %v2157 = vadd.f32 %v2091, %v2156
    %v2158 = vlaneseq
    %v2159 = vshrl.u32 %v2158, 7
    %v2160 = vsub.s32 6, %v2159
    %v2161 = vrot.slane %v2113, %v2160
    %v2162 = vmul.f32 %v2119, %v2161
    %v2163 = vadd.f32 %v2097, %v2162
    %v2164 = vlaneseq
    %v2165 = vshrl.u32 %v2164, 7
    %v2166 = vsub.s32 7, %v2165
    %v2167 = vrot.slane %v2113, %v2166
    %v2168 = vmul.f32 %v2119, %v2167
    %v2169 = vadd.f32 %v2103, %v2168
    %s2170 = sld [smem:[#allocation8 + $0x1b]]
    %s2171 = sld [smem:[#allocation8 + $0x9b]]
    %s2172 = sld [smem:[#allocation8 + $0x11b]]
    %s2173 = sld [smem:[#allocation8 + $0x19b]]
    %v2174 = vsub.f32 %v325, %v374
    %v2175 = vmul.f32 %v2174, %v385
    %v2176 = vstv %s2170
    %v2177 = vmul.f32 %v2175, %v2176
    %v2178 = vstv %s2171
    %v2179 = vadd.f32 %v2177, %v2178
    %v2180 = vsub.f32 %v327, %v375
    %v2181 = vmul.f32 %v2180, %v387
    %v2182 = vstv %s2172
    %v2183 = vmul.f32 %v2181, %v2182
    %v2184 = vstv %s2173
    %v2185 = vadd.f32 %v2183, %v2184
    %v2186 = vmul.f32 %v2179, %v2179
    %v2187 = vadd.f32 %v2121, %v2186
    %v2188 = vlaneseq
    %v2189 = vshrl.u32 %v2188, 7
    %v2190 = vsub.s32 0, %v2189
    %v2191 = vrot.slane %v2179, %v2190
    %v2192 = vmul.f32 %v2185, %v2191
    %v2193 = vadd.f32 %v2127, %v2192
    %v2194 = vlaneseq
    %v2195 = vshrl.u32 %v2194, 7
    %v2196 = vsub.s32 1, %v2195
    %v2197 = vrot.slane %v2179, %v2196
    %v2198 = vmul.f32 %v2185, %v2197
    %v2199 = vadd.f32 %v2133, %v2198
    %v2200 = vlaneseq
    %v2201 = vshrl.u32 %v2200, 7
    %v2202 = vsub.s32 2, %v2201
    %v2203 = vrot.slane %v2179, %v2202
    %v2204 = vmul.f32 %v2185, %v2203
    %v2205 = vadd.f32 %v2139, %v2204
    %v2206 = vlaneseq
    %v2207 = vshrl.u32 %v2206, 7
    %v2208 = vsub.s32 3, %v2207
    %v2209 = vrot.slane %v2179, %v2208
    %v2210 = vmul.f32 %v2185, %v2209
    %v2211 = vadd.f32 %v2145, %v2210
    %v2212 = vlaneseq
    %v2213 = vshrl.u32 %v2212, 7
    %v2214 = vsub.s32 4, %v2213
    %v2215 = vrot.slane %v2179, %v2214
    %v2216 = vmul.f32 %v2185, %v2215
    %v2217 = vadd.f32 %v2151, %v2216
    %v2218 = vlaneseq
    %v2219 = vshrl.u32 %v2218, 7
    %v2220 = vsub.s32 5, %v2219
    %v2221 = vrot.slane %v2179, %v2220
    %v2222 = vmul.f32 %v2185, %v2221
    %v2223 = vadd.f32 %v2157, %v2222
    %v2224 = vlaneseq
    %v2225 = vshrl.u32 %v2224, 7
    %v2226 = vsub.s32 6, %v2225
    %v2227 = vrot.slane %v2179, %v2226
    %v2228 = vmul.f32 %v2185, %v2227
    %v2229 = vadd.f32 %v2163, %v2228
    %v2230 = vlaneseq
    %v2231 = vshrl.u32 %v2230, 7
    %v2232 = vsub.s32 7, %v2231
    %v2233 = vrot.slane %v2179, %v2232
    %v2234 = vmul.f32 %v2185, %v2233
    %v2235 = vadd.f32 %v2169, %v2234
    %s2236 = sld [smem:[#allocation8 + $0x1c]]
    %s2237 = sld [smem:[#allocation8 + $0x9c]]
    %s2238 = sld [smem:[#allocation8 + $0x11c]]
    %s2239 = sld [smem:[#allocation8 + $0x19c]]
    %v2240 = vsub.f32 %v335, %v374
    %v2241 = vmul.f32 %v2240, %v385
    %v2242 = vstv %s2236
    %v2243 = vmul.f32 %v2241, %v2242
    %v2244 = vstv %s2237
    %v2245 = vadd.f32 %v2243, %v2244
    %v2246 = vsub.f32 %v337, %v375
    %v2247 = vmul.f32 %v2246, %v387
    %v2248 = vstv %s2238
    %v2249 = vmul.f32 %v2247, %v2248
    %v2250 = vstv %s2239
    %v2251 = vadd.f32 %v2249, %v2250
    %v2252 = vmul.f32 %v2245, %v2245
    %v2253 = vadd.f32 %v2187, %v2252
    %v2254 = vlaneseq
    %v2255 = vshrl.u32 %v2254, 7
    %v2256 = vsub.s32 0, %v2255
    %v2257 = vrot.slane %v2245, %v2256
    %v2258 = vmul.f32 %v2251, %v2257
    %v2259 = vadd.f32 %v2193, %v2258
    %v2260 = vlaneseq
    %v2261 = vshrl.u32 %v2260, 7
    %v2262 = vsub.s32 1, %v2261
    %v2263 = vrot.slane %v2245, %v2262
    %v2264 = vmul.f32 %v2251, %v2263
    %v2265 = vadd.f32 %v2199, %v2264
    %v2266 = vlaneseq
    %v2267 = vshrl.u32 %v2266, 7
    %v2268 = vsub.s32 2, %v2267
    %v2269 = vrot.slane %v2245, %v2268
    %v2270 = vmul.f32 %v2251, %v2269
    %v2271 = vadd.f32 %v2205, %v2270
    %v2272 = vlaneseq
    %v2273 = vshrl.u32 %v2272, 7
    %v2274 = vsub.s32 3, %v2273
    %v2275 = vrot.slane %v2245, %v2274
    %v2276 = vmul.f32 %v2251, %v2275
    %v2277 = vadd.f32 %v2211, %v2276
    %v2278 = vlaneseq
    %v2279 = vshrl.u32 %v2278, 7
    %v2280 = vsub.s32 4, %v2279
    %v2281 = vrot.slane %v2245, %v2280
    %v2282 = vmul.f32 %v2251, %v2281
    %v2283 = vadd.f32 %v2217, %v2282
    %v2284 = vlaneseq
    %v2285 = vshrl.u32 %v2284, 7
    %v2286 = vsub.s32 5, %v2285
    %v2287 = vrot.slane %v2245, %v2286
    %v2288 = vmul.f32 %v2251, %v2287
    %v2289 = vadd.f32 %v2223, %v2288
    %v2290 = vlaneseq
    %v2291 = vshrl.u32 %v2290, 7
    %v2292 = vsub.s32 6, %v2291
    %v2293 = vrot.slane %v2245, %v2292
    %v2294 = vmul.f32 %v2251, %v2293
    %v2295 = vadd.f32 %v2229, %v2294
    %v2296 = vlaneseq
    %v2297 = vshrl.u32 %v2296, 7
    %v2298 = vsub.s32 7, %v2297
    %v2299 = vrot.slane %v2245, %v2298
    %v2300 = vmul.f32 %v2251, %v2299
    %v2301 = vadd.f32 %v2235, %v2300
    %s2302 = sld [smem:[#allocation8 + $0x1d]]
    %s2303 = sld [smem:[#allocation8 + $0x9d]]
    %s2304 = sld [smem:[#allocation8 + $0x11d]]
    %s2305 = sld [smem:[#allocation8 + $0x19d]]
    %v2306 = vsub.f32 %v345, %v374
    %v2307 = vmul.f32 %v2306, %v385
    %v2308 = vstv %s2302
    %v2309 = vmul.f32 %v2307, %v2308
    %v2310 = vstv %s2303
    %v2311 = vadd.f32 %v2309, %v2310
    %v2312 = vsub.f32 %v347, %v375
    %v2313 = vmul.f32 %v2312, %v387
    %v2314 = vstv %s2304
    %v2315 = vmul.f32 %v2313, %v2314
    %v2316 = vstv %s2305
    %v2317 = vadd.f32 %v2315, %v2316
    %v2318 = vmul.f32 %v2311, %v2311
    %v2319 = vadd.f32 %v2253, %v2318
    %v2320 = vlaneseq
    %v2321 = vshrl.u32 %v2320, 7
    %v2322 = vsub.s32 0, %v2321
    %v2323 = vrot.slane %v2311, %v2322
    %v2324 = vmul.f32 %v2317, %v2323
    %v2325 = vadd.f32 %v2259, %v2324
    %v2326 = vlaneseq
    %v2327 = vshrl.u32 %v2326, 7
    %v2328 = vsub.s32 1, %v2327
    %v2329 = vrot.slane %v2311, %v2328
    %v2330 = vmul.f32 %v2317, %v2329
    %v2331 = vadd.f32 %v2265, %v2330
    %v2332 = vlaneseq
    %v2333 = vshrl.u32 %v2332, 7
    %v2334 = vsub.s32 2, %v2333
    %v2335 = vrot.slane %v2311, %v2334
    %v2336 = vmul.f32 %v2317, %v2335
    %v2337 = vadd.f32 %v2271, %v2336
    %v2338 = vlaneseq
    %v2339 = vshrl.u32 %v2338, 7
    %v2340 = vsub.s32 3, %v2339
    %v2341 = vrot.slane %v2311, %v2340
    %v2342 = vmul.f32 %v2317, %v2341
    %v2343 = vadd.f32 %v2277, %v2342
    %v2344 = vlaneseq
    %v2345 = vshrl.u32 %v2344, 7
    %v2346 = vsub.s32 4, %v2345
    %v2347 = vrot.slane %v2311, %v2346
    %v2348 = vmul.f32 %v2317, %v2347
    %v2349 = vadd.f32 %v2283, %v2348
    %v2350 = vlaneseq
    %v2351 = vshrl.u32 %v2350, 7
    %v2352 = vsub.s32 5, %v2351
    %v2353 = vrot.slane %v2311, %v2352
    %v2354 = vmul.f32 %v2317, %v2353
    %v2355 = vadd.f32 %v2289, %v2354
    %v2356 = vlaneseq
    %v2357 = vshrl.u32 %v2356, 7
    %v2358 = vsub.s32 6, %v2357
    %v2359 = vrot.slane %v2311, %v2358
    %v2360 = vmul.f32 %v2317, %v2359
    %v2361 = vadd.f32 %v2295, %v2360
    %v2362 = vlaneseq
    %v2363 = vshrl.u32 %v2362, 7
    %v2364 = vsub.s32 7, %v2363
    %v2365 = vrot.slane %v2311, %v2364
    %v2366 = vmul.f32 %v2317, %v2365
    %v2367 = vadd.f32 %v2301, %v2366
    %s2368 = sld [smem:[#allocation8 + $0x1e]]
    %s2369 = sld [smem:[#allocation8 + $0x9e]]
    %s2370 = sld [smem:[#allocation8 + $0x11e]]
    %s2371 = sld [smem:[#allocation8 + $0x19e]]
    %v2372 = vsub.f32 %v355, %v374
    %v2373 = vmul.f32 %v2372, %v385
    %v2374 = vstv %s2368
    %v2375 = vmul.f32 %v2373, %v2374
    %v2376 = vstv %s2369
    %v2377 = vadd.f32 %v2375, %v2376
    %v2378 = vsub.f32 %v357, %v375
    %v2379 = vmul.f32 %v2378, %v387
    %v2380 = vstv %s2370
    %v2381 = vmul.f32 %v2379, %v2380
    %v2382 = vstv %s2371
    %v2383 = vadd.f32 %v2381, %v2382
    %v2384 = vmul.f32 %v2377, %v2377
    %v2385 = vadd.f32 %v2319, %v2384
    %v2386 = vlaneseq
    %v2387 = vshrl.u32 %v2386, 7
    %v2388 = vsub.s32 0, %v2387
    %v2389 = vrot.slane %v2377, %v2388
    %v2390 = vmul.f32 %v2383, %v2389
    %v2391 = vadd.f32 %v2325, %v2390
    %v2392 = vlaneseq
    %v2393 = vshrl.u32 %v2392, 7
    %v2394 = vsub.s32 1, %v2393
    %v2395 = vrot.slane %v2377, %v2394
    %v2396 = vmul.f32 %v2383, %v2395
    %v2397 = vadd.f32 %v2331, %v2396
    %v2398 = vlaneseq
    %v2399 = vshrl.u32 %v2398, 7
    %v2400 = vsub.s32 2, %v2399
    %v2401 = vrot.slane %v2377, %v2400
    %v2402 = vmul.f32 %v2383, %v2401
    %v2403 = vadd.f32 %v2337, %v2402
    %v2404 = vlaneseq
    %v2405 = vshrl.u32 %v2404, 7
    %v2406 = vsub.s32 3, %v2405
    %v2407 = vrot.slane %v2377, %v2406
    %v2408 = vmul.f32 %v2383, %v2407
    %v2409 = vadd.f32 %v2343, %v2408
    %v2410 = vlaneseq
    %v2411 = vshrl.u32 %v2410, 7
    %v2412 = vsub.s32 4, %v2411
    %v2413 = vrot.slane %v2377, %v2412
    %v2414 = vmul.f32 %v2383, %v2413
    %v2415 = vadd.f32 %v2349, %v2414
    %v2416 = vlaneseq
    %v2417 = vshrl.u32 %v2416, 7
    %v2418 = vsub.s32 5, %v2417
    %v2419 = vrot.slane %v2377, %v2418
    %v2420 = vmul.f32 %v2383, %v2419
    %v2421 = vadd.f32 %v2355, %v2420
    %v2422 = vlaneseq
    %v2423 = vshrl.u32 %v2422, 7
    %v2424 = vsub.s32 6, %v2423
    %v2425 = vrot.slane %v2377, %v2424
    %v2426 = vmul.f32 %v2383, %v2425
    %v2427 = vadd.f32 %v2361, %v2426
    %v2428 = vlaneseq
    %v2429 = vshrl.u32 %v2428, 7
    %v2430 = vsub.s32 7, %v2429
    %v2431 = vrot.slane %v2377, %v2430
    %v2432 = vmul.f32 %v2383, %v2431
    %v2433 = vadd.f32 %v2367, %v2432
    %s2434 = sld [smem:[#allocation8 + $0x1f]]
    %s2435 = sld [smem:[#allocation8 + $0x9f]]
    %s2436 = sld [smem:[#allocation8 + $0x11f]]
    %s2437 = sld [smem:[#allocation8 + $0x19f]]
    %v2438 = vsub.f32 %v365, %v374
    %v2439 = vmul.f32 %v2438, %v385
    %v2440 = vstv %s2434
    %v2441 = vmul.f32 %v2439, %v2440
    %v2442 = vstv %s2435
    %v2443 = vadd.f32 %v2441, %v2442
    %v2444 = vsub.f32 %v367, %v375
    %v2445 = vmul.f32 %v2444, %v387
    %v2446 = vstv %s2436
    %v2447 = vmul.f32 %v2445, %v2446
    %v2448 = vstv %s2437
    %v2449 = vadd.f32 %v2447, %v2448
    %v2450 = vmul.f32 %v2443, %v2443
    %v2451 = vadd.f32 %v2385, %v2450
    %v2452 = vlaneseq
    %v2453 = vshrl.u32 %v2452, 7
    %v2454 = vsub.s32 0, %v2453
    %v2455 = vrot.slane %v2443, %v2454
    %v2456 = vmul.f32 %v2449, %v2455
    %v2457 = vadd.f32 %v2391, %v2456
    %v2458 = vlaneseq
    %v2459 = vshrl.u32 %v2458, 7
    %v2460 = vsub.s32 1, %v2459
    %v2461 = vrot.slane %v2443, %v2460
    %v2462 = vmul.f32 %v2449, %v2461
    %v2463 = vadd.f32 %v2397, %v2462
    %v2464 = vlaneseq
    %v2465 = vshrl.u32 %v2464, 7
    %v2466 = vsub.s32 2, %v2465
    %v2467 = vrot.slane %v2443, %v2466
    %v2468 = vmul.f32 %v2449, %v2467
    %v2469 = vadd.f32 %v2403, %v2468
    %v2470 = vlaneseq
    %v2471 = vshrl.u32 %v2470, 7
    %v2472 = vsub.s32 3, %v2471
    %v2473 = vrot.slane %v2443, %v2472
    %v2474 = vmul.f32 %v2449, %v2473
    %v2475 = vadd.f32 %v2409, %v2474
    %v2476 = vlaneseq
    %v2477 = vshrl.u32 %v2476, 7
    %v2478 = vsub.s32 4, %v2477
    %v2479 = vrot.slane %v2443, %v2478
    %v2480 = vmul.f32 %v2449, %v2479
    %v2481 = vadd.f32 %v2415, %v2480
    %v2482 = vlaneseq
    %v2483 = vshrl.u32 %v2482, 7
    %v2484 = vsub.s32 5, %v2483
    %v2485 = vrot.slane %v2443, %v2484
    %v2486 = vmul.f32 %v2449, %v2485
    %v2487 = vadd.f32 %v2421, %v2486
    %v2488 = vlaneseq
    %v2489 = vshrl.u32 %v2488, 7
    %v2490 = vsub.s32 6, %v2489
    %v2491 = vrot.slane %v2443, %v2490
    %v2492 = vmul.f32 %v2449, %v2491
    %v2493 = vadd.f32 %v2427, %v2492
    %v2494 = vlaneseq
    %v2495 = vshrl.u32 %v2494, 7
    %v2496 = vsub.s32 7, %v2495
    %v2497 = vrot.slane %v2443, %v2496
    %v2498 = vmul.f32 %v2449, %v2497
    %v2499 = vadd.f32 %v2433, %v2498
    %v2500 = vmul.f32 %v2457, 2.0
    %v2501 = vlaneseq
    %v2502 = vshrl.u32 %v2501, 7
    %v2503 = vsub.s32 0, %v2502
    %v2504 = vrot.slane %v2451, %v2503
    %v2505 = vsub.f32 %v2500, %v2504
    %v2506 = vmul.f32 %v2505, 0.17677669
    %v2507 = vmul.f32 %v2463, 2.0
    %v2508 = vlaneseq
    %v2509 = vshrl.u32 %v2508, 7
    %v2510 = vsub.s32 1, %v2509
    %v2511 = vrot.slane %v2451, %v2510
    %v2512 = vsub.f32 %v2507, %v2511
    %v2513 = vmul.f32 %v2512, 0.17677669
    %v2514 = vmul.f32 %v2469, 2.0
    %v2515 = vlaneseq
    %v2516 = vshrl.u32 %v2515, 7
    %v2517 = vsub.s32 2, %v2516
    %v2518 = vrot.slane %v2451, %v2517
    %v2519 = vsub.f32 %v2514, %v2518
    %v2520 = vmul.f32 %v2519, 0.17677669
    %v2521 = vmul.f32 %v2475, 2.0
    %v2522 = vlaneseq
    %v2523 = vshrl.u32 %v2522, 7
    %v2524 = vsub.s32 3, %v2523
    %v2525 = vrot.slane %v2451, %v2524
    %v2526 = vsub.f32 %v2521, %v2525
    %v2527 = vmul.f32 %v2526, 0.17677669
    %v2528 = vmul.f32 %v2481, 2.0
    %v2529 = vlaneseq
    %v2530 = vshrl.u32 %v2529, 7
    %v2531 = vsub.s32 4, %v2530
    %v2532 = vrot.slane %v2451, %v2531
    %v2533 = vsub.f32 %v2528, %v2532
    %v2534 = vmul.f32 %v2533, 0.17677669
    %v2535 = vmul.f32 %v2487, 2.0
    %v2536 = vlaneseq
    %v2537 = vshrl.u32 %v2536, 7
    %v2538 = vsub.s32 5, %v2537
    %v2539 = vrot.slane %v2451, %v2538
    %v2540 = vsub.f32 %v2535, %v2539
    %v2541 = vmul.f32 %v2540, 0.17677669
    %v2542 = vmul.f32 %v2493, 2.0
    %v2543 = vlaneseq
    %v2544 = vshrl.u32 %v2543, 7
    %v2545 = vsub.s32 6, %v2544
    %v2546 = vrot.slane %v2451, %v2545
    %v2547 = vsub.f32 %v2542, %v2546
    %v2548 = vmul.f32 %v2547, 0.17677669
    %v2549 = vmul.f32 %v2499, 2.0
    %v2550 = vlaneseq
    %v2551 = vshrl.u32 %v2550, 7
    %v2552 = vsub.s32 7, %v2551
    %v2553 = vrot.slane %v2451, %v2552
    %v2554 = vsub.f32 %v2549, %v2553
    %v2555 = vmul.f32 %v2554, 0.17677669
    %v2556 = vmax.f32 %v2506, %v2513
    %v2557 = vmax.f32 %v2556, %v2520
    %v2558 = vmax.f32 %v2557, %v2527
    %v2559 = vmax.f32 %v2558, %v2534
    %v2560 = vmax.f32 %v2559, %v2541
    %v2561 = vmax.f32 %v2560, %v2548
    %v2562 = vmax.f32 %v2561, %v2555
    %v2563 = vsub.f32 %v2506, %v2562
    %v2564 = vmul.f32 %v2563, 1.442695
    %v2565 = vpow.pop %v2564
    %v2566 = vsub.f32 %v2513, %v2562
    %v2567 = vmul.f32 %v2566, 1.442695
    %v2568 = vpow.pop %v2567
    %v2569 = vsub.f32 %v2520, %v2562
    %v2570 = vmul.f32 %v2569, 1.442695
    %v2571 = vpow.pop %v2570
    %v2572 = vsub.f32 %v2527, %v2562
    %v2573 = vmul.f32 %v2572, 1.442695
    %v2574 = vpow.pop %v2573
    %v2575 = vsub.f32 %v2534, %v2562
    %v2576 = vmul.f32 %v2575, 1.442695
    %v2577 = vpow.pop %v2576
    %v2578 = vsub.f32 %v2541, %v2562
    %v2579 = vmul.f32 %v2578, 1.442695
    %v2580 = vpow.pop %v2579
    %v2581 = vsub.f32 %v2548, %v2562
    %v2582 = vmul.f32 %v2581, 1.442695
    %v2583 = vpow.pop %v2582
    %v2584 = vsub.f32 %v2555, %v2562
    %v2585 = vmul.f32 %v2584, 1.442695
    %v2586 = vpow.pop %v2585
    %v2587 = vadd.f32 %v2565, %v2568
    %v2588 = vadd.f32 %v2587, %v2571
    %v2589 = vadd.f32 %v2588, %v2574
    %v2590 = vadd.f32 %v2589, %v2577
    %v2591 = vadd.f32 %v2590, %v2580
    %v2592 = vadd.f32 %v2591, %v2583
    %v2593 = vadd.f32 %v2592, %v2586
    %v2594 = vrcp.pop %v2593
    %v2595 = vmul.f32 1.0, %v2594
    %v2596 = vmul.f32 %v2568, %v2595
    %v2597 = vmul.f32 %v2571, %v2595
    %v2598 = vmul.f32 %v2574, %v2595
    %v2599 = vmul.f32 %v2577, %v2595
    %v2600 = vmul.f32 %v2580, %v2595
    %v2601 = vmul.f32 %v2583, %v2595
    %v2602 = vmul.f32 %v2586, %v2595
    %v2603 = vadd.f32 %v2599, %v2600
    %v2604 = vadd.f32 %v2603, %v2601
    %v2605 = vadd.f32 %v2604, %v2602
    %2606 = vst [vmem:[#allocation9] sm:$0xff] %v2605
    %v2607 = vadd.f32 %v2597, %v2598
    %v2608 = vadd.f32 %v2607, %v2601
    %v2609 = vadd.f32 %v2608, %v2602
    %s2610 = scalar_lea.vmem [#allocation9], 8
    %2611 = vst [vmem:[%s2610] sm:$0xff] %v2609
    %v2612 = vadd.f32 %v2596, %v2598
    %v2613 = vadd.f32 %v2612, %v2600
    %v2614 = vadd.f32 %v2613, %v2602
    %s2615 = scalar_lea.vmem [#allocation9], 16
    %2616 = vst [vmem:[%s2615] sm:$0xff] %v2614
    // Predicated region
    $region26: #{tpu_custom_call.1} parent=1 // pred_check
      _
    $region27: #{tpu_custom_call.1} parent=1 // pred_check_branch
      %2618 = sbr.rel (0) target = $region29
    $region28: #{tpu_custom_call.1} parent=1 // pred_region
      %s2620 = ssub.s32 384, 384
      %2621 = vsyncadd [#allocation4], %s2620
      %s2622 = sshll.u32 [#allocation9], 4
      %s2623 = int_to_ptr.vmem [resolvable:$true] %s2622
      %2628 = dma.vmem_to_hbm [thread:$0]  %s2623, 384, %s3, [#allocation4], 128, 128, 8
    $region29: #{tpu_custom_call.1} parent=1 // pred_fallthru
      _
    // Predicated region
    $region30: #{tpu_custom_call.1} parent=1 // pred_check
      _
    $region31: #{tpu_custom_call.1} parent=1 // pred_check_branch
      %2630 = sbr.rel (0) target = $region33
    $region32: #{tpu_custom_call.1} parent=1 // pred_region
      %2631 = dma.done [#allocation4], 384
    $region33: #{tpu_custom_call.1} parent=1 // pred_fallthru
      _
    %2632 = vsyncpa [#allocation3], 1
    %2633 = vsyncpa [#allocation7], 1
    %2634 = vsyncpa [#allocation4], 1
    %2635 = vsyncpa [#allocation5], 1

</llo_original>
